<compile_context>
chip_gen: v7x
topology: tpu7x:2x2x1
jax: 0.10.0
libtpu: 0.0.40
codegen_flags: <defaults>
</compile_context>

<pallas_src>
import functools

import jax
import jax.numpy as jnp
from jax.experimental import pallas as pl
from jax.experimental.pallas import tpu as pltpu

K = 5              # conv kernel size
NEG_SLOPE = 0.01   # LeakyReLU default negative slope
CMID = 64          # channel / hidden width of the model

# MXU input dtype for the conv matmuls (accumulation is always f32).
CONV_DTYPE = jnp.bfloat16
_W_ALIGN = 16      # conv-output width alignment (bf16 sublane packing = 16)


def _round_up(x, m):
    return (x + m - 1) // m * m


# ----------------------------------------------------------------------------
# In-kernel helpers
# ----------------------------------------------------------------------------
def _conv_rows(load_kh, w_ref, *, oh, owp):
    """Conv as K row-matmuls: acc += G[kh:kh+oh] @ W[kh]; f32 accumulation."""
    kc, cout = w_ref.shape[1], w_ref.shape[2]
    acc = jnp.zeros((oh * owp, cout), jnp.float32)
    for kh in range(K):
        lhs = load_kh(kh).reshape(oh * owp, kc)          # layout-preserving (owp % 16 == 0)
        acc = acc + jnp.dot(lhs, w_ref[kh], preferred_element_type=jnp.float32)
    return acc


def _pool_then_lrelu(acc, *, oh, ow, owp, cout):
    """MaxPool2d(2, stride=1) then LeakyReLU(0.01) — commute since LeakyReLU is monotone."""
    act = acc.reshape(oh, owp, cout)
    ph, pw = oh - 1, ow - 1
    pooled = jnp.maximum(
        jnp.maximum(act[:ph, :pw, :], act[:ph, 1:pw + 1, :]),
        jnp.maximum(act[1:ph + 1, :pw, :], act[1:ph + 1, 1:pw + 1, :]))
    return jnp.where(pooled >= 0, pooled, NEG_SLOPE * pooled)


def _zero_halo(xp_ref, ih, iw):
    """Zero only the conv halo + right alignment columns.

    Interior rows 1..ih / cols 1..iw are fully overwritten every grid step, so
    only rows {0, hp-1} and cols {0, iw+1..wp-1} need (re)zeroing per step.
    """
    hp, wp, c = xp_ref.shape
    zrow = jnp.zeros((1, wp, c), xp_ref.dtype)
    xp_ref[0:1, :, :] = zrow
    xp_ref[hp - 1:hp, :, :] = zrow
    xp_ref[:, 0:1, :] = jnp.zeros((hp, 1, c), xp_ref.dtype)
    xp_ref[:, iw + 1:wp, :] = jnp.zeros((hp, wp - iw - 1, c), xp_ref.dtype)


# ----------------------------------------------------------------------------
# Fused whole-model kernel: grid is over batch, one image per grid step.
# ----------------------------------------------------------------------------
def _fused_kernel(g1_ref, w1_ref, w2_ref, w3_ref,
                  wh1_ref, bh1_ref, wh2_ref, bh2_ref, wv_ref, bv_ref,
                  out_ref,
                  xp2, g2, xp3, g3,
                  *, dims):
    (oh1, ow1, ow1p), (oh2, ow2, ow2p), (oh3, ow3, ow3p) = dims
    cdt = g2.dtype   # conv matmul dtype (bf16)

    # ---- block 1: im2col precomputed lane-dense in the wrapper -----------
    acc1 = _conv_rows(lambda kh: g1_ref[0, kh:kh + oh1, :, :], w1_ref,
                      oh=oh1, owp=ow1p)
    p1 = _pool_then_lrelu(acc1, oh=oh1, ow=ow1, owp=ow1p, cout=CMID)   # [oh1-1, ow1-1, 64] f32

    # ---- block 2 ----------------------------------------------------------
    _zero_halo(xp2, oh1 - 1, ow1 - 1)
    xp2[1:oh1, 1:ow1, :] = p1
    for kw in range(K):                       # im2col along W, cast to bf16
        g2[:, :, kw * CMID:(kw + 1) * CMID] = xp2[:, kw:kw + ow2p, :].astype(cdt)
    acc2 = _conv_rows(lambda kh: g2[kh:kh + oh2, :, :], w2_ref, oh=oh2, owp=ow2p)
    p2 = _pool_then_lrelu(acc2, oh=oh2, ow=ow2, owp=ow2p, cout=CMID)

    # ---- block 3 ----------------------------------------------------------
    _zero_halo(xp3, oh2 - 1, ow2 - 1)
    xp3[1:oh2, 1:ow2, :] = p2
    for kw in range(K):
        g3[:, :, kw * CMID:(kw + 1) * CMID] = xp3[:, kw:kw + ow3p, :].astype(cdt)
    acc3 = _conv_rows(lambda kh: g3[kh:kh + oh3, :, :], w3_ref, oh=oh3, owp=ow3p)
    p3 = _pool_then_lrelu(acc3, oh=oh3, ow=ow3, owp=ow3p, cout=CMID)

    # ---- global average pool + fused heads (all f32) ----------------------
    s1, s2 = oh3 - 1, ow3 - 1
    feat = jnp.sum(p3, axis=0)                                    # [s2, 64]
    feat = jnp.sum(feat, axis=0, keepdims=True) * (1.0 / (s1 * s2))   # [1, 64]

    # layer 1 of actor & critic fused side-by-side (lane-dense 128 wide)
    h1 = jnp.tanh(jnp.dot(feat, wh1_ref[...],
                          preferred_element_type=jnp.float32) + bh1_ref[...])
    # layer 2 as block-diagonal [128,128]: cols :64 -> actor, 64: -> critic hidden
    h2 = jnp.tanh(jnp.dot(h1, wh2_ref[...],
                          preferred_element_type=jnp.float32) + bh2_ref[...])
    # critic final Linear(64,1) as multiply + lane reduction
    val = jnp.sum(h2[:, CMID:] * wv_ref[...], axis=1, keepdims=True) + bv_ref[...]   # [1,1]

    # Single lane-dense [1, 128] output row: actor in lanes 0..63, value in 64..127.
    lane = jax.lax.broadcasted_iota(jnp.int32, (1, 2 * CMID), 1)
    out_ref[0] = jnp.where(lane < CMID, h2, val).astype(out_ref.dtype)


# ----------------------------------------------------------------------------
# Wrapper
# ----------------------------------------------------------------------------
def _sizes(h, w):
    # conv(k=5, pad=1): s -> s-2 ; maxpool(2, stride=1): s -> s-1
    oh1, ow1 = h - 2, w - 2
    ph1, pw1 = oh1 - 1, ow1 - 1
    oh2, ow2 = ph1 - 2, pw1 - 2
    ph2, pw2 = oh2 - 1, ow2 - 1
    oh3, ow3 = ph2 - 2, pw2 - 2
    assert oh3 - 1 >= 1 and ow3 - 1 >= 1, "input spatial size too small"
    return (oh1, ow1), (oh2, ow2), (oh3, ow3)


def _forward_nhwc(x_nhwc, kp):
    n, h, w, cin = x_nhwc.shape
    (oh1, ow1), (oh2, ow2), (oh3, ow3) = _sizes(h, w)

    ow1p = _round_up(ow1, _W_ALIGN)
    ow2p = _round_up(ow2, _W_ALIGN)
    ow3p = _round_up(ow3, _W_ALIGN)
    hp1, hp2, hp3 = oh1 + K - 1, oh2 + K - 1, oh3 + K - 1
    wp2, wp3 = ow2p + K - 1, ow3p + K - 1

    kc1 = _round_up(K * cin, 128)     # lane-dense padded contraction for block 1
    kc = K * CMID                     # 320 for blocks 2/3

    # Block-1 im2col ("G1") built lane-dense in XLA: [N, hp1, ow1p, kc1] bf16.
    wp1 = ow1p + K - 1
    xpad = jnp.pad(x_nhwc, ((0, 0), (1, 1), (1, wp1 - (w + 1)), (0, 0)))
    g1 = jnp.concatenate([xpad[:, :, kw:kw + ow1p, :] for kw in range(K)], axis=-1)
    g1 = jnp.pad(g1, ((0, 0), (0, 0), (0, 0), (0, kc1 - K * cin))).astype(CONV_DTYPE)

    dims = ((oh1, ow1, ow1p), (oh2, ow2, ow2p), (oh3, ow3, ow3p))
    kernel = functools.partial(_fused_kernel, dims=dims)

    out = pl.pallas_call(
        kernel,
        out_shape=jax.ShapeDtypeStruct((n, 1, 2 * CMID), jnp.float32),
        grid=(n,),
        in_specs=[
            pl.BlockSpec((1, hp1, ow1p, kc1), lambda b: (b, 0, 0, 0)),   # block-1 im2col
            pl.BlockSpec((K, kc1, CMID), lambda b: (0, 0, 0)),           # conv1 weights
            pl.BlockSpec((K, kc, CMID), lambda b: (0, 0, 0)),            # conv2 weights
            pl.BlockSpec((K, kc, CMID), lambda b: (0, 0, 0)),            # conv3 weights
            pl.BlockSpec((CMID, 2 * CMID), lambda b: (0, 0)),            # fused head layer-1 W
            pl.BlockSpec((1, 2 * CMID), lambda b: (0, 0)),               # fused head layer-1 b
            pl.BlockSpec((2 * CMID, 2 * CMID), lambda b: (0, 0)),        # block-diag layer-2 W
            pl.BlockSpec((1, 2 * CMID), lambda b: (0, 0)),               # fused head layer-2 b
            pl.BlockSpec((1, CMID), lambda b: (0, 0)),                   # critic final W (row)
            pl.BlockSpec((1, 1), lambda b: (0, 0)),                      # critic final b
        ],
        out_specs=pl.BlockSpec((1, 1, 2 * CMID), lambda b: (b, 0, 0)),
        scratch_shapes=[
            pltpu.VMEM((hp2, wp2, CMID), jnp.float32),   # padded input, block 2 (f32)
            pltpu.VMEM((hp2, ow2p, kc), CONV_DTYPE),     # im2col-along-W, block 2 (bf16)
            pltpu.VMEM((hp3, wp3, CMID), jnp.float32),   # padded input, block 3 (f32)
            pltpu.VMEM((hp3, ow3p, kc), CONV_DTYPE),     # im2col-along-W, block 3 (bf16)
        ],
        compiler_params=pltpu.CompilerParams(
            dimension_semantics=("parallel",)),          # batch splits across TCs (v7x)
    )(g1, kp["w1"], kp["w2"], kp["w3"],
      kp["wh1"], kp["bh1"], kp["wh2"], kp["bh2"], kp["wv"], kp["bv"])

    return out[:, 0, :CMID], out[:, 0, CMID:CMID + 1]


# ----------------------------------------------------------------------------
# Parameter initialization (deterministic, synthetic) + one-time packing.
# Linear layers follow init_layer: rows ~ N(0,1), L2-normalized over inputs,
# bias = 0. Conv layers use a deterministic scaled normal (synthetic init).
# ----------------------------------------------------------------------------
def _linear_params(key, fin, fout):
    w = jax.random.normal(key, (fout, fin), dtype=jnp.float32)   # PyTorch [out, in]
    w = w / jnp.sqrt(jnp.sum(w * w, axis=1, keepdims=True))      # init_layer
    return jnp.transpose(w), jnp.zeros((1, fout), jnp.float32)   # stored [in, out]


def _conv_params(key, cin, cout):
    w = jax.random.normal(key, (K, K, cin, cout), dtype=jnp.float32)
    return w * (1.0 / jnp.sqrt(K * K * cin))


def init_params(seed, input_channels):
    keys = jax.random.split(jax.random.PRNGKey(seed), 8)
    p = {}
    p["w1"] = _conv_params(keys[0], input_channels, CMID)
    p["w2"] = _conv_params(keys[1], CMID, CMID)
    p["w3"] = _conv_params(keys[2], CMID, CMID)
    p["aw1"], p["ab1"] = _linear_params(keys[3], CMID, CMID)
    p["aw2"], p["ab2"] = _linear_params(keys[4], CMID, CMID)
    p["cw1"], p["cb1"] = _linear_params(keys[5], CMID, CMID)
    p["cw2"], p["cb2"] = _linear_params(keys[6], CMID, CMID)
    p["cw3"], p["cb3"] = _linear_params(keys[7], CMID, 1)
    return p


def pack_params(p):
    """One-time repacking of parameters into kernel-ready layouts."""
    cin = p["w1"].shape[2]
    kc1 = _round_up(K * cin, 128)
    kp = {}
    # conv weights: [K, K, Cin, Cout] -> [K, K*Cin, Cout] ((kw, ci) flattened per kh),
    # block-1 contraction zero-padded to kc1, all cast to the MXU dtype (bf16).
    w1 = p["w1"].reshape(K, K * cin, CMID)
    kp["w1"] = jnp.pad(w1, ((0, 0), (0, kc1 - K * cin), (0, 0))).astype(CONV_DTYPE)
    kp["w2"] = p["w2"].reshape(K, K * CMID, CMID).astype(CONV_DTYPE)
    kp["w3"] = p["w3"].reshape(K, K * CMID, CMID).astype(CONV_DTYPE)
    # heads stay f32: actor/critic layer-1 fused side-by-side (lane-dense 128 wide)
    kp["wh1"] = jnp.concatenate([p["aw1"], p["cw1"]], axis=1)        # [64, 128]
    kp["bh1"] = jnp.concatenate([p["ab1"], p["cb1"]], axis=1)        # [1, 128]
    z = jnp.zeros((CMID, CMID), jnp.float32)
    kp["wh2"] = jnp.concatenate(
        [jnp.concatenate([p["aw2"], z], axis=1),
         jnp.concatenate([z, p["cw2"]], axis=1)], axis=0)            # [128, 128]
    kp["bh2"] = jnp.concatenate([p["ab2"], p["cb2"]], axis=1)        # [1, 128]
    kp["wv"] = jnp.transpose(p["cw3"])                               # [1, 64]
    kp["bv"] = p["cb3"]                                              # [1, 1]
    return kp


# ----------------------------------------------------------------------------
# Full model forward. Input is NCHW (PyTorch convention).
# ----------------------------------------------------------------------------
@jax.jit
def model_forward(x_nchw, kparams):
    x = jnp.transpose(x_nchw, (0, 2, 3, 1)).astype(jnp.float32)   # -> NHWC
    return _forward_nhwc(x, kparams)


if __name__ == "__main__":
    N, C, H, W = 2, 4, 16, 16
    key = jax.random.PRNGKey(0)
    x = jax.random.normal(key, (N, C, H, W), dtype=jnp.float32)   # NCHW input

    params = init_params(seed=0, input_channels=C)
    kparams = pack_params(params)

    actor, critic = model_forward(x, kparams)
    actor = jax.block_until_ready(actor)
    critic = jax.block_until_ready(critic)

    assert actor.shape == (N, 64) and critic.shape == (N, 1)
    assert bool(jnp.all(jnp.isfinite(actor))) and bool(jnp.all(jnp.isfinite(critic)))
    print("KERNEL_OK")
</pallas_src>

<mosaic_0001>
module attributes {stable_mosaic.version = 11 : i64} {
  func.func @_fused_kernel(%arg0: i32, %arg1: memref<1x18x16x128xbf16, #tpu.memory_space<vmem>>, %arg2: memref<5x128x64xbf16, #tpu.memory_space<vmem>>, %arg3: memref<5x320x64xbf16, #tpu.memory_space<vmem>>, %arg4: memref<5x320x64xbf16, #tpu.memory_space<vmem>>, %arg5: memref<64x128xf32, #tpu.memory_space<vmem>>, %arg6: memref<1x128xf32, #tpu.memory_space<vmem>>, %arg7: memref<128x128xf32, #tpu.memory_space<vmem>>, %arg8: memref<1x128xf32, #tpu.memory_space<vmem>>, %arg9: memref<1x64xf32, #tpu.memory_space<vmem>>, %arg10: memref<1x1xf32, #tpu.memory_space<vmem>>, %arg11: memref<1x1x128xf32, #tpu.memory_space<vmem>>, %arg12: memref<15x20x64xf32, #tpu.memory_space<vmem>>, %arg13: memref<15x16x320xbf16, #tpu.memory_space<vmem>>, %arg14: memref<12x20x64xf32, #tpu.memory_space<vmem>>, %arg15: memref<12x16x320xbf16, #tpu.memory_space<vmem>>) attributes {dimension_semantics = [#tpu.dimension_semantics<parallel>], iteration_bounds = array<i64: 2>, scalar_prefetch = 0 : i64, scratch_operands = 4 : i64, tpu.core_type = #tpu.core_type<tc>, window_params = [{transform_indices = @transform_0, window_bounds = array<i64: 1, 18, 16, 128>}, {pipeline_mode = #tpu.pipeline_mode<synchronous>, transform_indices = @transform_1, window_bounds = array<i64: 5, 128, 64>}, {pipeline_mode = #tpu.pipeline_mode<synchronous>, transform_indices = @transform_2, window_bounds = array<i64: 5, 320, 64>}, {pipeline_mode = #tpu.pipeline_mode<synchronous>, transform_indices = @transform_3, window_bounds = array<i64: 5, 320, 64>}, {pipeline_mode = #tpu.pipeline_mode<synchronous>, transform_indices = @transform_4, window_bounds = array<i64: 64, 128>}, {pipeline_mode = #tpu.pipeline_mode<synchronous>, transform_indices = @transform_5, window_bounds = array<i64: 1, 128>}, {pipeline_mode = #tpu.pipeline_mode<synchronous>, transform_indices = @transform_6, window_bounds = array<i64: 128, 128>}, {pipeline_mode = #tpu.pipeline_mode<synchronous>, transform_indices = @transform_7, window_bounds = array<i64: 1, 128>}, {pipeline_mode = #tpu.pipeline_mode<synchronous>, transform_indices = @transform_8, window_bounds = array<i64: 1, 64>}, {pipeline_mode = #tpu.pipeline_mode<synchronous>, transform_indices = @transform_9, window_bounds = array<i64: 1, 1>}, {transform_indices = @transform_10, window_bounds = array<i64: 1, 1, 128>}]} {
    %cst = arith.constant 0.000000e+00 : f32
    %0 = vector.broadcast %cst : f32 to vector<224x64xf32>
    %c0 = arith.constant 0 : index
    %c0_0 = arith.constant 0 : index
    %c0_1 = arith.constant 0 : index
    %c0_2 = arith.constant 0 : index
    %1 = vector.load %arg1[%c0, %c0_0, %c0_1, %c0_2] : memref<1x18x16x128xbf16, #tpu.memory_space<vmem>>, vector<1x14x16x128xbf16>
    %2 = vector.shape_cast %1 : vector<1x14x16x128xbf16> to vector<14x16x128xbf16>
    %3 = vector.shape_cast %2 : vector<14x16x128xbf16> to vector<224x128xbf16>
    %c0_3 = arith.constant 0 : index
    %c0_4 = arith.constant 0 : index
    %c0_5 = arith.constant 0 : index
    %4 = vector.load %arg2[%c0_3, %c0_4, %c0_5] : memref<5x128x64xbf16, #tpu.memory_space<vmem>>, vector<1x128x64xbf16>
    %5 = vector.shape_cast %4 : vector<1x128x64xbf16> to vector<128x64xbf16>
    %cst_6 = arith.constant dense<0.000000e+00> : vector<224x64xf32>
    %6 = tpu.matmul %3, %5, %cst_6 {dimension_numbers = #tpu.dot_dimension_numbers<[1], [0], [0], [1], [0, 0, 1, 1], [], []>} : vector<224x128xbf16>, vector<128x64xbf16>, vector<224x64xf32> -> vector<224x64xf32>
    %7 = arith.addf %0, %6 : vector<224x64xf32>
    %c0_7 = arith.constant 0 : index
    %c1 = arith.constant 1 : index
    %c0_8 = arith.constant 0 : index
    %c0_9 = arith.constant 0 : index
    %8 = vector.load %arg1[%c0_7, %c1, %c0_8, %c0_9] : memref<1x18x16x128xbf16, #tpu.memory_space<vmem>>, vector<1x14x16x128xbf16>
    %9 = vector.shape_cast %8 : vector<1x14x16x128xbf16> to vector<14x16x128xbf16>
    %10 = vector.shape_cast %9 : vector<14x16x128xbf16> to vector<224x128xbf16>
    %c1_10 = arith.constant 1 : index
    %c0_11 = arith.constant 0 : index
    %c0_12 = arith.constant 0 : index
    %11 = vector.load %arg2[%c1_10, %c0_11, %c0_12] : memref<5x128x64xbf16, #tpu.memory_space<vmem>>, vector<1x128x64xbf16>
    %12 = vector.shape_cast %11 : vector<1x128x64xbf16> to vector<128x64xbf16>
    %cst_13 = arith.constant dense<0.000000e+00> : vector<224x64xf32>
    %13 = tpu.matmul %10, %12, %cst_13 {dimension_numbers = #tpu.dot_dimension_numbers<[1], [0], [0], [1], [0, 0, 1, 1], [], []>} : vector<224x128xbf16>, vector<128x64xbf16>, vector<224x64xf32> -> vector<224x64xf32>
    %14 = arith.addf %7, %13 : vector<224x64xf32>
    %c0_14 = arith.constant 0 : index
    %c2 = arith.constant 2 : index
    %c0_15 = arith.constant 0 : index
    %c0_16 = arith.constant 0 : index
    %15 = vector.load %arg1[%c0_14, %c2, %c0_15, %c0_16] : memref<1x18x16x128xbf16, #tpu.memory_space<vmem>>, vector<1x14x16x128xbf16>
    %16 = vector.shape_cast %15 : vector<1x14x16x128xbf16> to vector<14x16x128xbf16>
    %17 = vector.shape_cast %16 : vector<14x16x128xbf16> to vector<224x128xbf16>
    %c2_17 = arith.constant 2 : index
    %c0_18 = arith.constant 0 : index
    %c0_19 = arith.constant 0 : index
    %18 = vector.load %arg2[%c2_17, %c0_18, %c0_19] : memref<5x128x64xbf16, #tpu.memory_space<vmem>>, vector<1x128x64xbf16>
    %19 = vector.shape_cast %18 : vector<1x128x64xbf16> to vector<128x64xbf16>
    %cst_20 = arith.constant dense<0.000000e+00> : vector<224x64xf32>
    %20 = tpu.matmul %17, %19, %cst_20 {dimension_numbers = #tpu.dot_dimension_numbers<[1], [0], [0], [1], [0, 0, 1, 1], [], []>} : vector<224x128xbf16>, vector<128x64xbf16>, vector<224x64xf32> -> vector<224x64xf32>
    %21 = arith.addf %14, %20 : vector<224x64xf32>
    %c0_21 = arith.constant 0 : index
    %c3 = arith.constant 3 : index
    %c0_22 = arith.constant 0 : index
    %c0_23 = arith.constant 0 : index
    %22 = vector.load %arg1[%c0_21, %c3, %c0_22, %c0_23] : memref<1x18x16x128xbf16, #tpu.memory_space<vmem>>, vector<1x14x16x128xbf16>
    %23 = vector.shape_cast %22 : vector<1x14x16x128xbf16> to vector<14x16x128xbf16>
    %24 = vector.shape_cast %23 : vector<14x16x128xbf16> to vector<224x128xbf16>
    %c3_24 = arith.constant 3 : index
    %c0_25 = arith.constant 0 : index
    %c0_26 = arith.constant 0 : index
    %25 = vector.load %arg2[%c3_24, %c0_25, %c0_26] : memref<5x128x64xbf16, #tpu.memory_space<vmem>>, vector<1x128x64xbf16>
    %26 = vector.shape_cast %25 : vector<1x128x64xbf16> to vector<128x64xbf16>
    %cst_27 = arith.constant dense<0.000000e+00> : vector<224x64xf32>
    %27 = tpu.matmul %24, %26, %cst_27 {dimension_numbers = #tpu.dot_dimension_numbers<[1], [0], [0], [1], [0, 0, 1, 1], [], []>} : vector<224x128xbf16>, vector<128x64xbf16>, vector<224x64xf32> -> vector<224x64xf32>
    %28 = arith.addf %21, %27 : vector<224x64xf32>
    %c0_28 = arith.constant 0 : index
    %c4 = arith.constant 4 : index
    %c0_29 = arith.constant 0 : index
    %c0_30 = arith.constant 0 : index
    %29 = vector.load %arg1[%c0_28, %c4, %c0_29, %c0_30] : memref<1x18x16x128xbf16, #tpu.memory_space<vmem>>, vector<1x14x16x128xbf16>
    %30 = vector.shape_cast %29 : vector<1x14x16x128xbf16> to vector<14x16x128xbf16>
    %31 = vector.shape_cast %30 : vector<14x16x128xbf16> to vector<224x128xbf16>
    %c4_31 = arith.constant 4 : index
    %c0_32 = arith.constant 0 : index
    %c0_33 = arith.constant 0 : index
    %32 = vector.load %arg2[%c4_31, %c0_32, %c0_33] : memref<5x128x64xbf16, #tpu.memory_space<vmem>>, vector<1x128x64xbf16>
    %33 = vector.shape_cast %32 : vector<1x128x64xbf16> to vector<128x64xbf16>
    %cst_34 = arith.constant dense<0.000000e+00> : vector<224x64xf32>
    %34 = tpu.matmul %31, %33, %cst_34 {dimension_numbers = #tpu.dot_dimension_numbers<[1], [0], [0], [1], [0, 0, 1, 1], [], []>} : vector<224x128xbf16>, vector<128x64xbf16>, vector<224x64xf32> -> vector<224x64xf32>
    %35 = arith.addf %28, %34 : vector<224x64xf32>
    %36 = vector.shape_cast %35 : vector<224x64xf32> to vector<14x16x64xf32>
    %37 = vector.extract_strided_slice %36 {offsets = [0, 0, 0], sizes = [13, 13, 64], strides = [1, 1, 1]} : vector<14x16x64xf32> to vector<13x13x64xf32>
    %38 = vector.extract_strided_slice %36 {offsets = [0, 1, 0], sizes = [13, 13, 64], strides = [1, 1, 1]} : vector<14x16x64xf32> to vector<13x13x64xf32>
    %39 = arith.maximumf %37, %38 : vector<13x13x64xf32>
    %40 = vector.extract_strided_slice %36 {offsets = [1, 0, 0], sizes = [13, 13, 64], strides = [1, 1, 1]} : vector<14x16x64xf32> to vector<13x13x64xf32>
    %41 = vector.extract_strided_slice %36 {offsets = [1, 1, 0], sizes = [13, 13, 64], strides = [1, 1, 1]} : vector<14x16x64xf32> to vector<13x13x64xf32>
    %42 = arith.maximumf %40, %41 : vector<13x13x64xf32>
    %43 = arith.maximumf %39, %42 : vector<13x13x64xf32>
    %cst_35 = arith.constant 0.000000e+00 : f32
    %44 = vector.broadcast %cst_35 : f32 to vector<13x13x64xf32>
    %45 = arith.cmpf oge, %43, %44 : vector<13x13x64xf32>
    %cst_36 = arith.constant 0.00999999977 : f32
    %46 = vector.broadcast %cst_36 : f32 to vector<13x13x64xf32>
    %47 = arith.mulf %46, %43 : vector<13x13x64xf32>
    %48 = arith.select %45, %43, %47 : vector<13x13x64xi1>, vector<13x13x64xf32>
    %cst_37 = arith.constant 0.000000e+00 : f32
    %49 = vector.broadcast %cst_37 : f32 to vector<1x20x64xf32>
    %c0_38 = arith.constant 0 : index
    %c0_39 = arith.constant 0 : index
    %c0_40 = arith.constant 0 : index
    %50 = vector.load %arg12[%c0_38, %c0_39, %c0_40] : memref<15x20x64xf32, #tpu.memory_space<vmem>>, vector<1x20x64xf32>
    tpu.vector_store %arg12[%c0_38, %c0_39, %c0_40], %49 {strides = array<i32>} : memref<15x20x64xf32, #tpu.memory_space<vmem>>, vector<1x20x64xf32>,
    %c14 = arith.constant 14 : index
    %c0_41 = arith.constant 0 : index
    %c0_42 = arith.constant 0 : index
    %51 = vector.load %arg12[%c14, %c0_41, %c0_42] : memref<15x20x64xf32, #tpu.memory_space<vmem>>, vector<1x20x64xf32>
    tpu.vector_store %arg12[%c14, %c0_41, %c0_42], %49 {strides = array<i32>} : memref<15x20x64xf32, #tpu.memory_space<vmem>>, vector<1x20x64xf32>,
    %cst_43 = arith.constant 0.000000e+00 : f32
    %52 = vector.broadcast %cst_43 : f32 to vector<15x1x64xf32>
    %c0_44 = arith.constant 0 : index
    %c0_45 = arith.constant 0 : index
    %c0_46 = arith.constant 0 : index
    %53 = vector.load %arg12[%c0_44, %c0_45, %c0_46] : memref<15x20x64xf32, #tpu.memory_space<vmem>>, vector<15x1x64xf32>
    tpu.vector_store %arg12[%c0_44, %c0_45, %c0_46], %52 {strides = array<i32>} : memref<15x20x64xf32, #tpu.memory_space<vmem>>, vector<15x1x64xf32>,
    %cst_47 = arith.constant 0.000000e+00 : f32
    %54 = vector.broadcast %cst_47 : f32 to vector<15x6x64xf32>
    %c0_48 = arith.constant 0 : index
    %c14_49 = arith.constant 14 : index
    %c0_50 = arith.constant 0 : index
    %55 = vector.load %arg12[%c0_48, %c14_49, %c0_50] : memref<15x20x64xf32, #tpu.memory_space<vmem>>, vector<15x6x64xf32>
    tpu.vector_store %arg12[%c0_48, %c14_49, %c0_50], %54 {strides = array<i32>} : memref<15x20x64xf32, #tpu.memory_space<vmem>>, vector<15x6x64xf32>,
    %c1_51 = arith.constant 1 : index
    %c1_52 = arith.constant 1 : index
    %c0_53 = arith.constant 0 : index
    %56 = vector.load %arg12[%c1_51, %c1_52, %c0_53] : memref<15x20x64xf32, #tpu.memory_space<vmem>>, vector<13x13x64xf32>
    tpu.vector_store %arg12[%c1_51, %c1_52, %c0_53], %48 {strides = array<i32>} : memref<15x20x64xf32, #tpu.memory_space<vmem>>, vector<13x13x64xf32>,
    %c0_54 = arith.constant 0 : index
    %c0_55 = arith.constant 0 : index
    %c0_56 = arith.constant 0 : index
    %57 = vector.load %arg12[%c0_54, %c0_55, %c0_56] : memref<15x20x64xf32, #tpu.memory_space<vmem>>, vector<15x16x64xf32>
    %58 = arith.truncf %57 : vector<15x16x64xf32> to vector<15x16x64xbf16>
    %c0_57 = arith.constant 0 : index
    %c0_58 = arith.constant 0 : index
    %c0_59 = arith.constant 0 : index
    %59 = vector.load %arg13[%c0_57, %c0_58, %c0_59] : memref<15x16x320xbf16, #tpu.memory_space<vmem>>, vector<15x16x64xbf16>
    tpu.vector_store %arg13[%c0_57, %c0_58, %c0_59], %58 {strides = array<i32>} : memref<15x16x320xbf16, #tpu.memory_space<vmem>>, vector<15x16x64xbf16>,
    %c0_60 = arith.constant 0 : index
    %c1_61 = arith.constant 1 : index
    %c0_62 = arith.constant 0 : index
    %60 = vector.load %arg12[%c0_60, %c1_61, %c0_62] : memref<15x20x64xf32, #tpu.memory_space<vmem>>, vector<15x16x64xf32>
    %61 = arith.truncf %60 : vector<15x16x64xf32> to vector<15x16x64xbf16>
    %c0_63 = arith.constant 0 : index
    %c0_64 = arith.constant 0 : index
    %c64 = arith.constant 64 : index
    %62 = vector.load %arg13[%c0_63, %c0_64, %c64] : memref<15x16x320xbf16, #tpu.memory_space<vmem>>, vector<15x16x64xbf16>
    tpu.vector_store %arg13[%c0_63, %c0_64, %c64], %61 {strides = array<i32>} : memref<15x16x320xbf16, #tpu.memory_space<vmem>>, vector<15x16x64xbf16>,
    %c0_65 = arith.constant 0 : index
    %c2_66 = arith.constant 2 : index
    %c0_67 = arith.constant 0 : index
    %63 = vector.load %arg12[%c0_65, %c2_66, %c0_67] : memref<15x20x64xf32, #tpu.memory_space<vmem>>, vector<15x16x64xf32>
    %64 = arith.truncf %63 : vector<15x16x64xf32> to vector<15x16x64xbf16>
    %c0_68 = arith.constant 0 : index
    %c0_69 = arith.constant 0 : index
    %c128 = arith.constant 128 : index
    %65 = vector.load %arg13[%c0_68, %c0_69, %c128] : memref<15x16x320xbf16, #tpu.memory_space<vmem>>, vector<15x16x64xbf16>
    tpu.vector_store %arg13[%c0_68, %c0_69, %c128], %64 {strides = array<i32>} : memref<15x16x320xbf16, #tpu.memory_space<vmem>>, vector<15x16x64xbf16>,
    %c0_70 = arith.constant 0 : index
    %c3_71 = arith.constant 3 : index
    %c0_72 = arith.constant 0 : index
    %66 = vector.load %arg12[%c0_70, %c3_71, %c0_72] : memref<15x20x64xf32, #tpu.memory_space<vmem>>, vector<15x16x64xf32>
    %67 = arith.truncf %66 : vector<15x16x64xf32> to vector<15x16x64xbf16>
    %c0_73 = arith.constant 0 : index
    %c0_74 = arith.constant 0 : index
    %c192 = arith.constant 192 : index
    %68 = vector.load %arg13[%c0_73, %c0_74, %c192] : memref<15x16x320xbf16, #tpu.memory_space<vmem>>, vector<15x16x64xbf16>
    tpu.vector_store %arg13[%c0_73, %c0_74, %c192], %67 {strides = array<i32>} : memref<15x16x320xbf16, #tpu.memory_space<vmem>>, vector<15x16x64xbf16>,
    %c0_75 = arith.constant 0 : index
    %c4_76 = arith.constant 4 : index
    %c0_77 = arith.constant 0 : index
    %69 = vector.load %arg12[%c0_75, %c4_76, %c0_77] : memref<15x20x64xf32, #tpu.memory_space<vmem>>, vector<15x16x64xf32>
    %70 = arith.truncf %69 : vector<15x16x64xf32> to vector<15x16x64xbf16>
    %c0_78 = arith.constant 0 : index
    %c0_79 = arith.constant 0 : index
    %c256 = arith.constant 256 : index
    %71 = vector.load %arg13[%c0_78, %c0_79, %c256] : memref<15x16x320xbf16, #tpu.memory_space<vmem>>, vector<15x16x64xbf16>
    tpu.vector_store %arg13[%c0_78, %c0_79, %c256], %70 {strides = array<i32>} : memref<15x16x320xbf16, #tpu.memory_space<vmem>>, vector<15x16x64xbf16>,
    %cst_80 = arith.constant 0.000000e+00 : f32
    %72 = vector.broadcast %cst_80 : f32 to vector<176x64xf32>
    %c0_81 = arith.constant 0 : index
    %c0_82 = arith.constant 0 : index
    %c0_83 = arith.constant 0 : index
    %73 = vector.load %arg13[%c0_81, %c0_82, %c0_83] : memref<15x16x320xbf16, #tpu.memory_space<vmem>>, vector<11x16x320xbf16>
    %74 = vector.shape_cast %73 : vector<11x16x320xbf16> to vector<176x320xbf16>
    %c0_84 = arith.constant 0 : index
    %c0_85 = arith.constant 0 : index
    %c0_86 = arith.constant 0 : index
    %75 = vector.load %arg3[%c0_84, %c0_85, %c0_86] : memref<5x320x64xbf16, #tpu.memory_space<vmem>>, vector<1x320x64xbf16>
    %76 = vector.shape_cast %75 : vector<1x320x64xbf16> to vector<320x64xbf16>
    %cst_87 = arith.constant dense<0.000000e+00> : vector<176x64xf32>
    %77 = tpu.matmul %74, %76, %cst_87 {dimension_numbers = #tpu.dot_dimension_numbers<[1], [0], [0], [1], [0, 0, 1, 1], [], []>} : vector<176x320xbf16>, vector<320x64xbf16>, vector<176x64xf32> -> vector<176x64xf32>
    %78 = arith.addf %72, %77 : vector<176x64xf32>
    %c1_88 = arith.constant 1 : index
    %c0_89 = arith.constant 0 : index
    %c0_90 = arith.constant 0 : index
    %79 = vector.load %arg13[%c1_88, %c0_89, %c0_90] : memref<15x16x320xbf16, #tpu.memory_space<vmem>>, vector<11x16x320xbf16>
    %80 = vector.shape_cast %79 : vector<11x16x320xbf16> to vector<176x320xbf16>
    %c1_91 = arith.constant 1 : index
    %c0_92 = arith.constant 0 : index
    %c0_93 = arith.constant 0 : index
    %81 = vector.load %arg3[%c1_91, %c0_92, %c0_93] : memref<5x320x64xbf16, #tpu.memory_space<vmem>>, vector<1x320x64xbf16>
    %82 = vector.shape_cast %81 : vector<1x320x64xbf16> to vector<320x64xbf16>
    %cst_94 = arith.constant dense<0.000000e+00> : vector<176x64xf32>
    %83 = tpu.matmul %80, %82, %cst_94 {dimension_numbers = #tpu.dot_dimension_numbers<[1], [0], [0], [1], [0, 0, 1, 1], [], []>} : vector<176x320xbf16>, vector<320x64xbf16>, vector<176x64xf32> -> vector<176x64xf32>
    %84 = arith.addf %78, %83 : vector<176x64xf32>
    %c2_95 = arith.constant 2 : index
    %c0_96 = arith.constant 0 : index
    %c0_97 = arith.constant 0 : index
    %85 = vector.load %arg13[%c2_95, %c0_96, %c0_97] : memref<15x16x320xbf16, #tpu.memory_space<vmem>>, vector<11x16x320xbf16>
    %86 = vector.shape_cast %85 : vector<11x16x320xbf16> to vector<176x320xbf16>
    %c2_98 = arith.constant 2 : index
    %c0_99 = arith.constant 0 : index
    %c0_100 = arith.constant 0 : index
    %87 = vector.load %arg3[%c2_98, %c0_99, %c0_100] : memref<5x320x64xbf16, #tpu.memory_space<vmem>>, vector<1x320x64xbf16>
    %88 = vector.shape_cast %87 : vector<1x320x64xbf16> to vector<320x64xbf16>
    %cst_101 = arith.constant dense<0.000000e+00> : vector<176x64xf32>
    %89 = tpu.matmul %86, %88, %cst_101 {dimension_numbers = #tpu.dot_dimension_numbers<[1], [0], [0], [1], [0, 0, 1, 1], [], []>} : vector<176x320xbf16>, vector<320x64xbf16>, vector<176x64xf32> -> vector<176x64xf32>
    %90 = arith.addf %84, %89 : vector<176x64xf32>
    %c3_102 = arith.constant 3 : index
    %c0_103 = arith.constant 0 : index
    %c0_104 = arith.constant 0 : index
    %91 = vector.load %arg13[%c3_102, %c0_103, %c0_104] : memref<15x16x320xbf16, #tpu.memory_space<vmem>>, vector<11x16x320xbf16>
    %92 = vector.shape_cast %91 : vector<11x16x320xbf16> to vector<176x320xbf16>
    %c3_105 = arith.constant 3 : index
    %c0_106 = arith.constant 0 : index
    %c0_107 = arith.constant 0 : index
    %93 = vector.load %arg3[%c3_105, %c0_106, %c0_107] : memref<5x320x64xbf16, #tpu.memory_space<vmem>>, vector<1x320x64xbf16>
    %94 = vector.shape_cast %93 : vector<1x320x64xbf16> to vector<320x64xbf16>
    %cst_108 = arith.constant dense<0.000000e+00> : vector<176x64xf32>
    %95 = tpu.matmul %92, %94, %cst_108 {dimension_numbers = #tpu.dot_dimension_numbers<[1], [0], [0], [1], [0, 0, 1, 1], [], []>} : vector<176x320xbf16>, vector<320x64xbf16>, vector<176x64xf32> -> vector<176x64xf32>
    %96 = arith.addf %90, %95 : vector<176x64xf32>
    %c4_109 = arith.constant 4 : index
    %c0_110 = arith.constant 0 : index
    %c0_111 = arith.constant 0 : index
    %97 = vector.load %arg13[%c4_109, %c0_110, %c0_111] : memref<15x16x320xbf16, #tpu.memory_space<vmem>>, vector<11x16x320xbf16>
    %98 = vector.shape_cast %97 : vector<11x16x320xbf16> to vector<176x320xbf16>
    %c4_112 = arith.constant 4 : index
    %c0_113 = arith.constant 0 : index
    %c0_114 = arith.constant 0 : index
    %99 = vector.load %arg3[%c4_112, %c0_113, %c0_114] : memref<5x320x64xbf16, #tpu.memory_space<vmem>>, vector<1x320x64xbf16>
    %100 = vector.shape_cast %99 : vector<1x320x64xbf16> to vector<320x64xbf16>
    %cst_115 = arith.constant dense<0.000000e+00> : vector<176x64xf32>
    %101 = tpu.matmul %98, %100, %cst_115 {dimension_numbers = #tpu.dot_dimension_numbers<[1], [0], [0], [1], [0, 0, 1, 1], [], []>} : vector<176x320xbf16>, vector<320x64xbf16>, vector<176x64xf32> -> vector<176x64xf32>
    %102 = arith.addf %96, %101 : vector<176x64xf32>
    %103 = vector.shape_cast %102 : vector<176x64xf32> to vector<11x16x64xf32>
    %104 = vector.extract_strided_slice %103 {offsets = [0, 0, 0], sizes = [10, 10, 64], strides = [1, 1, 1]} : vector<11x16x64xf32> to vector<10x10x64xf32>
    %105 = vector.extract_strided_slice %103 {offsets = [0, 1, 0], sizes = [10, 10, 64], strides = [1, 1, 1]} : vector<11x16x64xf32> to vector<10x10x64xf32>
    %106 = arith.maximumf %104, %105 : vector<10x10x64xf32>
    %107 = vector.extract_strided_slice %103 {offsets = [1, 0, 0], sizes = [10, 10, 64], strides = [1, 1, 1]} : vector<11x16x64xf32> to vector<10x10x64xf32>
    %108 = vector.extract_strided_slice %103 {offsets = [1, 1, 0], sizes = [10, 10, 64], strides = [1, 1, 1]} : vector<11x16x64xf32> to vector<10x10x64xf32>
    %109 = arith.maximumf %107, %108 : vector<10x10x64xf32>
    %110 = arith.maximumf %106, %109 : vector<10x10x64xf32>
    %cst_116 = arith.constant 0.000000e+00 : f32
    %111 = vector.broadcast %cst_116 : f32 to vector<10x10x64xf32>
    %112 = arith.cmpf oge, %110, %111 : vector<10x10x64xf32>
    %cst_117 = arith.constant 0.00999999977 : f32
    %113 = vector.broadcast %cst_117 : f32 to vector<10x10x64xf32>
    %114 = arith.mulf %113, %110 : vector<10x10x64xf32>
    %115 = arith.select %112, %110, %114 : vector<10x10x64xi1>, vector<10x10x64xf32>
    %cst_118 = arith.constant 0.000000e+00 : f32
    %116 = vector.broadcast %cst_118 : f32 to vector<1x20x64xf32>
    %c0_119 = arith.constant 0 : index
    %c0_120 = arith.constant 0 : index
    %c0_121 = arith.constant 0 : index
    %117 = vector.load %arg14[%c0_119, %c0_120, %c0_121] : memref<12x20x64xf32, #tpu.memory_space<vmem>>, vector<1x20x64xf32>
    tpu.vector_store %arg14[%c0_119, %c0_120, %c0_121], %116 {strides = array<i32>} : memref<12x20x64xf32, #tpu.memory_space<vmem>>, vector<1x20x64xf32>,
    %c11 = arith.constant 11 : index
    %c0_122 = arith.constant 0 : index
    %c0_123 = arith.constant 0 : index
    %118 = vector.load %arg14[%c11, %c0_122, %c0_123] : memref<12x20x64xf32, #tpu.memory_space<vmem>>, vector<1x20x64xf32>
    tpu.vector_store %arg14[%c11, %c0_122, %c0_123], %116 {strides = array<i32>} : memref<12x20x64xf32, #tpu.memory_space<vmem>>, vector<1x20x64xf32>,
    %cst_124 = arith.constant 0.000000e+00 : f32
    %119 = vector.broadcast %cst_124 : f32 to vector<12x1x64xf32>
    %c0_125 = arith.constant 0 : index
    %c0_126 = arith.constant 0 : index
    %c0_127 = arith.constant 0 : index
    %120 = vector.load %arg14[%c0_125, %c0_126, %c0_127] : memref<12x20x64xf32, #tpu.memory_space<vmem>>, vector<12x1x64xf32>
    tpu.vector_store %arg14[%c0_125, %c0_126, %c0_127], %119 {strides = array<i32>} : memref<12x20x64xf32, #tpu.memory_space<vmem>>, vector<12x1x64xf32>,
    %cst_128 = arith.constant 0.000000e+00 : f32
    %121 = vector.broadcast %cst_128 : f32 to vector<12x9x64xf32>
    %c0_129 = arith.constant 0 : index
    %c11_130 = arith.constant 11 : index
    %c0_131 = arith.constant 0 : index
    %122 = vector.load %arg14[%c0_129, %c11_130, %c0_131] : memref<12x20x64xf32, #tpu.memory_space<vmem>>, vector<12x9x64xf32>
    tpu.vector_store %arg14[%c0_129, %c11_130, %c0_131], %121 {strides = array<i32>} : memref<12x20x64xf32, #tpu.memory_space<vmem>>, vector<12x9x64xf32>,
    %c1_132 = arith.constant 1 : index
    %c1_133 = arith.constant 1 : index
    %c0_134 = arith.constant 0 : index
    %123 = vector.load %arg14[%c1_132, %c1_133, %c0_134] : memref<12x20x64xf32, #tpu.memory_space<vmem>>, vector<10x10x64xf32>
    tpu.vector_store %arg14[%c1_132, %c1_133, %c0_134], %115 {strides = array<i32>} : memref<12x20x64xf32, #tpu.memory_space<vmem>>, vector<10x10x64xf32>,
    %c0_135 = arith.constant 0 : index
    %c0_136 = arith.constant 0 : index
    %c0_137 = arith.constant 0 : index
    %124 = vector.load %arg14[%c0_135, %c0_136, %c0_137] : memref<12x20x64xf32, #tpu.memory_space<vmem>>, vector<12x16x64xf32>
    %125 = arith.truncf %124 : vector<12x16x64xf32> to vector<12x16x64xbf16>
    %c0_138 = arith.constant 0 : index
    %c0_139 = arith.constant 0 : index
    %c0_140 = arith.constant 0 : index
    %126 = vector.load %arg15[%c0_138, %c0_139, %c0_140] : memref<12x16x320xbf16, #tpu.memory_space<vmem>>, vector<12x16x64xbf16>
    tpu.vector_store %arg15[%c0_138, %c0_139, %c0_140], %125 {strides = array<i32>} : memref<12x16x320xbf16, #tpu.memory_space<vmem>>, vector<12x16x64xbf16>,
    %c0_141 = arith.constant 0 : index
    %c1_142 = arith.constant 1 : index
    %c0_143 = arith.constant 0 : index
    %127 = vector.load %arg14[%c0_141, %c1_142, %c0_143] : memref<12x20x64xf32, #tpu.memory_space<vmem>>, vector<12x16x64xf32>
    %128 = arith.truncf %127 : vector<12x16x64xf32> to vector<12x16x64xbf16>
    %c0_144 = arith.constant 0 : index
    %c0_145 = arith.constant 0 : index
    %c64_146 = arith.constant 64 : index
    %129 = vector.load %arg15[%c0_144, %c0_145, %c64_146] : memref<12x16x320xbf16, #tpu.memory_space<vmem>>, vector<12x16x64xbf16>
    tpu.vector_store %arg15[%c0_144, %c0_145, %c64_146], %128 {strides = array<i32>} : memref<12x16x320xbf16, #tpu.memory_space<vmem>>, vector<12x16x64xbf16>,
    %c0_147 = arith.constant 0 : index
    %c2_148 = arith.constant 2 : index
    %c0_149 = arith.constant 0 : index
    %130 = vector.load %arg14[%c0_147, %c2_148, %c0_149] : memref<12x20x64xf32, #tpu.memory_space<vmem>>, vector<12x16x64xf32>
    %131 = arith.truncf %130 : vector<12x16x64xf32> to vector<12x16x64xbf16>
    %c0_150 = arith.constant 0 : index
    %c0_151 = arith.constant 0 : index
    %c128_152 = arith.constant 128 : index
    %132 = vector.load %arg15[%c0_150, %c0_151, %c128_152] : memref<12x16x320xbf16, #tpu.memory_space<vmem>>, vector<12x16x64xbf16>
    tpu.vector_store %arg15[%c0_150, %c0_151, %c128_152], %131 {strides = array<i32>} : memref<12x16x320xbf16, #tpu.memory_space<vmem>>, vector<12x16x64xbf16>,
    %c0_153 = arith.constant 0 : index
    %c3_154 = arith.constant 3 : index
    %c0_155 = arith.constant 0 : index
    %133 = vector.load %arg14[%c0_153, %c3_154, %c0_155] : memref<12x20x64xf32, #tpu.memory_space<vmem>>, vector<12x16x64xf32>
    %134 = arith.truncf %133 : vector<12x16x64xf32> to vector<12x16x64xbf16>
    %c0_156 = arith.constant 0 : index
    %c0_157 = arith.constant 0 : index
    %c192_158 = arith.constant 192 : index
    %135 = vector.load %arg15[%c0_156, %c0_157, %c192_158] : memref<12x16x320xbf16, #tpu.memory_space<vmem>>, vector<12x16x64xbf16>
    tpu.vector_store %arg15[%c0_156, %c0_157, %c192_158], %134 {strides = array<i32>} : memref<12x16x320xbf16, #tpu.memory_space<vmem>>, vector<12x16x64xbf16>,
    %c0_159 = arith.constant 0 : index
    %c4_160 = arith.constant 4 : index
    %c0_161 = arith.constant 0 : index
    %136 = vector.load %arg14[%c0_159, %c4_160, %c0_161] : memref<12x20x64xf32, #tpu.memory_space<vmem>>, vector<12x16x64xf32>
    %137 = arith.truncf %136 : vector<12x16x64xf32> to vector<12x16x64xbf16>
    %c0_162 = arith.constant 0 : index
    %c0_163 = arith.constant 0 : index
    %c256_164 = arith.constant 256 : index
    %138 = vector.load %arg15[%c0_162, %c0_163, %c256_164] : memref<12x16x320xbf16, #tpu.memory_space<vmem>>, vector<12x16x64xbf16>
    tpu.vector_store %arg15[%c0_162, %c0_163, %c256_164], %137 {strides = array<i32>} : memref<12x16x320xbf16, #tpu.memory_space<vmem>>, vector<12x16x64xbf16>,
    %cst_165 = arith.constant 0.000000e+00 : f32
    %139 = vector.broadcast %cst_165 : f32 to vector<128x64xf32>
    %c0_166 = arith.constant 0 : index
    %c0_167 = arith.constant 0 : index
    %c0_168 = arith.constant 0 : index
    %140 = vector.load %arg15[%c0_166, %c0_167, %c0_168] : memref<12x16x320xbf16, #tpu.memory_space<vmem>>, vector<8x16x320xbf16>
    %141 = vector.shape_cast %140 : vector<8x16x320xbf16> to vector<128x320xbf16>
    %c0_169 = arith.constant 0 : index
    %c0_170 = arith.constant 0 : index
    %c0_171 = arith.constant 0 : index
    %142 = vector.load %arg4[%c0_169, %c0_170, %c0_171] : memref<5x320x64xbf16, #tpu.memory_space<vmem>>, vector<1x320x64xbf16>
    %143 = vector.shape_cast %142 : vector<1x320x64xbf16> to vector<320x64xbf16>
    %cst_172 = arith.constant dense<0.000000e+00> : vector<128x64xf32>
    %144 = tpu.matmul %141, %143, %cst_172 {dimension_numbers = #tpu.dot_dimension_numbers<[1], [0], [0], [1], [0, 0, 1, 1], [], []>} : vector<128x320xbf16>, vector<320x64xbf16>, vector<128x64xf32> -> vector<128x64xf32>
    %145 = arith.addf %139, %144 : vector<128x64xf32>
    %c1_173 = arith.constant 1 : index
    %c0_174 = arith.constant 0 : index
    %c0_175 = arith.constant 0 : index
    %146 = vector.load %arg15[%c1_173, %c0_174, %c0_175] : memref<12x16x320xbf16, #tpu.memory_space<vmem>>, vector<8x16x320xbf16>
    %147 = vector.shape_cast %146 : vector<8x16x320xbf16> to vector<128x320xbf16>
    %c1_176 = arith.constant 1 : index
    %c0_177 = arith.constant 0 : index
    %c0_178 = arith.constant 0 : index
    %148 = vector.load %arg4[%c1_176, %c0_177, %c0_178] : memref<5x320x64xbf16, #tpu.memory_space<vmem>>, vector<1x320x64xbf16>
    %149 = vector.shape_cast %148 : vector<1x320x64xbf16> to vector<320x64xbf16>
    %cst_179 = arith.constant dense<0.000000e+00> : vector<128x64xf32>
    %150 = tpu.matmul %147, %149, %cst_179 {dimension_numbers = #tpu.dot_dimension_numbers<[1], [0], [0], [1], [0, 0, 1, 1], [], []>} : vector<128x320xbf16>, vector<320x64xbf16>, vector<128x64xf32> -> vector<128x64xf32>
    %151 = arith.addf %145, %150 : vector<128x64xf32>
    %c2_180 = arith.constant 2 : index
    %c0_181 = arith.constant 0 : index
    %c0_182 = arith.constant 0 : index
    %152 = vector.load %arg15[%c2_180, %c0_181, %c0_182] : memref<12x16x320xbf16, #tpu.memory_space<vmem>>, vector<8x16x320xbf16>
    %153 = vector.shape_cast %152 : vector<8x16x320xbf16> to vector<128x320xbf16>
    %c2_183 = arith.constant 2 : index
    %c0_184 = arith.constant 0 : index
    %c0_185 = arith.constant 0 : index
    %154 = vector.load %arg4[%c2_183, %c0_184, %c0_185] : memref<5x320x64xbf16, #tpu.memory_space<vmem>>, vector<1x320x64xbf16>
    %155 = vector.shape_cast %154 : vector<1x320x64xbf16> to vector<320x64xbf16>
    %cst_186 = arith.constant dense<0.000000e+00> : vector<128x64xf32>
    %156 = tpu.matmul %153, %155, %cst_186 {dimension_numbers = #tpu.dot_dimension_numbers<[1], [0], [0], [1], [0, 0, 1, 1], [], []>} : vector<128x320xbf16>, vector<320x64xbf16>, vector<128x64xf32> -> vector<128x64xf32>
    %157 = arith.addf %151, %156 : vector<128x64xf32>
    %c3_187 = arith.constant 3 : index
    %c0_188 = arith.constant 0 : index
    %c0_189 = arith.constant 0 : index
    %158 = vector.load %arg15[%c3_187, %c0_188, %c0_189] : memref<12x16x320xbf16, #tpu.memory_space<vmem>>, vector<8x16x320xbf16>
    %159 = vector.shape_cast %158 : vector<8x16x320xbf16> to vector<128x320xbf16>
    %c3_190 = arith.constant 3 : index
    %c0_191 = arith.constant 0 : index
    %c0_192 = arith.constant 0 : index
    %160 = vector.load %arg4[%c3_190, %c0_191, %c0_192] : memref<5x320x64xbf16, #tpu.memory_space<vmem>>, vector<1x320x64xbf16>
    %161 = vector.shape_cast %160 : vector<1x320x64xbf16> to vector<320x64xbf16>
    %cst_193 = arith.constant dense<0.000000e+00> : vector<128x64xf32>
    %162 = tpu.matmul %159, %161, %cst_193 {dimension_numbers = #tpu.dot_dimension_numbers<[1], [0], [0], [1], [0, 0, 1, 1], [], []>} : vector<128x320xbf16>, vector<320x64xbf16>, vector<128x64xf32> -> vector<128x64xf32>
    %163 = arith.addf %157, %162 : vector<128x64xf32>
    %c4_194 = arith.constant 4 : index
    %c0_195 = arith.constant 0 : index
    %c0_196 = arith.constant 0 : index
    %164 = vector.load %arg15[%c4_194, %c0_195, %c0_196] : memref<12x16x320xbf16, #tpu.memory_space<vmem>>, vector<8x16x320xbf16>
    %165 = vector.shape_cast %164 : vector<8x16x320xbf16> to vector<128x320xbf16>
    %c4_197 = arith.constant 4 : index
    %c0_198 = arith.constant 0 : index
    %c0_199 = arith.constant 0 : index
    %166 = vector.load %arg4[%c4_197, %c0_198, %c0_199] : memref<5x320x64xbf16, #tpu.memory_space<vmem>>, vector<1x320x64xbf16>
    %167 = vector.shape_cast %166 : vector<1x320x64xbf16> to vector<320x64xbf16>
    %cst_200 = arith.constant dense<0.000000e+00> : vector<128x64xf32>
    %168 = tpu.matmul %165, %167, %cst_200 {dimension_numbers = #tpu.dot_dimension_numbers<[1], [0], [0], [1], [0, 0, 1, 1], [], []>} : vector<128x320xbf16>, vector<320x64xbf16>, vector<128x64xf32> -> vector<128x64xf32>
    %169 = arith.addf %163, %168 : vector<128x64xf32>
    %170 = vector.shape_cast %169 : vector<128x64xf32> to vector<8x16x64xf32>
    %171 = vector.extract_strided_slice %170 {offsets = [0, 0, 0], sizes = [7, 7, 64], strides = [1, 1, 1]} : vector<8x16x64xf32> to vector<7x7x64xf32>
    %172 = vector.extract_strided_slice %170 {offsets = [0, 1, 0], sizes = [7, 7, 64], strides = [1, 1, 1]} : vector<8x16x64xf32> to vector<7x7x64xf32>
    %173 = arith.maximumf %171, %172 : vector<7x7x64xf32>
    %174 = vector.extract_strided_slice %170 {offsets = [1, 0, 0], sizes = [7, 7, 64], strides = [1, 1, 1]} : vector<8x16x64xf32> to vector<7x7x64xf32>
    %175 = vector.extract_strided_slice %170 {offsets = [1, 1, 0], sizes = [7, 7, 64], strides = [1, 1, 1]} : vector<8x16x64xf32> to vector<7x7x64xf32>
    %176 = arith.maximumf %174, %175 : vector<7x7x64xf32>
    %177 = arith.maximumf %173, %176 : vector<7x7x64xf32>
    %cst_201 = arith.constant 0.000000e+00 : f32
    %178 = vector.broadcast %cst_201 : f32 to vector<7x7x64xf32>
    %179 = arith.cmpf oge, %177, %178 : vector<7x7x64xf32>
    %cst_202 = arith.constant 0.00999999977 : f32
    %180 = vector.broadcast %cst_202 : f32 to vector<7x7x64xf32>
    %181 = arith.mulf %180, %177 : vector<7x7x64xf32>
    %182 = arith.select %179, %177, %181 : vector<7x7x64xi1>, vector<7x7x64xf32>
    %cst_203 = arith.constant dense<0.000000e+00> : vector<7x64xf32>
    %183 = vector.multi_reduction <add>, %182, %cst_203 [0] : vector<7x7x64xf32> to vector<7x64xf32>
    %cst_204 = arith.constant dense<0.000000e+00> : vector<64xf32>
    %184 = vector.multi_reduction <add>, %183, %cst_204 [0] : vector<7x64xf32> to vector<64xf32>
    %185 = vector.shape_cast %184 : vector<64xf32> to vector<1x64xf32>
    %cst_205 = arith.constant 0.0204081628 : f32
    %186 = vector.broadcast %cst_205 : f32 to vector<1x64xf32>
    %187 = arith.mulf %185, %186 : vector<1x64xf32>
    %c0_206 = arith.constant 0 : index
    %c0_207 = arith.constant 0 : index
    %188 = vector.load %arg5[%c0_206, %c0_207] : memref<64x128xf32, #tpu.memory_space<vmem>>, vector<64x128xf32>
    %cst_208 = arith.constant dense<0.000000e+00> : vector<1x128xf32>
    %189 = tpu.matmul %187, %188, %cst_208 {dimension_numbers = #tpu.dot_dimension_numbers<[1], [0], [0], [1], [0, 0, 1, 1], [], []>} : vector<1x64xf32>, vector<64x128xf32>, vector<1x128xf32> -> vector<1x128xf32>
    %c0_209 = arith.constant 0 : index
    %c0_210 = arith.constant 0 : index
    %190 = vector.load %arg6[%c0_209, %c0_210] : memref<1x128xf32, #tpu.memory_space<vmem>>, vector<1x128xf32>
    %191 = arith.addf %189, %190 : vector<1x128xf32>
    %192 = math.tanh %191 : vector<1x128xf32>
    %c0_211 = arith.constant 0 : index
    %c0_212 = arith.constant 0 : index
    %193 = vector.load %arg7[%c0_211, %c0_212] : memref<128x128xf32, #tpu.memory_space<vmem>>, vector<128x128xf32>
    %cst_213 = arith.constant dense<0.000000e+00> : vector<1x128xf32>
    %194 = tpu.matmul %192, %193, %cst_213 {dimension_numbers = #tpu.dot_dimension_numbers<[1], [0], [0], [1], [0, 0, 1, 1], [], []>} : vector<1x128xf32>, vector<128x128xf32>, vector<1x128xf32> -> vector<1x128xf32>
    %c0_214 = arith.constant 0 : index
    %c0_215 = arith.constant 0 : index
    %195 = vector.load %arg8[%c0_214, %c0_215] : memref<1x128xf32, #tpu.memory_space<vmem>>, vector<1x128xf32>
    %196 = arith.addf %194, %195 : vector<1x128xf32>
    %197 = math.tanh %196 : vector<1x128xf32>
    %198 = vector.extract_strided_slice %197 {offsets = [0, 64], sizes = [1, 64], strides = [1, 1]} : vector<1x128xf32> to vector<1x64xf32>
    %c0_216 = arith.constant 0 : index
    %c0_217 = arith.constant 0 : index
    %199 = vector.load %arg9[%c0_216, %c0_217] : memref<1x64xf32, #tpu.memory_space<vmem>>, vector<1x64xf32>
    %200 = arith.mulf %198, %199 : vector<1x64xf32>
    %cst_218 = arith.constant dense<0.000000e+00> : vector<1xf32>
    %201 = vector.multi_reduction <add>, %200, %cst_218 [1] : vector<1x64xf32> to vector<1xf32>
    %202 = vector.shape_cast %201 : vector<1xf32> to vector<1x1xf32>
    %c0_219 = arith.constant 0 : index
    %c0_220 = arith.constant 0 : index
    %203 = vector.load %arg10[%c0_219, %c0_220] : memref<1x1xf32, #tpu.memory_space<vmem>>, vector<1x1xf32>
    %204 = arith.addf %202, %203 : vector<1x1xf32>
    %205 = tpu.iota {dimensions = array<i32: 1>} : vector<1x128xi32>
    %c64_i32 = arith.constant 64 : i32
    %206 = vector.broadcast %c64_i32 : i32 to vector<1x128xi32>
    %207 = arith.cmpi slt, %205, %206 : vector<1x128xi32>
    %208 = vector.shape_cast %204 : vector<1x1xf32> to vector<1x1xf32>
    %209 = vector.broadcast %208 : vector<1x1xf32> to vector<1x128xf32>
    %210 = arith.select %207, %197, %209 : vector<1x128xi1>, vector<1x128xf32>
    %c0_221 = arith.constant 0 : index
    %c0_222 = arith.constant 0 : index
    %c0_223 = arith.constant 0 : index
    %211 = vector.load %arg11[%c0_221, %c0_222, %c0_223] : memref<1x1x128xf32, #tpu.memory_space<vmem>>, vector<1x1x128xf32>
    %212 = vector.shape_cast %211 : vector<1x1x128xf32> to vector<1x128xf32>
    %213 = vector.shape_cast %210 : vector<1x128xf32> to vector<1x1x128xf32>
    tpu.vector_store %arg11[%c0_221, %c0_222, %c0_223], %213 {strides = array<i32>} : memref<1x1x128xf32, #tpu.memory_space<vmem>>, vector<1x1x128xf32>,
    return
  }
  func.func @transform_0(%arg0: i32) -> (i32, i32, i32, i32) {
    %c0_i32 = arith.constant 0 : i32
    %c0_i32_0 = arith.constant 0 : i32
    %c0_i32_1 = arith.constant 0 : i32
    %c0_i32_2 = arith.constant 0 : i32
    return %arg0, %c0_i32, %c0_i32_0, %c0_i32_1 : i32, i32, i32, i32
  }
  func.func @transform_1(%arg0: i32) -> (i32, i32, i32) {
    %c0_i32 = arith.constant 0 : i32
    %c0_i32_0 = arith.constant 0 : i32
    %c0_i32_1 = arith.constant 0 : i32
    %c0_i32_2 = arith.constant 0 : i32
    return %c0_i32, %c0_i32_0, %c0_i32_1 : i32, i32, i32
  }
  func.func @transform_2(%arg0: i32) -> (i32, i32, i32) {
    %c0_i32 = arith.constant 0 : i32
    %c0_i32_0 = arith.constant 0 : i32
    %c0_i32_1 = arith.constant 0 : i32
    %c0_i32_2 = arith.constant 0 : i32
    return %c0_i32, %c0_i32_0, %c0_i32_1 : i32, i32, i32
  }
  func.func @transform_3(%arg0: i32) -> (i32, i32, i32) {
    %c0_i32 = arith.constant 0 : i32
    %c0_i32_0 = arith.constant 0 : i32
    %c0_i32_1 = arith.constant 0 : i32
    %c0_i32_2 = arith.constant 0 : i32
    return %c0_i32, %c0_i32_0, %c0_i32_1 : i32, i32, i32
  }
  func.func @transform_4(%arg0: i32) -> (i32, i32) {
    %c0_i32 = arith.constant 0 : i32
    %c0_i32_0 = arith.constant 0 : i32
    %c0_i32_1 = arith.constant 0 : i32
    return %c0_i32, %c0_i32_0 : i32, i32
  }
  func.func @transform_5(%arg0: i32) -> (i32, i32) {
    %c0_i32 = arith.constant 0 : i32
    %c0_i32_0 = arith.constant 0 : i32
    %c0_i32_1 = arith.constant 0 : i32
    return %c0_i32, %c0_i32_0 : i32, i32
  }
  func.func @transform_6(%arg0: i32) -> (i32, i32) {
    %c0_i32 = arith.constant 0 : i32
    %c0_i32_0 = arith.constant 0 : i32
    %c0_i32_1 = arith.constant 0 : i32
    return %c0_i32, %c0_i32_0 : i32, i32
  }
  func.func @transform_7(%arg0: i32) -> (i32, i32) {
    %c0_i32 = arith.constant 0 : i32
    %c0_i32_0 = arith.constant 0 : i32
    %c0_i32_1 = arith.constant 0 : i32
    return %c0_i32, %c0_i32_0 : i32, i32
  }
  func.func @transform_8(%arg0: i32) -> (i32, i32) {
    %c0_i32 = arith.constant 0 : i32
    %c0_i32_0 = arith.constant 0 : i32
    %c0_i32_1 = arith.constant 0 : i32
    return %c0_i32, %c0_i32_0 : i32, i32
  }
  func.func @transform_9(%arg0: i32) -> (i32, i32) {
    %c0_i32 = arith.constant 0 : i32
    %c0_i32_0 = arith.constant 0 : i32
    %c0_i32_1 = arith.constant 0 : i32
    return %c0_i32, %c0_i32_0 : i32, i32
  }
  func.func @transform_10(%arg0: i32) -> (i32, i32, i32) {
    %c0_i32 = arith.constant 0 : i32
    %c0_i32_0 = arith.constant 0 : i32
    %c0_i32_1 = arith.constant 0 : i32
    return %arg0, %c0_i32, %c0_i32_0 : i32, i32, i32
  }
}

</mosaic_0001>

<llo_original>
// kernel: model_forward.1
$region0: #{model_forward.1}
  #allocation0 [shape = 'u32[]', space=smem, size = 0x4, offset = 0x4, fixed_abs, tag = 'smem constant byte address 0x4 - core index']
  #allocation1 [shape = 'u32[144,128]{1,0:T(1,128)}', space=vmem, size = 0x12000, scoped, tag = 'internal scratch']
  #allocation2 [shape = 'f32[15,20,64]{2,1,0:T(8,128)}', space=vmem, size = 0x2d000, scoped, tag = 'scratch operand']
  #allocation3 [shape = 'bf16[15,16,320]{2,1,0:T(16,128)(2,1)}', space=vmem, size = 0x2d000, scoped, tag = 'scratch operand']
  #allocation4 [shape = 'f32[12,20,64]{2,1,0:T(8,128)}', space=vmem, size = 0x24000, scoped, tag = 'scratch operand']
  #allocation5 [shape = 'bf16[12,16,320]{2,1,0:T(16,128)(2,1)}', space=vmem, size = 0x24000, scoped, tag = 'scratch operand']
  #allocation6 [shape = 'f32[1,1]{1,0:T(1,128)S(1)}', space=vmem, size = 0x200, scoped, tag = 'scoped memory for model_forward.1']
  %s0 = inlined_call_operand.vmem [shape: bf16[2,18,16,128], index: 0, kind: input, shape index: {}]
  %s1 = inlined_call_operand.vmem [shape: bf16[5,128,64], index: 1, kind: input, shape index: {}]
  %s2 = inlined_call_operand.vmem [shape: bf16[5,320,64], index: 2, kind: input, shape index: {}]
  %s3 = inlined_call_operand.vmem [shape: bf16[5,320,64], index: 3, kind: input, shape index: {}]
  %s4 = inlined_call_operand.vmem [shape: f32[64,128], index: 4, kind: input, shape index: {}]
  %s5 = inlined_call_operand.vmem [shape: f32[1,128], index: 5, kind: input, shape index: {}]
  %s6 = inlined_call_operand.vmem [shape: f32[128,128], index: 6, kind: input, shape index: {}]
  %s7 = inlined_call_operand.vmem [shape: f32[1,128], index: 7, kind: input, shape index: {}]
  %s8 = inlined_call_operand.vmem [shape: f32[1,64], index: 8, kind: input, shape index: {}]
  %s9 = inlined_call_operand.<no memory space> [shape: f32[1,1], index: 9, kind: input, shape index: {}]
  %s10 = inlined_call_operand.vmem [shape: f32[2,1,128], index: 10, kind: output, shape index: {}]
  %s11 = sld [smem:[#allocation0]]
  $region73: #{model_forward.1} parent=0
    _
  %s13 = ssub.s32 1, %s11
  %s14 = scalar_select 0, %s13, %s11
  %v15 = vstv %s9
  %16 = vst [vmem:[#allocation6] sm:$0x1] %v15
  loop: start=0, step=1, limit=4
  $region2: #{model_forward.1} parent=0 // loop_pre_header
    _
  $region3: #{model_forward.1} parent=0 // loop_header
    %s18 = sphi 0, %s22
    %p19 = scmp.ge.s32.totalorder %s18, 4
    %s28 = sphi 0, %s30
    %s31 = sphi 0, %s28
    %s32 = sphi 0, %s31
    %s48 = sphi 0, %s32
    %s52 = sphi 0, %s52
    %s54 = sphi 0, %s52
    %s55 = sphi 0, %s54
    %s69 = sphi 0, %s55
    %s73 = sphi 0, %s73
    %s75 = sphi 0, %s73
    %s76 = sphi 0, %s75
    %s90 = sphi 0, %s76
    %s94 = sphi 0, %s94
    %s96 = sphi 0, %s94
    %s97 = sphi 0, %s96
    %s111 = sphi 0, %s97
    %s115 = sphi 0, %s115
    %s117 = sphi 0, %s115
    %s118 = sphi 0, %s117
    %s132 = sphi 0, %s118
    %s136 = sphi 0, %s136
    %s138 = sphi 0, %s136
    %s139 = sphi 0, %s138
    %s153 = sphi 0, %s139
    %s157 = sphi 0, %s157
    %s159 = sphi 0, %s157
    %s160 = sphi 0, %s159
    %s174 = sphi 0, %s160
    %s178 = sphi 0, %s178
    %s180 = sphi 0, %s178
    %s181 = sphi 0, %s180
    %s195 = sphi 0, %s181
    %s199 = sphi 0, %s199
    %s201 = sphi 0, %s199
    %s202 = sphi 0, %s201
    %s216 = sphi 0, %s202
    %s220 = sphi 0, %s220
    %s222 = sphi 0, %s220
    %s223 = sphi 0, %s222
    %s237 = sphi 0, %s223
    %s243 = sphi 0, %s245
    %s246 = sphi 0, %s243
    %s247 = sphi 0, %s246
    %s263 = sphi 0, %s247
  $region4: #{model_forward.1} parent=0 // loop_header_branch
    %21 = sbr.rel (%p19) target = $region8
  $region5: #{model_forward.1} parent=0 // loop_body
    %s23 = ssub.s32 %s18, 1
    %s24 = ssub.s32 %s18, 2
    %s25 = sadd.s32 %s18, 1
    %s26 = ssub.s32 %s18, %s25
    %p27 = scmp.eq.s32.totalorder %s26, 0
    %s29 = sadd.s32 %s28, 1
    %s30 = scalar_select %p27, %s28, %s29
    %p33 = pneg %p27
    %p34 = scmp.eq.s32.totalorder %s18, 1
    %p35 = por %p33, %p34
    %p36 = scmp.ne.s32.totalorder %s28, %s31
    %p37 = scmp.eq.s32.totalorder %s18, 0
    %p38 = por %p36, %p37
    %p39 = scmp.ne.s32.totalorder %s28, %s31
    %p40 = scmp.eq.s32.totalorder %s23, 1
    %p41 = por %p39, %p40
    %p42 = scmp.ne.s32.totalorder %s31, %s32
    %p43 = scmp.eq.s32.totalorder %s23, 0
    %p44 = por %p42, %p43
    %p45 = scmp.ne.s32.totalorder %s31, %s32
    %p46 = scmp.eq.s32.totalorder %s24, 1
    %p47 = por %p45, %p46
    %p49 = scmp.ne.s32.totalorder %s32, %s48
    %p50 = scmp.eq.s32.totalorder %s24, 0
    %p51 = por %p49, %p50
    %s53 = sadd.s32 %s52, 1
    %p56 = scmp.eq.s32.totalorder %s18, 1
    %p57 = scmp.ne.s32.totalorder %s52, %s54
    %p58 = scmp.eq.s32.totalorder %s18, 0
    %p59 = por %p57, %p58
    %p60 = scmp.ne.s32.totalorder %s52, %s54
    %p61 = scmp.eq.s32.totalorder %s23, 1
    %p62 = por %p60, %p61
    %p63 = scmp.ne.s32.totalorder %s54, %s55
    %p64 = scmp.eq.s32.totalorder %s23, 0
    %p65 = por %p63, %p64
    %p66 = scmp.ne.s32.totalorder %s54, %s55
    %p67 = scmp.eq.s32.totalorder %s24, 1
    %p68 = por %p66, %p67
    %p70 = scmp.ne.s32.totalorder %s55, %s69
    %p71 = scmp.eq.s32.totalorder %s24, 0
    %p72 = por %p70, %p71
    %s74 = sadd.s32 %s73, 1
    %p77 = scmp.eq.s32.totalorder %s18, 1
    %p78 = scmp.ne.s32.totalorder %s73, %s75
    %p79 = scmp.eq.s32.totalorder %s18, 0
    %p80 = por %p78, %p79
    %p81 = scmp.ne.s32.totalorder %s73, %s75
    %p82 = scmp.eq.s32.totalorder %s23, 1
    %p83 = por %p81, %p82
    %p84 = scmp.ne.s32.totalorder %s75, %s76
    %p85 = scmp.eq.s32.totalorder %s23, 0
    %p86 = por %p84, %p85
    %p87 = scmp.ne.s32.totalorder %s75, %s76
    %p88 = scmp.eq.s32.totalorder %s24, 1
    %p89 = por %p87, %p88
    %p91 = scmp.ne.s32.totalorder %s76, %s90
    %p92 = scmp.eq.s32.totalorder %s24, 0
    %p93 = por %p91, %p92
    %s95 = sadd.s32 %s94, 1
    %p98 = scmp.eq.s32.totalorder %s18, 1
    %p99 = scmp.ne.s32.totalorder %s94, %s96
    %p100 = scmp.eq.s32.totalorder %s18, 0
    %p101 = por %p99, %p100
    %p102 = scmp.ne.s32.totalorder %s94, %s96
    %p103 = scmp.eq.s32.totalorder %s23, 1
    %p104 = por %p102, %p103
    %p105 = scmp.ne.s32.totalorder %s96, %s97
    %p106 = scmp.eq.s32.totalorder %s23, 0
    %p107 = por %p105, %p106
    %p108 = scmp.ne.s32.totalorder %s96, %s97
    %p109 = scmp.eq.s32.totalorder %s24, 1
    %p110 = por %p108, %p109
    %p112 = scmp.ne.s32.totalorder %s97, %s111
    %p113 = scmp.eq.s32.totalorder %s24, 0
    %p114 = por %p112, %p113
    %s116 = sadd.s32 %s115, 1
    %p119 = scmp.eq.s32.totalorder %s18, 1
    %p120 = scmp.ne.s32.totalorder %s115, %s117
    %p121 = scmp.eq.s32.totalorder %s18, 0
    %p122 = por %p120, %p121
    %p123 = scmp.ne.s32.totalorder %s115, %s117
    %p124 = scmp.eq.s32.totalorder %s23, 1
    %p125 = por %p123, %p124
    %p126 = scmp.ne.s32.totalorder %s117, %s118
    %p127 = scmp.eq.s32.totalorder %s23, 0
    %p128 = por %p126, %p127
    %p129 = scmp.ne.s32.totalorder %s117, %s118
    %p130 = scmp.eq.s32.totalorder %s24, 1
    %p131 = por %p129, %p130
    %p133 = scmp.ne.s32.totalorder %s118, %s132
    %p134 = scmp.eq.s32.totalorder %s24, 0
    %p135 = por %p133, %p134
    %s137 = sadd.s32 %s136, 1
    %p140 = scmp.eq.s32.totalorder %s18, 1
    %p141 = scmp.ne.s32.totalorder %s136, %s138
    %p142 = scmp.eq.s32.totalorder %s18, 0
    %p143 = por %p141, %p142
    %p144 = scmp.ne.s32.totalorder %s136, %s138
    %p145 = scmp.eq.s32.totalorder %s23, 1
    %p146 = por %p144, %p145
    %p147 = scmp.ne.s32.totalorder %s138, %s139
    %p148 = scmp.eq.s32.totalorder %s23, 0
    %p149 = por %p147, %p148
    %p150 = scmp.ne.s32.totalorder %s138, %s139
    %p151 = scmp.eq.s32.totalorder %s24, 1
    %p152 = por %p150, %p151
    %p154 = scmp.ne.s32.totalorder %s139, %s153
    %p155 = scmp.eq.s32.totalorder %s24, 0
    %p156 = por %p154, %p155
    %s158 = sadd.s32 %s157, 1
    %p161 = scmp.eq.s32.totalorder %s18, 1
    %p162 = scmp.ne.s32.totalorder %s157, %s159
    %p163 = scmp.eq.s32.totalorder %s18, 0
    %p164 = por %p162, %p163
    %p165 = scmp.ne.s32.totalorder %s157, %s159
    %p166 = scmp.eq.s32.totalorder %s23, 1
    %p167 = por %p165, %p166
    %p168 = scmp.ne.s32.totalorder %s159, %s160
    %p169 = scmp.eq.s32.totalorder %s23, 0
    %p170 = por %p168, %p169
    %p171 = scmp.ne.s32.totalorder %s159, %s160
    %p172 = scmp.eq.s32.totalorder %s24, 1
    %p173 = por %p171, %p172
    %p175 = scmp.ne.s32.totalorder %s160, %s174
    %p176 = scmp.eq.s32.totalorder %s24, 0
    %p177 = por %p175, %p176
    %s179 = sadd.s32 %s178, 1
    %p182 = scmp.eq.s32.totalorder %s18, 1
    %p183 = scmp.ne.s32.totalorder %s178, %s180
    %p184 = scmp.eq.s32.totalorder %s18, 0
    %p185 = por %p183, %p184
    %p186 = scmp.ne.s32.totalorder %s178, %s180
    %p187 = scmp.eq.s32.totalorder %s23, 1
    %p188 = por %p186, %p187
    %p189 = scmp.ne.s32.totalorder %s180, %s181
    %p190 = scmp.eq.s32.totalorder %s23, 0
    %p191 = por %p189, %p190
    %p192 = scmp.ne.s32.totalorder %s180, %s181
    %p193 = scmp.eq.s32.totalorder %s24, 1
    %p194 = por %p192, %p193
    %p196 = scmp.ne.s32.totalorder %s181, %s195
    %p197 = scmp.eq.s32.totalorder %s24, 0
    %p198 = por %p196, %p197
    %s200 = sadd.s32 %s199, 1
    %p203 = scmp.eq.s32.totalorder %s18, 1
    %p204 = scmp.ne.s32.totalorder %s199, %s201
    %p205 = scmp.eq.s32.totalorder %s18, 0
    %p206 = por %p204, %p205
    %p207 = scmp.ne.s32.totalorder %s199, %s201
    %p208 = scmp.eq.s32.totalorder %s23, 1
    %p209 = por %p207, %p208
    %p210 = scmp.ne.s32.totalorder %s201, %s202
    %p211 = scmp.eq.s32.totalorder %s23, 0
    %p212 = por %p210, %p211
    %p213 = scmp.ne.s32.totalorder %s201, %s202
    %p214 = scmp.eq.s32.totalorder %s24, 1
    %p215 = por %p213, %p214
    %p217 = scmp.ne.s32.totalorder %s202, %s216
    %p218 = scmp.eq.s32.totalorder %s24, 0
    %p219 = por %p217, %p218
    %s221 = sadd.s32 %s220, 1
    %p224 = scmp.eq.s32.totalorder %s18, 1
    %p225 = scmp.ne.s32.totalorder %s220, %s222
    %p226 = scmp.eq.s32.totalorder %s18, 0
    %p227 = por %p225, %p226
    %p228 = scmp.ne.s32.totalorder %s220, %s222
    %p229 = scmp.eq.s32.totalorder %s23, 1
    %p230 = por %p228, %p229
    %p231 = scmp.ne.s32.totalorder %s222, %s223
    %p232 = scmp.eq.s32.totalorder %s23, 0
    %p233 = por %p231, %p232
    %p234 = scmp.ne.s32.totalorder %s222, %s223
    %p235 = scmp.eq.s32.totalorder %s24, 1
    %p236 = por %p234, %p235
    %p238 = scmp.ne.s32.totalorder %s223, %s237
    %p239 = scmp.eq.s32.totalorder %s24, 0
    %p240 = por %p238, %p239
    %s241 = ssub.s32 %s18, %s25
    %p242 = scmp.eq.s32.totalorder %s241, 0
    %s244 = sadd.s32 %s243, 1
    %s245 = scalar_select %p242, %s243, %s244
    %p248 = pneg %p242
    %p249 = scmp.eq.s32.totalorder %s18, 1
    %p250 = por %p248, %p249
    %p251 = scmp.ne.s32.totalorder %s243, %s246
    %p252 = scmp.eq.s32.totalorder %s18, 0
    %p253 = por %p251, %p252
    %p254 = scmp.ne.s32.totalorder %s243, %s246
    %p255 = scmp.eq.s32.totalorder %s23, 1
    %p256 = por %p254, %p255
    %p257 = scmp.ne.s32.totalorder %s246, %s247
    %p258 = scmp.eq.s32.totalorder %s23, 0
    %p259 = por %p257, %p258
    %p260 = scmp.ne.s32.totalorder %s246, %s247
    %p261 = scmp.eq.s32.totalorder %s24, 1
    %p262 = por %p260, %p261
    %p264 = scmp.ne.s32.totalorder %s247, %s263
    %p265 = scmp.eq.s32.totalorder %s24, 0
    %p266 = por %p264, %p265
    %p267 = scmp.le.s32.totalorder 1, %s18
    %p268 = scmp.lt.s32.totalorder %s18, 3
    %p269 = pnand %p267, %p268
    %p270 = pneg %p269
    // Predicated region
    $region9: #{model_forward.1} parent=5 // pred_check
      _
    $region10: #{model_forward.1} parent=5 // pred_check_branch
      %272 = sbr.rel (%p269) target = $region12
    $region11: #{model_forward.1} parent=5 // pred_region
      %s273 = ssub.s32 %s18, 1
      // Predicated region
      $region13: #{model_forward.1} parent=11 // pred_check
        %p274 = pneg %p65
      $region14: #{model_forward.1} parent=11 // pred_check_branch
        %276 = sbr.rel (%p274) target = $region16
      $region15: #{model_forward.1} parent=11 // pred_region
        _
      $region16: #{model_forward.1} parent=11 // pred_fallthru
        _
      // Predicated region
      $region17: #{model_forward.1} parent=11 // pred_check
        %p277 = pneg %p86
      $region18: #{model_forward.1} parent=11 // pred_check_branch
        %279 = sbr.rel (%p277) target = $region20
      $region19: #{model_forward.1} parent=11 // pred_region
        _
      $region20: #{model_forward.1} parent=11 // pred_fallthru
        _
      // Predicated region
      $region21: #{model_forward.1} parent=11 // pred_check
        %p280 = pneg %p107
      $region22: #{model_forward.1} parent=11 // pred_check_branch
        %282 = sbr.rel (%p280) target = $region24
      $region23: #{model_forward.1} parent=11 // pred_region
        _
      $region24: #{model_forward.1} parent=11 // pred_fallthru
        _
      // Predicated region
      $region25: #{model_forward.1} parent=11 // pred_check
        %p283 = pneg %p128
      $region26: #{model_forward.1} parent=11 // pred_check_branch
        %285 = sbr.rel (%p283) target = $region28
      $region27: #{model_forward.1} parent=11 // pred_region
        _
      $region28: #{model_forward.1} parent=11 // pred_fallthru
        _
      // Predicated region
      $region29: #{model_forward.1} parent=11 // pred_check
        %p286 = pneg %p149
      $region30: #{model_forward.1} parent=11 // pred_check_branch
        %288 = sbr.rel (%p286) target = $region32
      $region31: #{model_forward.1} parent=11 // pred_region
        _
      $region32: #{model_forward.1} parent=11 // pred_fallthru
        _
      // Predicated region
      $region33: #{model_forward.1} parent=11 // pred_check
        %p289 = pneg %p170
      $region34: #{model_forward.1} parent=11 // pred_check_branch
        %291 = sbr.rel (%p289) target = $region36
      $region35: #{model_forward.1} parent=11 // pred_region
        _
      $region36: #{model_forward.1} parent=11 // pred_fallthru
        _
      // Predicated region
      $region37: #{model_forward.1} parent=11 // pred_check
        %p292 = pneg %p191
      $region38: #{model_forward.1} parent=11 // pred_check_branch
        %294 = sbr.rel (%p292) target = $region40
      $region39: #{model_forward.1} parent=11 // pred_region
        _
      $region40: #{model_forward.1} parent=11 // pred_fallthru
        _
      // Predicated region
      $region41: #{model_forward.1} parent=11 // pred_check
        %p295 = pneg %p212
      $region42: #{model_forward.1} parent=11 // pred_check_branch
        %297 = sbr.rel (%p295) target = $region44
      $region43: #{model_forward.1} parent=11 // pred_region
        _
      $region44: #{model_forward.1} parent=11 // pred_fallthru
        _
      // Predicated region
      $region45: #{model_forward.1} parent=11 // pred_check
        %p298 = pneg %p233
      $region46: #{model_forward.1} parent=11 // pred_check_branch
        %300 = sbr.rel (%p298) target = $region48
      $region47: #{model_forward.1} parent=11 // pred_region
        _
      $region48: #{model_forward.1} parent=11 // pred_fallthru
        _
    $region12: #{model_forward.1} parent=5 // pred_fallthru
      _
    %p301 = scmp.lt.s32.totalorder %s18, 2
    // Predicated region
    $region49: #{model_forward.1} parent=5 // pred_check
      %p302 = pneg %p301
    $region50: #{model_forward.1} parent=5 // pred_check_branch
      %304 = sbr.rel (%p302) target = $region52
    $region51: #{model_forward.1} parent=5 // pred_region
      // Predicated region
      $region53: #{model_forward.1} parent=51 // pred_check
        %p305 = pneg %p38
      $region54: #{model_forward.1} parent=51 // pred_check_branch
        %307 = sbr.rel (%p305) target = $region56
      $region55: #{model_forward.1} parent=51 // pred_region
        %p308 = scmp.lt.s32.totalorder %s18, 1
        %s309 = scalar_select %p308, %s18, 1
        %s310 = smul.addr %s309, 36
        %s311 = smul.addr %s310, 4
        %s312 = scalar_lea.vmem %s0, %s311
      $region56: #{model_forward.1} parent=51 // pred_fallthru
        _
    $region52: #{model_forward.1} parent=5 // pred_fallthru
      _
    %p313 = scmp.le.s32.totalorder 1, %s18
    %p314 = scmp.lt.s32.totalorder %s18, 3
    %p315 = pnand %p313, %p314
    %p316 = pneg %p315
    // Predicated region
    $region57: #{model_forward.1} parent=5 // pred_check
      _
    $region58: #{model_forward.1} parent=5 // pred_check_branch
      %318 = sbr.rel (%p315) target = $region60
    $region59: #{model_forward.1} parent=5 // pred_region
      %s319 = ssub.s32 %s18, 1
      %p320 = scmp.lt.s32.totalorder %s23, 1
      %s321 = scalar_select %p320, %s23, 1
      %s322 = smul.addr %s321, 36
      %s323 = smul.addr %s322, 4
      %s324 = scalar_lea.vmem %s0, %s323
      %p325 = pneg %p44
      %p326 = pneg %p41
      %p327 = pneg %p65
      %p328 = pneg %p62
      %p329 = pneg %p86
      %p330 = pneg %p83
      %p331 = pneg %p107
      %p332 = pneg %p104
      %p333 = pneg %p128
      %p334 = pneg %p125
      %p335 = pneg %p149
      %p336 = pneg %p146
      %p337 = pneg %p170
      %p338 = pneg %p167
      %p339 = pneg %p191
      %p340 = pneg %p188
      %p341 = pneg %p212
      %p342 = pneg %p209
      %p343 = pneg %p233
      %p344 = pneg %p230
      %p345 = pneg %p259
      %p346 = pneg %p256
      %p347 = scmp.lt.s32.totalorder %s23, 1
      %s348 = scalar_select %p347, %s23, 1
      %s349 = scalar_lea.vmem %s10, %s348
      %p350 = scmp.lt.s32.totalorder %s23, 1
      %s351 = scalar_select %p350, %s23, 1
      %s352 = smul.addr %s351, 36
      %s353 = smul.addr %s352, 4
      %s354 = scalar_lea.vmem %s0, %s353
      %p355 = scmp.lt.s32.totalorder %s23, 1
      %s356 = scalar_select %p355, %s23, 1
      %s357 = scalar_lea.vmem %s10, %s356
      %v359 = vld [vmem:[%s354] sm:$0xf]
      %v360 = vld [vmem:[%s354 + $0x4] sm:$0xf]
      %v361 = vld [vmem:[%s354 + $0x8] sm:$0xf]
      %v362 = vld [vmem:[%s354 + $0xc] sm:$0xf]
      %v363 = vld [vmem:[%s354 + $0x10] sm:$0xf]
      %v364 = vld [vmem:[%s354 + $0x14] sm:$0xf]
      %v365 = vld [vmem:[%s354 + $0x18] sm:$0xf]
      %v366 = vld [vmem:[%s354 + $0x1c] sm:$0xf]
      %v367 = vld [vmem:[%s354 + $0x20] sm:$0xf]
      %v368 = vld [vmem:[%s354 + $0x24] sm:$0xf]
      %v369 = vld [vmem:[%s354 + $0x28] sm:$0xf]
      %v370 = vld [vmem:[%s354 + $0x2c] sm:$0xf]
      %v371 = vld [vmem:[%s354 + $0x30] sm:$0xf]
      %v372 = vld [vmem:[%s354 + $0x34] sm:$0xf]
      %v373 = vld [vmem:[%s354 + $0x38] sm:$0xf]
      %v374 = vld [vmem:[%s354 + $0x3c] sm:$0xf]
      %v375 = vld [vmem:[%s354 + $0x40] sm:$0xf]
      %v376 = vld [vmem:[%s354 + $0x44] sm:$0xf]
      %v377 = vld [vmem:[%s354 + $0x48] sm:$0xf]
      %v378 = vld [vmem:[%s354 + $0x4c] sm:$0xf]
      %v379 = vld [vmem:[%s354 + $0x50] sm:$0xf]
      %v380 = vld [vmem:[%s354 + $0x54] sm:$0xf]
      %v381 = vld [vmem:[%s354 + $0x58] sm:$0xf]
      %v382 = vld [vmem:[%s354 + $0x5c] sm:$0xf]
      %v383 = vld [vmem:[%s354 + $0x60] sm:$0xf]
      %v384 = vld [vmem:[%s354 + $0x64] sm:$0xf]
      %v385 = vld [vmem:[%s354 + $0x68] sm:$0xf]
      %v386 = vld [vmem:[%s354 + $0x6c] sm:$0xf]
      %v387 = vld [vmem:[%s1] sm:$0xf]
      %v388 = vld [vmem:[%s1 + $0x4] sm:$0xf]
      %v389 = vld [vmem:[%s1 + $0x8] sm:$0xf]
      %v390 = vld [vmem:[%s1 + $0xc] sm:$0xf]
      %v391 = vld [vmem:[%s1 + $0x10] sm:$0xf]
      %v392 = vld [vmem:[%s1 + $0x14] sm:$0xf]
      %v393 = vld [vmem:[%s1 + $0x18] sm:$0xf]
      %v394 = vld [vmem:[%s1 + $0x1c] sm:$0xf]
      %v395 = vld [vmem:[%s1 + $0x20] sm:$0xf]
      %v396 = vld [vmem:[%s1 + $0x24] sm:$0xf]
      %v397 = vld [vmem:[%s1 + $0x28] sm:$0xf]
      %v398 = vld [vmem:[%s1 + $0x2c] sm:$0xf]
      %v399 = vld [vmem:[%s1 + $0x30] sm:$0xf]
      %v400 = vld [vmem:[%s1 + $0x34] sm:$0xf]
      %v401 = vld [vmem:[%s1 + $0x38] sm:$0xf]
      %v402 = vld [vmem:[%s1 + $0x3c] sm:$0xf]
      %s403 = scalar_lea.vmem %s354, 8
      %v404 = vld [vmem:[%s403] sm:$0xf]
      %v405 = vld [vmem:[%s403 + $0x4] sm:$0xf]
      %v406 = vld [vmem:[%s403 + $0x8] sm:$0xf]
      %v407 = vld [vmem:[%s403 + $0xc] sm:$0xf]
      %v408 = vld [vmem:[%s403 + $0x10] sm:$0xf]
      %v409 = vld [vmem:[%s403 + $0x14] sm:$0xf]
      %v410 = vld [vmem:[%s403 + $0x18] sm:$0xf]
      %v411 = vld [vmem:[%s403 + $0x1c] sm:$0xf]
      %v412 = vld [vmem:[%s403 + $0x20] sm:$0xf]
      %v413 = vld [vmem:[%s403 + $0x24] sm:$0xf]
      %v414 = vld [vmem:[%s403 + $0x28] sm:$0xf]
      %v415 = vld [vmem:[%s403 + $0x2c] sm:$0xf]
      %v416 = vld [vmem:[%s403 + $0x30] sm:$0xf]
      %v417 = vld [vmem:[%s403 + $0x34] sm:$0xf]
      %v418 = vld [vmem:[%s403 + $0x38] sm:$0xf]
      %v419 = vld [vmem:[%s403 + $0x3c] sm:$0xf]
      %v420 = vld [vmem:[%s403 + $0x40] sm:$0xf]
      %v421 = vld [vmem:[%s403 + $0x44] sm:$0xf]
      %v422 = vld [vmem:[%s403 + $0x48] sm:$0xf]
      %v423 = vld [vmem:[%s403 + $0x4c] sm:$0xf]
      %v424 = vld [vmem:[%s403 + $0x50] sm:$0xf]
      %v425 = vld [vmem:[%s403 + $0x54] sm:$0xf]
      %v426 = vld [vmem:[%s403 + $0x58] sm:$0xf]
      %v427 = vld [vmem:[%s403 + $0x5c] sm:$0xf]
      %v428 = vld [vmem:[%s403 + $0x60] sm:$0xf]
      %v429 = vld [vmem:[%s403 + $0x64] sm:$0xf]
      %v430 = vld [vmem:[%s403 + $0x68] sm:$0xf]
      %v431 = vld [vmem:[%s403 + $0x6c] sm:$0xf]
      %s432 = scalar_lea.vmem %s1, 64
      %v433 = vld [vmem:[%s432] sm:$0xf]
      %v434 = vld [vmem:[%s432 + $0x4] sm:$0xf]
      %v435 = vld [vmem:[%s432 + $0x8] sm:$0xf]
      %v436 = vld [vmem:[%s432 + $0xc] sm:$0xf]
      %v437 = vld [vmem:[%s432 + $0x10] sm:$0xf]
      %v438 = vld [vmem:[%s432 + $0x14] sm:$0xf]
      %v439 = vld [vmem:[%s432 + $0x18] sm:$0xf]
      %v440 = vld [vmem:[%s432 + $0x1c] sm:$0xf]
      %v441 = vld [vmem:[%s432 + $0x20] sm:$0xf]
      %v442 = vld [vmem:[%s432 + $0x24] sm:$0xf]
      %v443 = vld [vmem:[%s432 + $0x28] sm:$0xf]
      %v444 = vld [vmem:[%s432 + $0x2c] sm:$0xf]
      %v445 = vld [vmem:[%s432 + $0x30] sm:$0xf]
      %v446 = vld [vmem:[%s432 + $0x34] sm:$0xf]
      %v447 = vld [vmem:[%s432 + $0x38] sm:$0xf]
      %v448 = vld [vmem:[%s432 + $0x3c] sm:$0xf]
      %v477 = vunpack.c.l.b16 %v404
      %v478 = vunpack.c.l.b16 %v405
      %v479 = vunpack.c.l.b16 %v406
      %v480 = vunpack.c.l.b16 %v407
      %v481 = vunpack.c.l.b16 %v408
      %v482 = vunpack.c.l.b16 %v409
      %v483 = vunpack.c.l.b16 %v410
      %v484 = vunpack.c.l.b16 %v411
      %v485 = vunpack.c.l.b16 %v412
      %v486 = vunpack.c.l.b16 %v413
      %v487 = vunpack.c.l.b16 %v414
      %v488 = vunpack.c.l.b16 %v415
      %v489 = vunpack.c.l.b16 %v416
      %v490 = vunpack.c.l.b16 %v417
      %v491 = vunpack.c.l.b16 %v418
      %v492 = vunpack.c.l.b16 %v419
      %v493 = vunpack.c.l.b16 %v420
      %v494 = vunpack.c.l.b16 %v421
      %v495 = vunpack.c.l.b16 %v422
      %v496 = vunpack.c.l.b16 %v423
      %v497 = vunpack.c.l.b16 %v424
      %v498 = vunpack.c.l.b16 %v425
      %v499 = vunpack.c.l.b16 %v426
      %v500 = vunpack.c.l.b16 %v427
      %v501 = vunpack.c.l.b16 %v428
      %v502 = vunpack.c.l.b16 %v429
      %v503 = vunpack.c.l.b16 %v430
      %v504 = vunpack.c.l.b16 %v431
      %v505 = vpack.c.b16 %v478, %v477
      %v506 = vpack.c.b16 %v480, %v479
      %v507 = vpack.c.b16 %v482, %v481
      %v508 = vpack.c.b16 %v484, %v483
      %v509 = vpack.c.b16 %v486, %v485
      %v510 = vpack.c.b16 %v488, %v487
      %v511 = vpack.c.b16 %v490, %v489
      %v512 = vpack.c.b16 %v492, %v491
      %v513 = vpack.c.b16 %v494, %v493
      %v514 = vpack.c.b16 %v496, %v495
      %v515 = vpack.c.b16 %v498, %v497
      %v516 = vpack.c.b16 %v500, %v499
      %v517 = vpack.c.b16 %v502, %v501
      %v518 = vpack.c.b16 %v504, %v503
      %v549 = vunpack.c.l.b16 %v433
      %v550 = vunpack.c.l.b16 %v434
      %v551 = vunpack.c.l.b16 %v435
      %v552 = vunpack.c.l.b16 %v436
      %v553 = vunpack.c.l.b16 %v437
      %v554 = vunpack.c.l.b16 %v438
      %v555 = vunpack.c.l.b16 %v439
      %v556 = vunpack.c.l.b16 %v440
      %v557 = vunpack.c.l.b16 %v441
      %v558 = vunpack.c.l.b16 %v442
      %v559 = vunpack.c.l.b16 %v443
      %v560 = vunpack.c.l.b16 %v444
      %v561 = vunpack.c.l.b16 %v445
      %v562 = vunpack.c.l.b16 %v446
      %v563 = vunpack.c.l.b16 %v447
      %v564 = vunpack.c.l.b16 %v448
      %v565 = vpack.c.b16 %v550, %v549
      %v566 = vpack.c.b16 %v552, %v551
      %v567 = vpack.c.b16 %v554, %v553
      %v568 = vpack.c.b16 %v556, %v555
      %v569 = vpack.c.b16 %v558, %v557
      %v570 = vpack.c.b16 %v560, %v559
      %v571 = vpack.c.b16 %v562, %v561
      %v572 = vpack.c.b16 %v564, %v563
      %581 = vmatprep.subr.bf16.mxu0 0
      %582 = vmatpush1.bf16.msra.mxu0 %v565
      %583 = vmatprep.subr.bf16.mxu0 0
      %584 = vmatpush1.bf16.msra.mxu0 %v566
      %585 = vmatprep.subr.bf16.mxu0 0
      %586 = vmatpush1.bf16.msra.mxu0 %v567
      %587 = vmatprep.subr.bf16.mxu0 0
      %588 = vmatpush1.bf16.msra.mxu0 %v568
      %589 = vmatprep.subr.bf16.mxu0 0
      %590 = vmatpush1.bf16.msra.mxu0 %v569
      %591 = vmatprep.subr.bf16.mxu0 0
      %592 = vmatpush1.bf16.msra.mxu0 %v570
      %593 = vmatprep.subr.bf16.mxu0 0
      %594 = vmatpush1.bf16.msra.mxu0 %v571
      %595 = vmatprep.subr.bf16.mxu0 0
      %596 = vmatpush1.bf16.msra.mxu0 %v572
      %597 = vmatprep.subr.bf16.mxu0 0
      %598 = vmatpush1.bf16.msra.mxu0 0
      %599 = vmatprep.subr.bf16.mxu0 0
      %600 = vmatpush1.bf16.msra.mxu0 0
      %601 = vmatprep.subr.bf16.mxu0 0
      %602 = vmatpush1.bf16.msra.mxu0 0
      %603 = vmatprep.subr.bf16.mxu0 0
      %604 = vmatpush1.bf16.msra.mxu0 0
      %605 = vmatprep.subr.bf16.mxu0 0
      %606 = vmatpush1.bf16.msra.mxu0 0
      %607 = vmatprep.subr.bf16.mxu0 0
      %608 = vmatpush1.bf16.msra.mxu0 0
      %609 = vmatprep.subr.bf16.mxu0 0
      %610 = vmatpush1.bf16.msra.mxu0 0
      %611 = vmatprep.subr.bf16.mxu0 0
      %612 = vmatpush1.bf16.msra.mxu0 0
      %613 = vmatprep.mubr.bf16.mxu0 0
      %614 = vmatmul.mubr.bf16.gmra.mrb[0].mxu0 %v505
      %v615 = vpop.f32.mrb[0].mxu0
      %v616 = vadd.f32 0.0, %v615
      %v617 = vpop.f32.mrb[0].mxu0
      %v618 = vpop.f32.mrb[0].mxu0
      %v619 = vadd.f32 0.0, %v618
      %v620 = vpop.f32.mrb[0].mxu0
      %621 = vmatprep.mubr.bf16.mxu0 0
      %622 = vmatmul.mubr.bf16.gmra.mrb[0].mxu0 %v506
      %v623 = vpop.f32.mrb[0].mxu0
      %v624 = vadd.f32 0.0, %v623
      %v625 = vpop.f32.mrb[0].mxu0
      %v626 = vpop.f32.mrb[0].mxu0
      %v627 = vadd.f32 0.0, %v626
      %v628 = vpop.f32.mrb[0].mxu0
      %629 = vmatprep.mubr.bf16.mxu0 0
      %630 = vmatmul.mubr.bf16.gmra.mrb[0].mxu0 %v507
      %v631 = vpop.f32.mrb[0].mxu0
      %v632 = vadd.f32 0.0, %v631
      %v633 = vpop.f32.mrb[0].mxu0
      %v634 = vpop.f32.mrb[0].mxu0
      %v635 = vadd.f32 0.0, %v634
      %v636 = vpop.f32.mrb[0].mxu0
      %637 = vmatprep.mubr.bf16.mxu0 0
      %638 = vmatmul.mubr.bf16.gmra.mrb[0].mxu0 %v508
      %v639 = vpop.f32.mrb[0].mxu0
      %v640 = vadd.f32 0.0, %v639
      %v641 = vpop.f32.mrb[0].mxu0
      %v642 = vpop.f32.mrb[0].mxu0
      %v643 = vadd.f32 0.0, %v642
      %v644 = vpop.f32.mrb[0].mxu0
      %645 = vmatprep.mubr.bf16.mxu0 0
      %646 = vmatmul.mubr.bf16.gmra.mrb[0].mxu0 %v509
      %v647 = vpop.f32.mrb[0].mxu0
      %v648 = vadd.f32 0.0, %v647
      %v649 = vpop.f32.mrb[0].mxu0
      %v650 = vpop.f32.mrb[0].mxu0
      %v651 = vadd.f32 0.0, %v650
      %v652 = vpop.f32.mrb[0].mxu0
      %653 = vmatprep.mubr.bf16.mxu0 0
      %654 = vmatmul.mubr.bf16.gmra.mrb[0].mxu0 %v510
      %v655 = vpop.f32.mrb[0].mxu0
      %v656 = vadd.f32 0.0, %v655
      %v657 = vpop.f32.mrb[0].mxu0
      %v658 = vpop.f32.mrb[0].mxu0
      %v659 = vadd.f32 0.0, %v658
      %v660 = vpop.f32.mrb[0].mxu0
      %661 = vmatprep.mubr.bf16.mxu0 0
      %662 = vmatmul.mubr.bf16.gmra.mrb[0].mxu0 %v511
      %v663 = vpop.f32.mrb[0].mxu0
      %v664 = vadd.f32 0.0, %v663
      %v665 = vpop.f32.mrb[0].mxu0
      %v666 = vpop.f32.mrb[0].mxu0
      %v667 = vadd.f32 0.0, %v666
      %v668 = vpop.f32.mrb[0].mxu0
      %669 = vmatprep.mubr.bf16.mxu0 0
      %670 = vmatmul.mubr.bf16.gmra.mrb[0].mxu0 %v512
      %v671 = vpop.f32.mrb[0].mxu0
      %v672 = vadd.f32 0.0, %v671
      %v673 = vpop.f32.mrb[0].mxu0
      %v674 = vpop.f32.mrb[0].mxu0
      %v675 = vadd.f32 0.0, %v674
      %v676 = vpop.f32.mrb[0].mxu0
      %677 = vmatprep.mubr.bf16.mxu0 0
      %678 = vmatmul.mubr.bf16.gmra.mrb[0].mxu0 %v513
      %v679 = vpop.f32.mrb[0].mxu0
      %v680 = vadd.f32 0.0, %v679
      %v681 = vpop.f32.mrb[0].mxu0
      %v682 = vpop.f32.mrb[0].mxu0
      %v683 = vadd.f32 0.0, %v682
      %v684 = vpop.f32.mrb[0].mxu0
      %685 = vmatprep.mubr.bf16.mxu0 0
      %686 = vmatmul.mubr.bf16.gmra.mrb[0].mxu0 %v514
      %v687 = vpop.f32.mrb[0].mxu0
      %v688 = vadd.f32 0.0, %v687
      %v689 = vpop.f32.mrb[0].mxu0
      %v690 = vpop.f32.mrb[0].mxu0
      %v691 = vadd.f32 0.0, %v690
      %v692 = vpop.f32.mrb[0].mxu0
      %693 = vmatprep.mubr.bf16.mxu0 0
      %694 = vmatmul.mubr.bf16.gmra.mrb[0].mxu0 %v515
      %v695 = vpop.f32.mrb[0].mxu0
      %v696 = vadd.f32 0.0, %v695
      %v697 = vpop.f32.mrb[0].mxu0
      %v698 = vpop.f32.mrb[0].mxu0
      %v699 = vadd.f32 0.0, %v698
      %v700 = vpop.f32.mrb[0].mxu0
      %701 = vmatprep.mubr.bf16.mxu0 0
      %702 = vmatmul.mubr.bf16.gmra.mrb[0].mxu0 %v516
      %v703 = vpop.f32.mrb[0].mxu0
      %v704 = vadd.f32 0.0, %v703
      %v705 = vpop.f32.mrb[0].mxu0
      %v706 = vpop.f32.mrb[0].mxu0
      %v707 = vadd.f32 0.0, %v706
      %v708 = vpop.f32.mrb[0].mxu0
      %709 = vmatprep.mubr.bf16.mxu0 0
      %710 = vmatmul.mubr.bf16.gmra.mrb[0].mxu0 %v517
      %v711 = vpop.f32.mrb[0].mxu0
      %v712 = vadd.f32 0.0, %v711
      %v713 = vpop.f32.mrb[0].mxu0
      %v714 = vpop.f32.mrb[0].mxu0
      %v715 = vadd.f32 0.0, %v714
      %v716 = vpop.f32.mrb[0].mxu0
      %717 = vmatprep.mubr.bf16.mxu0 0
      %718 = vmatmul.mubr.bf16.gmra.mrb[0].mxu0 %v518
      %v719 = vpop.f32.mrb[0].mxu0
      %v720 = vadd.f32 0.0, %v719
      %v721 = vpop.f32.mrb[0].mxu0
      %v722 = vpop.f32.mrb[0].mxu0
      %v723 = vadd.f32 0.0, %v722
      %v724 = vpop.f32.mrb[0].mxu0
      %725 = vdwg.mxu0
      %v754 = vunpack.c.l.b16 %v359
      %v755 = vunpack.c.l.b16 %v360
      %v756 = vunpack.c.l.b16 %v361
      %v757 = vunpack.c.l.b16 %v362
      %v758 = vunpack.c.l.b16 %v363
      %v759 = vunpack.c.l.b16 %v364
      %v760 = vunpack.c.l.b16 %v365
      %v761 = vunpack.c.l.b16 %v366
      %v762 = vunpack.c.l.b16 %v367
      %v763 = vunpack.c.l.b16 %v368
      %v764 = vunpack.c.l.b16 %v369
      %v765 = vunpack.c.l.b16 %v370
      %v766 = vunpack.c.l.b16 %v371
      %v767 = vunpack.c.l.b16 %v372
      %v768 = vunpack.c.l.b16 %v373
      %v769 = vunpack.c.l.b16 %v374
      %v770 = vunpack.c.l.b16 %v375
      %v771 = vunpack.c.l.b16 %v376
      %v772 = vunpack.c.l.b16 %v377
      %v773 = vunpack.c.l.b16 %v378
      %v774 = vunpack.c.l.b16 %v379
      %v775 = vunpack.c.l.b16 %v380
      %v776 = vunpack.c.l.b16 %v381
      %v777 = vunpack.c.l.b16 %v382
      %v778 = vunpack.c.l.b16 %v383
      %v779 = vunpack.c.l.b16 %v384
      %v780 = vunpack.c.l.b16 %v385
      %v781 = vunpack.c.l.b16 %v386
      %v782 = vpack.c.b16 %v755, %v754
      %v783 = vpack.c.b16 %v757, %v756
      %v784 = vpack.c.b16 %v759, %v758
      %v785 = vpack.c.b16 %v761, %v760
      %v786 = vpack.c.b16 %v763, %v762
      %v787 = vpack.c.b16 %v765, %v764
      %v788 = vpack.c.b16 %v767, %v766
      %v789 = vpack.c.b16 %v769, %v768
      %v790 = vpack.c.b16 %v771, %v770
      %v791 = vpack.c.b16 %v773, %v772
      %v792 = vpack.c.b16 %v775, %v774
      %v793 = vpack.c.b16 %v777, %v776
      %v794 = vpack.c.b16 %v779, %v778
      %v795 = vpack.c.b16 %v781, %v780
      %v826 = vunpack.c.l.b16 %v387
      %v827 = vunpack.c.l.b16 %v388
      %v828 = vunpack.c.l.b16 %v389
      %v829 = vunpack.c.l.b16 %v390
      %v830 = vunpack.c.l.b16 %v391
      %v831 = vunpack.c.l.b16 %v392
      %v832 = vunpack.c.l.b16 %v393
      %v833 = vunpack.c.l.b16 %v394
      %v834 = vunpack.c.l.b16 %v395
      %v835 = vunpack.c.l.b16 %v396
      %v836 = vunpack.c.l.b16 %v397
      %v837 = vunpack.c.l.b16 %v398
      %v838 = vunpack.c.l.b16 %v399
      %v839 = vunpack.c.l.b16 %v400
      %v840 = vunpack.c.l.b16 %v401
      %v841 = vunpack.c.l.b16 %v402
      %v842 = vpack.c.b16 %v827, %v826
      %v843 = vpack.c.b16 %v829, %v828
      %v844 = vpack.c.b16 %v831, %v830
      %v845 = vpack.c.b16 %v833, %v832
      %v846 = vpack.c.b16 %v835, %v834
      %v847 = vpack.c.b16 %v837, %v836
      %v848 = vpack.c.b16 %v839, %v838
      %v849 = vpack.c.b16 %v841, %v840
      %858 = vmatprep.subr.bf16.mxu0 0
      %859 = vmatpush1.bf16.msra.mxu0 %v842
      %860 = vmatprep.subr.bf16.mxu0 0
      %861 = vmatpush1.bf16.msra.mxu0 %v843
      %862 = vmatprep.subr.bf16.mxu0 0
      %863 = vmatpush1.bf16.msra.mxu0 %v844
      %864 = vmatprep.subr.bf16.mxu0 0
      %865 = vmatpush1.bf16.msra.mxu0 %v845
      %866 = vmatprep.subr.bf16.mxu0 0
      %867 = vmatpush1.bf16.msra.mxu0 %v846
      %868 = vmatprep.subr.bf16.mxu0 0
      %869 = vmatpush1.bf16.msra.mxu0 %v847
      %870 = vmatprep.subr.bf16.mxu0 0
      %871 = vmatpush1.bf16.msra.mxu0 %v848
      %872 = vmatprep.subr.bf16.mxu0 0
      %873 = vmatpush1.bf16.msra.mxu0 %v849
      %874 = vmatprep.subr.bf16.mxu0 0
      %875 = vmatpush1.bf16.msra.mxu0 0
      %876 = vmatprep.subr.bf16.mxu0 0
      %877 = vmatpush1.bf16.msra.mxu0 0
      %878 = vmatprep.subr.bf16.mxu0 0
      %879 = vmatpush1.bf16.msra.mxu0 0
      %880 = vmatprep.subr.bf16.mxu0 0
      %881 = vmatpush1.bf16.msra.mxu0 0
      %882 = vmatprep.subr.bf16.mxu0 0
      %883 = vmatpush1.bf16.msra.mxu0 0
      %884 = vmatprep.subr.bf16.mxu0 0
      %885 = vmatpush1.bf16.msra.mxu0 0
      %886 = vmatprep.subr.bf16.mxu0 0
      %887 = vmatpush1.bf16.msra.mxu0 0
      %888 = vmatprep.subr.bf16.mxu0 0
      %889 = vmatpush1.bf16.msra.mxu0 0
      %890 = vmatprep.mubr.bf16.mxu0 0
      %891 = vmatmul.mubr.bf16.gmra.mrb[0].mxu0 %v782
      %v892 = vpop.f32.mrb[0].mxu0
      %v893 = vadd.f32 %v616, %v892
      %v894 = vpop.f32.mrb[0].mxu0
      %v895 = vpop.f32.mrb[0].mxu0
      %v896 = vadd.f32 %v619, %v895
      %v897 = vpop.f32.mrb[0].mxu0
      %898 = vmatprep.mubr.bf16.mxu0 0
      %899 = vmatmul.mubr.bf16.gmra.mrb[0].mxu0 %v783
      %v900 = vpop.f32.mrb[0].mxu0
      %v901 = vadd.f32 %v624, %v900
      %v902 = vpop.f32.mrb[0].mxu0
      %v903 = vpop.f32.mrb[0].mxu0
      %v904 = vadd.f32 %v627, %v903
      %v905 = vpop.f32.mrb[0].mxu0
      %906 = vmatprep.mubr.bf16.mxu0 0
      %907 = vmatmul.mubr.bf16.gmra.mrb[0].mxu0 %v784
      %v908 = vpop.f32.mrb[0].mxu0
      %v909 = vadd.f32 %v632, %v908
      %v910 = vpop.f32.mrb[0].mxu0
      %v911 = vpop.f32.mrb[0].mxu0
      %v912 = vadd.f32 %v635, %v911
      %v913 = vpop.f32.mrb[0].mxu0
      %914 = vmatprep.mubr.bf16.mxu0 0
      %915 = vmatmul.mubr.bf16.gmra.mrb[0].mxu0 %v785
      %v916 = vpop.f32.mrb[0].mxu0
      %v917 = vadd.f32 %v640, %v916
      %v918 = vpop.f32.mrb[0].mxu0
      %v919 = vpop.f32.mrb[0].mxu0
      %v920 = vadd.f32 %v643, %v919
      %v921 = vpop.f32.mrb[0].mxu0
      %922 = vmatprep.mubr.bf16.mxu0 0
      %923 = vmatmul.mubr.bf16.gmra.mrb[0].mxu0 %v786
      %v924 = vpop.f32.mrb[0].mxu0
      %v925 = vadd.f32 %v648, %v924
      %v926 = vpop.f32.mrb[0].mxu0
      %v927 = vpop.f32.mrb[0].mxu0
      %v928 = vadd.f32 %v651, %v927
      %v929 = vpop.f32.mrb[0].mxu0
      %930 = vmatprep.mubr.bf16.mxu0 0
      %931 = vmatmul.mubr.bf16.gmra.mrb[0].mxu0 %v787
      %v932 = vpop.f32.mrb[0].mxu0
      %v933 = vadd.f32 %v656, %v932
      %v934 = vpop.f32.mrb[0].mxu0
      %v935 = vpop.f32.mrb[0].mxu0
      %v936 = vadd.f32 %v659, %v935
      %v937 = vpop.f32.mrb[0].mxu0
      %938 = vmatprep.mubr.bf16.mxu0 0
      %939 = vmatmul.mubr.bf16.gmra.mrb[0].mxu0 %v788
      %v940 = vpop.f32.mrb[0].mxu0
      %v941 = vadd.f32 %v664, %v940
      %v942 = vpop.f32.mrb[0].mxu0
      %v943 = vpop.f32.mrb[0].mxu0
      %v944 = vadd.f32 %v667, %v943
      %v945 = vpop.f32.mrb[0].mxu0
      %946 = vmatprep.mubr.bf16.mxu0 0
      %947 = vmatmul.mubr.bf16.gmra.mrb[0].mxu0 %v789
      %v948 = vpop.f32.mrb[0].mxu0
      %v949 = vadd.f32 %v672, %v948
      %v950 = vpop.f32.mrb[0].mxu0
      %v951 = vpop.f32.mrb[0].mxu0
      %v952 = vadd.f32 %v675, %v951
      %v953 = vpop.f32.mrb[0].mxu0
      %954 = vmatprep.mubr.bf16.mxu0 0
      %955 = vmatmul.mubr.bf16.gmra.mrb[0].mxu0 %v790
      %v956 = vpop.f32.mrb[0].mxu0
      %v957 = vadd.f32 %v680, %v956
      %v958 = vpop.f32.mrb[0].mxu0
      %v959 = vpop.f32.mrb[0].mxu0
      %v960 = vadd.f32 %v683, %v959
      %v961 = vpop.f32.mrb[0].mxu0
      %962 = vmatprep.mubr.bf16.mxu0 0
      %963 = vmatmul.mubr.bf16.gmra.mrb[0].mxu0 %v791
      %v964 = vpop.f32.mrb[0].mxu0
      %v965 = vadd.f32 %v688, %v964
      %v966 = vpop.f32.mrb[0].mxu0
      %v967 = vpop.f32.mrb[0].mxu0
      %v968 = vadd.f32 %v691, %v967
      %v969 = vpop.f32.mrb[0].mxu0
      %970 = vmatprep.mubr.bf16.mxu0 0
      %971 = vmatmul.mubr.bf16.gmra.mrb[0].mxu0 %v792
      %v972 = vpop.f32.mrb[0].mxu0
      %v973 = vadd.f32 %v696, %v972
      %v974 = vpop.f32.mrb[0].mxu0
      %v975 = vpop.f32.mrb[0].mxu0
      %v976 = vadd.f32 %v699, %v975
      %v977 = vpop.f32.mrb[0].mxu0
      %978 = vmatprep.mubr.bf16.mxu0 0
      %979 = vmatmul.mubr.bf16.gmra.mrb[0].mxu0 %v793
      %v980 = vpop.f32.mrb[0].mxu0
      %v981 = vadd.f32 %v704, %v980
      %v982 = vpop.f32.mrb[0].mxu0
      %v983 = vpop.f32.mrb[0].mxu0
      %v984 = vadd.f32 %v707, %v983
      %v985 = vpop.f32.mrb[0].mxu0
      %986 = vmatprep.mubr.bf16.mxu0 0
      %987 = vmatmul.mubr.bf16.gmra.mrb[0].mxu0 %v794
      %v988 = vpop.f32.mrb[0].mxu0
      %v989 = vadd.f32 %v712, %v988
      %v990 = vpop.f32.mrb[0].mxu0
      %v991 = vpop.f32.mrb[0].mxu0
      %v992 = vadd.f32 %v715, %v991
      %v993 = vpop.f32.mrb[0].mxu0
      %994 = vmatprep.mubr.bf16.mxu0 0
      %995 = vmatmul.mubr.bf16.gmra.mrb[0].mxu0 %v795
      %v996 = vpop.f32.mrb[0].mxu0
      %v997 = vadd.f32 %v720, %v996
      %v998 = vpop.f32.mrb[0].mxu0
      %v999 = vpop.f32.mrb[0].mxu0
      %v1000 = vadd.f32 %v723, %v999
      %v1001 = vpop.f32.mrb[0].mxu0
      %1002 = vdwg.mxu0
      %s1003 = scalar_lea.vmem %s354, 16
      %v1004 = vld [vmem:[%s1003] sm:$0xf]
      %v1005 = vld [vmem:[%s1003 + $0x4] sm:$0xf]
      %v1006 = vld [vmem:[%s1003 + $0x8] sm:$0xf]
      %v1007 = vld [vmem:[%s1003 + $0xc] sm:$0xf]
      %v1008 = vld [vmem:[%s1003 + $0x10] sm:$0xf]
      %v1009 = vld [vmem:[%s1003 + $0x14] sm:$0xf]
      %v1010 = vld [vmem:[%s1003 + $0x18] sm:$0xf]
      %v1011 = vld [vmem:[%s1003 + $0x1c] sm:$0xf]
      %v1012 = vld [vmem:[%s1003 + $0x20] sm:$0xf]
      %v1013 = vld [vmem:[%s1003 + $0x24] sm:$0xf]
      %v1014 = vld [vmem:[%s1003 + $0x28] sm:$0xf]
      %v1015 = vld [vmem:[%s1003 + $0x2c] sm:$0xf]
      %v1016 = vld [vmem:[%s1003 + $0x30] sm:$0xf]
      %v1017 = vld [vmem:[%s1003 + $0x34] sm:$0xf]
      %v1018 = vld [vmem:[%s1003 + $0x38] sm:$0xf]
      %v1019 = vld [vmem:[%s1003 + $0x3c] sm:$0xf]
      %v1020 = vld [vmem:[%s1003 + $0x40] sm:$0xf]
      %v1021 = vld [vmem:[%s1003 + $0x44] sm:$0xf]
      %v1022 = vld [vmem:[%s1003 + $0x48] sm:$0xf]
      %v1023 = vld [vmem:[%s1003 + $0x4c] sm:$0xf]
      %v1024 = vld [vmem:[%s1003 + $0x50] sm:$0xf]
      %v1025 = vld [vmem:[%s1003 + $0x54] sm:$0xf]
      %v1026 = vld [vmem:[%s1003 + $0x58] sm:$0xf]
      %v1027 = vld [vmem:[%s1003 + $0x5c] sm:$0xf]
      %v1028 = vld [vmem:[%s1003 + $0x60] sm:$0xf]
      %v1029 = vld [vmem:[%s1003 + $0x64] sm:$0xf]
      %v1030 = vld [vmem:[%s1003 + $0x68] sm:$0xf]
      %v1031 = vld [vmem:[%s1003 + $0x6c] sm:$0xf]
      %s1032 = scalar_lea.vmem %s1, 128
      %v1033 = vld [vmem:[%s1032] sm:$0xf]
      %v1034 = vld [vmem:[%s1032 + $0x4] sm:$0xf]
      %v1035 = vld [vmem:[%s1032 + $0x8] sm:$0xf]
      %v1036 = vld [vmem:[%s1032 + $0xc] sm:$0xf]
      %v1037 = vld [vmem:[%s1032 + $0x10] sm:$0xf]
      %v1038 = vld [vmem:[%s1032 + $0x14] sm:$0xf]
      %v1039 = vld [vmem:[%s1032 + $0x18] sm:$0xf]
      %v1040 = vld [vmem:[%s1032 + $0x1c] sm:$0xf]
      %v1041 = vld [vmem:[%s1032 + $0x20] sm:$0xf]
      %v1042 = vld [vmem:[%s1032 + $0x24] sm:$0xf]
      %v1043 = vld [vmem:[%s1032 + $0x28] sm:$0xf]
      %v1044 = vld [vmem:[%s1032 + $0x2c] sm:$0xf]
      %v1045 = vld [vmem:[%s1032 + $0x30] sm:$0xf]
      %v1046 = vld [vmem:[%s1032 + $0x34] sm:$0xf]
      %v1047 = vld [vmem:[%s1032 + $0x38] sm:$0xf]
      %v1048 = vld [vmem:[%s1032 + $0x3c] sm:$0xf]
      %v1077 = vunpack.c.l.b16 %v1004
      %v1078 = vunpack.c.l.b16 %v1005
      %v1079 = vunpack.c.l.b16 %v1006
      %v1080 = vunpack.c.l.b16 %v1007
      %v1081 = vunpack.c.l.b16 %v1008
      %v1082 = vunpack.c.l.b16 %v1009
      %v1083 = vunpack.c.l.b16 %v1010
      %v1084 = vunpack.c.l.b16 %v1011
      %v1085 = vunpack.c.l.b16 %v1012
      %v1086 = vunpack.c.l.b16 %v1013
      %v1087 = vunpack.c.l.b16 %v1014
      %v1088 = vunpack.c.l.b16 %v1015
      %v1089 = vunpack.c.l.b16 %v1016
      %v1090 = vunpack.c.l.b16 %v1017
      %v1091 = vunpack.c.l.b16 %v1018
      %v1092 = vunpack.c.l.b16 %v1019
      %v1093 = vunpack.c.l.b16 %v1020
      %v1094 = vunpack.c.l.b16 %v1021
      %v1095 = vunpack.c.l.b16 %v1022
      %v1096 = vunpack.c.l.b16 %v1023
      %v1097 = vunpack.c.l.b16 %v1024
      %v1098 = vunpack.c.l.b16 %v1025
      %v1099 = vunpack.c.l.b16 %v1026
      %v1100 = vunpack.c.l.b16 %v1027
      %v1101 = vunpack.c.l.b16 %v1028
      %v1102 = vunpack.c.l.b16 %v1029
      %v1103 = vunpack.c.l.b16 %v1030
      %v1104 = vunpack.c.l.b16 %v1031
      %v1105 = vpack.c.b16 %v1078, %v1077
      %v1106 = vpack.c.b16 %v1080, %v1079
      %v1107 = vpack.c.b16 %v1082, %v1081
      %v1108 = vpack.c.b16 %v1084, %v1083
      %v1109 = vpack.c.b16 %v1086, %v1085
      %v1110 = vpack.c.b16 %v1088, %v1087
      %v1111 = vpack.c.b16 %v1090, %v1089
      %v1112 = vpack.c.b16 %v1092, %v1091
      %v1113 = vpack.c.b16 %v1094, %v1093
      %v1114 = vpack.c.b16 %v1096, %v1095
      %v1115 = vpack.c.b16 %v1098, %v1097
      %v1116 = vpack.c.b16 %v1100, %v1099
      %v1117 = vpack.c.b16 %v1102, %v1101
      %v1118 = vpack.c.b16 %v1104, %v1103
      %v1149 = vunpack.c.l.b16 %v1033
      %v1150 = vunpack.c.l.b16 %v1034
      %v1151 = vunpack.c.l.b16 %v1035
      %v1152 = vunpack.c.l.b16 %v1036
      %v1153 = vunpack.c.l.b16 %v1037
      %v1154 = vunpack.c.l.b16 %v1038
      %v1155 = vunpack.c.l.b16 %v1039
      %v1156 = vunpack.c.l.b16 %v1040
      %v1157 = vunpack.c.l.b16 %v1041
      %v1158 = vunpack.c.l.b16 %v1042
      %v1159 = vunpack.c.l.b16 %v1043
      %v1160 = vunpack.c.l.b16 %v1044
      %v1161 = vunpack.c.l.b16 %v1045
      %v1162 = vunpack.c.l.b16 %v1046
      %v1163 = vunpack.c.l.b16 %v1047
      %v1164 = vunpack.c.l.b16 %v1048
      %v1165 = vpack.c.b16 %v1150, %v1149
      %v1166 = vpack.c.b16 %v1152, %v1151
      %v1167 = vpack.c.b16 %v1154, %v1153
      %v1168 = vpack.c.b16 %v1156, %v1155
      %v1169 = vpack.c.b16 %v1158, %v1157
      %v1170 = vpack.c.b16 %v1160, %v1159
      %v1171 = vpack.c.b16 %v1162, %v1161
      %v1172 = vpack.c.b16 %v1164, %v1163
      %1181 = vmatprep.subr.bf16.mxu0 0
      %1182 = vmatpush1.bf16.msra.mxu0 %v1165
      %1183 = vmatprep.subr.bf16.mxu0 0
      %1184 = vmatpush1.bf16.msra.mxu0 %v1166
      %1185 = vmatprep.subr.bf16.mxu0 0
      %1186 = vmatpush1.bf16.msra.mxu0 %v1167
      %1187 = vmatprep.subr.bf16.mxu0 0
      %1188 = vmatpush1.bf16.msra.mxu0 %v1168
      %1189 = vmatprep.subr.bf16.mxu0 0
      %1190 = vmatpush1.bf16.msra.mxu0 %v1169
      %1191 = vmatprep.subr.bf16.mxu0 0
      %1192 = vmatpush1.bf16.msra.mxu0 %v1170
      %1193 = vmatprep.subr.bf16.mxu0 0
      %1194 = vmatpush1.bf16.msra.mxu0 %v1171
      %1195 = vmatprep.subr.bf16.mxu0 0
      %1196 = vmatpush1.bf16.msra.mxu0 %v1172
      %1197 = vmatprep.subr.bf16.mxu0 0
      %1198 = vmatpush1.bf16.msra.mxu0 0
      %1199 = vmatprep.subr.bf16.mxu0 0
      %1200 = vmatpush1.bf16.msra.mxu0 0
      %1201 = vmatprep.subr.bf16.mxu0 0
      %1202 = vmatpush1.bf16.msra.mxu0 0
      %1203 = vmatprep.subr.bf16.mxu0 0
      %1204 = vmatpush1.bf16.msra.mxu0 0
      %1205 = vmatprep.subr.bf16.mxu0 0
      %1206 = vmatpush1.bf16.msra.mxu0 0
      %1207 = vmatprep.subr.bf16.mxu0 0
      %1208 = vmatpush1.bf16.msra.mxu0 0
      %1209 = vmatprep.subr.bf16.mxu0 0
      %1210 = vmatpush1.bf16.msra.mxu0 0
      %1211 = vmatprep.subr.bf16.mxu0 0
      %1212 = vmatpush1.bf16.msra.mxu0 0
      %1213 = vmatprep.mubr.bf16.mxu0 0
      %1214 = vmatmul.mubr.bf16.gmra.mrb[0].mxu0 %v1105
      %v1215 = vpop.f32.mrb[0].mxu0
      %v1216 = vadd.f32 0.0, %v1215
      %v1217 = vpop.f32.mrb[0].mxu0
      %v1218 = vpop.f32.mrb[0].mxu0
      %v1219 = vadd.f32 0.0, %v1218
      %v1220 = vpop.f32.mrb[0].mxu0
      %1221 = vmatprep.mubr.bf16.mxu0 0
      %1222 = vmatmul.mubr.bf16.gmra.mrb[0].mxu0 %v1106
      %v1223 = vpop.f32.mrb[0].mxu0
      %v1224 = vadd.f32 0.0, %v1223
      %v1225 = vpop.f32.mrb[0].mxu0
      %v1226 = vpop.f32.mrb[0].mxu0
      %v1227 = vadd.f32 0.0, %v1226
      %v1228 = vpop.f32.mrb[0].mxu0
      %1229 = vmatprep.mubr.bf16.mxu0 0
      %1230 = vmatmul.mubr.bf16.gmra.mrb[0].mxu0 %v1107
      %v1231 = vpop.f32.mrb[0].mxu0
      %v1232 = vadd.f32 0.0, %v1231
      %v1233 = vpop.f32.mrb[0].mxu0
      %v1234 = vpop.f32.mrb[0].mxu0
      %v1235 = vadd.f32 0.0, %v1234
      %v1236 = vpop.f32.mrb[0].mxu0
      %1237 = vmatprep.mubr.bf16.mxu0 0
      %1238 = vmatmul.mubr.bf16.gmra.mrb[0].mxu0 %v1108
      %v1239 = vpop.f32.mrb[0].mxu0
      %v1240 = vadd.f32 0.0, %v1239
      %v1241 = vpop.f32.mrb[0].mxu0
      %v1242 = vpop.f32.mrb[0].mxu0
      %v1243 = vadd.f32 0.0, %v1242
      %v1244 = vpop.f32.mrb[0].mxu0
      %1245 = vmatprep.mubr.bf16.mxu0 0
      %1246 = vmatmul.mubr.bf16.gmra.mrb[0].mxu0 %v1109
      %v1247 = vpop.f32.mrb[0].mxu0
      %v1248 = vadd.f32 0.0, %v1247
      %v1249 = vpop.f32.mrb[0].mxu0
      %v1250 = vpop.f32.mrb[0].mxu0
      %v1251 = vadd.f32 0.0, %v1250
      %v1252 = vpop.f32.mrb[0].mxu0
      %1253 = vmatprep.mubr.bf16.mxu0 0
      %1254 = vmatmul.mubr.bf16.gmra.mrb[0].mxu0 %v1110
      %v1255 = vpop.f32.mrb[0].mxu0
      %v1256 = vadd.f32 0.0, %v1255
      %v1257 = vpop.f32.mrb[0].mxu0
      %v1258 = vpop.f32.mrb[0].mxu0
      %v1259 = vadd.f32 0.0, %v1258
      %v1260 = vpop.f32.mrb[0].mxu0
      %1261 = vmatprep.mubr.bf16.mxu0 0
      %1262 = vmatmul.mubr.bf16.gmra.mrb[0].mxu0 %v1111
      %v1263 = vpop.f32.mrb[0].mxu0
      %v1264 = vadd.f32 0.0, %v1263
      %v1265 = vpop.f32.mrb[0].mxu0
      %v1266 = vpop.f32.mrb[0].mxu0
      %v1267 = vadd.f32 0.0, %v1266
      %v1268 = vpop.f32.mrb[0].mxu0
      %1269 = vmatprep.mubr.bf16.mxu0 0
      %1270 = vmatmul.mubr.bf16.gmra.mrb[0].mxu0 %v1112
      %v1271 = vpop.f32.mrb[0].mxu0
      %v1272 = vadd.f32 0.0, %v1271
      %v1273 = vpop.f32.mrb[0].mxu0
      %v1274 = vpop.f32.mrb[0].mxu0
      %v1275 = vadd.f32 0.0, %v1274
      %v1276 = vpop.f32.mrb[0].mxu0
      %1277 = vmatprep.mubr.bf16.mxu0 0
      %1278 = vmatmul.mubr.bf16.gmra.mrb[0].mxu0 %v1113
      %v1279 = vpop.f32.mrb[0].mxu0
      %v1280 = vadd.f32 0.0, %v1279
      %v1281 = vpop.f32.mrb[0].mxu0
      %v1282 = vpop.f32.mrb[0].mxu0
      %v1283 = vadd.f32 0.0, %v1282
      %v1284 = vpop.f32.mrb[0].mxu0
      %1285 = vmatprep.mubr.bf16.mxu0 0
      %1286 = vmatmul.mubr.bf16.gmra.mrb[0].mxu0 %v1114
      %v1287 = vpop.f32.mrb[0].mxu0
      %v1288 = vadd.f32 0.0, %v1287
      %v1289 = vpop.f32.mrb[0].mxu0
      %v1290 = vpop.f32.mrb[0].mxu0
      %v1291 = vadd.f32 0.0, %v1290
      %v1292 = vpop.f32.mrb[0].mxu0
      %1293 = vmatprep.mubr.bf16.mxu0 0
      %1294 = vmatmul.mubr.bf16.gmra.mrb[0].mxu0 %v1115
      %v1295 = vpop.f32.mrb[0].mxu0
      %v1296 = vadd.f32 0.0, %v1295
      %v1297 = vpop.f32.mrb[0].mxu0
      %v1298 = vpop.f32.mrb[0].mxu0
      %v1299 = vadd.f32 0.0, %v1298
      %v1300 = vpop.f32.mrb[0].mxu0
      %1301 = vmatprep.mubr.bf16.mxu0 0
      %1302 = vmatmul.mubr.bf16.gmra.mrb[0].mxu0 %v1116
      %v1303 = vpop.f32.mrb[0].mxu0
      %v1304 = vadd.f32 0.0, %v1303
      %v1305 = vpop.f32.mrb[0].mxu0
      %v1306 = vpop.f32.mrb[0].mxu0
      %v1307 = vadd.f32 0.0, %v1306
      %v1308 = vpop.f32.mrb[0].mxu0
      %1309 = vmatprep.mubr.bf16.mxu0 0
      %1310 = vmatmul.mubr.bf16.gmra.mrb[0].mxu0 %v1117
      %v1311 = vpop.f32.mrb[0].mxu0
      %v1312 = vadd.f32 0.0, %v1311
      %v1313 = vpop.f32.mrb[0].mxu0
      %v1314 = vpop.f32.mrb[0].mxu0
      %v1315 = vadd.f32 0.0, %v1314
      %v1316 = vpop.f32.mrb[0].mxu0
      %1317 = vmatprep.mubr.bf16.mxu0 0
      %1318 = vmatmul.mubr.bf16.gmra.mrb[0].mxu0 %v1118
      %v1319 = vpop.f32.mrb[0].mxu0
      %v1320 = vadd.f32 0.0, %v1319
      %v1321 = vpop.f32.mrb[0].mxu0
      %v1322 = vpop.f32.mrb[0].mxu0
      %v1323 = vadd.f32 0.0, %v1322
      %v1324 = vpop.f32.mrb[0].mxu0
      %1325 = vdwg.mxu0
      %v1326 = vadd.f32 %v893, %v1216
      %v1327 = vadd.f32 %v896, %v1219
      %v1328 = vadd.f32 %v901, %v1224
      %v1329 = vadd.f32 %v904, %v1227
      %v1330 = vadd.f32 %v909, %v1232
      %v1331 = vadd.f32 %v912, %v1235
      %v1332 = vadd.f32 %v917, %v1240
      %v1333 = vadd.f32 %v920, %v1243
      %v1334 = vadd.f32 %v925, %v1248
      %v1335 = vadd.f32 %v928, %v1251
      %v1336 = vadd.f32 %v933, %v1256
      %v1337 = vadd.f32 %v936, %v1259
      %v1338 = vadd.f32 %v941, %v1264
      %v1339 = vadd.f32 %v944, %v1267
      %v1340 = vadd.f32 %v949, %v1272
      %v1341 = vadd.f32 %v952, %v1275
      %v1342 = vadd.f32 %v957, %v1280
      %v1343 = vadd.f32 %v960, %v1283
      %v1344 = vadd.f32 %v965, %v1288
      %v1345 = vadd.f32 %v968, %v1291
      %v1346 = vadd.f32 %v973, %v1296
      %v1347 = vadd.f32 %v976, %v1299
      %v1348 = vadd.f32 %v981, %v1304
      %v1349 = vadd.f32 %v984, %v1307
      %v1350 = vadd.f32 %v989, %v1312
      %v1351 = vadd.f32 %v992, %v1315
      %v1352 = vadd.f32 %v997, %v1320
      %v1353 = vadd.f32 %v1000, %v1323
      %s1354 = scalar_lea.vmem %s354, 24
      %v1355 = vld [vmem:[%s1354] sm:$0xf]
      %v1356 = vld [vmem:[%s1354 + $0x4] sm:$0xf]
      %v1357 = vld [vmem:[%s1354 + $0x8] sm:$0xf]
      %v1358 = vld [vmem:[%s1354 + $0xc] sm:$0xf]
      %v1359 = vld [vmem:[%s1354 + $0x10] sm:$0xf]
      %v1360 = vld [vmem:[%s1354 + $0x14] sm:$0xf]
      %v1361 = vld [vmem:[%s1354 + $0x18] sm:$0xf]
      %v1362 = vld [vmem:[%s1354 + $0x1c] sm:$0xf]
      %v1363 = vld [vmem:[%s1354 + $0x20] sm:$0xf]
      %v1364 = vld [vmem:[%s1354 + $0x24] sm:$0xf]
      %v1365 = vld [vmem:[%s1354 + $0x28] sm:$0xf]
      %v1366 = vld [vmem:[%s1354 + $0x2c] sm:$0xf]
      %v1367 = vld [vmem:[%s1354 + $0x30] sm:$0xf]
      %v1368 = vld [vmem:[%s1354 + $0x34] sm:$0xf]
      %v1369 = vld [vmem:[%s1354 + $0x38] sm:$0xf]
      %v1370 = vld [vmem:[%s1354 + $0x3c] sm:$0xf]
      %v1371 = vld [vmem:[%s1354 + $0x40] sm:$0xf]
      %v1372 = vld [vmem:[%s1354 + $0x44] sm:$0xf]
      %v1373 = vld [vmem:[%s1354 + $0x48] sm:$0xf]
      %v1374 = vld [vmem:[%s1354 + $0x4c] sm:$0xf]
      %v1375 = vld [vmem:[%s1354 + $0x50] sm:$0xf]
      %v1376 = vld [vmem:[%s1354 + $0x54] sm:$0xf]
      %v1377 = vld [vmem:[%s1354 + $0x58] sm:$0xf]
      %v1378 = vld [vmem:[%s1354 + $0x5c] sm:$0xf]
      %v1379 = vld [vmem:[%s1354 + $0x60] sm:$0xf]
      %v1380 = vld [vmem:[%s1354 + $0x64] sm:$0xf]
      %v1381 = vld [vmem:[%s1354 + $0x68] sm:$0xf]
      %v1382 = vld [vmem:[%s1354 + $0x6c] sm:$0xf]
      %s1383 = scalar_lea.vmem %s1, 192
      %v1384 = vld [vmem:[%s1383] sm:$0xf]
      %v1385 = vld [vmem:[%s1383 + $0x4] sm:$0xf]
      %v1386 = vld [vmem:[%s1383 + $0x8] sm:$0xf]
      %v1387 = vld [vmem:[%s1383 + $0xc] sm:$0xf]
      %v1388 = vld [vmem:[%s1383 + $0x10] sm:$0xf]
      %v1389 = vld [vmem:[%s1383 + $0x14] sm:$0xf]
      %v1390 = vld [vmem:[%s1383 + $0x18] sm:$0xf]
      %v1391 = vld [vmem:[%s1383 + $0x1c] sm:$0xf]
      %v1392 = vld [vmem:[%s1383 + $0x20] sm:$0xf]
      %v1393 = vld [vmem:[%s1383 + $0x24] sm:$0xf]
      %v1394 = vld [vmem:[%s1383 + $0x28] sm:$0xf]
      %v1395 = vld [vmem:[%s1383 + $0x2c] sm:$0xf]
      %v1396 = vld [vmem:[%s1383 + $0x30] sm:$0xf]
      %v1397 = vld [vmem:[%s1383 + $0x34] sm:$0xf]
      %v1398 = vld [vmem:[%s1383 + $0x38] sm:$0xf]
      %v1399 = vld [vmem:[%s1383 + $0x3c] sm:$0xf]
      %v1428 = vunpack.c.l.b16 %v1355
      %v1429 = vunpack.c.l.b16 %v1356
      %v1430 = vunpack.c.l.b16 %v1357
      %v1431 = vunpack.c.l.b16 %v1358
      %v1432 = vunpack.c.l.b16 %v1359
      %v1433 = vunpack.c.l.b16 %v1360
      %v1434 = vunpack.c.l.b16 %v1361
      %v1435 = vunpack.c.l.b16 %v1362
      %v1436 = vunpack.c.l.b16 %v1363
      %v1437 = vunpack.c.l.b16 %v1364
      %v1438 = vunpack.c.l.b16 %v1365
      %v1439 = vunpack.c.l.b16 %v1366
      %v1440 = vunpack.c.l.b16 %v1367
      %v1441 = vunpack.c.l.b16 %v1368
      %v1442 = vunpack.c.l.b16 %v1369
      %v1443 = vunpack.c.l.b16 %v1370
      %v1444 = vunpack.c.l.b16 %v1371
      %v1445 = vunpack.c.l.b16 %v1372
      %v1446 = vunpack.c.l.b16 %v1373
      %v1447 = vunpack.c.l.b16 %v1374
      %v1448 = vunpack.c.l.b16 %v1375
      %v1449 = vunpack.c.l.b16 %v1376
      %v1450 = vunpack.c.l.b16 %v1377
      %v1451 = vunpack.c.l.b16 %v1378
      %v1452 = vunpack.c.l.b16 %v1379
      %v1453 = vunpack.c.l.b16 %v1380
      %v1454 = vunpack.c.l.b16 %v1381
      %v1455 = vunpack.c.l.b16 %v1382
      %v1456 = vpack.c.b16 %v1429, %v1428
      %v1457 = vpack.c.b16 %v1431, %v1430
      %v1458 = vpack.c.b16 %v1433, %v1432
      %v1459 = vpack.c.b16 %v1435, %v1434
      %v1460 = vpack.c.b16 %v1437, %v1436
      %v1461 = vpack.c.b16 %v1439, %v1438
      %v1462 = vpack.c.b16 %v1441, %v1440
      %v1463 = vpack.c.b16 %v1443, %v1442
      %v1464 = vpack.c.b16 %v1445, %v1444
      %v1465 = vpack.c.b16 %v1447, %v1446
      %v1466 = vpack.c.b16 %v1449, %v1448
      %v1467 = vpack.c.b16 %v1451, %v1450
      %v1468 = vpack.c.b16 %v1453, %v1452
      %v1469 = vpack.c.b16 %v1455, %v1454
      %v1500 = vunpack.c.l.b16 %v1384
      %v1501 = vunpack.c.l.b16 %v1385
      %v1502 = vunpack.c.l.b16 %v1386
      %v1503 = vunpack.c.l.b16 %v1387
      %v1504 = vunpack.c.l.b16 %v1388
      %v1505 = vunpack.c.l.b16 %v1389
      %v1506 = vunpack.c.l.b16 %v1390
      %v1507 = vunpack.c.l.b16 %v1391
      %v1508 = vunpack.c.l.b16 %v1392
      %v1509 = vunpack.c.l.b16 %v1393
      %v1510 = vunpack.c.l.b16 %v1394
      %v1511 = vunpack.c.l.b16 %v1395
      %v1512 = vunpack.c.l.b16 %v1396
      %v1513 = vunpack.c.l.b16 %v1397
      %v1514 = vunpack.c.l.b16 %v1398
      %v1515 = vunpack.c.l.b16 %v1399
      %v1516 = vpack.c.b16 %v1501, %v1500
      %v1517 = vpack.c.b16 %v1503, %v1502
      %v1518 = vpack.c.b16 %v1505, %v1504
      %v1519 = vpack.c.b16 %v1507, %v1506
      %v1520 = vpack.c.b16 %v1509, %v1508
      %v1521 = vpack.c.b16 %v1511, %v1510
      %v1522 = vpack.c.b16 %v1513, %v1512
      %v1523 = vpack.c.b16 %v1515, %v1514
      %1532 = vmatprep.subr.bf16.mxu0 0
      %1533 = vmatpush1.bf16.msra.mxu0 %v1516
      %1534 = vmatprep.subr.bf16.mxu0 0
      %1535 = vmatpush1.bf16.msra.mxu0 %v1517
      %1536 = vmatprep.subr.bf16.mxu0 0
      %1537 = vmatpush1.bf16.msra.mxu0 %v1518
      %1538 = vmatprep.subr.bf16.mxu0 0
      %1539 = vmatpush1.bf16.msra.mxu0 %v1519
      %1540 = vmatprep.subr.bf16.mxu0 0
      %1541 = vmatpush1.bf16.msra.mxu0 %v1520
      %1542 = vmatprep.subr.bf16.mxu0 0
      %1543 = vmatpush1.bf16.msra.mxu0 %v1521
      %1544 = vmatprep.subr.bf16.mxu0 0
      %1545 = vmatpush1.bf16.msra.mxu0 %v1522
      %1546 = vmatprep.subr.bf16.mxu0 0
      %1547 = vmatpush1.bf16.msra.mxu0 %v1523
      %1548 = vmatprep.subr.bf16.mxu0 0
      %1549 = vmatpush1.bf16.msra.mxu0 0
      %1550 = vmatprep.subr.bf16.mxu0 0
      %1551 = vmatpush1.bf16.msra.mxu0 0
      %1552 = vmatprep.subr.bf16.mxu0 0
      %1553 = vmatpush1.bf16.msra.mxu0 0
      %1554 = vmatprep.subr.bf16.mxu0 0
      %1555 = vmatpush1.bf16.msra.mxu0 0
      %1556 = vmatprep.subr.bf16.mxu0 0
      %1557 = vmatpush1.bf16.msra.mxu0 0
      %1558 = vmatprep.subr.bf16.mxu0 0
      %1559 = vmatpush1.bf16.msra.mxu0 0
      %1560 = vmatprep.subr.bf16.mxu0 0
      %1561 = vmatpush1.bf16.msra.mxu0 0
      %1562 = vmatprep.subr.bf16.mxu0 0
      %1563 = vmatpush1.bf16.msra.mxu0 0
      %1564 = vmatprep.mubr.bf16.mxu0 0
      %1565 = vmatmul.mubr.bf16.gmra.mrb[0].mxu0 %v1456
      %v1566 = vpop.f32.mrb[0].mxu0
      %v1567 = vadd.f32 0.0, %v1566
      %v1568 = vpop.f32.mrb[0].mxu0
      %v1569 = vpop.f32.mrb[0].mxu0
      %v1570 = vadd.f32 0.0, %v1569
      %v1571 = vpop.f32.mrb[0].mxu0
      %1572 = vmatprep.mubr.bf16.mxu0 0
      %1573 = vmatmul.mubr.bf16.gmra.mrb[0].mxu0 %v1457
      %v1574 = vpop.f32.mrb[0].mxu0
      %v1575 = vadd.f32 0.0, %v1574
      %v1576 = vpop.f32.mrb[0].mxu0
      %v1577 = vpop.f32.mrb[0].mxu0
      %v1578 = vadd.f32 0.0, %v1577
      %v1579 = vpop.f32.mrb[0].mxu0
      %1580 = vmatprep.mubr.bf16.mxu0 0
      %1581 = vmatmul.mubr.bf16.gmra.mrb[0].mxu0 %v1458
      %v1582 = vpop.f32.mrb[0].mxu0
      %v1583 = vadd.f32 0.0, %v1582
      %v1584 = vpop.f32.mrb[0].mxu0
      %v1585 = vpop.f32.mrb[0].mxu0
      %v1586 = vadd.f32 0.0, %v1585
      %v1587 = vpop.f32.mrb[0].mxu0
      %1588 = vmatprep.mubr.bf16.mxu0 0
      %1589 = vmatmul.mubr.bf16.gmra.mrb[0].mxu0 %v1459
      %v1590 = vpop.f32.mrb[0].mxu0
      %v1591 = vadd.f32 0.0, %v1590
      %v1592 = vpop.f32.mrb[0].mxu0
      %v1593 = vpop.f32.mrb[0].mxu0
      %v1594 = vadd.f32 0.0, %v1593
      %v1595 = vpop.f32.mrb[0].mxu0
      %1596 = vmatprep.mubr.bf16.mxu0 0
      %1597 = vmatmul.mubr.bf16.gmra.mrb[0].mxu0 %v1460
      %v1598 = vpop.f32.mrb[0].mxu0
      %v1599 = vadd.f32 0.0, %v1598
      %v1600 = vpop.f32.mrb[0].mxu0
      %v1601 = vpop.f32.mrb[0].mxu0
      %v1602 = vadd.f32 0.0, %v1601
      %v1603 = vpop.f32.mrb[0].mxu0
      %1604 = vmatprep.mubr.bf16.mxu0 0
      %1605 = vmatmul.mubr.bf16.gmra.mrb[0].mxu0 %v1461
      %v1606 = vpop.f32.mrb[0].mxu0
      %v1607 = vadd.f32 0.0, %v1606
      %v1608 = vpop.f32.mrb[0].mxu0
      %v1609 = vpop.f32.mrb[0].mxu0
      %v1610 = vadd.f32 0.0, %v1609
      %v1611 = vpop.f32.mrb[0].mxu0
      %1612 = vmatprep.mubr.bf16.mxu0 0
      %1613 = vmatmul.mubr.bf16.gmra.mrb[0].mxu0 %v1462
      %v1614 = vpop.f32.mrb[0].mxu0
      %v1615 = vadd.f32 0.0, %v1614
      %v1616 = vpop.f32.mrb[0].mxu0
      %v1617 = vpop.f32.mrb[0].mxu0
      %v1618 = vadd.f32 0.0, %v1617
      %v1619 = vpop.f32.mrb[0].mxu0
      %1620 = vmatprep.mubr.bf16.mxu0 0
      %1621 = vmatmul.mubr.bf16.gmra.mrb[0].mxu0 %v1463
      %v1622 = vpop.f32.mrb[0].mxu0
      %v1623 = vadd.f32 0.0, %v1622
      %v1624 = vpop.f32.mrb[0].mxu0
      %v1625 = vpop.f32.mrb[0].mxu0
      %v1626 = vadd.f32 0.0, %v1625
      %v1627 = vpop.f32.mrb[0].mxu0
      %1628 = vmatprep.mubr.bf16.mxu0 0
      %1629 = vmatmul.mubr.bf16.gmra.mrb[0].mxu0 %v1464
      %v1630 = vpop.f32.mrb[0].mxu0
      %v1631 = vadd.f32 0.0, %v1630
      %v1632 = vpop.f32.mrb[0].mxu0
      %v1633 = vpop.f32.mrb[0].mxu0
      %v1634 = vadd.f32 0.0, %v1633
      %v1635 = vpop.f32.mrb[0].mxu0
      %1636 = vmatprep.mubr.bf16.mxu0 0
      %1637 = vmatmul.mubr.bf16.gmra.mrb[0].mxu0 %v1465
      %v1638 = vpop.f32.mrb[0].mxu0
      %v1639 = vadd.f32 0.0, %v1638
      %v1640 = vpop.f32.mrb[0].mxu0
      %v1641 = vpop.f32.mrb[0].mxu0
      %v1642 = vadd.f32 0.0, %v1641
      %v1643 = vpop.f32.mrb[0].mxu0
      %1644 = vmatprep.mubr.bf16.mxu0 0
      %1645 = vmatmul.mubr.bf16.gmra.mrb[0].mxu0 %v1466
      %v1646 = vpop.f32.mrb[0].mxu0
      %v1647 = vadd.f32 0.0, %v1646
      %v1648 = vpop.f32.mrb[0].mxu0
      %v1649 = vpop.f32.mrb[0].mxu0
      %v1650 = vadd.f32 0.0, %v1649
      %v1651 = vpop.f32.mrb[0].mxu0
      %1652 = vmatprep.mubr.bf16.mxu0 0
      %1653 = vmatmul.mubr.bf16.gmra.mrb[0].mxu0 %v1467
      %v1654 = vpop.f32.mrb[0].mxu0
      %v1655 = vadd.f32 0.0, %v1654
      %v1656 = vpop.f32.mrb[0].mxu0
      %v1657 = vpop.f32.mrb[0].mxu0
      %v1658 = vadd.f32 0.0, %v1657
      %v1659 = vpop.f32.mrb[0].mxu0
      %1660 = vmatprep.mubr.bf16.mxu0 0
      %1661 = vmatmul.mubr.bf16.gmra.mrb[0].mxu0 %v1468
      %v1662 = vpop.f32.mrb[0].mxu0
      %v1663 = vadd.f32 0.0, %v1662
      %v1664 = vpop.f32.mrb[0].mxu0
      %v1665 = vpop.f32.mrb[0].mxu0
      %v1666 = vadd.f32 0.0, %v1665
      %v1667 = vpop.f32.mrb[0].mxu0
      %1668 = vmatprep.mubr.bf16.mxu0 0
      %1669 = vmatmul.mubr.bf16.gmra.mrb[0].mxu0 %v1469
      %v1670 = vpop.f32.mrb[0].mxu0
      %v1671 = vadd.f32 0.0, %v1670
      %v1672 = vpop.f32.mrb[0].mxu0
      %v1673 = vpop.f32.mrb[0].mxu0
      %v1674 = vadd.f32 0.0, %v1673
      %v1675 = vpop.f32.mrb[0].mxu0
      %1676 = vdwg.mxu0
      %v1677 = vadd.f32 %v1326, %v1567
      %v1678 = vadd.f32 %v1327, %v1570
      %v1679 = vadd.f32 %v1328, %v1575
      %v1680 = vadd.f32 %v1329, %v1578
      %v1681 = vadd.f32 %v1330, %v1583
      %v1682 = vadd.f32 %v1331, %v1586
      %v1683 = vadd.f32 %v1332, %v1591
      %v1684 = vadd.f32 %v1333, %v1594
      %v1685 = vadd.f32 %v1334, %v1599
      %v1686 = vadd.f32 %v1335, %v1602
      %v1687 = vadd.f32 %v1336, %v1607
      %v1688 = vadd.f32 %v1337, %v1610
      %v1689 = vadd.f32 %v1338, %v1615
      %v1690 = vadd.f32 %v1339, %v1618
      %v1691 = vadd.f32 %v1340, %v1623
      %v1692 = vadd.f32 %v1341, %v1626
      %v1693 = vadd.f32 %v1342, %v1631
      %v1694 = vadd.f32 %v1343, %v1634
      %v1695 = vadd.f32 %v1344, %v1639
      %v1696 = vadd.f32 %v1345, %v1642
      %v1697 = vadd.f32 %v1346, %v1647
      %v1698 = vadd.f32 %v1347, %v1650
      %v1699 = vadd.f32 %v1348, %v1655
      %v1700 = vadd.f32 %v1349, %v1658
      %v1701 = vadd.f32 %v1350, %v1663
      %v1702 = vadd.f32 %v1351, %v1666
      %v1703 = vadd.f32 %v1352, %v1671
      %v1704 = vadd.f32 %v1353, %v1674
      %s1705 = scalar_lea.vmem %s354, 32
      %v1706 = vld [vmem:[%s1705] sm:$0xf]
      %v1707 = vld [vmem:[%s1705 + $0x4] sm:$0xf]
      %v1708 = vld [vmem:[%s1705 + $0x8] sm:$0xf]
      %v1709 = vld [vmem:[%s1705 + $0xc] sm:$0xf]
      %v1710 = vld [vmem:[%s1705 + $0x10] sm:$0xf]
      %v1711 = vld [vmem:[%s1705 + $0x14] sm:$0xf]
      %v1712 = vld [vmem:[%s1705 + $0x18] sm:$0xf]
      %v1713 = vld [vmem:[%s1705 + $0x1c] sm:$0xf]
      %v1714 = vld [vmem:[%s1705 + $0x20] sm:$0xf]
      %v1715 = vld [vmem:[%s1705 + $0x24] sm:$0xf]
      %v1716 = vld [vmem:[%s1705 + $0x28] sm:$0xf]
      %v1717 = vld [vmem:[%s1705 + $0x2c] sm:$0xf]
      %v1718 = vld [vmem:[%s1705 + $0x30] sm:$0xf]
      %v1719 = vld [vmem:[%s1705 + $0x34] sm:$0xf]
      %v1720 = vld [vmem:[%s1705 + $0x38] sm:$0xf]
      %v1721 = vld [vmem:[%s1705 + $0x3c] sm:$0xf]
      %v1722 = vld [vmem:[%s1705 + $0x40] sm:$0xf]
      %v1723 = vld [vmem:[%s1705 + $0x44] sm:$0xf]
      %v1724 = vld [vmem:[%s1705 + $0x48] sm:$0xf]
      %v1725 = vld [vmem:[%s1705 + $0x4c] sm:$0xf]
      %v1726 = vld [vmem:[%s1705 + $0x50] sm:$0xf]
      %v1727 = vld [vmem:[%s1705 + $0x54] sm:$0xf]
      %v1728 = vld [vmem:[%s1705 + $0x58] sm:$0xf]
      %v1729 = vld [vmem:[%s1705 + $0x5c] sm:$0xf]
      %v1730 = vld [vmem:[%s1705 + $0x60] sm:$0xf]
      %v1731 = vld [vmem:[%s1705 + $0x64] sm:$0xf]
      %v1732 = vld [vmem:[%s1705 + $0x68] sm:$0xf]
      %v1733 = vld [vmem:[%s1705 + $0x6c] sm:$0xf]
      %s1734 = scalar_lea.vmem %s1, 256
      %v1735 = vld [vmem:[%s1734] sm:$0xf]
      %v1736 = vld [vmem:[%s1734 + $0x4] sm:$0xf]
      %v1737 = vld [vmem:[%s1734 + $0x8] sm:$0xf]
      %v1738 = vld [vmem:[%s1734 + $0xc] sm:$0xf]
      %v1739 = vld [vmem:[%s1734 + $0x10] sm:$0xf]
      %v1740 = vld [vmem:[%s1734 + $0x14] sm:$0xf]
      %v1741 = vld [vmem:[%s1734 + $0x18] sm:$0xf]
      %v1742 = vld [vmem:[%s1734 + $0x1c] sm:$0xf]
      %v1743 = vld [vmem:[%s1734 + $0x20] sm:$0xf]
      %v1744 = vld [vmem:[%s1734 + $0x24] sm:$0xf]
      %v1745 = vld [vmem:[%s1734 + $0x28] sm:$0xf]
      %v1746 = vld [vmem:[%s1734 + $0x2c] sm:$0xf]
      %v1747 = vld [vmem:[%s1734 + $0x30] sm:$0xf]
      %v1748 = vld [vmem:[%s1734 + $0x34] sm:$0xf]
      %v1749 = vld [vmem:[%s1734 + $0x38] sm:$0xf]
      %v1750 = vld [vmem:[%s1734 + $0x3c] sm:$0xf]
      %v1779 = vunpack.c.l.b16 %v1706
      %v1780 = vunpack.c.l.b16 %v1707
      %v1781 = vunpack.c.l.b16 %v1708
      %v1782 = vunpack.c.l.b16 %v1709
      %v1783 = vunpack.c.l.b16 %v1710
      %v1784 = vunpack.c.l.b16 %v1711
      %v1785 = vunpack.c.l.b16 %v1712
      %v1786 = vunpack.c.l.b16 %v1713
      %v1787 = vunpack.c.l.b16 %v1714
      %v1788 = vunpack.c.l.b16 %v1715
      %v1789 = vunpack.c.l.b16 %v1716
      %v1790 = vunpack.c.l.b16 %v1717
      %v1791 = vunpack.c.l.b16 %v1718
      %v1792 = vunpack.c.l.b16 %v1719
      %v1793 = vunpack.c.l.b16 %v1720
      %v1794 = vunpack.c.l.b16 %v1721
      %v1795 = vunpack.c.l.b16 %v1722
      %v1796 = vunpack.c.l.b16 %v1723
      %v1797 = vunpack.c.l.b16 %v1724
      %v1798 = vunpack.c.l.b16 %v1725
      %v1799 = vunpack.c.l.b16 %v1726
      %v1800 = vunpack.c.l.b16 %v1727
      %v1801 = vunpack.c.l.b16 %v1728
      %v1802 = vunpack.c.l.b16 %v1729
      %v1803 = vunpack.c.l.b16 %v1730
      %v1804 = vunpack.c.l.b16 %v1731
      %v1805 = vunpack.c.l.b16 %v1732
      %v1806 = vunpack.c.l.b16 %v1733
      %v1807 = vpack.c.b16 %v1780, %v1779
      %v1808 = vpack.c.b16 %v1782, %v1781
      %v1809 = vpack.c.b16 %v1784, %v1783
      %v1810 = vpack.c.b16 %v1786, %v1785
      %v1811 = vpack.c.b16 %v1788, %v1787
      %v1812 = vpack.c.b16 %v1790, %v1789
      %v1813 = vpack.c.b16 %v1792, %v1791
      %v1814 = vpack.c.b16 %v1794, %v1793
      %v1815 = vpack.c.b16 %v1796, %v1795
      %v1816 = vpack.c.b16 %v1798, %v1797
      %v1817 = vpack.c.b16 %v1800, %v1799
      %v1818 = vpack.c.b16 %v1802, %v1801
      %v1819 = vpack.c.b16 %v1804, %v1803
      %v1820 = vpack.c.b16 %v1806, %v1805
      %v1851 = vunpack.c.l.b16 %v1735
      %v1852 = vunpack.c.l.b16 %v1736
      %v1853 = vunpack.c.l.b16 %v1737
      %v1854 = vunpack.c.l.b16 %v1738
      %v1855 = vunpack.c.l.b16 %v1739
      %v1856 = vunpack.c.l.b16 %v1740
      %v1857 = vunpack.c.l.b16 %v1741
      %v1858 = vunpack.c.l.b16 %v1742
      %v1859 = vunpack.c.l.b16 %v1743
      %v1860 = vunpack.c.l.b16 %v1744
      %v1861 = vunpack.c.l.b16 %v1745
      %v1862 = vunpack.c.l.b16 %v1746
      %v1863 = vunpack.c.l.b16 %v1747
      %v1864 = vunpack.c.l.b16 %v1748
      %v1865 = vunpack.c.l.b16 %v1749
      %v1866 = vunpack.c.l.b16 %v1750
      %v1867 = vpack.c.b16 %v1852, %v1851
      %v1868 = vpack.c.b16 %v1854, %v1853
      %v1869 = vpack.c.b16 %v1856, %v1855
      %v1870 = vpack.c.b16 %v1858, %v1857
      %v1871 = vpack.c.b16 %v1860, %v1859
      %v1872 = vpack.c.b16 %v1862, %v1861
      %v1873 = vpack.c.b16 %v1864, %v1863
      %v1874 = vpack.c.b16 %v1866, %v1865
      %1883 = vmatprep.subr.bf16.mxu0 0
      %1884 = vmatpush1.bf16.msra.mxu0 %v1867
      %1885 = vmatprep.subr.bf16.mxu0 0
      %1886 = vmatpush1.bf16.msra.mxu0 %v1868
      %1887 = vmatprep.subr.bf16.mxu0 0
      %1888 = vmatpush1.bf16.msra.mxu0 %v1869
      %1889 = vmatprep.subr.bf16.mxu0 0
      %1890 = vmatpush1.bf16.msra.mxu0 %v1870
      %1891 = vmatprep.subr.bf16.mxu0 0
      %1892 = vmatpush1.bf16.msra.mxu0 %v1871
      %1893 = vmatprep.subr.bf16.mxu0 0
      %1894 = vmatpush1.bf16.msra.mxu0 %v1872
      %1895 = vmatprep.subr.bf16.mxu0 0
      %1896 = vmatpush1.bf16.msra.mxu0 %v1873
      %1897 = vmatprep.subr.bf16.mxu0 0
      %1898 = vmatpush1.bf16.msra.mxu0 %v1874
      %1899 = vmatprep.subr.bf16.mxu0 0
      %1900 = vmatpush1.bf16.msra.mxu0 0
      %1901 = vmatprep.subr.bf16.mxu0 0
      %1902 = vmatpush1.bf16.msra.mxu0 0
      %1903 = vmatprep.subr.bf16.mxu0 0
      %1904 = vmatpush1.bf16.msra.mxu0 0
      %1905 = vmatprep.subr.bf16.mxu0 0
      %1906 = vmatpush1.bf16.msra.mxu0 0
      %1907 = vmatprep.subr.bf16.mxu0 0
      %1908 = vmatpush1.bf16.msra.mxu0 0
      %1909 = vmatprep.subr.bf16.mxu0 0
      %1910 = vmatpush1.bf16.msra.mxu0 0
      %1911 = vmatprep.subr.bf16.mxu0 0
      %1912 = vmatpush1.bf16.msra.mxu0 0
      %1913 = vmatprep.subr.bf16.mxu0 0
      %1914 = vmatpush1.bf16.msra.mxu0 0
      %1915 = vmatprep.mubr.bf16.mxu0 0
      %1916 = vmatmul.mubr.bf16.gmra.mrb[0].mxu0 %v1807
      %v1917 = vpop.f32.mrb[0].mxu0
      %v1918 = vadd.f32 0.0, %v1917
      %v1919 = vpop.f32.mrb[0].mxu0
      %v1920 = vpop.f32.mrb[0].mxu0
      %v1921 = vadd.f32 0.0, %v1920
      %v1922 = vpop.f32.mrb[0].mxu0
      %1923 = vmatprep.mubr.bf16.mxu0 0
      %1924 = vmatmul.mubr.bf16.gmra.mrb[0].mxu0 %v1808
      %v1925 = vpop.f32.mrb[0].mxu0
      %v1926 = vadd.f32 0.0, %v1925
      %v1927 = vpop.f32.mrb[0].mxu0
      %v1928 = vpop.f32.mrb[0].mxu0
      %v1929 = vadd.f32 0.0, %v1928
      %v1930 = vpop.f32.mrb[0].mxu0
      %1931 = vmatprep.mubr.bf16.mxu0 0
      %1932 = vmatmul.mubr.bf16.gmra.mrb[0].mxu0 %v1809
      %v1933 = vpop.f32.mrb[0].mxu0
      %v1934 = vadd.f32 0.0, %v1933
      %v1935 = vpop.f32.mrb[0].mxu0
      %v1936 = vpop.f32.mrb[0].mxu0
      %v1937 = vadd.f32 0.0, %v1936
      %v1938 = vpop.f32.mrb[0].mxu0
      %1939 = vmatprep.mubr.bf16.mxu0 0
      %1940 = vmatmul.mubr.bf16.gmra.mrb[0].mxu0 %v1810
      %v1941 = vpop.f32.mrb[0].mxu0
      %v1942 = vadd.f32 0.0, %v1941
      %v1943 = vpop.f32.mrb[0].mxu0
      %v1944 = vpop.f32.mrb[0].mxu0
      %v1945 = vadd.f32 0.0, %v1944
      %v1946 = vpop.f32.mrb[0].mxu0
      %1947 = vmatprep.mubr.bf16.mxu0 0
      %1948 = vmatmul.mubr.bf16.gmra.mrb[0].mxu0 %v1811
      %v1949 = vpop.f32.mrb[0].mxu0
      %v1950 = vadd.f32 0.0, %v1949
      %v1951 = vpop.f32.mrb[0].mxu0
      %v1952 = vpop.f32.mrb[0].mxu0
      %v1953 = vadd.f32 0.0, %v1952
      %v1954 = vpop.f32.mrb[0].mxu0
      %1955 = vmatprep.mubr.bf16.mxu0 0
      %1956 = vmatmul.mubr.bf16.gmra.mrb[0].mxu0 %v1812
      %v1957 = vpop.f32.mrb[0].mxu0
      %v1958 = vadd.f32 0.0, %v1957
      %v1959 = vpop.f32.mrb[0].mxu0
      %v1960 = vpop.f32.mrb[0].mxu0
      %v1961 = vadd.f32 0.0, %v1960
      %v1962 = vpop.f32.mrb[0].mxu0
      %1963 = vmatprep.mubr.bf16.mxu0 0
      %1964 = vmatmul.mubr.bf16.gmra.mrb[0].mxu0 %v1813
      %v1965 = vpop.f32.mrb[0].mxu0
      %v1966 = vadd.f32 0.0, %v1965
      %v1967 = vpop.f32.mrb[0].mxu0
      %v1968 = vpop.f32.mrb[0].mxu0
      %v1969 = vadd.f32 0.0, %v1968
      %v1970 = vpop.f32.mrb[0].mxu0
      %1971 = vmatprep.mubr.bf16.mxu0 0
      %1972 = vmatmul.mubr.bf16.gmra.mrb[0].mxu0 %v1814
      %v1973 = vpop.f32.mrb[0].mxu0
      %v1974 = vadd.f32 0.0, %v1973
      %v1975 = vpop.f32.mrb[0].mxu0
      %v1976 = vpop.f32.mrb[0].mxu0
      %v1977 = vadd.f32 0.0, %v1976
      %v1978 = vpop.f32.mrb[0].mxu0
      %1979 = vmatprep.mubr.bf16.mxu0 0
      %1980 = vmatmul.mubr.bf16.gmra.mrb[0].mxu0 %v1815
      %v1981 = vpop.f32.mrb[0].mxu0
      %v1982 = vadd.f32 0.0, %v1981
      %v1983 = vpop.f32.mrb[0].mxu0
      %v1984 = vpop.f32.mrb[0].mxu0
      %v1985 = vadd.f32 0.0, %v1984
      %v1986 = vpop.f32.mrb[0].mxu0
      %1987 = vmatprep.mubr.bf16.mxu0 0
      %1988 = vmatmul.mubr.bf16.gmra.mrb[0].mxu0 %v1816
      %v1989 = vpop.f32.mrb[0].mxu0
      %v1990 = vadd.f32 0.0, %v1989
      %v1991 = vpop.f32.mrb[0].mxu0
      %v1992 = vpop.f32.mrb[0].mxu0
      %v1993 = vadd.f32 0.0, %v1992
      %v1994 = vpop.f32.mrb[0].mxu0
      %1995 = vmatprep.mubr.bf16.mxu0 0
      %1996 = vmatmul.mubr.bf16.gmra.mrb[0].mxu0 %v1817
      %v1997 = vpop.f32.mrb[0].mxu0
      %v1998 = vadd.f32 0.0, %v1997
      %v1999 = vpop.f32.mrb[0].mxu0
      %v2000 = vpop.f32.mrb[0].mxu0
      %v2001 = vadd.f32 0.0, %v2000
      %v2002 = vpop.f32.mrb[0].mxu0
      %2003 = vmatprep.mubr.bf16.mxu0 0
      %2004 = vmatmul.mubr.bf16.gmra.mrb[0].mxu0 %v1818
      %v2005 = vpop.f32.mrb[0].mxu0
      %v2006 = vadd.f32 0.0, %v2005
      %v2007 = vpop.f32.mrb[0].mxu0
      %v2008 = vpop.f32.mrb[0].mxu0
      %v2009 = vadd.f32 0.0, %v2008
      %v2010 = vpop.f32.mrb[0].mxu0
      %2011 = vmatprep.mubr.bf16.mxu0 0
      %2012 = vmatmul.mubr.bf16.gmra.mrb[0].mxu0 %v1819
      %v2013 = vpop.f32.mrb[0].mxu0
      %v2014 = vadd.f32 0.0, %v2013
      %v2015 = vpop.f32.mrb[0].mxu0
      %v2016 = vpop.f32.mrb[0].mxu0
      %v2017 = vadd.f32 0.0, %v2016
      %v2018 = vpop.f32.mrb[0].mxu0
      %2019 = vmatprep.mubr.bf16.mxu0 0
      %2020 = vmatmul.mubr.bf16.gmra.mrb[0].mxu0 %v1820
      %v2021 = vpop.f32.mrb[0].mxu0
      %v2022 = vadd.f32 0.0, %v2021
      %v2023 = vpop.f32.mrb[0].mxu0
      %v2024 = vpop.f32.mrb[0].mxu0
      %v2025 = vadd.f32 0.0, %v2024
      %v2026 = vpop.f32.mrb[0].mxu0
      %2027 = vdwg.mxu0
      %v2028 = vadd.f32 %v1677, %v1918
      %v2029 = vadd.f32 %v1678, %v1921
      %v2030 = vadd.f32 %v1679, %v1926
      %v2031 = vadd.f32 %v1680, %v1929
      %v2032 = vadd.f32 %v1681, %v1934
      %v2033 = vadd.f32 %v1682, %v1937
      %v2034 = vadd.f32 %v1683, %v1942
      %v2035 = vadd.f32 %v1684, %v1945
      %v2036 = vadd.f32 %v1685, %v1950
      %v2037 = vadd.f32 %v1686, %v1953
      %v2038 = vadd.f32 %v1687, %v1958
      %v2039 = vadd.f32 %v1688, %v1961
      %v2040 = vadd.f32 %v1689, %v1966
      %v2041 = vadd.f32 %v1690, %v1969
      %v2042 = vadd.f32 %v1691, %v1974
      %v2043 = vadd.f32 %v1692, %v1977
      %v2044 = vadd.f32 %v1693, %v1982
      %v2045 = vadd.f32 %v1694, %v1985
      %v2046 = vadd.f32 %v1695, %v1990
      %v2047 = vadd.f32 %v1696, %v1993
      %v2048 = vadd.f32 %v1697, %v1998
      %v2049 = vadd.f32 %v1698, %v2001
      %v2050 = vadd.f32 %v1699, %v2006
      %v2051 = vadd.f32 %v1700, %v2009
      %v2052 = vadd.f32 %v1701, %v2014
      %v2053 = vadd.f32 %v1702, %v2017
      %v2054 = vadd.f32 %v1703, %v2022
      %v2055 = vadd.f32 %v1704, %v2025
      %vm2082 = vcmask 1046528
      %v2083 = vrot.slane %v2028, 1
      %v2084 = vrot.slane %v2029, 1
      %v2085 = vsel %vm2082, %v2083, %v2084
      %v2086 = vrot.slane %v2030, 1
      %v2087 = vrot.slane %v2031, 1
      %v2088 = vsel %vm2082, %v2086, %v2087
      %v2089 = vrot.slane %v2032, 1
      %v2090 = vrot.slane %v2033, 1
      %v2091 = vsel %vm2082, %v2089, %v2090
      %v2092 = vrot.slane %v2034, 1
      %v2093 = vrot.slane %v2035, 1
      %v2094 = vsel %vm2082, %v2092, %v2093
      %v2095 = vrot.slane %v2036, 1
      %v2096 = vrot.slane %v2037, 1
      %v2097 = vsel %vm2082, %v2095, %v2096
      %v2098 = vrot.slane %v2038, 1
      %v2099 = vrot.slane %v2039, 1
      %v2100 = vsel %vm2082, %v2098, %v2099
      %v2101 = vrot.slane %v2040, 1
      %v2102 = vrot.slane %v2041, 1
      %v2103 = vsel %vm2082, %v2101, %v2102
      %v2104 = vrot.slane %v2042, 1
      %v2105 = vrot.slane %v2043, 1
      %v2106 = vsel %vm2082, %v2104, %v2105
      %v2107 = vrot.slane %v2044, 1
      %v2108 = vrot.slane %v2045, 1
      %v2109 = vsel %vm2082, %v2107, %v2108
      %v2110 = vrot.slane %v2046, 1
      %v2111 = vrot.slane %v2047, 1
      %v2112 = vsel %vm2082, %v2110, %v2111
      %v2113 = vrot.slane %v2048, 1
      %v2114 = vrot.slane %v2049, 1
      %v2115 = vsel %vm2082, %v2113, %v2114
      %v2116 = vrot.slane %v2050, 1
      %v2117 = vrot.slane %v2051, 1
      %v2118 = vsel %vm2082, %v2116, %v2117
      %v2119 = vrot.slane %v2052, 1
      %v2120 = vrot.slane %v2053, 1
      %v2121 = vsel %vm2082, %v2119, %v2120
      %v2148 = vmax.f32 %v2028, %v2085
      %v2149 = vmax.f32 %v2029, %v2084
      %v2150 = vmax.f32 %v2030, %v2088
      %v2151 = vmax.f32 %v2031, %v2087
      %v2152 = vmax.f32 %v2032, %v2091
      %v2153 = vmax.f32 %v2033, %v2090
      %v2154 = vmax.f32 %v2034, %v2094
      %v2155 = vmax.f32 %v2035, %v2093
      %v2156 = vmax.f32 %v2036, %v2097
      %v2157 = vmax.f32 %v2037, %v2096
      %v2158 = vmax.f32 %v2038, %v2100
      %v2159 = vmax.f32 %v2039, %v2099
      %v2160 = vmax.f32 %v2040, %v2103
      %v2161 = vmax.f32 %v2041, %v2102
      %v2162 = vmax.f32 %v2042, %v2106
      %v2163 = vmax.f32 %v2043, %v2105
      %v2164 = vmax.f32 %v2044, %v2109
      %v2165 = vmax.f32 %v2045, %v2108
      %v2166 = vmax.f32 %v2046, %v2112
      %v2167 = vmax.f32 %v2047, %v2111
      %v2168 = vmax.f32 %v2048, %v2115
      %v2169 = vmax.f32 %v2049, %v2114
      %v2170 = vmax.f32 %v2050, %v2118
      %v2171 = vmax.f32 %v2051, %v2117
      %v2172 = vmax.f32 %v2052, %v2121
      %v2173 = vmax.f32 %v2053, %v2120
      %v2176 = vrot.slane %v2054, 1
      %v2177 = vrot.slane %v2055, 1
      %v2178 = vsel %vm2082, %v2176, %v2177
      %v2181 = vmax.f32 %v2054, %v2178
      %v2182 = vmax.f32 %v2055, %v2177
      %v2183 = vmax.f32 %v2148, %v2150
      %v2184 = vmax.f32 %v2149, %v2151
      %v2185 = vmax.f32 %v2150, %v2152
      %v2186 = vmax.f32 %v2151, %v2153
      %v2187 = vmax.f32 %v2152, %v2154
      %v2188 = vmax.f32 %v2153, %v2155
      %v2189 = vmax.f32 %v2154, %v2156
      %v2190 = vmax.f32 %v2155, %v2157
      %v2191 = vmax.f32 %v2156, %v2158
      %v2192 = vmax.f32 %v2157, %v2159
      %v2193 = vmax.f32 %v2158, %v2160
      %v2194 = vmax.f32 %v2159, %v2161
      %v2195 = vmax.f32 %v2160, %v2162
      %v2196 = vmax.f32 %v2161, %v2163
      %v2197 = vmax.f32 %v2162, %v2164
      %v2198 = vmax.f32 %v2163, %v2165
      %v2199 = vmax.f32 %v2164, %v2166
      %v2200 = vmax.f32 %v2165, %v2167
      %v2201 = vmax.f32 %v2166, %v2168
      %v2202 = vmax.f32 %v2167, %v2169
      %v2203 = vmax.f32 %v2168, %v2170
      %v2204 = vmax.f32 %v2169, %v2171
      %v2205 = vmax.f32 %v2170, %v2172
      %v2206 = vmax.f32 %v2171, %v2173
      %v2207 = vmax.f32 %v2172, %v2181
      %v2208 = vmax.f32 %v2173, %v2182
      %vm2209 = vcmp.ge.f32.partialorder %v2183, 0.0
      %vm2210 = vcmp.ge.f32.partialorder %v2184, 0.0
      %vm2211 = vcmp.ge.f32.partialorder %v2185, 0.0
      %vm2212 = vcmp.ge.f32.partialorder %v2186, 0.0
      %vm2213 = vcmp.ge.f32.partialorder %v2187, 0.0
      %vm2214 = vcmp.ge.f32.partialorder %v2188, 0.0
      %vm2215 = vcmp.ge.f32.partialorder %v2189, 0.0
      %vm2216 = vcmp.ge.f32.partialorder %v2190, 0.0
      %vm2217 = vcmp.ge.f32.partialorder %v2191, 0.0
      %vm2218 = vcmp.ge.f32.partialorder %v2192, 0.0
      %vm2219 = vcmp.ge.f32.partialorder %v2193, 0.0
      %vm2220 = vcmp.ge.f32.partialorder %v2194, 0.0
      %vm2221 = vcmp.ge.f32.partialorder %v2195, 0.0
      %vm2222 = vcmp.ge.f32.partialorder %v2196, 0.0
      %vm2223 = vcmp.ge.f32.partialorder %v2197, 0.0
      %vm2224 = vcmp.ge.f32.partialorder %v2198, 0.0
      %vm2225 = vcmp.ge.f32.partialorder %v2199, 0.0
      %vm2226 = vcmp.ge.f32.partialorder %v2200, 0.0
      %vm2227 = vcmp.ge.f32.partialorder %v2201, 0.0
      %vm2228 = vcmp.ge.f32.partialorder %v2202, 0.0
      %vm2229 = vcmp.ge.f32.partialorder %v2203, 0.0
      %vm2230 = vcmp.ge.f32.partialorder %v2204, 0.0
      %vm2231 = vcmp.ge.f32.partialorder %v2205, 0.0
      %vm2232 = vcmp.ge.f32.partialorder %v2206, 0.0
      %vm2233 = vcmp.ge.f32.partialorder %v2207, 0.0
      %vm2234 = vcmp.ge.f32.partialorder %v2208, 0.0
      %v2235 = vmul.f32 %v2183, 0.01
      %v2236 = vmul.f32 %v2184, 0.01
      %v2237 = vmul.f32 %v2185, 0.01
      %v2238 = vmul.f32 %v2186, 0.01
      %v2239 = vmul.f32 %v2187, 0.01
      %v2240 = vmul.f32 %v2188, 0.01
      %v2241 = vmul.f32 %v2189, 0.01
      %v2242 = vmul.f32 %v2190, 0.01
      %v2243 = vmul.f32 %v2191, 0.01
      %v2244 = vmul.f32 %v2192, 0.01
      %v2245 = vmul.f32 %v2193, 0.01
      %v2246 = vmul.f32 %v2194, 0.01
      %v2247 = vmul.f32 %v2195, 0.01
      %v2248 = vmul.f32 %v2196, 0.01
      %v2249 = vmul.f32 %v2197, 0.01
      %v2250 = vmul.f32 %v2198, 0.01
      %v2251 = vmul.f32 %v2199, 0.01
      %v2252 = vmul.f32 %v2200, 0.01
      %v2253 = vmul.f32 %v2201, 0.01
      %v2254 = vmul.f32 %v2202, 0.01
      %v2255 = vmul.f32 %v2203, 0.01
      %v2256 = vmul.f32 %v2204, 0.01
      %v2257 = vmul.f32 %v2205, 0.01
      %v2258 = vmul.f32 %v2206, 0.01
      %v2259 = vmul.f32 %v2207, 0.01
      %v2260 = vmul.f32 %v2208, 0.01
      %v2261 = vsel %vm2209, %v2183, %v2235
      %v2262 = vsel %vm2210, %v2184, %v2236
      %v2263 = vsel %vm2211, %v2185, %v2237
      %v2264 = vsel %vm2212, %v2186, %v2238
      %v2265 = vsel %vm2213, %v2187, %v2239
      %v2266 = vsel %vm2214, %v2188, %v2240
      %v2267 = vsel %vm2215, %v2189, %v2241
      %v2268 = vsel %vm2216, %v2190, %v2242
      %v2269 = vsel %vm2217, %v2191, %v2243
      %v2270 = vsel %vm2218, %v2192, %v2244
      %v2271 = vsel %vm2219, %v2193, %v2245
      %v2272 = vsel %vm2220, %v2194, %v2246
      %v2273 = vsel %vm2221, %v2195, %v2247
      %v2274 = vsel %vm2222, %v2196, %v2248
      %v2275 = vsel %vm2223, %v2197, %v2249
      %v2276 = vsel %vm2224, %v2198, %v2250
      %v2277 = vsel %vm2225, %v2199, %v2251
      %v2278 = vsel %vm2226, %v2200, %v2252
      %v2279 = vsel %vm2227, %v2201, %v2253
      %v2280 = vsel %vm2228, %v2202, %v2254
      %v2281 = vsel %vm2229, %v2203, %v2255
      %v2282 = vsel %vm2230, %v2204, %v2256
      %v2283 = vsel %vm2231, %v2205, %v2257
      %v2284 = vsel %vm2232, %v2206, %v2258
      %v2285 = vsel %vm2233, %v2207, %v2259
      %v2286 = vsel %vm2234, %v2208, %v2260
      %vm2287 = vcmask 523264
      %2288 = vst.msk [vmem:[#allocation2] sm:$0xff] %vm2287, 0.0
      %2289 = vst.msk [vmem:[#allocation2 + $0x8] sm:$0xff] %vm2287, 0.0
      %vm2290 = vcmask 519168
      %2291 = vst.msk [vmem:[#allocation2 + $0x10] sm:$0xf] %vm2290, 0.0
      %s2292 = scalar_lea.vmem [#allocation2], 336
      %2293 = vst.msk [vmem:[%s2292] sm:$0xff] %vm2287, 0.0
      %2294 = vst.msk [vmem:[%s2292 + $0x8] sm:$0xff] %vm2287, 0.0
      %2295 = vst.msk [vmem:[%s2292 + $0x10] sm:$0xf] %vm2290, 0.0
      %vm2296 = vcmask 516096
      %2297 = vst.msk [vmem:[#allocation2] sm:$0x1] %vm2296, 0.0
      %2298 = vst.msk [vmem:[#allocation2 + $0x18] sm:$0x1] %vm2296, 0.0
      %2299 = vst.msk [vmem:[#allocation2 + $0x30] sm:$0x1] %vm2296, 0.0
      %2300 = vst.msk [vmem:[#allocation2 + $0x48] sm:$0x1] %vm2296, 0.0
      %2301 = vst.msk [vmem:[#allocation2 + $0x60] sm:$0x1] %vm2296, 0.0
      %2302 = vst.msk [vmem:[#allocation2 + $0x78] sm:$0x1] %vm2296, 0.0
      %2303 = vst.msk [vmem:[#allocation2 + $0x90] sm:$0x1] %vm2296, 0.0
      %2304 = vst.msk [vmem:[#allocation2 + $0xa8] sm:$0x1] %vm2296, 0.0
      %2305 = vst.msk [vmem:[#allocation2 + $0xc0] sm:$0x1] %vm2296, 0.0
      %2306 = vst.msk [vmem:[#allocation2 + $0xd8] sm:$0x1] %vm2296, 0.0
      %2307 = vst.msk [vmem:[#allocation2 + $0xf0] sm:$0x1] %vm2296, 0.0
      %2308 = vst.msk [vmem:[#allocation2 + $0x108] sm:$0x1] %vm2296, 0.0
      %2309 = vst.msk [vmem:[#allocation2 + $0x120] sm:$0x1] %vm2296, 0.0
      %2310 = vst.msk [vmem:[#allocation2 + $0x138] sm:$0x1] %vm2296, 0.0
      %2311 = vst.msk [vmem:[#allocation2 + $0x150] sm:$0x1] %vm2296, 0.0
      %vm2312 = vcmask 521216
      %2313 = vst.msk [vmem:[#allocation2 + $0xe] sm:$0x3f] %vm2312, 0.0
      %2314 = vst.msk [vmem:[#allocation2 + $0x26] sm:$0x3f] %vm2312, 0.0
      %2315 = vst.msk [vmem:[#allocation2 + $0x3e] sm:$0x3f] %vm2312, 0.0
      %2316 = vst.msk [vmem:[#allocation2 + $0x56] sm:$0x3f] %vm2312, 0.0
      %2317 = vst.msk [vmem:[#allocation2 + $0x6e] sm:$0x3f] %vm2312, 0.0
      %2318 = vst.msk [vmem:[#allocation2 + $0x86] sm:$0x3f] %vm2312, 0.0
      %2319 = vst.msk [vmem:[#allocation2 + $0x9e] sm:$0x3f] %vm2312, 0.0
      %2320 = vst.msk [vmem:[#allocation2 + $0xb6] sm:$0x3f] %vm2312, 0.0
      %2321 = vst.msk [vmem:[#allocation2 + $0xce] sm:$0x3f] %vm2312, 0.0
      %2322 = vst.msk [vmem:[#allocation2 + $0xe6] sm:$0x3f] %vm2312, 0.0
      %2323 = vst.msk [vmem:[#allocation2 + $0xfe] sm:$0x3f] %vm2312, 0.0
      %2324 = vst.msk [vmem:[#allocation2 + $0x116] sm:$0x3f] %vm2312, 0.0
      %2325 = vst.msk [vmem:[#allocation2 + $0x12e] sm:$0x3f] %vm2312, 0.0
      %2326 = vst.msk [vmem:[#allocation2 + $0x146] sm:$0x3f] %vm2312, 0.0
      %2327 = vst.msk [vmem:[#allocation2 + $0x15e] sm:$0x3f] %vm2312, 0.0
      %s2328 = scalar_lea.vmem [#allocation2], 24
      %2329 = vst.msk [vmem:[%s2328 + $0x1] sm:$0xff] %vm2287, %v2261
      %vm2330 = vcmask 520192
      %2331 = vst.msk [vmem:[%s2328 + $0x9] sm:$0x1f] %vm2330, %v2262
      %2332 = vst.msk [vmem:[%s2328 + $0x19] sm:$0xff] %vm2287, %v2263
      %2333 = vst.msk [vmem:[%s2328 + $0x21] sm:$0x1f] %vm2330, %v2264
      %2334 = vst.msk [vmem:[%s2328 + $0x31] sm:$0xff] %vm2287, %v2265
      %2335 = vst.msk [vmem:[%s2328 + $0x39] sm:$0x1f] %vm2330, %v2266
      %2336 = vst.msk [vmem:[%s2328 + $0x49] sm:$0xff] %vm2287, %v2267
      %2337 = vst.msk [vmem:[%s2328 + $0x51] sm:$0x1f] %vm2330, %v2268
      %2338 = vst.msk [vmem:[%s2328 + $0x61] sm:$0xff] %vm2287, %v2269
      %2339 = vst.msk [vmem:[%s2328 + $0x69] sm:$0x1f] %vm2330, %v2270
      %2340 = vst.msk [vmem:[%s2328 + $0x79] sm:$0xff] %vm2287, %v2271
      %2341 = vst.msk [vmem:[%s2328 + $0x81] sm:$0x1f] %vm2330, %v2272
      %2342 = vst.msk [vmem:[%s2328 + $0x91] sm:$0xff] %vm2287, %v2273
      %2343 = vst.msk [vmem:[%s2328 + $0x99] sm:$0x1f] %vm2330, %v2274
      %2344 = vst.msk [vmem:[%s2328 + $0xa9] sm:$0xff] %vm2287, %v2275
      %2345 = vst.msk [vmem:[%s2328 + $0xb1] sm:$0x1f] %vm2330, %v2276
      %2346 = vst.msk [vmem:[%s2328 + $0xc1] sm:$0xff] %vm2287, %v2277
      %2347 = vst.msk [vmem:[%s2328 + $0xc9] sm:$0x1f] %vm2330, %v2278
      %2348 = vst.msk [vmem:[%s2328 + $0xd9] sm:$0xff] %vm2287, %v2279
      %2349 = vst.msk [vmem:[%s2328 + $0xe1] sm:$0x1f] %vm2330, %v2280
      %2350 = vst.msk [vmem:[%s2328 + $0xf1] sm:$0xff] %vm2287, %v2281
      %2351 = vst.msk [vmem:[%s2328 + $0xf9] sm:$0x1f] %vm2330, %v2282
      %2352 = vst.msk [vmem:[%s2328 + $0x109] sm:$0xff] %vm2287, %v2283
      %2353 = vst.msk [vmem:[%s2328 + $0x111] sm:$0x1f] %vm2330, %v2284
      %2354 = vst.msk [vmem:[%s2328 + $0x121] sm:$0xff] %vm2287, %v2285
      %2355 = vst.msk [vmem:[%s2328 + $0x129] sm:$0x1f] %vm2330, %v2286
      %v2356 = vld [vmem:[#allocation2] sm:$0xff]
      %v2357 = vld [vmem:[#allocation2 + $0x8] sm:$0xff]
      %v2358 = vld [vmem:[#allocation2 + $0x18] sm:$0xff]
      %v2359 = vld [vmem:[#allocation2 + $0x20] sm:$0xff]
      %v2360 = vld [vmem:[#allocation2 + $0x30] sm:$0xff]
      %v2361 = vld [vmem:[#allocation2 + $0x38] sm:$0xff]
      %v2362 = vld [vmem:[#allocation2 + $0x48] sm:$0xff]
      %v2363 = vld [vmem:[#allocation2 + $0x50] sm:$0xff]
      %v2364 = vld [vmem:[#allocation2 + $0x60] sm:$0xff]
      %v2365 = vld [vmem:[#allocation2 + $0x68] sm:$0xff]
      %v2366 = vld [vmem:[#allocation2 + $0x78] sm:$0xff]
      %v2367 = vld [vmem:[#allocation2 + $0x80] sm:$0xff]
      %v2368 = vld [vmem:[#allocation2 + $0x90] sm:$0xff]
      %v2369 = vld [vmem:[#allocation2 + $0x98] sm:$0xff]
      %v2370 = vld [vmem:[#allocation2 + $0xa8] sm:$0xff]
      %v2371 = vld [vmem:[#allocation2 + $0xb0] sm:$0xff]
      %v2372 = vld [vmem:[#allocation2 + $0xc0] sm:$0xff]
      %v2373 = vld [vmem:[#allocation2 + $0xc8] sm:$0xff]
      %v2374 = vld [vmem:[#allocation2 + $0xd8] sm:$0xff]
      %v2375 = vld [vmem:[#allocation2 + $0xe0] sm:$0xff]
      %v2376 = vld [vmem:[#allocation2 + $0xf0] sm:$0xff]
      %v2377 = vld [vmem:[#allocation2 + $0xf8] sm:$0xff]
      %v2378 = vld [vmem:[#allocation2 + $0x108] sm:$0xff]
      %v2379 = vld [vmem:[#allocation2 + $0x110] sm:$0xff]
      %v2380 = vld [vmem:[#allocation2 + $0x120] sm:$0xff]
      %v2381 = vld [vmem:[#allocation2 + $0x128] sm:$0xff]
      %v2382 = vld [vmem:[#allocation2 + $0x138] sm:$0xff]
      %v2383 = vld [vmem:[#allocation2 + $0x140] sm:$0xff]
      %v2384 = vld [vmem:[#allocation2 + $0x150] sm:$0xff]
      %v2385 = vld [vmem:[#allocation2 + $0x158] sm:$0xff]
      %v2386 = vpack.c.bf16 %v2357, %v2356
      %v2387 = vpack.c.bf16 %v2359, %v2358
      %v2388 = vpack.c.bf16 %v2361, %v2360
      %v2389 = vpack.c.bf16 %v2363, %v2362
      %v2390 = vpack.c.bf16 %v2365, %v2364
      %v2391 = vpack.c.bf16 %v2367, %v2366
      %v2392 = vpack.c.bf16 %v2369, %v2368
      %v2393 = vpack.c.bf16 %v2371, %v2370
      %v2394 = vpack.c.bf16 %v2373, %v2372
      %v2395 = vpack.c.bf16 %v2375, %v2374
      %v2396 = vpack.c.bf16 %v2377, %v2376
      %v2397 = vpack.c.bf16 %v2379, %v2378
      %v2398 = vpack.c.bf16 %v2381, %v2380
      %v2399 = vpack.c.bf16 %v2383, %v2382
      %v2400 = vpack.c.bf16 %v2385, %v2384
      %2401 = vst.msk [vmem:[#allocation3] sm:$0xff] %vm2287, %v2386
      %2402 = vst.msk [vmem:[#allocation3 + $0x18] sm:$0xff] %vm2287, %v2387
      %2403 = vst.msk [vmem:[#allocation3 + $0x30] sm:$0xff] %vm2287, %v2388
      %2404 = vst.msk [vmem:[#allocation3 + $0x48] sm:$0xff] %vm2287, %v2389
      %2405 = vst.msk [vmem:[#allocation3 + $0x60] sm:$0xff] %vm2287, %v2390
      %2406 = vst.msk [vmem:[#allocation3 + $0x78] sm:$0xff] %vm2287, %v2391
      %2407 = vst.msk [vmem:[#allocation3 + $0x90] sm:$0xff] %vm2287, %v2392
      %2408 = vst.msk [vmem:[#allocation3 + $0xa8] sm:$0xff] %vm2287, %v2393
      %2409 = vst.msk [vmem:[#allocation3 + $0xc0] sm:$0xff] %vm2287, %v2394
      %2410 = vst.msk [vmem:[#allocation3 + $0xd8] sm:$0xff] %vm2287, %v2395
      %2411 = vst.msk [vmem:[#allocation3 + $0xf0] sm:$0xff] %vm2287, %v2396
      %2412 = vst.msk [vmem:[#allocation3 + $0x108] sm:$0xff] %vm2287, %v2397
      %2413 = vst.msk [vmem:[#allocation3 + $0x120] sm:$0xff] %vm2287, %v2398
      %2414 = vst.msk [vmem:[#allocation3 + $0x138] sm:$0xff] %vm2287, %v2399
      %2415 = vst.msk [vmem:[#allocation3 + $0x150] sm:$0xff] %vm2287, %v2400
      %v2416 = vld [vmem:[#allocation2 + $0x1] sm:$0xff]
      %v2417 = vld [vmem:[#allocation2 + $0x9] sm:$0xff]
      %v2418 = vld [vmem:[#allocation2 + $0x19] sm:$0xff]
      %v2419 = vld [vmem:[#allocation2 + $0x21] sm:$0xff]
      %v2420 = vld [vmem:[#allocation2 + $0x31] sm:$0xff]
      %v2421 = vld [vmem:[#allocation2 + $0x39] sm:$0xff]
      %v2422 = vld [vmem:[#allocation2 + $0x49] sm:$0xff]
      %v2423 = vld [vmem:[#allocation2 + $0x51] sm:$0xff]
      %v2424 = vld [vmem:[#allocation2 + $0x61] sm:$0xff]
      %v2425 = vld [vmem:[#allocation2 + $0x69] sm:$0xff]
      %v2426 = vld [vmem:[#allocation2 + $0x79] sm:$0xff]
      %v2427 = vld [vmem:[#allocation2 + $0x81] sm:$0xff]
      %v2428 = vld [vmem:[#allocation2 + $0x91] sm:$0xff]
      %v2429 = vld [vmem:[#allocation2 + $0x99] sm:$0xff]
      %v2430 = vld [vmem:[#allocation2 + $0xa9] sm:$0xff]
      %v2431 = vld [vmem:[#allocation2 + $0xb1] sm:$0xff]
      %v2432 = vld [vmem:[#allocation2 + $0xc1] sm:$0xff]
      %v2433 = vld [vmem:[#allocation2 + $0xc9] sm:$0xff]
      %v2434 = vld [vmem:[#allocation2 + $0xd9] sm:$0xff]
      %v2435 = vld [vmem:[#allocation2 + $0xe1] sm:$0xff]
      %v2436 = vld [vmem:[#allocation2 + $0xf1] sm:$0xff]
      %v2437 = vld [vmem:[#allocation2 + $0xf9] sm:$0xff]
      %v2438 = vld [vmem:[#allocation2 + $0x109] sm:$0xff]
      %v2439 = vld [vmem:[#allocation2 + $0x111] sm:$0xff]
      %v2440 = vld [vmem:[#allocation2 + $0x121] sm:$0xff]
      %v2441 = vld [vmem:[#allocation2 + $0x129] sm:$0xff]
      %v2442 = vld [vmem:[#allocation2 + $0x139] sm:$0xff]
      %v2443 = vld [vmem:[#allocation2 + $0x141] sm:$0xff]
      %v2444 = vld [vmem:[#allocation2 + $0x151] sm:$0xff]
      %v2445 = vld [vmem:[#allocation2 + $0x159] sm:$0xff]
      %v2446 = vpack.c.bf16 %v2417, %v2416
      %v2447 = vpack.c.bf16 %v2419, %v2418
      %v2448 = vpack.c.bf16 %v2421, %v2420
      %v2449 = vpack.c.bf16 %v2423, %v2422
      %v2450 = vpack.c.bf16 %v2425, %v2424
      %v2451 = vpack.c.bf16 %v2427, %v2426
      %v2452 = vpack.c.bf16 %v2429, %v2428
      %v2453 = vpack.c.bf16 %v2431, %v2430
      %v2454 = vpack.c.bf16 %v2433, %v2432
      %v2455 = vpack.c.bf16 %v2435, %v2434
      %v2456 = vpack.c.bf16 %v2437, %v2436
      %v2457 = vpack.c.bf16 %v2439, %v2438
      %v2458 = vpack.c.bf16 %v2441, %v2440
      %v2459 = vpack.c.bf16 %v2443, %v2442
      %v2460 = vpack.c.bf16 %v2445, %v2444
      %2476 = vrot.lane.b32.xlu0 %v2446, 64
      %v2477 = vpop.permute.xlu0 %2476
      %2478 = vrot.lane.b32.xlu0 %v2447, 64
      %v2479 = vpop.permute.xlu0 %2478
      %2480 = vrot.lane.b32.xlu0 %v2448, 64
      %v2481 = vpop.permute.xlu0 %2480
      %2482 = vrot.lane.b32.xlu0 %v2449, 64
      %v2483 = vpop.permute.xlu0 %2482
      %2484 = vrot.lane.b32.xlu0 %v2450, 64
      %v2485 = vpop.permute.xlu0 %2484
      %2486 = vrot.lane.b32.xlu0 %v2451, 64
      %v2487 = vpop.permute.xlu0 %2486
      %2488 = vrot.lane.b32.xlu0 %v2452, 64
      %v2489 = vpop.permute.xlu0 %2488
      %2490 = vrot.lane.b32.xlu0 %v2453, 64
      %v2491 = vpop.permute.xlu0 %2490
      %2492 = vrot.lane.b32.xlu0 %v2454, 64
      %v2493 = vpop.permute.xlu0 %2492
      %2494 = vrot.lane.b32.xlu0 %v2455, 64
      %v2495 = vpop.permute.xlu0 %2494
      %2496 = vrot.lane.b32.xlu0 %v2456, 64
      %v2497 = vpop.permute.xlu0 %2496
      %2498 = vrot.lane.b32.xlu0 %v2457, 64
      %v2499 = vpop.permute.xlu0 %2498
      %2500 = vrot.lane.b32.xlu0 %v2458, 64
      %v2501 = vpop.permute.xlu0 %2500
      %2502 = vrot.lane.b32.xlu0 %v2459, 64
      %v2503 = vpop.permute.xlu0 %2502
      %2504 = vrot.lane.b32.xlu0 %v2460, 64
      %v2505 = vpop.permute.xlu0 %2504
      %vm2521 = vcmask 1048064
      %2522 = vst.msk [vmem:[#allocation3] sm:$0xff] %vm2521, %v2477
      %2523 = vst.msk [vmem:[#allocation3 + $0x18] sm:$0xff] %vm2521, %v2479
      %2524 = vst.msk [vmem:[#allocation3 + $0x30] sm:$0xff] %vm2521, %v2481
      %2525 = vst.msk [vmem:[#allocation3 + $0x48] sm:$0xff] %vm2521, %v2483
      %2526 = vst.msk [vmem:[#allocation3 + $0x60] sm:$0xff] %vm2521, %v2485
      %2527 = vst.msk [vmem:[#allocation3 + $0x78] sm:$0xff] %vm2521, %v2487
      %2528 = vst.msk [vmem:[#allocation3 + $0x90] sm:$0xff] %vm2521, %v2489
      %2529 = vst.msk [vmem:[#allocation3 + $0xa8] sm:$0xff] %vm2521, %v2491
      %2530 = vst.msk [vmem:[#allocation3 + $0xc0] sm:$0xff] %vm2521, %v2493
      %2531 = vst.msk [vmem:[#allocation3 + $0xd8] sm:$0xff] %vm2521, %v2495
      %2532 = vst.msk [vmem:[#allocation3 + $0xf0] sm:$0xff] %vm2521, %v2497
      %2533 = vst.msk [vmem:[#allocation3 + $0x108] sm:$0xff] %vm2521, %v2499
      %2534 = vst.msk [vmem:[#allocation3 + $0x120] sm:$0xff] %vm2521, %v2501
      %2535 = vst.msk [vmem:[#allocation3 + $0x138] sm:$0xff] %vm2521, %v2503
      %2536 = vst.msk [vmem:[#allocation3 + $0x150] sm:$0xff] %vm2521, %v2505
      %v2537 = vld [vmem:[#allocation2 + $0x2] sm:$0xff]
      %v2538 = vld [vmem:[#allocation2 + $0xa] sm:$0xff]
      %v2539 = vld [vmem:[#allocation2 + $0x1a] sm:$0xff]
      %v2540 = vld [vmem:[#allocation2 + $0x22] sm:$0xff]
      %v2541 = vld [vmem:[#allocation2 + $0x32] sm:$0xff]
      %v2542 = vld [vmem:[#allocation2 + $0x3a] sm:$0xff]
      %v2543 = vld [vmem:[#allocation2 + $0x4a] sm:$0xff]
      %v2544 = vld [vmem:[#allocation2 + $0x52] sm:$0xff]
      %v2545 = vld [vmem:[#allocation2 + $0x62] sm:$0xff]
      %v2546 = vld [vmem:[#allocation2 + $0x6a] sm:$0xff]
      %v2547 = vld [vmem:[#allocation2 + $0x7a] sm:$0xff]
      %v2548 = vld [vmem:[#allocation2 + $0x82] sm:$0xff]
      %v2549 = vld [vmem:[#allocation2 + $0x92] sm:$0xff]
      %v2550 = vld [vmem:[#allocation2 + $0x9a] sm:$0xff]
      %v2551 = vld [vmem:[#allocation2 + $0xaa] sm:$0xff]
      %v2552 = vld [vmem:[#allocation2 + $0xb2] sm:$0xff]
      %v2553 = vld [vmem:[#allocation2 + $0xc2] sm:$0xff]
      %v2554 = vld [vmem:[#allocation2 + $0xca] sm:$0xff]
      %v2555 = vld [vmem:[#allocation2 + $0xda] sm:$0xff]
      %v2556 = vld [vmem:[#allocation2 + $0xe2] sm:$0xff]
      %v2557 = vld [vmem:[#allocation2 + $0xf2] sm:$0xff]
      %v2558 = vld [vmem:[#allocation2 + $0xfa] sm:$0xff]
      %v2559 = vld [vmem:[#allocation2 + $0x10a] sm:$0xff]
      %v2560 = vld [vmem:[#allocation2 + $0x112] sm:$0xff]
      %v2561 = vld [vmem:[#allocation2 + $0x122] sm:$0xff]
      %v2562 = vld [vmem:[#allocation2 + $0x12a] sm:$0xff]
      %v2563 = vld [vmem:[#allocation2 + $0x13a] sm:$0xff]
      %v2564 = vld [vmem:[#allocation2 + $0x142] sm:$0xff]
      %v2565 = vld [vmem:[#allocation2 + $0x152] sm:$0xff]
      %v2566 = vld [vmem:[#allocation2 + $0x15a] sm:$0xff]
      %v2567 = vpack.c.bf16 %v2538, %v2537
      %v2568 = vpack.c.bf16 %v2540, %v2539
      %v2569 = vpack.c.bf16 %v2542, %v2541
      %v2570 = vpack.c.bf16 %v2544, %v2543
      %v2571 = vpack.c.bf16 %v2546, %v2545
      %v2572 = vpack.c.bf16 %v2548, %v2547
      %v2573 = vpack.c.bf16 %v2550, %v2549
      %v2574 = vpack.c.bf16 %v2552, %v2551
      %v2575 = vpack.c.bf16 %v2554, %v2553
      %v2576 = vpack.c.bf16 %v2556, %v2555
      %v2577 = vpack.c.bf16 %v2558, %v2557
      %v2578 = vpack.c.bf16 %v2560, %v2559
      %v2579 = vpack.c.bf16 %v2562, %v2561
      %v2580 = vpack.c.bf16 %v2564, %v2563
      %v2581 = vpack.c.bf16 %v2566, %v2565
      %2582 = vst.msk [vmem:[#allocation3 + $0x8] sm:$0xff] %vm2287, %v2567
      %2583 = vst.msk [vmem:[#allocation3 + $0x20] sm:$0xff] %vm2287, %v2568
      %2584 = vst.msk [vmem:[#allocation3 + $0x38] sm:$0xff] %vm2287, %v2569
      %2585 = vst.msk [vmem:[#allocation3 + $0x50] sm:$0xff] %vm2287, %v2570
      %2586 = vst.msk [vmem:[#allocation3 + $0x68] sm:$0xff] %vm2287, %v2571
      %2587 = vst.msk [vmem:[#allocation3 + $0x80] sm:$0xff] %vm2287, %v2572
      %2588 = vst.msk [vmem:[#allocation3 + $0x98] sm:$0xff] %vm2287, %v2573
      %2589 = vst.msk [vmem:[#allocation3 + $0xb0] sm:$0xff] %vm2287, %v2574
      %2590 = vst.msk [vmem:[#allocation3 + $0xc8] sm:$0xff] %vm2287, %v2575
      %2591 = vst.msk [vmem:[#allocation3 + $0xe0] sm:$0xff] %vm2287, %v2576
      %2592 = vst.msk [vmem:[#allocation3 + $0xf8] sm:$0xff] %vm2287, %v2577
      %2593 = vst.msk [vmem:[#allocation3 + $0x110] sm:$0xff] %vm2287, %v2578
      %2594 = vst.msk [vmem:[#allocation3 + $0x128] sm:$0xff] %vm2287, %v2579
      %2595 = vst.msk [vmem:[#allocation3 + $0x140] sm:$0xff] %vm2287, %v2580
      %2596 = vst.msk [vmem:[#allocation3 + $0x158] sm:$0xff] %vm2287, %v2581
      %v2597 = vld [vmem:[#allocation2 + $0x3] sm:$0xff]
      %v2598 = vld [vmem:[#allocation2 + $0xb] sm:$0xff]
      %v2599 = vld [vmem:[#allocation2 + $0x1b] sm:$0xff]
      %v2600 = vld [vmem:[#allocation2 + $0x23] sm:$0xff]
      %v2601 = vld [vmem:[#allocation2 + $0x33] sm:$0xff]
      %v2602 = vld [vmem:[#allocation2 + $0x3b] sm:$0xff]
      %v2603 = vld [vmem:[#allocation2 + $0x4b] sm:$0xff]
      %v2604 = vld [vmem:[#allocation2 + $0x53] sm:$0xff]
      %v2605 = vld [vmem:[#allocation2 + $0x63] sm:$0xff]
      %v2606 = vld [vmem:[#allocation2 + $0x6b] sm:$0xff]
      %v2607 = vld [vmem:[#allocation2 + $0x7b] sm:$0xff]
      %v2608 = vld [vmem:[#allocation2 + $0x83] sm:$0xff]
      %v2609 = vld [vmem:[#allocation2 + $0x93] sm:$0xff]
      %v2610 = vld [vmem:[#allocation2 + $0x9b] sm:$0xff]
      %v2611 = vld [vmem:[#allocation2 + $0xab] sm:$0xff]
      %v2612 = vld [vmem:[#allocation2 + $0xb3] sm:$0xff]
      %v2613 = vld [vmem:[#allocation2 + $0xc3] sm:$0xff]
      %v2614 = vld [vmem:[#allocation2 + $0xcb] sm:$0xff]
      %v2615 = vld [vmem:[#allocation2 + $0xdb] sm:$0xff]
      %v2616 = vld [vmem:[#allocation2 + $0xe3] sm:$0xff]
      %v2617 = vld [vmem:[#allocation2 + $0xf3] sm:$0xff]
      %v2618 = vld [vmem:[#allocation2 + $0xfb] sm:$0xff]
      %v2619 = vld [vmem:[#allocation2 + $0x10b] sm:$0xff]
      %v2620 = vld [vmem:[#allocation2 + $0x113] sm:$0xff]
      %v2621 = vld [vmem:[#allocation2 + $0x123] sm:$0xff]
      %v2622 = vld [vmem:[#allocation2 + $0x12b] sm:$0xff]
      %v2623 = vld [vmem:[#allocation2 + $0x13b] sm:$0xff]
      %v2624 = vld [vmem:[#allocation2 + $0x143] sm:$0xff]
      %v2625 = vld [vmem:[#allocation2 + $0x153] sm:$0xff]
      %v2626 = vld [vmem:[#allocation2 + $0x15b] sm:$0xff]
      %v2627 = vpack.c.bf16 %v2598, %v2597
      %v2628 = vpack.c.bf16 %v2600, %v2599
      %v2629 = vpack.c.bf16 %v2602, %v2601
      %v2630 = vpack.c.bf16 %v2604, %v2603
      %v2631 = vpack.c.bf16 %v2606, %v2605
      %v2632 = vpack.c.bf16 %v2608, %v2607
      %v2633 = vpack.c.bf16 %v2610, %v2609
      %v2634 = vpack.c.bf16 %v2612, %v2611
      %v2635 = vpack.c.bf16 %v2614, %v2613
      %v2636 = vpack.c.bf16 %v2616, %v2615
      %v2637 = vpack.c.bf16 %v2618, %v2617
      %v2638 = vpack.c.bf16 %v2620, %v2619
      %v2639 = vpack.c.bf16 %v2622, %v2621
      %v2640 = vpack.c.bf16 %v2624, %v2623
      %v2641 = vpack.c.bf16 %v2626, %v2625
      %2657 = vrot.lane.b32.xlu0 %v2627, 64
      %v2658 = vpop.permute.xlu0 %2657
      %2659 = vrot.lane.b32.xlu0 %v2628, 64
      %v2660 = vpop.permute.xlu0 %2659
      %2661 = vrot.lane.b32.xlu0 %v2629, 64
      %v2662 = vpop.permute.xlu0 %2661
      %2663 = vrot.lane.b32.xlu0 %v2630, 64
      %v2664 = vpop.permute.xlu0 %2663
      %2665 = vrot.lane.b32.xlu0 %v2631, 64
      %v2666 = vpop.permute.xlu0 %2665
      %2667 = vrot.lane.b32.xlu0 %v2632, 64
      %v2668 = vpop.permute.xlu0 %2667
      %2669 = vrot.lane.b32.xlu0 %v2633, 64
      %v2670 = vpop.permute.xlu0 %2669
      %2671 = vrot.lane.b32.xlu0 %v2634, 64
      %v2672 = vpop.permute.xlu0 %2671
      %2673 = vrot.lane.b32.xlu0 %v2635, 64
      %v2674 = vpop.permute.xlu0 %2673
      %2675 = vrot.lane.b32.xlu0 %v2636, 64
      %v2676 = vpop.permute.xlu0 %2675
      %2677 = vrot.lane.b32.xlu0 %v2637, 64
      %v2678 = vpop.permute.xlu0 %2677
      %2679 = vrot.lane.b32.xlu0 %v2638, 64
      %v2680 = vpop.permute.xlu0 %2679
      %2681 = vrot.lane.b32.xlu0 %v2639, 64
      %v2682 = vpop.permute.xlu0 %2681
      %2683 = vrot.lane.b32.xlu0 %v2640, 64
      %v2684 = vpop.permute.xlu0 %2683
      %2685 = vrot.lane.b32.xlu0 %v2641, 64
      %v2686 = vpop.permute.xlu0 %2685
      %2702 = vst.msk [vmem:[#allocation3 + $0x8] sm:$0xff] %vm2521, %v2658
      %2703 = vst.msk [vmem:[#allocation3 + $0x20] sm:$0xff] %vm2521, %v2660
      %2704 = vst.msk [vmem:[#allocation3 + $0x38] sm:$0xff] %vm2521, %v2662
      %2705 = vst.msk [vmem:[#allocation3 + $0x50] sm:$0xff] %vm2521, %v2664
      %2706 = vst.msk [vmem:[#allocation3 + $0x68] sm:$0xff] %vm2521, %v2666
      %2707 = vst.msk [vmem:[#allocation3 + $0x80] sm:$0xff] %vm2521, %v2668
      %2708 = vst.msk [vmem:[#allocation3 + $0x98] sm:$0xff] %vm2521, %v2670
      %2709 = vst.msk [vmem:[#allocation3 + $0xb0] sm:$0xff] %vm2521, %v2672
      %2710 = vst.msk [vmem:[#allocation3 + $0xc8] sm:$0xff] %vm2521, %v2674
      %2711 = vst.msk [vmem:[#allocation3 + $0xe0] sm:$0xff] %vm2521, %v2676
      %2712 = vst.msk [vmem:[#allocation3 + $0xf8] sm:$0xff] %vm2521, %v2678
      %2713 = vst.msk [vmem:[#allocation3 + $0x110] sm:$0xff] %vm2521, %v2680
      %2714 = vst.msk [vmem:[#allocation3 + $0x128] sm:$0xff] %vm2521, %v2682
      %2715 = vst.msk [vmem:[#allocation3 + $0x140] sm:$0xff] %vm2521, %v2684
      %2716 = vst.msk [vmem:[#allocation3 + $0x158] sm:$0xff] %vm2521, %v2686
      %v2717 = vld [vmem:[#allocation2 + $0x4] sm:$0xff]
      %v2718 = vld [vmem:[#allocation2 + $0xc] sm:$0xff]
      %v2719 = vld [vmem:[#allocation2 + $0x1c] sm:$0xff]
      %v2720 = vld [vmem:[#allocation2 + $0x24] sm:$0xff]
      %v2721 = vld [vmem:[#allocation2 + $0x34] sm:$0xff]
      %v2722 = vld [vmem:[#allocation2 + $0x3c] sm:$0xff]
      %v2723 = vld [vmem:[#allocation2 + $0x4c] sm:$0xff]
      %v2724 = vld [vmem:[#allocation2 + $0x54] sm:$0xff]
      %v2725 = vld [vmem:[#allocation2 + $0x64] sm:$0xff]
      %v2726 = vld [vmem:[#allocation2 + $0x6c] sm:$0xff]
      %v2727 = vld [vmem:[#allocation2 + $0x7c] sm:$0xff]
      %v2728 = vld [vmem:[#allocation2 + $0x84] sm:$0xff]
      %v2729 = vld [vmem:[#allocation2 + $0x94] sm:$0xff]
      %v2730 = vld [vmem:[#allocation2 + $0x9c] sm:$0xff]
      %v2731 = vld [vmem:[#allocation2 + $0xac] sm:$0xff]
      %v2732 = vld [vmem:[#allocation2 + $0xb4] sm:$0xff]
      %v2733 = vld [vmem:[#allocation2 + $0xc4] sm:$0xff]
      %v2734 = vld [vmem:[#allocation2 + $0xcc] sm:$0xff]
      %v2735 = vld [vmem:[#allocation2 + $0xdc] sm:$0xff]
      %v2736 = vld [vmem:[#allocation2 + $0xe4] sm:$0xff]
      %v2737 = vld [vmem:[#allocation2 + $0xf4] sm:$0xff]
      %v2738 = vld [vmem:[#allocation2 + $0xfc] sm:$0xff]
      %v2739 = vld [vmem:[#allocation2 + $0x10c] sm:$0xff]
      %v2740 = vld [vmem:[#allocation2 + $0x114] sm:$0xff]
      %v2741 = vld [vmem:[#allocation2 + $0x124] sm:$0xff]
      %v2742 = vld [vmem:[#allocation2 + $0x12c] sm:$0xff]
      %v2743 = vld [vmem:[#allocation2 + $0x13c] sm:$0xff]
      %v2744 = vld [vmem:[#allocation2 + $0x144] sm:$0xff]
      %v2745 = vld [vmem:[#allocation2 + $0x154] sm:$0xff]
      %v2746 = vld [vmem:[#allocation2 + $0x15c] sm:$0xff]
      %v2747 = vpack.c.bf16 %v2718, %v2717
      %v2748 = vpack.c.bf16 %v2720, %v2719
      %v2749 = vpack.c.bf16 %v2722, %v2721
      %v2750 = vpack.c.bf16 %v2724, %v2723
      %v2751 = vpack.c.bf16 %v2726, %v2725
      %v2752 = vpack.c.bf16 %v2728, %v2727
      %v2753 = vpack.c.bf16 %v2730, %v2729
      %v2754 = vpack.c.bf16 %v2732, %v2731
      %v2755 = vpack.c.bf16 %v2734, %v2733
      %v2756 = vpack.c.bf16 %v2736, %v2735
      %v2757 = vpack.c.bf16 %v2738, %v2737
      %v2758 = vpack.c.bf16 %v2740, %v2739
      %v2759 = vpack.c.bf16 %v2742, %v2741
      %v2760 = vpack.c.bf16 %v2744, %v2743
      %v2761 = vpack.c.bf16 %v2746, %v2745
      %2762 = vst.msk [vmem:[#allocation3 + $0x10] sm:$0xff] %vm2287, %v2747
      %2763 = vst.msk [vmem:[#allocation3 + $0x28] sm:$0xff] %vm2287, %v2748
      %2764 = vst.msk [vmem:[#allocation3 + $0x40] sm:$0xff] %vm2287, %v2749
      %2765 = vst.msk [vmem:[#allocation3 + $0x58] sm:$0xff] %vm2287, %v2750
      %2766 = vst.msk [vmem:[#allocation3 + $0x70] sm:$0xff] %vm2287, %v2751
      %2767 = vst.msk [vmem:[#allocation3 + $0x88] sm:$0xff] %vm2287, %v2752
      %2768 = vst.msk [vmem:[#allocation3 + $0xa0] sm:$0xff] %vm2287, %v2753
      %2769 = vst.msk [vmem:[#allocation3 + $0xb8] sm:$0xff] %vm2287, %v2754
      %2770 = vst.msk [vmem:[#allocation3 + $0xd0] sm:$0xff] %vm2287, %v2755
      %2771 = vst.msk [vmem:[#allocation3 + $0xe8] sm:$0xff] %vm2287, %v2756
      %2772 = vst.msk [vmem:[#allocation3 + $0x100] sm:$0xff] %vm2287, %v2757
      %2773 = vst.msk [vmem:[#allocation3 + $0x118] sm:$0xff] %vm2287, %v2758
      %2774 = vst.msk [vmem:[#allocation3 + $0x130] sm:$0xff] %vm2287, %v2759
      %2775 = vst.msk [vmem:[#allocation3 + $0x148] sm:$0xff] %vm2287, %v2760
      %2776 = vst.msk [vmem:[#allocation3 + $0x160] sm:$0xff] %vm2287, %v2761
      %v2777 = vld [vmem:[#allocation3] sm:$0xff]
      %v2778 = vld [vmem:[#allocation3 + $0x8] sm:$0xff]
      %v2779 = vld [vmem:[#allocation3 + $0x10] sm:$0xff]
      %v2780 = vld [vmem:[#allocation3 + $0x18] sm:$0xff]
      %v2781 = vld [vmem:[#allocation3 + $0x20] sm:$0xff]
      %v2782 = vld [vmem:[#allocation3 + $0x28] sm:$0xff]
      %v2783 = vld [vmem:[#allocation3 + $0x30] sm:$0xff]
      %v2784 = vld [vmem:[#allocation3 + $0x38] sm:$0xff]
      %v2785 = vld [vmem:[#allocation3 + $0x40] sm:$0xff]
      %v2786 = vld [vmem:[#allocation3 + $0x48] sm:$0xff]
      %v2787 = vld [vmem:[#allocation3 + $0x50] sm:$0xff]
      %v2788 = vld [vmem:[#allocation3 + $0x58] sm:$0xff]
      %v2789 = vld [vmem:[#allocation3 + $0x60] sm:$0xff]
      %v2790 = vld [vmem:[#allocation3 + $0x68] sm:$0xff]
      %v2791 = vld [vmem:[#allocation3 + $0x70] sm:$0xff]
      %v2792 = vld [vmem:[#allocation3 + $0x78] sm:$0xff]
      %v2793 = vld [vmem:[#allocation3 + $0x80] sm:$0xff]
      %v2794 = vld [vmem:[#allocation3 + $0x88] sm:$0xff]
      %v2795 = vld [vmem:[#allocation3 + $0x90] sm:$0xff]
      %v2796 = vld [vmem:[#allocation3 + $0x98] sm:$0xff]
      %v2797 = vld [vmem:[#allocation3 + $0xa0] sm:$0xff]
      %v2798 = vld [vmem:[#allocation3 + $0xa8] sm:$0xff]
      %v2799 = vld [vmem:[#allocation3 + $0xb0] sm:$0xff]
      %v2800 = vld [vmem:[#allocation3 + $0xb8] sm:$0xff]
      %v2801 = vld [vmem:[#allocation3 + $0xc0] sm:$0xff]
      %v2802 = vld [vmem:[#allocation3 + $0xc8] sm:$0xff]
      %v2803 = vld [vmem:[#allocation3 + $0xd0] sm:$0xff]
      %v2804 = vld [vmem:[#allocation3 + $0xd8] sm:$0xff]
      %v2805 = vld [vmem:[#allocation3 + $0xe0] sm:$0xff]
      %v2806 = vld [vmem:[#allocation3 + $0xe8] sm:$0xff]
      %v2807 = vld [vmem:[#allocation3 + $0xf0] sm:$0xff]
      %v2808 = vld [vmem:[#allocation3 + $0xf8] sm:$0xff]
      %v2809 = vld [vmem:[#allocation3 + $0x100] sm:$0xff]
      %v2810 = vld [vmem:[%s2] sm:$0xf]
      %v2811 = vld [vmem:[%s2 + $0x4] sm:$0xf]
      %v2812 = vld [vmem:[%s2 + $0x8] sm:$0xf]
      %v2813 = vld [vmem:[%s2 + $0xc] sm:$0xf]
      %v2814 = vld [vmem:[%s2 + $0x10] sm:$0xf]
      %v2815 = vld [vmem:[%s2 + $0x14] sm:$0xf]
      %v2816 = vld [vmem:[%s2 + $0x18] sm:$0xf]
      %v2817 = vld [vmem:[%s2 + $0x1c] sm:$0xf]
      %v2818 = vld [vmem:[%s2 + $0x20] sm:$0xf]
      %v2819 = vld [vmem:[%s2 + $0x24] sm:$0xf]
      %v2820 = vld [vmem:[%s2 + $0x28] sm:$0xf]
      %v2821 = vld [vmem:[%s2 + $0x2c] sm:$0xf]
      %v2822 = vld [vmem:[%s2 + $0x30] sm:$0xf]
      %v2823 = vld [vmem:[%s2 + $0x34] sm:$0xf]
      %v2824 = vld [vmem:[%s2 + $0x38] sm:$0xf]
      %v2825 = vld [vmem:[%s2 + $0x3c] sm:$0xf]
      %v2826 = vld [vmem:[%s2 + $0x40] sm:$0xf]
      %v2827 = vld [vmem:[%s2 + $0x44] sm:$0xf]
      %v2828 = vld [vmem:[%s2 + $0x48] sm:$0xf]
      %v2829 = vld [vmem:[%s2 + $0x4c] sm:$0xf]
      %v2830 = vld [vmem:[%s2 + $0x50] sm:$0xf]
      %v2831 = vld [vmem:[%s2 + $0x54] sm:$0xf]
      %v2832 = vld [vmem:[%s2 + $0x58] sm:$0xf]
      %v2833 = vld [vmem:[%s2 + $0x5c] sm:$0xf]
      %v2834 = vld [vmem:[%s2 + $0x60] sm:$0xf]
      %v2835 = vld [vmem:[%s2 + $0x64] sm:$0xf]
      %v2836 = vld [vmem:[%s2 + $0x68] sm:$0xf]
      %v2837 = vld [vmem:[%s2 + $0x6c] sm:$0xf]
      %v2838 = vld [vmem:[%s2 + $0x70] sm:$0xf]
      %v2839 = vld [vmem:[%s2 + $0x74] sm:$0xf]
      %v2840 = vld [vmem:[%s2 + $0x78] sm:$0xf]
      %v2841 = vld [vmem:[%s2 + $0x7c] sm:$0xf]
      %v2842 = vld [vmem:[%s2 + $0x80] sm:$0xf]
      %v2843 = vld [vmem:[%s2 + $0x84] sm:$0xf]
      %v2844 = vld [vmem:[%s2 + $0x88] sm:$0xf]
      %v2845 = vld [vmem:[%s2 + $0x8c] sm:$0xf]
      %v2846 = vld [vmem:[%s2 + $0x90] sm:$0xf]
      %v2847 = vld [vmem:[%s2 + $0x94] sm:$0xf]
      %v2848 = vld [vmem:[%s2 + $0x98] sm:$0xf]
      %v2849 = vld [vmem:[%s2 + $0x9c] sm:$0xf]
      %s2850 = scalar_lea.vmem [#allocation3], 24
      %v2851 = vld [vmem:[%s2850] sm:$0xff]
      %v2852 = vld [vmem:[%s2850 + $0x8] sm:$0xff]
      %v2853 = vld [vmem:[%s2850 + $0x10] sm:$0xff]
      %v2854 = vld [vmem:[%s2850 + $0x18] sm:$0xff]
      %v2855 = vld [vmem:[%s2850 + $0x20] sm:$0xff]
      %v2856 = vld [vmem:[%s2850 + $0x28] sm:$0xff]
      %v2857 = vld [vmem:[%s2850 + $0x30] sm:$0xff]
      %v2858 = vld [vmem:[%s2850 + $0x38] sm:$0xff]
      %v2859 = vld [vmem:[%s2850 + $0x40] sm:$0xff]
      %v2860 = vld [vmem:[%s2850 + $0x48] sm:$0xff]
      %v2861 = vld [vmem:[%s2850 + $0x50] sm:$0xff]
      %v2862 = vld [vmem:[%s2850 + $0x58] sm:$0xff]
      %v2863 = vld [vmem:[%s2850 + $0x60] sm:$0xff]
      %v2864 = vld [vmem:[%s2850 + $0x68] sm:$0xff]
      %v2865 = vld [vmem:[%s2850 + $0x70] sm:$0xff]
      %v2866 = vld [vmem:[%s2850 + $0x78] sm:$0xff]
      %v2867 = vld [vmem:[%s2850 + $0x80] sm:$0xff]
      %v2868 = vld [vmem:[%s2850 + $0x88] sm:$0xff]
      %v2869 = vld [vmem:[%s2850 + $0x90] sm:$0xff]
      %v2870 = vld [vmem:[%s2850 + $0x98] sm:$0xff]
      %v2871 = vld [vmem:[%s2850 + $0xa0] sm:$0xff]
      %v2872 = vld [vmem:[%s2850 + $0xa8] sm:$0xff]
      %v2873 = vld [vmem:[%s2850 + $0xb0] sm:$0xff]
      %v2874 = vld [vmem:[%s2850 + $0xb8] sm:$0xff]
      %v2875 = vld [vmem:[%s2850 + $0xc0] sm:$0xff]
      %v2876 = vld [vmem:[%s2850 + $0xc8] sm:$0xff]
      %v2877 = vld [vmem:[%s2850 + $0xd0] sm:$0xff]
      %v2878 = vld [vmem:[%s2850 + $0xd8] sm:$0xff]
      %v2879 = vld [vmem:[%s2850 + $0xe0] sm:$0xff]
      %v2880 = vld [vmem:[%s2850 + $0xe8] sm:$0xff]
      %v2881 = vld [vmem:[%s2850 + $0xf0] sm:$0xff]
      %v2882 = vld [vmem:[%s2850 + $0xf8] sm:$0xff]
      %v2883 = vld [vmem:[%s2850 + $0x100] sm:$0xff]
      %s2884 = scalar_lea.vmem %s2, 160
      %v2885 = vld [vmem:[%s2884] sm:$0xf]
      %v2886 = vld [vmem:[%s2884 + $0x4] sm:$0xf]
      %v2887 = vld [vmem:[%s2884 + $0x8] sm:$0xf]
      %v2888 = vld [vmem:[%s2884 + $0xc] sm:$0xf]
      %v2889 = vld [vmem:[%s2884 + $0x10] sm:$0xf]
      %v2890 = vld [vmem:[%s2884 + $0x14] sm:$0xf]
      %v2891 = vld [vmem:[%s2884 + $0x18] sm:$0xf]
      %v2892 = vld [vmem:[%s2884 + $0x1c] sm:$0xf]
      %v2893 = vld [vmem:[%s2884 + $0x20] sm:$0xf]
      %v2894 = vld [vmem:[%s2884 + $0x24] sm:$0xf]
      %v2895 = vld [vmem:[%s2884 + $0x28] sm:$0xf]
      %v2896 = vld [vmem:[%s2884 + $0x2c] sm:$0xf]
      %v2897 = vld [vmem:[%s2884 + $0x30] sm:$0xf]
      %v2898 = vld [vmem:[%s2884 + $0x34] sm:$0xf]
      %v2899 = vld [vmem:[%s2884 + $0x38] sm:$0xf]
      %v2900 = vld [vmem:[%s2884 + $0x3c] sm:$0xf]
      %v2901 = vld [vmem:[%s2884 + $0x40] sm:$0xf]
      %v2902 = vld [vmem:[%s2884 + $0x44] sm:$0xf]
      %v2903 = vld [vmem:[%s2884 + $0x48] sm:$0xf]
      %v2904 = vld [vmem:[%s2884 + $0x4c] sm:$0xf]
      %v2905 = vld [vmem:[%s2884 + $0x50] sm:$0xf]
      %v2906 = vld [vmem:[%s2884 + $0x54] sm:$0xf]
      %v2907 = vld [vmem:[%s2884 + $0x58] sm:$0xf]
      %v2908 = vld [vmem:[%s2884 + $0x5c] sm:$0xf]
      %v2909 = vld [vmem:[%s2884 + $0x60] sm:$0xf]
      %v2910 = vld [vmem:[%s2884 + $0x64] sm:$0xf]
      %v2911 = vld [vmem:[%s2884 + $0x68] sm:$0xf]
      %v2912 = vld [vmem:[%s2884 + $0x6c] sm:$0xf]
      %v2913 = vld [vmem:[%s2884 + $0x70] sm:$0xf]
      %v2914 = vld [vmem:[%s2884 + $0x74] sm:$0xf]
      %v2915 = vld [vmem:[%s2884 + $0x78] sm:$0xf]
      %v2916 = vld [vmem:[%s2884 + $0x7c] sm:$0xf]
      %v2917 = vld [vmem:[%s2884 + $0x80] sm:$0xf]
      %v2918 = vld [vmem:[%s2884 + $0x84] sm:$0xf]
      %v2919 = vld [vmem:[%s2884 + $0x88] sm:$0xf]
      %v2920 = vld [vmem:[%s2884 + $0x8c] sm:$0xf]
      %v2921 = vld [vmem:[%s2884 + $0x90] sm:$0xf]
      %v2922 = vld [vmem:[%s2884 + $0x94] sm:$0xf]
      %v2923 = vld [vmem:[%s2884 + $0x98] sm:$0xf]
      %v2924 = vld [vmem:[%s2884 + $0x9c] sm:$0xf]
      %v2965 = vunpack.c.l.b16 %v2885
      %v2966 = vunpack.c.l.b16 %v2886
      %v2967 = vunpack.c.l.b16 %v2887
      %v2968 = vunpack.c.l.b16 %v2888
      %v2969 = vunpack.c.l.b16 %v2889
      %v2970 = vunpack.c.l.b16 %v2890
      %v2971 = vunpack.c.l.b16 %v2891
      %v2972 = vunpack.c.l.b16 %v2892
      %v2973 = vunpack.c.l.b16 %v2893
      %v2974 = vunpack.c.l.b16 %v2894
      %v2975 = vunpack.c.l.b16 %v2895
      %v2976 = vunpack.c.l.b16 %v2896
      %v2977 = vunpack.c.l.b16 %v2897
      %v2978 = vunpack.c.l.b16 %v2898
      %v2979 = vunpack.c.l.b16 %v2899
      %v2980 = vunpack.c.l.b16 %v2900
      %v2981 = vunpack.c.l.b16 %v2901
      %v2982 = vunpack.c.l.b16 %v2902
      %v2983 = vunpack.c.l.b16 %v2903
      %v2984 = vunpack.c.l.b16 %v2904
      %v2985 = vunpack.c.l.b16 %v2905
      %v2986 = vunpack.c.l.b16 %v2906
      %v2987 = vunpack.c.l.b16 %v2907
      %v2988 = vunpack.c.l.b16 %v2908
      %v2989 = vunpack.c.l.b16 %v2909
      %v2990 = vunpack.c.l.b16 %v2910
      %v2991 = vunpack.c.l.b16 %v2911
      %v2992 = vunpack.c.l.b16 %v2912
      %v2993 = vunpack.c.l.b16 %v2913
      %v2994 = vunpack.c.l.b16 %v2914
      %v2995 = vunpack.c.l.b16 %v2915
      %v2996 = vunpack.c.l.b16 %v2916
      %v2997 = vunpack.c.l.b16 %v2917
      %v2998 = vunpack.c.l.b16 %v2918
      %v2999 = vunpack.c.l.b16 %v2919
      %v3000 = vunpack.c.l.b16 %v2920
      %v3001 = vunpack.c.l.b16 %v2921
      %v3002 = vunpack.c.l.b16 %v2922
      %v3003 = vunpack.c.l.b16 %v2923
      %v3004 = vunpack.c.l.b16 %v2924
      %v3005 = vpack.c.b16 %v2966, %v2965
      %v3006 = vpack.c.b16 %v2968, %v2967
      %v3007 = vpack.c.b16 %v2970, %v2969
      %v3008 = vpack.c.b16 %v2972, %v2971
      %v3009 = vpack.c.b16 %v2974, %v2973
      %v3010 = vpack.c.b16 %v2976, %v2975
      %v3011 = vpack.c.b16 %v2978, %v2977
      %v3012 = vpack.c.b16 %v2980, %v2979
      %v3013 = vpack.c.b16 %v2982, %v2981
      %v3014 = vpack.c.b16 %v2984, %v2983
      %v3015 = vpack.c.b16 %v2986, %v2985
      %v3016 = vpack.c.b16 %v2988, %v2987
      %v3017 = vpack.c.b16 %v2990, %v2989
      %v3018 = vpack.c.b16 %v2992, %v2991
      %v3019 = vpack.c.b16 %v2994, %v2993
      %v3020 = vpack.c.b16 %v2996, %v2995
      %v3021 = vpack.c.b16 %v2998, %v2997
      %v3022 = vpack.c.b16 %v3000, %v2999
      %v3023 = vpack.c.b16 %v3002, %v3001
      %v3024 = vpack.c.b16 %v3004, %v3003
      %v3046 = vsel %vm2287, %v2853, 0
      %v3049 = vsel %vm2287, %v2856, 0
      %v3052 = vsel %vm2287, %v2859, 0
      %v3055 = vsel %vm2287, %v2862, 0
      %v3058 = vsel %vm2287, %v2865, 0
      %v3061 = vsel %vm2287, %v2868, 0
      %v3064 = vsel %vm2287, %v2871, 0
      %v3067 = vsel %vm2287, %v2874, 0
      %v3070 = vsel %vm2287, %v2877, 0
      %v3073 = vsel %vm2287, %v2880, 0
      %v3076 = vsel %vm2287, %v2883, 0
      %3078 = vmatprep.subr.bf16.mxu0 0
      %3079 = vmatpush1.bf16.msra.mxu0 %v3005
      %3080 = vmatprep.subr.bf16.mxu0 0
      %3081 = vmatpush1.bf16.msra.mxu0 %v3006
      %3082 = vmatprep.subr.bf16.mxu0 0
      %3083 = vmatpush1.bf16.msra.mxu0 %v3007
      %3084 = vmatprep.subr.bf16.mxu0 0
      %3085 = vmatpush1.bf16.msra.mxu0 %v3008
      %3086 = vmatprep.subr.bf16.mxu0 0
      %3087 = vmatpush1.bf16.msra.mxu0 %v3009
      %3088 = vmatprep.subr.bf16.mxu0 0
      %3089 = vmatpush1.bf16.msra.mxu0 %v3010
      %3090 = vmatprep.subr.bf16.mxu0 0
      %3091 = vmatpush1.bf16.msra.mxu0 %v3011
      %3092 = vmatprep.subr.bf16.mxu0 0
      %3093 = vmatpush1.bf16.msra.mxu0 %v3012
      %3094 = vmatprep.subr.bf16.mxu0 0
      %3095 = vmatpush1.bf16.msra.mxu0 %v3013
      %3096 = vmatprep.subr.bf16.mxu0 0
      %3097 = vmatpush1.bf16.msra.mxu0 %v3014
      %3098 = vmatprep.subr.bf16.mxu0 0
      %3099 = vmatpush1.bf16.msra.mxu0 %v3015
      %3100 = vmatprep.subr.bf16.mxu0 0
      %3101 = vmatpush1.bf16.msra.mxu0 %v3016
      %3102 = vmatprep.subr.bf16.mxu0 0
      %3103 = vmatpush1.bf16.msra.mxu0 %v3017
      %3104 = vmatprep.subr.bf16.mxu0 0
      %3105 = vmatpush1.bf16.msra.mxu0 %v3018
      %3106 = vmatprep.subr.bf16.mxu0 0
      %3107 = vmatpush1.bf16.msra.mxu0 %v3019
      %3108 = vmatprep.subr.bf16.mxu0 0
      %3109 = vmatpush1.bf16.msra.mxu0 %v3020
      %3110 = vmatprep.mubr.bf16.mxu0 %v2852
      %3111 = vmatmul.mubr.bf16.gmra.mrb[0].mxu0 %v2851
      %v3112 = vpop.f32.mrb[0].mxu0
      %v3113 = vadd.f32 0.0, %v3112
      %v3114 = vpop.f32.mrb[0].mxu0
      %v3115 = vpop.f32.mrb[0].mxu0
      %v3116 = vadd.f32 0.0, %v3115
      %v3117 = vpop.f32.mrb[0].mxu0
      %3118 = vmatprep.mubr.bf16.mxu0 %v2855
      %3119 = vmatmul.mubr.bf16.gmra.mrb[0].mxu0 %v2854
      %v3120 = vpop.f32.mrb[0].mxu0
      %v3121 = vadd.f32 0.0, %v3120
      %v3122 = vpop.f32.mrb[0].mxu0
      %v3123 = vpop.f32.mrb[0].mxu0
      %v3124 = vadd.f32 0.0, %v3123
      %v3125 = vpop.f32.mrb[0].mxu0
      %3126 = vmatprep.mubr.bf16.mxu0 %v2858
      %3127 = vmatmul.mubr.bf16.gmra.mrb[0].mxu0 %v2857
      %v3128 = vpop.f32.mrb[0].mxu0
      %v3129 = vadd.f32 0.0, %v3128
      %v3130 = vpop.f32.mrb[0].mxu0
      %v3131 = vpop.f32.mrb[0].mxu0
      %v3132 = vadd.f32 0.0, %v3131
      %v3133 = vpop.f32.mrb[0].mxu0
      %3134 = vmatprep.mubr.bf16.mxu0 %v2861
      %3135 = vmatmul.mubr.bf16.gmra.mrb[0].mxu0 %v2860
      %v3136 = vpop.f32.mrb[0].mxu0
      %v3137 = vadd.f32 0.0, %v3136
      %v3138 = vpop.f32.mrb[0].mxu0
      %v3139 = vpop.f32.mrb[0].mxu0
      %v3140 = vadd.f32 0.0, %v3139
      %v3141 = vpop.f32.mrb[0].mxu0
      %3142 = vmatprep.mubr.bf16.mxu0 %v2864
      %3143 = vmatmul.mubr.bf16.gmra.mrb[0].mxu0 %v2863
      %v3144 = vpop.f32.mrb[0].mxu0
      %v3145 = vadd.f32 0.0, %v3144
      %v3146 = vpop.f32.mrb[0].mxu0
      %v3147 = vpop.f32.mrb[0].mxu0
      %v3148 = vadd.f32 0.0, %v3147
      %v3149 = vpop.f32.mrb[0].mxu0
      %3150 = vmatprep.mubr.bf16.mxu0 %v2867
      %3151 = vmatmul.mubr.bf16.gmra.mrb[0].mxu0 %v2866
      %v3152 = vpop.f32.mrb[0].mxu0
      %v3153 = vadd.f32 0.0, %v3152
      %v3154 = vpop.f32.mrb[0].mxu0
      %v3155 = vpop.f32.mrb[0].mxu0
      %v3156 = vadd.f32 0.0, %v3155
      %v3157 = vpop.f32.mrb[0].mxu0
      %3158 = vmatprep.mubr.bf16.mxu0 %v2870
      %3159 = vmatmul.mubr.bf16.gmra.mrb[0].mxu0 %v2869
      %v3160 = vpop.f32.mrb[0].mxu0
      %v3161 = vadd.f32 0.0, %v3160
      %v3162 = vpop.f32.mrb[0].mxu0
      %v3163 = vpop.f32.mrb[0].mxu0
      %v3164 = vadd.f32 0.0, %v3163
      %v3165 = vpop.f32.mrb[0].mxu0
      %3166 = vmatprep.mubr.bf16.mxu0 %v2873
      %3167 = vmatmul.mubr.bf16.gmra.mrb[0].mxu0 %v2872
      %v3168 = vpop.f32.mrb[0].mxu0
      %v3169 = vadd.f32 0.0, %v3168
      %v3170 = vpop.f32.mrb[0].mxu0
      %v3171 = vpop.f32.mrb[0].mxu0
      %v3172 = vadd.f32 0.0, %v3171
      %v3173 = vpop.f32.mrb[0].mxu0
      %3174 = vmatprep.mubr.bf16.mxu0 %v2876
      %3175 = vmatmul.mubr.bf16.gmra.mrb[0].mxu0 %v2875
      %v3176 = vpop.f32.mrb[0].mxu0
      %v3177 = vadd.f32 0.0, %v3176
      %v3178 = vpop.f32.mrb[0].mxu0
      %v3179 = vpop.f32.mrb[0].mxu0
      %v3180 = vadd.f32 0.0, %v3179
      %v3181 = vpop.f32.mrb[0].mxu0
      %3182 = vmatprep.mubr.bf16.mxu0 %v2879
      %3183 = vmatmul.mubr.bf16.gmra.mrb[0].mxu0 %v2878
      %v3184 = vpop.f32.mrb[0].mxu0
      %v3185 = vadd.f32 0.0, %v3184
      %v3186 = vpop.f32.mrb[0].mxu0
      %v3187 = vpop.f32.mrb[0].mxu0
      %v3188 = vadd.f32 0.0, %v3187
      %v3189 = vpop.f32.mrb[0].mxu0
      %3190 = vmatprep.mubr.bf16.mxu0 %v2882
      %3191 = vmatmul.mubr.bf16.gmra.mrb[0].mxu0 %v2881
      %v3192 = vpop.f32.mrb[0].mxu0
      %v3193 = vadd.f32 0.0, %v3192
      %v3194 = vpop.f32.mrb[0].mxu0
      %v3195 = vpop.f32.mrb[0].mxu0
      %v3196 = vadd.f32 0.0, %v3195
      %v3197 = vpop.f32.mrb[0].mxu0
      %3198 = vdwg.mxu0
      %3199 = vmatprep.subr.bf16.mxu0 0
      %3200 = vmatpush1.bf16.msra.mxu0 %v3021
      %3201 = vmatprep.subr.bf16.mxu0 0
      %3202 = vmatpush1.bf16.msra.mxu0 %v3022
      %3203 = vmatprep.subr.bf16.mxu0 0
      %3204 = vmatpush1.bf16.msra.mxu0 %v3023
      %3205 = vmatprep.subr.bf16.mxu0 0
      %3206 = vmatpush1.bf16.msra.mxu0 %v3024
      %3207 = vmatprep.subr.bf16.mxu0 0
      %3208 = vmatpush1.bf16.msra.mxu0 0
      %3209 = vmatprep.subr.bf16.mxu0 0
      %3210 = vmatpush1.bf16.msra.mxu0 0
      %3211 = vmatprep.subr.bf16.mxu0 0
      %3212 = vmatpush1.bf16.msra.mxu0 0
      %3213 = vmatprep.subr.bf16.mxu0 0
      %3214 = vmatpush1.bf16.msra.mxu0 0
      %3215 = vmatprep.subr.bf16.mxu0 0
      %3216 = vmatpush1.bf16.msra.mxu0 0
      %3217 = vmatprep.subr.bf16.mxu0 0
      %3218 = vmatpush1.bf16.msra.mxu0 0
      %3219 = vmatprep.subr.bf16.mxu0 0
      %3220 = vmatpush1.bf16.msra.mxu0 0
      %3221 = vmatprep.subr.bf16.mxu0 0
      %3222 = vmatpush1.bf16.msra.mxu0 0
      %3223 = vmatprep.subr.bf16.mxu0 0
      %3224 = vmatpush1.bf16.msra.mxu0 0
      %3225 = vmatprep.subr.bf16.mxu0 0
      %3226 = vmatpush1.bf16.msra.mxu0 0
      %3227 = vmatprep.subr.bf16.mxu0 0
      %3228 = vmatpush1.bf16.msra.mxu0 0
      %3229 = vmatprep.subr.bf16.mxu0 0
      %3230 = vmatpush1.bf16.msra.mxu0 0
      %3231 = vmatprep.mubr.bf16.mxu0 0
      %3232 = vmatmul.mubr.bf16.gmra.mrb[0].mxu0 %v3046
      %v3233 = vpop.f32.mrb[0].mxu0
      %v3234 = vadd.f32 %v3113, %v3233
      %v3235 = vpop.f32.mrb[0].mxu0
      %v3236 = vpop.f32.mrb[0].mxu0
      %v3237 = vadd.f32 %v3116, %v3236
      %v3238 = vpop.f32.mrb[0].mxu0
      %3239 = vmatprep.mubr.bf16.mxu0 0
      %3240 = vmatmul.mubr.bf16.gmra.mrb[0].mxu0 %v3049
      %v3241 = vpop.f32.mrb[0].mxu0
      %v3242 = vadd.f32 %v3121, %v3241
      %v3243 = vpop.f32.mrb[0].mxu0
      %v3244 = vpop.f32.mrb[0].mxu0
      %v3245 = vadd.f32 %v3124, %v3244
      %v3246 = vpop.f32.mrb[0].mxu0
      %3247 = vmatprep.mubr.bf16.mxu0 0
      %3248 = vmatmul.mubr.bf16.gmra.mrb[0].mxu0 %v3052
      %v3249 = vpop.f32.mrb[0].mxu0
      %v3250 = vadd.f32 %v3129, %v3249
      %v3251 = vpop.f32.mrb[0].mxu0
      %v3252 = vpop.f32.mrb[0].mxu0
      %v3253 = vadd.f32 %v3132, %v3252
      %v3254 = vpop.f32.mrb[0].mxu0
      %3255 = vmatprep.mubr.bf16.mxu0 0
      %3256 = vmatmul.mubr.bf16.gmra.mrb[0].mxu0 %v3055
      %v3257 = vpop.f32.mrb[0].mxu0
      %v3258 = vadd.f32 %v3137, %v3257
      %v3259 = vpop.f32.mrb[0].mxu0
      %v3260 = vpop.f32.mrb[0].mxu0
      %v3261 = vadd.f32 %v3140, %v3260
      %v3262 = vpop.f32.mrb[0].mxu0
      %3263 = vmatprep.mubr.bf16.mxu0 0
      %3264 = vmatmul.mubr.bf16.gmra.mrb[0].mxu0 %v3058
      %v3265 = vpop.f32.mrb[0].mxu0
      %v3266 = vadd.f32 %v3145, %v3265
      %v3267 = vpop.f32.mrb[0].mxu0
      %v3268 = vpop.f32.mrb[0].mxu0
      %v3269 = vadd.f32 %v3148, %v3268
      %v3270 = vpop.f32.mrb[0].mxu0
      %3271 = vmatprep.mubr.bf16.mxu0 0
      %3272 = vmatmul.mubr.bf16.gmra.mrb[0].mxu0 %v3061
      %v3273 = vpop.f32.mrb[0].mxu0
      %v3274 = vadd.f32 %v3153, %v3273
      %v3275 = vpop.f32.mrb[0].mxu0
      %v3276 = vpop.f32.mrb[0].mxu0
      %v3277 = vadd.f32 %v3156, %v3276
      %v3278 = vpop.f32.mrb[0].mxu0
      %3279 = vmatprep.mubr.bf16.mxu0 0
      %3280 = vmatmul.mubr.bf16.gmra.mrb[0].mxu0 %v3064
      %v3281 = vpop.f32.mrb[0].mxu0
      %v3282 = vadd.f32 %v3161, %v3281
      %v3283 = vpop.f32.mrb[0].mxu0
      %v3284 = vpop.f32.mrb[0].mxu0
      %v3285 = vadd.f32 %v3164, %v3284
      %v3286 = vpop.f32.mrb[0].mxu0
      %3287 = vmatprep.mubr.bf16.mxu0 0
      %3288 = vmatmul.mubr.bf16.gmra.mrb[0].mxu0 %v3067
      %v3289 = vpop.f32.mrb[0].mxu0
      %v3290 = vadd.f32 %v3169, %v3289
      %v3291 = vpop.f32.mrb[0].mxu0
      %v3292 = vpop.f32.mrb[0].mxu0
      %v3293 = vadd.f32 %v3172, %v3292
      %v3294 = vpop.f32.mrb[0].mxu0
      %3295 = vmatprep.mubr.bf16.mxu0 0
      %3296 = vmatmul.mubr.bf16.gmra.mrb[0].mxu0 %v3070
      %v3297 = vpop.f32.mrb[0].mxu0
      %v3298 = vadd.f32 %v3177, %v3297
      %v3299 = vpop.f32.mrb[0].mxu0
      %v3300 = vpop.f32.mrb[0].mxu0
      %v3301 = vadd.f32 %v3180, %v3300
      %v3302 = vpop.f32.mrb[0].mxu0
      %3303 = vmatprep.mubr.bf16.mxu0 0
      %3304 = vmatmul.mubr.bf16.gmra.mrb[0].mxu0 %v3073
      %v3305 = vpop.f32.mrb[0].mxu0
      %v3306 = vadd.f32 %v3185, %v3305
      %v3307 = vpop.f32.mrb[0].mxu0
      %v3308 = vpop.f32.mrb[0].mxu0
      %v3309 = vadd.f32 %v3188, %v3308
      %v3310 = vpop.f32.mrb[0].mxu0
      %3311 = vmatprep.mubr.bf16.mxu0 0
      %3312 = vmatmul.mubr.bf16.gmra.mrb[0].mxu0 %v3076
      %v3313 = vpop.f32.mrb[0].mxu0
      %v3314 = vadd.f32 %v3193, %v3313
      %v3315 = vpop.f32.mrb[0].mxu0
      %v3316 = vpop.f32.mrb[0].mxu0
      %v3317 = vadd.f32 %v3196, %v3316
      %v3318 = vpop.f32.mrb[0].mxu0
      %3319 = vdwg.mxu0
      %v3360 = vunpack.c.l.b16 %v2810
      %v3361 = vunpack.c.l.b16 %v2811
      %v3362 = vunpack.c.l.b16 %v2812
      %v3363 = vunpack.c.l.b16 %v2813
      %v3364 = vunpack.c.l.b16 %v2814
      %v3365 = vunpack.c.l.b16 %v2815
      %v3366 = vunpack.c.l.b16 %v2816
      %v3367 = vunpack.c.l.b16 %v2817
      %v3368 = vunpack.c.l.b16 %v2818
      %v3369 = vunpack.c.l.b16 %v2819
      %v3370 = vunpack.c.l.b16 %v2820
      %v3371 = vunpack.c.l.b16 %v2821
      %v3372 = vunpack.c.l.b16 %v2822
      %v3373 = vunpack.c.l.b16 %v2823
      %v3374 = vunpack.c.l.b16 %v2824
      %v3375 = vunpack.c.l.b16 %v2825
      %v3376 = vunpack.c.l.b16 %v2826
      %v3377 = vunpack.c.l.b16 %v2827
      %v3378 = vunpack.c.l.b16 %v2828
      %v3379 = vunpack.c.l.b16 %v2829
      %v3380 = vunpack.c.l.b16 %v2830
      %v3381 = vunpack.c.l.b16 %v2831
      %v3382 = vunpack.c.l.b16 %v2832
      %v3383 = vunpack.c.l.b16 %v2833
      %v3384 = vunpack.c.l.b16 %v2834
      %v3385 = vunpack.c.l.b16 %v2835
      %v3386 = vunpack.c.l.b16 %v2836
      %v3387 = vunpack.c.l.b16 %v2837
      %v3388 = vunpack.c.l.b16 %v2838
      %v3389 = vunpack.c.l.b16 %v2839
      %v3390 = vunpack.c.l.b16 %v2840
      %v3391 = vunpack.c.l.b16 %v2841
      %v3392 = vunpack.c.l.b16 %v2842
      %v3393 = vunpack.c.l.b16 %v2843
      %v3394 = vunpack.c.l.b16 %v2844
      %v3395 = vunpack.c.l.b16 %v2845
      %v3396 = vunpack.c.l.b16 %v2846
      %v3397 = vunpack.c.l.b16 %v2847
      %v3398 = vunpack.c.l.b16 %v2848
      %v3399 = vunpack.c.l.b16 %v2849
      %v3400 = vpack.c.b16 %v3361, %v3360
      %v3401 = vpack.c.b16 %v3363, %v3362
      %v3402 = vpack.c.b16 %v3365, %v3364
      %v3403 = vpack.c.b16 %v3367, %v3366
      %v3404 = vpack.c.b16 %v3369, %v3368
      %v3405 = vpack.c.b16 %v3371, %v3370
      %v3406 = vpack.c.b16 %v3373, %v3372
      %v3407 = vpack.c.b16 %v3375, %v3374
      %v3408 = vpack.c.b16 %v3377, %v3376
      %v3409 = vpack.c.b16 %v3379, %v3378
      %v3410 = vpack.c.b16 %v3381, %v3380
      %v3411 = vpack.c.b16 %v3383, %v3382
      %v3412 = vpack.c.b16 %v3385, %v3384
      %v3413 = vpack.c.b16 %v3387, %v3386
      %v3414 = vpack.c.b16 %v3389, %v3388
      %v3415 = vpack.c.b16 %v3391, %v3390
      %v3416 = vpack.c.b16 %v3393, %v3392
      %v3417 = vpack.c.b16 %v3395, %v3394
      %v3418 = vpack.c.b16 %v3397, %v3396
      %v3419 = vpack.c.b16 %v3399, %v3398
      %v3441 = vsel %vm2287, %v2779, 0
      %v3444 = vsel %vm2287, %v2782, 0
      %v3447 = vsel %vm2287, %v2785, 0
      %v3450 = vsel %vm2287, %v2788, 0
      %v3453 = vsel %vm2287, %v2791, 0
      %v3456 = vsel %vm2287, %v2794, 0
      %v3459 = vsel %vm2287, %v2797, 0
      %v3462 = vsel %vm2287, %v2800, 0
      %v3465 = vsel %vm2287, %v2803, 0
      %v3468 = vsel %vm2287, %v2806, 0
      %v3471 = vsel %vm2287, %v2809, 0
      %3473 = vmatprep.subr.bf16.mxu0 0
      %3474 = vmatpush1.bf16.msra.mxu0 %v3400
      %3475 = vmatprep.subr.bf16.mxu0 0
      %3476 = vmatpush1.bf16.msra.mxu0 %v3401
      %3477 = vmatprep.subr.bf16.mxu0 0
      %3478 = vmatpush1.bf16.msra.mxu0 %v3402
      %3479 = vmatprep.subr.bf16.mxu0 0
      %3480 = vmatpush1.bf16.msra.mxu0 %v3403
      %3481 = vmatprep.subr.bf16.mxu0 0
      %3482 = vmatpush1.bf16.msra.mxu0 %v3404
      %3483 = vmatprep.subr.bf16.mxu0 0
      %3484 = vmatpush1.bf16.msra.mxu0 %v3405
      %3485 = vmatprep.subr.bf16.mxu0 0
      %3486 = vmatpush1.bf16.msra.mxu0 %v3406
      %3487 = vmatprep.subr.bf16.mxu0 0
      %3488 = vmatpush1.bf16.msra.mxu0 %v3407
      %3489 = vmatprep.subr.bf16.mxu0 0
      %3490 = vmatpush1.bf16.msra.mxu0 %v3408
      %3491 = vmatprep.subr.bf16.mxu0 0
      %3492 = vmatpush1.bf16.msra.mxu0 %v3409
      %3493 = vmatprep.subr.bf16.mxu0 0
      %3494 = vmatpush1.bf16.msra.mxu0 %v3410
      %3495 = vmatprep.subr.bf16.mxu0 0
      %3496 = vmatpush1.bf16.msra.mxu0 %v3411
      %3497 = vmatprep.subr.bf16.mxu0 0
      %3498 = vmatpush1.bf16.msra.mxu0 %v3412
      %3499 = vmatprep.subr.bf16.mxu0 0
      %3500 = vmatpush1.bf16.msra.mxu0 %v3413
      %3501 = vmatprep.subr.bf16.mxu0 0
      %3502 = vmatpush1.bf16.msra.mxu0 %v3414
      %3503 = vmatprep.subr.bf16.mxu0 0
      %3504 = vmatpush1.bf16.msra.mxu0 %v3415
      %3505 = vmatprep.mubr.bf16.mxu0 %v2778
      %3506 = vmatmul.mubr.bf16.gmra.mrb[0].mxu0 %v2777
      %v3507 = vpop.f32.mrb[0].mxu0
      %v3508 = vadd.f32 %v3234, %v3507
      %v3509 = vpop.f32.mrb[0].mxu0
      %v3510 = vpop.f32.mrb[0].mxu0
      %v3511 = vadd.f32 %v3237, %v3510
      %v3512 = vpop.f32.mrb[0].mxu0
      %3513 = vmatprep.mubr.bf16.mxu0 %v2781
      %3514 = vmatmul.mubr.bf16.gmra.mrb[0].mxu0 %v2780
      %v3515 = vpop.f32.mrb[0].mxu0
      %v3516 = vadd.f32 %v3242, %v3515
      %v3517 = vpop.f32.mrb[0].mxu0
      %v3518 = vpop.f32.mrb[0].mxu0
      %v3519 = vadd.f32 %v3245, %v3518
      %v3520 = vpop.f32.mrb[0].mxu0
      %3521 = vmatprep.mubr.bf16.mxu0 %v2784
      %3522 = vmatmul.mubr.bf16.gmra.mrb[0].mxu0 %v2783
      %v3523 = vpop.f32.mrb[0].mxu0
      %v3524 = vadd.f32 %v3250, %v3523
      %v3525 = vpop.f32.mrb[0].mxu0
      %v3526 = vpop.f32.mrb[0].mxu0
      %v3527 = vadd.f32 %v3253, %v3526
      %v3528 = vpop.f32.mrb[0].mxu0
      %3529 = vmatprep.mubr.bf16.mxu0 %v2787
      %3530 = vmatmul.mubr.bf16.gmra.mrb[0].mxu0 %v2786
      %v3531 = vpop.f32.mrb[0].mxu0
      %v3532 = vadd.f32 %v3258, %v3531
      %v3533 = vpop.f32.mrb[0].mxu0
      %v3534 = vpop.f32.mrb[0].mxu0
      %v3535 = vadd.f32 %v3261, %v3534
      %v3536 = vpop.f32.mrb[0].mxu0
      %3537 = vmatprep.mubr.bf16.mxu0 %v2790
      %3538 = vmatmul.mubr.bf16.gmra.mrb[0].mxu0 %v2789
      %v3539 = vpop.f32.mrb[0].mxu0
      %v3540 = vadd.f32 %v3266, %v3539
      %v3541 = vpop.f32.mrb[0].mxu0
      %v3542 = vpop.f32.mrb[0].mxu0
      %v3543 = vadd.f32 %v3269, %v3542
      %v3544 = vpop.f32.mrb[0].mxu0
      %3545 = vmatprep.mubr.bf16.mxu0 %v2793
      %3546 = vmatmul.mubr.bf16.gmra.mrb[0].mxu0 %v2792
      %v3547 = vpop.f32.mrb[0].mxu0
      %v3548 = vadd.f32 %v3274, %v3547
      %v3549 = vpop.f32.mrb[0].mxu0
      %v3550 = vpop.f32.mrb[0].mxu0
      %v3551 = vadd.f32 %v3277, %v3550
      %v3552 = vpop.f32.mrb[0].mxu0
      %3553 = vmatprep.mubr.bf16.mxu0 %v2796
      %3554 = vmatmul.mubr.bf16.gmra.mrb[0].mxu0 %v2795
      %v3555 = vpop.f32.mrb[0].mxu0
      %v3556 = vadd.f32 %v3282, %v3555
      %v3557 = vpop.f32.mrb[0].mxu0
      %v3558 = vpop.f32.mrb[0].mxu0
      %v3559 = vadd.f32 %v3285, %v3558
      %v3560 = vpop.f32.mrb[0].mxu0
      %3561 = vmatprep.mubr.bf16.mxu0 %v2799
      %3562 = vmatmul.mubr.bf16.gmra.mrb[0].mxu0 %v2798
      %v3563 = vpop.f32.mrb[0].mxu0
      %v3564 = vadd.f32 %v3290, %v3563
      %v3565 = vpop.f32.mrb[0].mxu0
      %v3566 = vpop.f32.mrb[0].mxu0
      %v3567 = vadd.f32 %v3293, %v3566
      %v3568 = vpop.f32.mrb[0].mxu0
      %3569 = vmatprep.mubr.bf16.mxu0 %v2802
      %3570 = vmatmul.mubr.bf16.gmra.mrb[0].mxu0 %v2801
      %v3571 = vpop.f32.mrb[0].mxu0
      %v3572 = vadd.f32 %v3298, %v3571
      %v3573 = vpop.f32.mrb[0].mxu0
      %v3574 = vpop.f32.mrb[0].mxu0
      %v3575 = vadd.f32 %v3301, %v3574
      %v3576 = vpop.f32.mrb[0].mxu0
      %3577 = vmatprep.mubr.bf16.mxu0 %v2805
      %3578 = vmatmul.mubr.bf16.gmra.mrb[0].mxu0 %v2804
      %v3579 = vpop.f32.mrb[0].mxu0
      %v3580 = vadd.f32 %v3306, %v3579
      %v3581 = vpop.f32.mrb[0].mxu0
      %v3582 = vpop.f32.mrb[0].mxu0
      %v3583 = vadd.f32 %v3309, %v3582
      %v3584 = vpop.f32.mrb[0].mxu0
      %3585 = vmatprep.mubr.bf16.mxu0 %v2808
      %3586 = vmatmul.mubr.bf16.gmra.mrb[0].mxu0 %v2807
      %v3587 = vpop.f32.mrb[0].mxu0
      %v3588 = vadd.f32 %v3314, %v3587
      %v3589 = vpop.f32.mrb[0].mxu0
      %v3590 = vpop.f32.mrb[0].mxu0
      %v3591 = vadd.f32 %v3317, %v3590
      %v3592 = vpop.f32.mrb[0].mxu0
      %3593 = vdwg.mxu0
      %3594 = vmatprep.subr.bf16.mxu0 0
      %3595 = vmatpush1.bf16.msra.mxu0 %v3416
      %3596 = vmatprep.subr.bf16.mxu0 0
      %3597 = vmatpush1.bf16.msra.mxu0 %v3417
      %3598 = vmatprep.subr.bf16.mxu0 0
      %3599 = vmatpush1.bf16.msra.mxu0 %v3418
      %3600 = vmatprep.subr.bf16.mxu0 0
      %3601 = vmatpush1.bf16.msra.mxu0 %v3419
      %3602 = vmatprep.subr.bf16.mxu0 0
      %3603 = vmatpush1.bf16.msra.mxu0 0
      %3604 = vmatprep.subr.bf16.mxu0 0
      %3605 = vmatpush1.bf16.msra.mxu0 0
      %3606 = vmatprep.subr.bf16.mxu0 0
      %3607 = vmatpush1.bf16.msra.mxu0 0
      %3608 = vmatprep.subr.bf16.mxu0 0
      %3609 = vmatpush1.bf16.msra.mxu0 0
      %3610 = vmatprep.subr.bf16.mxu0 0
      %3611 = vmatpush1.bf16.msra.mxu0 0
      %3612 = vmatprep.subr.bf16.mxu0 0
      %3613 = vmatpush1.bf16.msra.mxu0 0
      %3614 = vmatprep.subr.bf16.mxu0 0
      %3615 = vmatpush1.bf16.msra.mxu0 0
      %3616 = vmatprep.subr.bf16.mxu0 0
      %3617 = vmatpush1.bf16.msra.mxu0 0
      %3618 = vmatprep.subr.bf16.mxu0 0
      %3619 = vmatpush1.bf16.msra.mxu0 0
      %3620 = vmatprep.subr.bf16.mxu0 0
      %3621 = vmatpush1.bf16.msra.mxu0 0
      %3622 = vmatprep.subr.bf16.mxu0 0
      %3623 = vmatpush1.bf16.msra.mxu0 0
      %3624 = vmatprep.subr.bf16.mxu0 0
      %3625 = vmatpush1.bf16.msra.mxu0 0
      %3626 = vmatprep.mubr.bf16.mxu0 0
      %3627 = vmatmul.mubr.bf16.gmra.mrb[0].mxu0 %v3441
      %v3628 = vpop.f32.mrb[0].mxu0
      %v3629 = vadd.f32 %v3508, %v3628
      %v3630 = vpop.f32.mrb[0].mxu0
      %v3631 = vpop.f32.mrb[0].mxu0
      %v3632 = vadd.f32 %v3511, %v3631
      %v3633 = vpop.f32.mrb[0].mxu0
      %3634 = vmatprep.mubr.bf16.mxu0 0
      %3635 = vmatmul.mubr.bf16.gmra.mrb[0].mxu0 %v3444
      %v3636 = vpop.f32.mrb[0].mxu0
      %v3637 = vadd.f32 %v3516, %v3636
      %v3638 = vpop.f32.mrb[0].mxu0
      %v3639 = vpop.f32.mrb[0].mxu0
      %v3640 = vadd.f32 %v3519, %v3639
      %v3641 = vpop.f32.mrb[0].mxu0
      %3642 = vmatprep.mubr.bf16.mxu0 0
      %3643 = vmatmul.mubr.bf16.gmra.mrb[0].mxu0 %v3447
      %v3644 = vpop.f32.mrb[0].mxu0
      %v3645 = vadd.f32 %v3524, %v3644
      %v3646 = vpop.f32.mrb[0].mxu0
      %v3647 = vpop.f32.mrb[0].mxu0
      %v3648 = vadd.f32 %v3527, %v3647
      %v3649 = vpop.f32.mrb[0].mxu0
      %3650 = vmatprep.mubr.bf16.mxu0 0
      %3651 = vmatmul.mubr.bf16.gmra.mrb[0].mxu0 %v3450
      %v3652 = vpop.f32.mrb[0].mxu0
      %v3653 = vadd.f32 %v3532, %v3652
      %v3654 = vpop.f32.mrb[0].mxu0
      %v3655 = vpop.f32.mrb[0].mxu0
      %v3656 = vadd.f32 %v3535, %v3655
      %v3657 = vpop.f32.mrb[0].mxu0
      %3658 = vmatprep.mubr.bf16.mxu0 0
      %3659 = vmatmul.mubr.bf16.gmra.mrb[0].mxu0 %v3453
      %v3660 = vpop.f32.mrb[0].mxu0
      %v3661 = vadd.f32 %v3540, %v3660
      %v3662 = vpop.f32.mrb[0].mxu0
      %v3663 = vpop.f32.mrb[0].mxu0
      %v3664 = vadd.f32 %v3543, %v3663
      %v3665 = vpop.f32.mrb[0].mxu0
      %3666 = vmatprep.mubr.bf16.mxu0 0
      %3667 = vmatmul.mubr.bf16.gmra.mrb[0].mxu0 %v3456
      %v3668 = vpop.f32.mrb[0].mxu0
      %v3669 = vadd.f32 %v3548, %v3668
      %v3670 = vpop.f32.mrb[0].mxu0
      %v3671 = vpop.f32.mrb[0].mxu0
      %v3672 = vadd.f32 %v3551, %v3671
      %v3673 = vpop.f32.mrb[0].mxu0
      %3674 = vmatprep.mubr.bf16.mxu0 0
      %3675 = vmatmul.mubr.bf16.gmra.mrb[0].mxu0 %v3459
      %v3676 = vpop.f32.mrb[0].mxu0
      %v3677 = vadd.f32 %v3556, %v3676
      %v3678 = vpop.f32.mrb[0].mxu0
      %v3679 = vpop.f32.mrb[0].mxu0
      %v3680 = vadd.f32 %v3559, %v3679
      %v3681 = vpop.f32.mrb[0].mxu0
      %3682 = vmatprep.mubr.bf16.mxu0 0
      %3683 = vmatmul.mubr.bf16.gmra.mrb[0].mxu0 %v3462
      %v3684 = vpop.f32.mrb[0].mxu0
      %v3685 = vadd.f32 %v3564, %v3684
      %v3686 = vpop.f32.mrb[0].mxu0
      %v3687 = vpop.f32.mrb[0].mxu0
      %v3688 = vadd.f32 %v3567, %v3687
      %v3689 = vpop.f32.mrb[0].mxu0
      %3690 = vmatprep.mubr.bf16.mxu0 0
      %3691 = vmatmul.mubr.bf16.gmra.mrb[0].mxu0 %v3465
      %v3692 = vpop.f32.mrb[0].mxu0
      %v3693 = vadd.f32 %v3572, %v3692
      %v3694 = vpop.f32.mrb[0].mxu0
      %v3695 = vpop.f32.mrb[0].mxu0
      %v3696 = vadd.f32 %v3575, %v3695
      %v3697 = vpop.f32.mrb[0].mxu0
      %3698 = vmatprep.mubr.bf16.mxu0 0
      %3699 = vmatmul.mubr.bf16.gmra.mrb[0].mxu0 %v3468
      %v3700 = vpop.f32.mrb[0].mxu0
      %v3701 = vadd.f32 %v3580, %v3700
      %v3702 = vpop.f32.mrb[0].mxu0
      %v3703 = vpop.f32.mrb[0].mxu0
      %v3704 = vadd.f32 %v3583, %v3703
      %v3705 = vpop.f32.mrb[0].mxu0
      %3706 = vmatprep.mubr.bf16.mxu0 0
      %3707 = vmatmul.mubr.bf16.gmra.mrb[0].mxu0 %v3471
      %v3708 = vpop.f32.mrb[0].mxu0
      %v3709 = vadd.f32 %v3588, %v3708
      %v3710 = vpop.f32.mrb[0].mxu0
      %v3711 = vpop.f32.mrb[0].mxu0
      %v3712 = vadd.f32 %v3591, %v3711
      %v3713 = vpop.f32.mrb[0].mxu0
      %3714 = vdwg.mxu0
      %s3715 = scalar_lea.vmem [#allocation3], 48
      %v3716 = vld [vmem:[%s3715] sm:$0xff]
      %v3717 = vld [vmem:[%s3715 + $0x8] sm:$0xff]
      %v3718 = vld [vmem:[%s3715 + $0x10] sm:$0xff]
      %v3719 = vld [vmem:[%s3715 + $0x18] sm:$0xff]
      %v3720 = vld [vmem:[%s3715 + $0x20] sm:$0xff]
      %v3721 = vld [vmem:[%s3715 + $0x28] sm:$0xff]
      %v3722 = vld [vmem:[%s3715 + $0x30] sm:$0xff]
      %v3723 = vld [vmem:[%s3715 + $0x38] sm:$0xff]
      %v3724 = vld [vmem:[%s3715 + $0x40] sm:$0xff]
      %v3725 = vld [vmem:[%s3715 + $0x48] sm:$0xff]
      %v3726 = vld [vmem:[%s3715 + $0x50] sm:$0xff]
      %v3727 = vld [vmem:[%s3715 + $0x58] sm:$0xff]
      %v3728 = vld [vmem:[%s3715 + $0x60] sm:$0xff]
      %v3729 = vld [vmem:[%s3715 + $0x68] sm:$0xff]
      %v3730 = vld [vmem:[%s3715 + $0x70] sm:$0xff]
      %v3731 = vld [vmem:[%s3715 + $0x78] sm:$0xff]
      %v3732 = vld [vmem:[%s3715 + $0x80] sm:$0xff]
      %v3733 = vld [vmem:[%s3715 + $0x88] sm:$0xff]
      %v3734 = vld [vmem:[%s3715 + $0x90] sm:$0xff]
      %v3735 = vld [vmem:[%s3715 + $0x98] sm:$0xff]
      %v3736 = vld [vmem:[%s3715 + $0xa0] sm:$0xff]
      %v3737 = vld [vmem:[%s3715 + $0xa8] sm:$0xff]
      %v3738 = vld [vmem:[%s3715 + $0xb0] sm:$0xff]
      %v3739 = vld [vmem:[%s3715 + $0xb8] sm:$0xff]
      %v3740 = vld [vmem:[%s3715 + $0xc0] sm:$0xff]
      %v3741 = vld [vmem:[%s3715 + $0xc8] sm:$0xff]
      %v3742 = vld [vmem:[%s3715 + $0xd0] sm:$0xff]
      %v3743 = vld [vmem:[%s3715 + $0xd8] sm:$0xff]
      %v3744 = vld [vmem:[%s3715 + $0xe0] sm:$0xff]
      %v3745 = vld [vmem:[%s3715 + $0xe8] sm:$0xff]
      %v3746 = vld [vmem:[%s3715 + $0xf0] sm:$0xff]
      %v3747 = vld [vmem:[%s3715 + $0xf8] sm:$0xff]
      %v3748 = vld [vmem:[%s3715 + $0x100] sm:$0xff]
      %s3749 = scalar_lea.vmem %s2, 320
      %v3750 = vld [vmem:[%s3749] sm:$0xf]
      %v3751 = vld [vmem:[%s3749 + $0x4] sm:$0xf]
      %v3752 = vld [vmem:[%s3749 + $0x8] sm:$0xf]
      %v3753 = vld [vmem:[%s3749 + $0xc] sm:$0xf]
      %v3754 = vld [vmem:[%s3749 + $0x10] sm:$0xf]
      %v3755 = vld [vmem:[%s3749 + $0x14] sm:$0xf]
      %v3756 = vld [vmem:[%s3749 + $0x18] sm:$0xf]
      %v3757 = vld [vmem:[%s3749 + $0x1c] sm:$0xf]
      %v3758 = vld [vmem:[%s3749 + $0x20] sm:$0xf]
      %v3759 = vld [vmem:[%s3749 + $0x24] sm:$0xf]
      %v3760 = vld [vmem:[%s3749 + $0x28] sm:$0xf]
      %v3761 = vld [vmem:[%s3749 + $0x2c] sm:$0xf]
      %v3762 = vld [vmem:[%s3749 + $0x30] sm:$0xf]
      %v3763 = vld [vmem:[%s3749 + $0x34] sm:$0xf]
      %v3764 = vld [vmem:[%s3749 + $0x38] sm:$0xf]
      %v3765 = vld [vmem:[%s3749 + $0x3c] sm:$0xf]
      %v3766 = vld [vmem:[%s3749 + $0x40] sm:$0xf]
      %v3767 = vld [vmem:[%s3749 + $0x44] sm:$0xf]
      %v3768 = vld [vmem:[%s3749 + $0x48] sm:$0xf]
      %v3769 = vld [vmem:[%s3749 + $0x4c] sm:$0xf]
      %v3770 = vld [vmem:[%s3749 + $0x50] sm:$0xf]
      %v3771 = vld [vmem:[%s3749 + $0x54] sm:$0xf]
      %v3772 = vld [vmem:[%s3749 + $0x58] sm:$0xf]
      %v3773 = vld [vmem:[%s3749 + $0x5c] sm:$0xf]
      %v3774 = vld [vmem:[%s3749 + $0x60] sm:$0xf]
      %v3775 = vld [vmem:[%s3749 + $0x64] sm:$0xf]
      %v3776 = vld [vmem:[%s3749 + $0x68] sm:$0xf]
      %v3777 = vld [vmem:[%s3749 + $0x6c] sm:$0xf]
      %v3778 = vld [vmem:[%s3749 + $0x70] sm:$0xf]
      %v3779 = vld [vmem:[%s3749 + $0x74] sm:$0xf]
      %v3780 = vld [vmem:[%s3749 + $0x78] sm:$0xf]
      %v3781 = vld [vmem:[%s3749 + $0x7c] sm:$0xf]
      %v3782 = vld [vmem:[%s3749 + $0x80] sm:$0xf]
      %v3783 = vld [vmem:[%s3749 + $0x84] sm:$0xf]
      %v3784 = vld [vmem:[%s3749 + $0x88] sm:$0xf]
      %v3785 = vld [vmem:[%s3749 + $0x8c] sm:$0xf]
      %v3786 = vld [vmem:[%s3749 + $0x90] sm:$0xf]
      %v3787 = vld [vmem:[%s3749 + $0x94] sm:$0xf]
      %v3788 = vld [vmem:[%s3749 + $0x98] sm:$0xf]
      %v3789 = vld [vmem:[%s3749 + $0x9c] sm:$0xf]
      %v3830 = vunpack.c.l.b16 %v3750
      %v3831 = vunpack.c.l.b16 %v3751
      %v3832 = vunpack.c.l.b16 %v3752
      %v3833 = vunpack.c.l.b16 %v3753
      %v3834 = vunpack.c.l.b16 %v3754
      %v3835 = vunpack.c.l.b16 %v3755
      %v3836 = vunpack.c.l.b16 %v3756
      %v3837 = vunpack.c.l.b16 %v3757
      %v3838 = vunpack.c.l.b16 %v3758
      %v3839 = vunpack.c.l.b16 %v3759
      %v3840 = vunpack.c.l.b16 %v3760
      %v3841 = vunpack.c.l.b16 %v3761
      %v3842 = vunpack.c.l.b16 %v3762
      %v3843 = vunpack.c.l.b16 %v3763
      %v3844 = vunpack.c.l.b16 %v3764
      %v3845 = vunpack.c.l.b16 %v3765
      %v3846 = vunpack.c.l.b16 %v3766
      %v3847 = vunpack.c.l.b16 %v3767
      %v3848 = vunpack.c.l.b16 %v3768
      %v3849 = vunpack.c.l.b16 %v3769
      %v3850 = vunpack.c.l.b16 %v3770
      %v3851 = vunpack.c.l.b16 %v3771
      %v3852 = vunpack.c.l.b16 %v3772
      %v3853 = vunpack.c.l.b16 %v3773
      %v3854 = vunpack.c.l.b16 %v3774
      %v3855 = vunpack.c.l.b16 %v3775
      %v3856 = vunpack.c.l.b16 %v3776
      %v3857 = vunpack.c.l.b16 %v3777
      %v3858 = vunpack.c.l.b16 %v3778
      %v3859 = vunpack.c.l.b16 %v3779
      %v3860 = vunpack.c.l.b16 %v3780
      %v3861 = vunpack.c.l.b16 %v3781
      %v3862 = vunpack.c.l.b16 %v3782
      %v3863 = vunpack.c.l.b16 %v3783
      %v3864 = vunpack.c.l.b16 %v3784
      %v3865 = vunpack.c.l.b16 %v3785
      %v3866 = vunpack.c.l.b16 %v3786
      %v3867 = vunpack.c.l.b16 %v3787
      %v3868 = vunpack.c.l.b16 %v3788
      %v3869 = vunpack.c.l.b16 %v3789
      %v3870 = vpack.c.b16 %v3831, %v3830
      %v3871 = vpack.c.b16 %v3833, %v3832
      %v3872 = vpack.c.b16 %v3835, %v3834
      %v3873 = vpack.c.b16 %v3837, %v3836
      %v3874 = vpack.c.b16 %v3839, %v3838
      %v3875 = vpack.c.b16 %v3841, %v3840
      %v3876 = vpack.c.b16 %v3843, %v3842
      %v3877 = vpack.c.b16 %v3845, %v3844
      %v3878 = vpack.c.b16 %v3847, %v3846
      %v3879 = vpack.c.b16 %v3849, %v3848
      %v3880 = vpack.c.b16 %v3851, %v3850
      %v3881 = vpack.c.b16 %v3853, %v3852
      %v3882 = vpack.c.b16 %v3855, %v3854
      %v3883 = vpack.c.b16 %v3857, %v3856
      %v3884 = vpack.c.b16 %v3859, %v3858
      %v3885 = vpack.c.b16 %v3861, %v3860
      %v3886 = vpack.c.b16 %v3863, %v3862
      %v3887 = vpack.c.b16 %v3865, %v3864
      %v3888 = vpack.c.b16 %v3867, %v3866
      %v3889 = vpack.c.b16 %v3869, %v3868
      %v3911 = vsel %vm2287, %v3718, 0
      %v3914 = vsel %vm2287, %v3721, 0
      %v3917 = vsel %vm2287, %v3724, 0
      %v3920 = vsel %vm2287, %v3727, 0
      %v3923 = vsel %vm2287, %v3730, 0
      %v3926 = vsel %vm2287, %v3733, 0
      %v3929 = vsel %vm2287, %v3736, 0
      %v3932 = vsel %vm2287, %v3739, 0
      %v3935 = vsel %vm2287, %v3742, 0
      %v3938 = vsel %vm2287, %v3745, 0
      %v3941 = vsel %vm2287, %v3748, 0
      %3943 = vmatprep.subr.bf16.mxu0 0
      %3944 = vmatpush1.bf16.msra.mxu0 %v3870
      %3945 = vmatprep.subr.bf16.mxu0 0
      %3946 = vmatpush1.bf16.msra.mxu0 %v3871
      %3947 = vmatprep.subr.bf16.mxu0 0
      %3948 = vmatpush1.bf16.msra.mxu0 %v3872
      %3949 = vmatprep.subr.bf16.mxu0 0
      %3950 = vmatpush1.bf16.msra.mxu0 %v3873
      %3951 = vmatprep.subr.bf16.mxu0 0
      %3952 = vmatpush1.bf16.msra.mxu0 %v3874
      %3953 = vmatprep.subr.bf16.mxu0 0
      %3954 = vmatpush1.bf16.msra.mxu0 %v3875
      %3955 = vmatprep.subr.bf16.mxu0 0
      %3956 = vmatpush1.bf16.msra.mxu0 %v3876
      %3957 = vmatprep.subr.bf16.mxu0 0
      %3958 = vmatpush1.bf16.msra.mxu0 %v3877
      %3959 = vmatprep.subr.bf16.mxu0 0
      %3960 = vmatpush1.bf16.msra.mxu0 %v3878
      %3961 = vmatprep.subr.bf16.mxu0 0
      %3962 = vmatpush1.bf16.msra.mxu0 %v3879
      %3963 = vmatprep.subr.bf16.mxu0 0
      %3964 = vmatpush1.bf16.msra.mxu0 %v3880
      %3965 = vmatprep.subr.bf16.mxu0 0
      %3966 = vmatpush1.bf16.msra.mxu0 %v3881
      %3967 = vmatprep.subr.bf16.mxu0 0
      %3968 = vmatpush1.bf16.msra.mxu0 %v3882
      %3969 = vmatprep.subr.bf16.mxu0 0
      %3970 = vmatpush1.bf16.msra.mxu0 %v3883
      %3971 = vmatprep.subr.bf16.mxu0 0
      %3972 = vmatpush1.bf16.msra.mxu0 %v3884
      %3973 = vmatprep.subr.bf16.mxu0 0
      %3974 = vmatpush1.bf16.msra.mxu0 %v3885
      %3975 = vmatprep.mubr.bf16.mxu0 %v3717
      %3976 = vmatmul.mubr.bf16.gmra.mrb[0].mxu0 %v3716
      %v3977 = vpop.f32.mrb[0].mxu0
      %v3978 = vadd.f32 0.0, %v3977
      %v3979 = vpop.f32.mrb[0].mxu0
      %v3980 = vpop.f32.mrb[0].mxu0
      %v3981 = vadd.f32 0.0, %v3980
      %v3982 = vpop.f32.mrb[0].mxu0
      %3983 = vmatprep.mubr.bf16.mxu0 %v3720
      %3984 = vmatmul.mubr.bf16.gmra.mrb[0].mxu0 %v3719
      %v3985 = vpop.f32.mrb[0].mxu0
      %v3986 = vadd.f32 0.0, %v3985
      %v3987 = vpop.f32.mrb[0].mxu0
      %v3988 = vpop.f32.mrb[0].mxu0
      %v3989 = vadd.f32 0.0, %v3988
      %v3990 = vpop.f32.mrb[0].mxu0
      %3991 = vmatprep.mubr.bf16.mxu0 %v3723
      %3992 = vmatmul.mubr.bf16.gmra.mrb[0].mxu0 %v3722
      %v3993 = vpop.f32.mrb[0].mxu0
      %v3994 = vadd.f32 0.0, %v3993
      %v3995 = vpop.f32.mrb[0].mxu0
      %v3996 = vpop.f32.mrb[0].mxu0
      %v3997 = vadd.f32 0.0, %v3996
      %v3998 = vpop.f32.mrb[0].mxu0
      %3999 = vmatprep.mubr.bf16.mxu0 %v3726
      %4000 = vmatmul.mubr.bf16.gmra.mrb[0].mxu0 %v3725
      %v4001 = vpop.f32.mrb[0].mxu0
      %v4002 = vadd.f32 0.0, %v4001
      %v4003 = vpop.f32.mrb[0].mxu0
      %v4004 = vpop.f32.mrb[0].mxu0
      %v4005 = vadd.f32 0.0, %v4004
      %v4006 = vpop.f32.mrb[0].mxu0
      %4007 = vmatprep.mubr.bf16.mxu0 %v3729
      %4008 = vmatmul.mubr.bf16.gmra.mrb[0].mxu0 %v3728
      %v4009 = vpop.f32.mrb[0].mxu0
      %v4010 = vadd.f32 0.0, %v4009
      %v4011 = vpop.f32.mrb[0].mxu0
      %v4012 = vpop.f32.mrb[0].mxu0
      %v4013 = vadd.f32 0.0, %v4012
      %v4014 = vpop.f32.mrb[0].mxu0
      %4015 = vmatprep.mubr.bf16.mxu0 %v3732
      %4016 = vmatmul.mubr.bf16.gmra.mrb[0].mxu0 %v3731
      %v4017 = vpop.f32.mrb[0].mxu0
      %v4018 = vadd.f32 0.0, %v4017
      %v4019 = vpop.f32.mrb[0].mxu0
      %v4020 = vpop.f32.mrb[0].mxu0
      %v4021 = vadd.f32 0.0, %v4020
      %v4022 = vpop.f32.mrb[0].mxu0
      %4023 = vmatprep.mubr.bf16.mxu0 %v3735
      %4024 = vmatmul.mubr.bf16.gmra.mrb[0].mxu0 %v3734
      %v4025 = vpop.f32.mrb[0].mxu0
      %v4026 = vadd.f32 0.0, %v4025
      %v4027 = vpop.f32.mrb[0].mxu0
      %v4028 = vpop.f32.mrb[0].mxu0
      %v4029 = vadd.f32 0.0, %v4028
      %v4030 = vpop.f32.mrb[0].mxu0
      %4031 = vmatprep.mubr.bf16.mxu0 %v3738
      %4032 = vmatmul.mubr.bf16.gmra.mrb[0].mxu0 %v3737
      %v4033 = vpop.f32.mrb[0].mxu0
      %v4034 = vadd.f32 0.0, %v4033
      %v4035 = vpop.f32.mrb[0].mxu0
      %v4036 = vpop.f32.mrb[0].mxu0
      %v4037 = vadd.f32 0.0, %v4036
      %v4038 = vpop.f32.mrb[0].mxu0
      %4039 = vmatprep.mubr.bf16.mxu0 %v3741
      %4040 = vmatmul.mubr.bf16.gmra.mrb[0].mxu0 %v3740
      %v4041 = vpop.f32.mrb[0].mxu0
      %v4042 = vadd.f32 0.0, %v4041
      %v4043 = vpop.f32.mrb[0].mxu0
      %v4044 = vpop.f32.mrb[0].mxu0
      %v4045 = vadd.f32 0.0, %v4044
      %v4046 = vpop.f32.mrb[0].mxu0
      %4047 = vmatprep.mubr.bf16.mxu0 %v3744
      %4048 = vmatmul.mubr.bf16.gmra.mrb[0].mxu0 %v3743
      %v4049 = vpop.f32.mrb[0].mxu0
      %v4050 = vadd.f32 0.0, %v4049
      %v4051 = vpop.f32.mrb[0].mxu0
      %v4052 = vpop.f32.mrb[0].mxu0
      %v4053 = vadd.f32 0.0, %v4052
      %v4054 = vpop.f32.mrb[0].mxu0
      %4055 = vmatprep.mubr.bf16.mxu0 %v3747
      %4056 = vmatmul.mubr.bf16.gmra.mrb[0].mxu0 %v3746
      %v4057 = vpop.f32.mrb[0].mxu0
      %v4058 = vadd.f32 0.0, %v4057
      %v4059 = vpop.f32.mrb[0].mxu0
      %v4060 = vpop.f32.mrb[0].mxu0
      %v4061 = vadd.f32 0.0, %v4060
      %v4062 = vpop.f32.mrb[0].mxu0
      %4063 = vdwg.mxu0
      %4064 = vmatprep.subr.bf16.mxu0 0
      %4065 = vmatpush1.bf16.msra.mxu0 %v3886
      %4066 = vmatprep.subr.bf16.mxu0 0
      %4067 = vmatpush1.bf16.msra.mxu0 %v3887
      %4068 = vmatprep.subr.bf16.mxu0 0
      %4069 = vmatpush1.bf16.msra.mxu0 %v3888
      %4070 = vmatprep.subr.bf16.mxu0 0
      %4071 = vmatpush1.bf16.msra.mxu0 %v3889
      %4072 = vmatprep.subr.bf16.mxu0 0
      %4073 = vmatpush1.bf16.msra.mxu0 0
      %4074 = vmatprep.subr.bf16.mxu0 0
      %4075 = vmatpush1.bf16.msra.mxu0 0
      %4076 = vmatprep.subr.bf16.mxu0 0
      %4077 = vmatpush1.bf16.msra.mxu0 0
      %4078 = vmatprep.subr.bf16.mxu0 0
      %4079 = vmatpush1.bf16.msra.mxu0 0
      %4080 = vmatprep.subr.bf16.mxu0 0
      %4081 = vmatpush1.bf16.msra.mxu0 0
      %4082 = vmatprep.subr.bf16.mxu0 0
      %4083 = vmatpush1.bf16.msra.mxu0 0
      %4084 = vmatprep.subr.bf16.mxu0 0
      %4085 = vmatpush1.bf16.msra.mxu0 0
      %4086 = vmatprep.subr.bf16.mxu0 0
      %4087 = vmatpush1.bf16.msra.mxu0 0
      %4088 = vmatprep.subr.bf16.mxu0 0
      %4089 = vmatpush1.bf16.msra.mxu0 0
      %4090 = vmatprep.subr.bf16.mxu0 0
      %4091 = vmatpush1.bf16.msra.mxu0 0
      %4092 = vmatprep.subr.bf16.mxu0 0
      %4093 = vmatpush1.bf16.msra.mxu0 0
      %4094 = vmatprep.subr.bf16.mxu0 0
      %4095 = vmatpush1.bf16.msra.mxu0 0
      %4096 = vmatprep.mubr.bf16.mxu0 0
      %4097 = vmatmul.mubr.bf16.gmra.mrb[0].mxu0 %v3911
      %v4098 = vpop.f32.mrb[0].mxu0
      %v4099 = vadd.f32 %v3978, %v4098
      %v4100 = vpop.f32.mrb[0].mxu0
      %v4101 = vpop.f32.mrb[0].mxu0
      %v4102 = vadd.f32 %v3981, %v4101
      %v4103 = vpop.f32.mrb[0].mxu0
      %4104 = vmatprep.mubr.bf16.mxu0 0
      %4105 = vmatmul.mubr.bf16.gmra.mrb[0].mxu0 %v3914
      %v4106 = vpop.f32.mrb[0].mxu0
      %v4107 = vadd.f32 %v3986, %v4106
      %v4108 = vpop.f32.mrb[0].mxu0
      %v4109 = vpop.f32.mrb[0].mxu0
      %v4110 = vadd.f32 %v3989, %v4109
      %v4111 = vpop.f32.mrb[0].mxu0
      %4112 = vmatprep.mubr.bf16.mxu0 0
      %4113 = vmatmul.mubr.bf16.gmra.mrb[0].mxu0 %v3917
      %v4114 = vpop.f32.mrb[0].mxu0
      %v4115 = vadd.f32 %v3994, %v4114
      %v4116 = vpop.f32.mrb[0].mxu0
      %v4117 = vpop.f32.mrb[0].mxu0
      %v4118 = vadd.f32 %v3997, %v4117
      %v4119 = vpop.f32.mrb[0].mxu0
      %4120 = vmatprep.mubr.bf16.mxu0 0
      %4121 = vmatmul.mubr.bf16.gmra.mrb[0].mxu0 %v3920
      %v4122 = vpop.f32.mrb[0].mxu0
      %v4123 = vadd.f32 %v4002, %v4122
      %v4124 = vpop.f32.mrb[0].mxu0
      %v4125 = vpop.f32.mrb[0].mxu0
      %v4126 = vadd.f32 %v4005, %v4125
      %v4127 = vpop.f32.mrb[0].mxu0
      %4128 = vmatprep.mubr.bf16.mxu0 0
      %4129 = vmatmul.mubr.bf16.gmra.mrb[0].mxu0 %v3923
      %v4130 = vpop.f32.mrb[0].mxu0
      %v4131 = vadd.f32 %v4010, %v4130
      %v4132 = vpop.f32.mrb[0].mxu0
      %v4133 = vpop.f32.mrb[0].mxu0
      %v4134 = vadd.f32 %v4013, %v4133
      %v4135 = vpop.f32.mrb[0].mxu0
      %4136 = vmatprep.mubr.bf16.mxu0 0
      %4137 = vmatmul.mubr.bf16.gmra.mrb[0].mxu0 %v3926
      %v4138 = vpop.f32.mrb[0].mxu0
      %v4139 = vadd.f32 %v4018, %v4138
      %v4140 = vpop.f32.mrb[0].mxu0
      %v4141 = vpop.f32.mrb[0].mxu0
      %v4142 = vadd.f32 %v4021, %v4141
      %v4143 = vpop.f32.mrb[0].mxu0
      %4144 = vmatprep.mubr.bf16.mxu0 0
      %4145 = vmatmul.mubr.bf16.gmra.mrb[0].mxu0 %v3929
      %v4146 = vpop.f32.mrb[0].mxu0
      %v4147 = vadd.f32 %v4026, %v4146
      %v4148 = vpop.f32.mrb[0].mxu0
      %v4149 = vpop.f32.mrb[0].mxu0
      %v4150 = vadd.f32 %v4029, %v4149
      %v4151 = vpop.f32.mrb[0].mxu0
      %4152 = vmatprep.mubr.bf16.mxu0 0
      %4153 = vmatmul.mubr.bf16.gmra.mrb[0].mxu0 %v3932
      %v4154 = vpop.f32.mrb[0].mxu0
      %v4155 = vadd.f32 %v4034, %v4154
      %v4156 = vpop.f32.mrb[0].mxu0
      %v4157 = vpop.f32.mrb[0].mxu0
      %v4158 = vadd.f32 %v4037, %v4157
      %v4159 = vpop.f32.mrb[0].mxu0
      %4160 = vmatprep.mubr.bf16.mxu0 0
      %4161 = vmatmul.mubr.bf16.gmra.mrb[0].mxu0 %v3935
      %v4162 = vpop.f32.mrb[0].mxu0
      %v4163 = vadd.f32 %v4042, %v4162
      %v4164 = vpop.f32.mrb[0].mxu0
      %v4165 = vpop.f32.mrb[0].mxu0
      %v4166 = vadd.f32 %v4045, %v4165
      %v4167 = vpop.f32.mrb[0].mxu0
      %4168 = vmatprep.mubr.bf16.mxu0 0
      %4169 = vmatmul.mubr.bf16.gmra.mrb[0].mxu0 %v3938
      %v4170 = vpop.f32.mrb[0].mxu0
      %v4171 = vadd.f32 %v4050, %v4170
      %v4172 = vpop.f32.mrb[0].mxu0
      %v4173 = vpop.f32.mrb[0].mxu0
      %v4174 = vadd.f32 %v4053, %v4173
      %v4175 = vpop.f32.mrb[0].mxu0
      %4176 = vmatprep.mubr.bf16.mxu0 0
      %4177 = vmatmul.mubr.bf16.gmra.mrb[0].mxu0 %v3941
      %v4178 = vpop.f32.mrb[0].mxu0
      %v4179 = vadd.f32 %v4058, %v4178
      %v4180 = vpop.f32.mrb[0].mxu0
      %v4181 = vpop.f32.mrb[0].mxu0
      %v4182 = vadd.f32 %v4061, %v4181
      %v4183 = vpop.f32.mrb[0].mxu0
      %4184 = vdwg.mxu0
      %v4185 = vadd.f32 %v3629, %v4099
      %v4186 = vadd.f32 %v3632, %v4102
      %v4187 = vadd.f32 %v3637, %v4107
      %v4188 = vadd.f32 %v3640, %v4110
      %v4189 = vadd.f32 %v3645, %v4115
      %v4190 = vadd.f32 %v3648, %v4118
      %v4191 = vadd.f32 %v3653, %v4123
      %v4192 = vadd.f32 %v3656, %v4126
      %v4193 = vadd.f32 %v3661, %v4131
      %v4194 = vadd.f32 %v3664, %v4134
      %v4195 = vadd.f32 %v3669, %v4139
      %v4196 = vadd.f32 %v3672, %v4142
      %v4197 = vadd.f32 %v3677, %v4147
      %v4198 = vadd.f32 %v3680, %v4150
      %v4199 = vadd.f32 %v3685, %v4155
      %v4200 = vadd.f32 %v3688, %v4158
      %v4201 = vadd.f32 %v3693, %v4163
      %v4202 = vadd.f32 %v3696, %v4166
      %v4203 = vadd.f32 %v3701, %v4171
      %v4204 = vadd.f32 %v3704, %v4174
      %v4205 = vadd.f32 %v3709, %v4179
      %v4206 = vadd.f32 %v3712, %v4182
      %s4207 = scalar_lea.vmem [#allocation3], 72
      %v4208 = vld [vmem:[%s4207] sm:$0xff]
      %v4209 = vld [vmem:[%s4207 + $0x8] sm:$0xff]
      %v4210 = vld [vmem:[%s4207 + $0x10] sm:$0xff]
      %v4211 = vld [vmem:[%s4207 + $0x18] sm:$0xff]
      %v4212 = vld [vmem:[%s4207 + $0x20] sm:$0xff]
      %v4213 = vld [vmem:[%s4207 + $0x28] sm:$0xff]
      %v4214 = vld [vmem:[%s4207 + $0x30] sm:$0xff]
      %v4215 = vld [vmem:[%s4207 + $0x38] sm:$0xff]
      %v4216 = vld [vmem:[%s4207 + $0x40] sm:$0xff]
      %v4217 = vld [vmem:[%s4207 + $0x48] sm:$0xff]
      %v4218 = vld [vmem:[%s4207 + $0x50] sm:$0xff]
      %v4219 = vld [vmem:[%s4207 + $0x58] sm:$0xff]
      %v4220 = vld [vmem:[%s4207 + $0x60] sm:$0xff]
      %v4221 = vld [vmem:[%s4207 + $0x68] sm:$0xff]
      %v4222 = vld [vmem:[%s4207 + $0x70] sm:$0xff]
      %v4223 = vld [vmem:[%s4207 + $0x78] sm:$0xff]
      %v4224 = vld [vmem:[%s4207 + $0x80] sm:$0xff]
      %v4225 = vld [vmem:[%s4207 + $0x88] sm:$0xff]
      %v4226 = vld [vmem:[%s4207 + $0x90] sm:$0xff]
      %v4227 = vld [vmem:[%s4207 + $0x98] sm:$0xff]
      %v4228 = vld [vmem:[%s4207 + $0xa0] sm:$0xff]
      %v4229 = vld [vmem:[%s4207 + $0xa8] sm:$0xff]
      %v4230 = vld [vmem:[%s4207 + $0xb0] sm:$0xff]
      %v4231 = vld [vmem:[%s4207 + $0xb8] sm:$0xff]
      %v4232 = vld [vmem:[%s4207 + $0xc0] sm:$0xff]
      %v4233 = vld [vmem:[%s4207 + $0xc8] sm:$0xff]
      %v4234 = vld [vmem:[%s4207 + $0xd0] sm:$0xff]
      %v4235 = vld [vmem:[%s4207 + $0xd8] sm:$0xff]
      %v4236 = vld [vmem:[%s4207 + $0xe0] sm:$0xff]
      %v4237 = vld [vmem:[%s4207 + $0xe8] sm:$0xff]
      %v4238 = vld [vmem:[%s4207 + $0xf0] sm:$0xff]
      %v4239 = vld [vmem:[%s4207 + $0xf8] sm:$0xff]
      %v4240 = vld [vmem:[%s4207 + $0x100] sm:$0xff]
      %s4241 = scalar_lea.vmem %s2, 480
      %v4242 = vld [vmem:[%s4241] sm:$0xf]
      %v4243 = vld [vmem:[%s4241 + $0x4] sm:$0xf]
      %v4244 = vld [vmem:[%s4241 + $0x8] sm:$0xf]
      %v4245 = vld [vmem:[%s4241 + $0xc] sm:$0xf]
      %v4246 = vld [vmem:[%s4241 + $0x10] sm:$0xf]
      %v4247 = vld [vmem:[%s4241 + $0x14] sm:$0xf]
      %v4248 = vld [vmem:[%s4241 + $0x18] sm:$0xf]
      %v4249 = vld [vmem:[%s4241 + $0x1c] sm:$0xf]
      %v4250 = vld [vmem:[%s4241 + $0x20] sm:$0xf]
      %v4251 = vld [vmem:[%s4241 + $0x24] sm:$0xf]
      %v4252 = vld [vmem:[%s4241 + $0x28] sm:$0xf]
      %v4253 = vld [vmem:[%s4241 + $0x2c] sm:$0xf]
      %v4254 = vld [vmem:[%s4241 + $0x30] sm:$0xf]
      %v4255 = vld [vmem:[%s4241 + $0x34] sm:$0xf]
      %v4256 = vld [vmem:[%s4241 + $0x38] sm:$0xf]
      %v4257 = vld [vmem:[%s4241 + $0x3c] sm:$0xf]
      %v4258 = vld [vmem:[%s4241 + $0x40] sm:$0xf]
      %v4259 = vld [vmem:[%s4241 + $0x44] sm:$0xf]
      %v4260 = vld [vmem:[%s4241 + $0x48] sm:$0xf]
      %v4261 = vld [vmem:[%s4241 + $0x4c] sm:$0xf]
      %v4262 = vld [vmem:[%s4241 + $0x50] sm:$0xf]
      %v4263 = vld [vmem:[%s4241 + $0x54] sm:$0xf]
      %v4264 = vld [vmem:[%s4241 + $0x58] sm:$0xf]
      %v4265 = vld [vmem:[%s4241 + $0x5c] sm:$0xf]
      %v4266 = vld [vmem:[%s4241 + $0x60] sm:$0xf]
      %v4267 = vld [vmem:[%s4241 + $0x64] sm:$0xf]
      %v4268 = vld [vmem:[%s4241 + $0x68] sm:$0xf]
      %v4269 = vld [vmem:[%s4241 + $0x6c] sm:$0xf]
      %v4270 = vld [vmem:[%s4241 + $0x70] sm:$0xf]
      %v4271 = vld [vmem:[%s4241 + $0x74] sm:$0xf]
      %v4272 = vld [vmem:[%s4241 + $0x78] sm:$0xf]
      %v4273 = vld [vmem:[%s4241 + $0x7c] sm:$0xf]
      %v4274 = vld [vmem:[%s4241 + $0x80] sm:$0xf]
      %v4275 = vld [vmem:[%s4241 + $0x84] sm:$0xf]
      %v4276 = vld [vmem:[%s4241 + $0x88] sm:$0xf]
      %v4277 = vld [vmem:[%s4241 + $0x8c] sm:$0xf]
      %v4278 = vld [vmem:[%s4241 + $0x90] sm:$0xf]
      %v4279 = vld [vmem:[%s4241 + $0x94] sm:$0xf]
      %v4280 = vld [vmem:[%s4241 + $0x98] sm:$0xf]
      %v4281 = vld [vmem:[%s4241 + $0x9c] sm:$0xf]
      %v4322 = vunpack.c.l.b16 %v4242
      %v4323 = vunpack.c.l.b16 %v4243
      %v4324 = vunpack.c.l.b16 %v4244
      %v4325 = vunpack.c.l.b16 %v4245
      %v4326 = vunpack.c.l.b16 %v4246
      %v4327 = vunpack.c.l.b16 %v4247
      %v4328 = vunpack.c.l.b16 %v4248
      %v4329 = vunpack.c.l.b16 %v4249
      %v4330 = vunpack.c.l.b16 %v4250
      %v4331 = vunpack.c.l.b16 %v4251
      %v4332 = vunpack.c.l.b16 %v4252
      %v4333 = vunpack.c.l.b16 %v4253
      %v4334 = vunpack.c.l.b16 %v4254
      %v4335 = vunpack.c.l.b16 %v4255
      %v4336 = vunpack.c.l.b16 %v4256
      %v4337 = vunpack.c.l.b16 %v4257
      %v4338 = vunpack.c.l.b16 %v4258
      %v4339 = vunpack.c.l.b16 %v4259
      %v4340 = vunpack.c.l.b16 %v4260
      %v4341 = vunpack.c.l.b16 %v4261
      %v4342 = vunpack.c.l.b16 %v4262
      %v4343 = vunpack.c.l.b16 %v4263
      %v4344 = vunpack.c.l.b16 %v4264
      %v4345 = vunpack.c.l.b16 %v4265
      %v4346 = vunpack.c.l.b16 %v4266
      %v4347 = vunpack.c.l.b16 %v4267
      %v4348 = vunpack.c.l.b16 %v4268
      %v4349 = vunpack.c.l.b16 %v4269
      %v4350 = vunpack.c.l.b16 %v4270
      %v4351 = vunpack.c.l.b16 %v4271
      %v4352 = vunpack.c.l.b16 %v4272
      %v4353 = vunpack.c.l.b16 %v4273
      %v4354 = vunpack.c.l.b16 %v4274
      %v4355 = vunpack.c.l.b16 %v4275
      %v4356 = vunpack.c.l.b16 %v4276
      %v4357 = vunpack.c.l.b16 %v4277
      %v4358 = vunpack.c.l.b16 %v4278
      %v4359 = vunpack.c.l.b16 %v4279
      %v4360 = vunpack.c.l.b16 %v4280
      %v4361 = vunpack.c.l.b16 %v4281
      %v4362 = vpack.c.b16 %v4323, %v4322
      %v4363 = vpack.c.b16 %v4325, %v4324
      %v4364 = vpack.c.b16 %v4327, %v4326
      %v4365 = vpack.c.b16 %v4329, %v4328
      %v4366 = vpack.c.b16 %v4331, %v4330
      %v4367 = vpack.c.b16 %v4333, %v4332
      %v4368 = vpack.c.b16 %v4335, %v4334
      %v4369 = vpack.c.b16 %v4337, %v4336
      %v4370 = vpack.c.b16 %v4339, %v4338
      %v4371 = vpack.c.b16 %v4341, %v4340
      %v4372 = vpack.c.b16 %v4343, %v4342
      %v4373 = vpack.c.b16 %v4345, %v4344
      %v4374 = vpack.c.b16 %v4347, %v4346
      %v4375 = vpack.c.b16 %v4349, %v4348
      %v4376 = vpack.c.b16 %v4351, %v4350
      %v4377 = vpack.c.b16 %v4353, %v4352
      %v4378 = vpack.c.b16 %v4355, %v4354
      %v4379 = vpack.c.b16 %v4357, %v4356
      %v4380 = vpack.c.b16 %v4359, %v4358
      %v4381 = vpack.c.b16 %v4361, %v4360
      %v4403 = vsel %vm2287, %v4210, 0
      %v4406 = vsel %vm2287, %v4213, 0
      %v4409 = vsel %vm2287, %v4216, 0
      %v4412 = vsel %vm2287, %v4219, 0
      %v4415 = vsel %vm2287, %v4222, 0
      %v4418 = vsel %vm2287, %v4225, 0
      %v4421 = vsel %vm2287, %v4228, 0
      %v4424 = vsel %vm2287, %v4231, 0
      %v4427 = vsel %vm2287, %v4234, 0
      %v4430 = vsel %vm2287, %v4237, 0
      %v4433 = vsel %vm2287, %v4240, 0
      %4435 = vmatprep.subr.bf16.mxu0 0
      %4436 = vmatpush1.bf16.msra.mxu0 %v4362
      %4437 = vmatprep.subr.bf16.mxu0 0
      %4438 = vmatpush1.bf16.msra.mxu0 %v4363
      %4439 = vmatprep.subr.bf16.mxu0 0
      %4440 = vmatpush1.bf16.msra.mxu0 %v4364
      %4441 = vmatprep.subr.bf16.mxu0 0
      %4442 = vmatpush1.bf16.msra.mxu0 %v4365
      %4443 = vmatprep.subr.bf16.mxu0 0
      %4444 = vmatpush1.bf16.msra.mxu0 %v4366
      %4445 = vmatprep.subr.bf16.mxu0 0
      %4446 = vmatpush1.bf16.msra.mxu0 %v4367
      %4447 = vmatprep.subr.bf16.mxu0 0
      %4448 = vmatpush1.bf16.msra.mxu0 %v4368
      %4449 = vmatprep.subr.bf16.mxu0 0
      %4450 = vmatpush1.bf16.msra.mxu0 %v4369
      %4451 = vmatprep.subr.bf16.mxu0 0
      %4452 = vmatpush1.bf16.msra.mxu0 %v4370
      %4453 = vmatprep.subr.bf16.mxu0 0
      %4454 = vmatpush1.bf16.msra.mxu0 %v4371
      %4455 = vmatprep.subr.bf16.mxu0 0
      %4456 = vmatpush1.bf16.msra.mxu0 %v4372
      %4457 = vmatprep.subr.bf16.mxu0 0
      %4458 = vmatpush1.bf16.msra.mxu0 %v4373
      %4459 = vmatprep.subr.bf16.mxu0 0
      %4460 = vmatpush1.bf16.msra.mxu0 %v4374
      %4461 = vmatprep.subr.bf16.mxu0 0
      %4462 = vmatpush1.bf16.msra.mxu0 %v4375
      %4463 = vmatprep.subr.bf16.mxu0 0
      %4464 = vmatpush1.bf16.msra.mxu0 %v4376
      %4465 = vmatprep.subr.bf16.mxu0 0
      %4466 = vmatpush1.bf16.msra.mxu0 %v4377
      %4467 = vmatprep.mubr.bf16.mxu0 %v4209
      %4468 = vmatmul.mubr.bf16.gmra.mrb[0].mxu0 %v4208
      %v4469 = vpop.f32.mrb[0].mxu0
      %v4470 = vadd.f32 0.0, %v4469
      %v4471 = vpop.f32.mrb[0].mxu0
      %v4472 = vpop.f32.mrb[0].mxu0
      %v4473 = vadd.f32 0.0, %v4472
      %v4474 = vpop.f32.mrb[0].mxu0
      %4475 = vmatprep.mubr.bf16.mxu0 %v4212
      %4476 = vmatmul.mubr.bf16.gmra.mrb[0].mxu0 %v4211
      %v4477 = vpop.f32.mrb[0].mxu0
      %v4478 = vadd.f32 0.0, %v4477
      %v4479 = vpop.f32.mrb[0].mxu0
      %v4480 = vpop.f32.mrb[0].mxu0
      %v4481 = vadd.f32 0.0, %v4480
      %v4482 = vpop.f32.mrb[0].mxu0
      %4483 = vmatprep.mubr.bf16.mxu0 %v4215
      %4484 = vmatmul.mubr.bf16.gmra.mrb[0].mxu0 %v4214
      %v4485 = vpop.f32.mrb[0].mxu0
      %v4486 = vadd.f32 0.0, %v4485
      %v4487 = vpop.f32.mrb[0].mxu0
      %v4488 = vpop.f32.mrb[0].mxu0
      %v4489 = vadd.f32 0.0, %v4488
      %v4490 = vpop.f32.mrb[0].mxu0
      %4491 = vmatprep.mubr.bf16.mxu0 %v4218
      %4492 = vmatmul.mubr.bf16.gmra.mrb[0].mxu0 %v4217
      %v4493 = vpop.f32.mrb[0].mxu0
      %v4494 = vadd.f32 0.0, %v4493
      %v4495 = vpop.f32.mrb[0].mxu0
      %v4496 = vpop.f32.mrb[0].mxu0
      %v4497 = vadd.f32 0.0, %v4496
      %v4498 = vpop.f32.mrb[0].mxu0
      %4499 = vmatprep.mubr.bf16.mxu0 %v4221
      %4500 = vmatmul.mubr.bf16.gmra.mrb[0].mxu0 %v4220
      %v4501 = vpop.f32.mrb[0].mxu0
      %v4502 = vadd.f32 0.0, %v4501
      %v4503 = vpop.f32.mrb[0].mxu0
      %v4504 = vpop.f32.mrb[0].mxu0
      %v4505 = vadd.f32 0.0, %v4504
      %v4506 = vpop.f32.mrb[0].mxu0
      %4507 = vmatprep.mubr.bf16.mxu0 %v4224
      %4508 = vmatmul.mubr.bf16.gmra.mrb[0].mxu0 %v4223
      %v4509 = vpop.f32.mrb[0].mxu0
      %v4510 = vadd.f32 0.0, %v4509
      %v4511 = vpop.f32.mrb[0].mxu0
      %v4512 = vpop.f32.mrb[0].mxu0
      %v4513 = vadd.f32 0.0, %v4512
      %v4514 = vpop.f32.mrb[0].mxu0
      %4515 = vmatprep.mubr.bf16.mxu0 %v4227
      %4516 = vmatmul.mubr.bf16.gmra.mrb[0].mxu0 %v4226
      %v4517 = vpop.f32.mrb[0].mxu0
      %v4518 = vadd.f32 0.0, %v4517
      %v4519 = vpop.f32.mrb[0].mxu0
      %v4520 = vpop.f32.mrb[0].mxu0
      %v4521 = vadd.f32 0.0, %v4520
      %v4522 = vpop.f32.mrb[0].mxu0
      %4523 = vmatprep.mubr.bf16.mxu0 %v4230
      %4524 = vmatmul.mubr.bf16.gmra.mrb[0].mxu0 %v4229
      %v4525 = vpop.f32.mrb[0].mxu0
      %v4526 = vadd.f32 0.0, %v4525
      %v4527 = vpop.f32.mrb[0].mxu0
      %v4528 = vpop.f32.mrb[0].mxu0
      %v4529 = vadd.f32 0.0, %v4528
      %v4530 = vpop.f32.mrb[0].mxu0
      %4531 = vmatprep.mubr.bf16.mxu0 %v4233
      %4532 = vmatmul.mubr.bf16.gmra.mrb[0].mxu0 %v4232
      %v4533 = vpop.f32.mrb[0].mxu0
      %v4534 = vadd.f32 0.0, %v4533
      %v4535 = vpop.f32.mrb[0].mxu0
      %v4536 = vpop.f32.mrb[0].mxu0
      %v4537 = vadd.f32 0.0, %v4536
      %v4538 = vpop.f32.mrb[0].mxu0
      %4539 = vmatprep.mubr.bf16.mxu0 %v4236
      %4540 = vmatmul.mubr.bf16.gmra.mrb[0].mxu0 %v4235
      %v4541 = vpop.f32.mrb[0].mxu0
      %v4542 = vadd.f32 0.0, %v4541
      %v4543 = vpop.f32.mrb[0].mxu0
      %v4544 = vpop.f32.mrb[0].mxu0
      %v4545 = vadd.f32 0.0, %v4544
      %v4546 = vpop.f32.mrb[0].mxu0
      %4547 = vmatprep.mubr.bf16.mxu0 %v4239
      %4548 = vmatmul.mubr.bf16.gmra.mrb[0].mxu0 %v4238
      %v4549 = vpop.f32.mrb[0].mxu0
      %v4550 = vadd.f32 0.0, %v4549
      %v4551 = vpop.f32.mrb[0].mxu0
      %v4552 = vpop.f32.mrb[0].mxu0
      %v4553 = vadd.f32 0.0, %v4552
      %v4554 = vpop.f32.mrb[0].mxu0
      %4555 = vdwg.mxu0
      %4556 = vmatprep.subr.bf16.mxu0 0
      %4557 = vmatpush1.bf16.msra.mxu0 %v4378
      %4558 = vmatprep.subr.bf16.mxu0 0
      %4559 = vmatpush1.bf16.msra.mxu0 %v4379
      %4560 = vmatprep.subr.bf16.mxu0 0
      %4561 = vmatpush1.bf16.msra.mxu0 %v4380
      %4562 = vmatprep.subr.bf16.mxu0 0
      %4563 = vmatpush1.bf16.msra.mxu0 %v4381
      %4564 = vmatprep.subr.bf16.mxu0 0
      %4565 = vmatpush1.bf16.msra.mxu0 0
      %4566 = vmatprep.subr.bf16.mxu0 0
      %4567 = vmatpush1.bf16.msra.mxu0 0
      %4568 = vmatprep.subr.bf16.mxu0 0
      %4569 = vmatpush1.bf16.msra.mxu0 0
      %4570 = vmatprep.subr.bf16.mxu0 0
      %4571 = vmatpush1.bf16.msra.mxu0 0
      %4572 = vmatprep.subr.bf16.mxu0 0
      %4573 = vmatpush1.bf16.msra.mxu0 0
      %4574 = vmatprep.subr.bf16.mxu0 0
      %4575 = vmatpush1.bf16.msra.mxu0 0
      %4576 = vmatprep.subr.bf16.mxu0 0
      %4577 = vmatpush1.bf16.msra.mxu0 0
      %4578 = vmatprep.subr.bf16.mxu0 0
      %4579 = vmatpush1.bf16.msra.mxu0 0
      %4580 = vmatprep.subr.bf16.mxu0 0
      %4581 = vmatpush1.bf16.msra.mxu0 0
      %4582 = vmatprep.subr.bf16.mxu0 0
      %4583 = vmatpush1.bf16.msra.mxu0 0
      %4584 = vmatprep.subr.bf16.mxu0 0
      %4585 = vmatpush1.bf16.msra.mxu0 0
      %4586 = vmatprep.subr.bf16.mxu0 0
      %4587 = vmatpush1.bf16.msra.mxu0 0
      %4588 = vmatprep.mubr.bf16.mxu0 0
      %4589 = vmatmul.mubr.bf16.gmra.mrb[0].mxu0 %v4403
      %v4590 = vpop.f32.mrb[0].mxu0
      %v4591 = vadd.f32 %v4470, %v4590
      %v4592 = vpop.f32.mrb[0].mxu0
      %v4593 = vpop.f32.mrb[0].mxu0
      %v4594 = vadd.f32 %v4473, %v4593
      %v4595 = vpop.f32.mrb[0].mxu0
      %4596 = vmatprep.mubr.bf16.mxu0 0
      %4597 = vmatmul.mubr.bf16.gmra.mrb[0].mxu0 %v4406
      %v4598 = vpop.f32.mrb[0].mxu0
      %v4599 = vadd.f32 %v4478, %v4598
      %v4600 = vpop.f32.mrb[0].mxu0
      %v4601 = vpop.f32.mrb[0].mxu0
      %v4602 = vadd.f32 %v4481, %v4601
      %v4603 = vpop.f32.mrb[0].mxu0
      %4604 = vmatprep.mubr.bf16.mxu0 0
      %4605 = vmatmul.mubr.bf16.gmra.mrb[0].mxu0 %v4409
      %v4606 = vpop.f32.mrb[0].mxu0
      %v4607 = vadd.f32 %v4486, %v4606
      %v4608 = vpop.f32.mrb[0].mxu0
      %v4609 = vpop.f32.mrb[0].mxu0
      %v4610 = vadd.f32 %v4489, %v4609
      %v4611 = vpop.f32.mrb[0].mxu0
      %4612 = vmatprep.mubr.bf16.mxu0 0
      %4613 = vmatmul.mubr.bf16.gmra.mrb[0].mxu0 %v4412
      %v4614 = vpop.f32.mrb[0].mxu0
      %v4615 = vadd.f32 %v4494, %v4614
      %v4616 = vpop.f32.mrb[0].mxu0
      %v4617 = vpop.f32.mrb[0].mxu0
      %v4618 = vadd.f32 %v4497, %v4617
      %v4619 = vpop.f32.mrb[0].mxu0
      %4620 = vmatprep.mubr.bf16.mxu0 0
      %4621 = vmatmul.mubr.bf16.gmra.mrb[0].mxu0 %v4415
      %v4622 = vpop.f32.mrb[0].mxu0
      %v4623 = vadd.f32 %v4502, %v4622
      %v4624 = vpop.f32.mrb[0].mxu0
      %v4625 = vpop.f32.mrb[0].mxu0
      %v4626 = vadd.f32 %v4505, %v4625
      %v4627 = vpop.f32.mrb[0].mxu0
      %4628 = vmatprep.mubr.bf16.mxu0 0
      %4629 = vmatmul.mubr.bf16.gmra.mrb[0].mxu0 %v4418
      %v4630 = vpop.f32.mrb[0].mxu0
      %v4631 = vadd.f32 %v4510, %v4630
      %v4632 = vpop.f32.mrb[0].mxu0
      %v4633 = vpop.f32.mrb[0].mxu0
      %v4634 = vadd.f32 %v4513, %v4633
      %v4635 = vpop.f32.mrb[0].mxu0
      %4636 = vmatprep.mubr.bf16.mxu0 0
      %4637 = vmatmul.mubr.bf16.gmra.mrb[0].mxu0 %v4421
      %v4638 = vpop.f32.mrb[0].mxu0
      %v4639 = vadd.f32 %v4518, %v4638
      %v4640 = vpop.f32.mrb[0].mxu0
      %v4641 = vpop.f32.mrb[0].mxu0
      %v4642 = vadd.f32 %v4521, %v4641
      %v4643 = vpop.f32.mrb[0].mxu0
      %4644 = vmatprep.mubr.bf16.mxu0 0
      %4645 = vmatmul.mubr.bf16.gmra.mrb[0].mxu0 %v4424
      %v4646 = vpop.f32.mrb[0].mxu0
      %v4647 = vadd.f32 %v4526, %v4646
      %v4648 = vpop.f32.mrb[0].mxu0
      %v4649 = vpop.f32.mrb[0].mxu0
      %v4650 = vadd.f32 %v4529, %v4649
      %v4651 = vpop.f32.mrb[0].mxu0
      %4652 = vmatprep.mubr.bf16.mxu0 0
      %4653 = vmatmul.mubr.bf16.gmra.mrb[0].mxu0 %v4427
      %v4654 = vpop.f32.mrb[0].mxu0
      %v4655 = vadd.f32 %v4534, %v4654
      %v4656 = vpop.f32.mrb[0].mxu0
      %v4657 = vpop.f32.mrb[0].mxu0
      %v4658 = vadd.f32 %v4537, %v4657
      %v4659 = vpop.f32.mrb[0].mxu0
      %4660 = vmatprep.mubr.bf16.mxu0 0
      %4661 = vmatmul.mubr.bf16.gmra.mrb[0].mxu0 %v4430
      %v4662 = vpop.f32.mrb[0].mxu0
      %v4663 = vadd.f32 %v4542, %v4662
      %v4664 = vpop.f32.mrb[0].mxu0
      %v4665 = vpop.f32.mrb[0].mxu0
      %v4666 = vadd.f32 %v4545, %v4665
      %v4667 = vpop.f32.mrb[0].mxu0
      %4668 = vmatprep.mubr.bf16.mxu0 0
      %4669 = vmatmul.mubr.bf16.gmra.mrb[0].mxu0 %v4433
      %v4670 = vpop.f32.mrb[0].mxu0
      %v4671 = vadd.f32 %v4550, %v4670
      %v4672 = vpop.f32.mrb[0].mxu0
      %v4673 = vpop.f32.mrb[0].mxu0
      %v4674 = vadd.f32 %v4553, %v4673
      %v4675 = vpop.f32.mrb[0].mxu0
      %4676 = vdwg.mxu0
      %v4677 = vadd.f32 %v4185, %v4591
      %v4678 = vadd.f32 %v4186, %v4594
      %v4679 = vadd.f32 %v4187, %v4599
      %v4680 = vadd.f32 %v4188, %v4602
      %v4681 = vadd.f32 %v4189, %v4607
      %v4682 = vadd.f32 %v4190, %v4610
      %v4683 = vadd.f32 %v4191, %v4615
      %v4684 = vadd.f32 %v4192, %v4618
      %v4685 = vadd.f32 %v4193, %v4623
      %v4686 = vadd.f32 %v4194, %v4626
      %v4687 = vadd.f32 %v4195, %v4631
      %v4688 = vadd.f32 %v4196, %v4634
      %v4689 = vadd.f32 %v4197, %v4639
      %v4690 = vadd.f32 %v4198, %v4642
      %v4691 = vadd.f32 %v4199, %v4647
      %v4692 = vadd.f32 %v4200, %v4650
      %v4693 = vadd.f32 %v4201, %v4655
      %v4694 = vadd.f32 %v4202, %v4658
      %v4695 = vadd.f32 %v4203, %v4663
      %v4696 = vadd.f32 %v4204, %v4666
      %v4697 = vadd.f32 %v4205, %v4671
      %v4698 = vadd.f32 %v4206, %v4674
      %s4699 = scalar_lea.vmem [#allocation3], 96
      %v4700 = vld [vmem:[%s4699] sm:$0xff]
      %v4701 = vld [vmem:[%s4699 + $0x8] sm:$0xff]
      %v4702 = vld [vmem:[%s4699 + $0x10] sm:$0xff]
      %v4703 = vld [vmem:[%s4699 + $0x18] sm:$0xff]
      %v4704 = vld [vmem:[%s4699 + $0x20] sm:$0xff]
      %v4705 = vld [vmem:[%s4699 + $0x28] sm:$0xff]
      %v4706 = vld [vmem:[%s4699 + $0x30] sm:$0xff]
      %v4707 = vld [vmem:[%s4699 + $0x38] sm:$0xff]
      %v4708 = vld [vmem:[%s4699 + $0x40] sm:$0xff]
      %v4709 = vld [vmem:[%s4699 + $0x48] sm:$0xff]
      %v4710 = vld [vmem:[%s4699 + $0x50] sm:$0xff]
      %v4711 = vld [vmem:[%s4699 + $0x58] sm:$0xff]
      %v4712 = vld [vmem:[%s4699 + $0x60] sm:$0xff]
      %v4713 = vld [vmem:[%s4699 + $0x68] sm:$0xff]
      %v4714 = vld [vmem:[%s4699 + $0x70] sm:$0xff]
      %v4715 = vld [vmem:[%s4699 + $0x78] sm:$0xff]
      %v4716 = vld [vmem:[%s4699 + $0x80] sm:$0xff]
      %v4717 = vld [vmem:[%s4699 + $0x88] sm:$0xff]
      %v4718 = vld [vmem:[%s4699 + $0x90] sm:$0xff]
      %v4719 = vld [vmem:[%s4699 + $0x98] sm:$0xff]
      %v4720 = vld [vmem:[%s4699 + $0xa0] sm:$0xff]
      %v4721 = vld [vmem:[%s4699 + $0xa8] sm:$0xff]
      %v4722 = vld [vmem:[%s4699 + $0xb0] sm:$0xff]
      %v4723 = vld [vmem:[%s4699 + $0xb8] sm:$0xff]
      %v4724 = vld [vmem:[%s4699 + $0xc0] sm:$0xff]
      %v4725 = vld [vmem:[%s4699 + $0xc8] sm:$0xff]
      %v4726 = vld [vmem:[%s4699 + $0xd0] sm:$0xff]
      %v4727 = vld [vmem:[%s4699 + $0xd8] sm:$0xff]
      %v4728 = vld [vmem:[%s4699 + $0xe0] sm:$0xff]
      %v4729 = vld [vmem:[%s4699 + $0xe8] sm:$0xff]
      %v4730 = vld [vmem:[%s4699 + $0xf0] sm:$0xff]
      %v4731 = vld [vmem:[%s4699 + $0xf8] sm:$0xff]
      %v4732 = vld [vmem:[%s4699 + $0x100] sm:$0xff]
      %s4733 = scalar_lea.vmem %s2, 640
      %v4734 = vld [vmem:[%s4733] sm:$0xf]
      %v4735 = vld [vmem:[%s4733 + $0x4] sm:$0xf]
      %v4736 = vld [vmem:[%s4733 + $0x8] sm:$0xf]
      %v4737 = vld [vmem:[%s4733 + $0xc] sm:$0xf]
      %v4738 = vld [vmem:[%s4733 + $0x10] sm:$0xf]
      %v4739 = vld [vmem:[%s4733 + $0x14] sm:$0xf]
      %v4740 = vld [vmem:[%s4733 + $0x18] sm:$0xf]
      %v4741 = vld [vmem:[%s4733 + $0x1c] sm:$0xf]
      %v4742 = vld [vmem:[%s4733 + $0x20] sm:$0xf]
      %v4743 = vld [vmem:[%s4733 + $0x24] sm:$0xf]
      %v4744 = vld [vmem:[%s4733 + $0x28] sm:$0xf]
      %v4745 = vld [vmem:[%s4733 + $0x2c] sm:$0xf]
      %v4746 = vld [vmem:[%s4733 + $0x30] sm:$0xf]
      %v4747 = vld [vmem:[%s4733 + $0x34] sm:$0xf]
      %v4748 = vld [vmem:[%s4733 + $0x38] sm:$0xf]
      %v4749 = vld [vmem:[%s4733 + $0x3c] sm:$0xf]
      %v4750 = vld [vmem:[%s4733 + $0x40] sm:$0xf]
      %v4751 = vld [vmem:[%s4733 + $0x44] sm:$0xf]
      %v4752 = vld [vmem:[%s4733 + $0x48] sm:$0xf]
      %v4753 = vld [vmem:[%s4733 + $0x4c] sm:$0xf]
      %v4754 = vld [vmem:[%s4733 + $0x50] sm:$0xf]
      %v4755 = vld [vmem:[%s4733 + $0x54] sm:$0xf]
      %v4756 = vld [vmem:[%s4733 + $0x58] sm:$0xf]
      %v4757 = vld [vmem:[%s4733 + $0x5c] sm:$0xf]
      %v4758 = vld [vmem:[%s4733 + $0x60] sm:$0xf]
      %v4759 = vld [vmem:[%s4733 + $0x64] sm:$0xf]
      %v4760 = vld [vmem:[%s4733 + $0x68] sm:$0xf]
      %v4761 = vld [vmem:[%s4733 + $0x6c] sm:$0xf]
      %v4762 = vld [vmem:[%s4733 + $0x70] sm:$0xf]
      %v4763 = vld [vmem:[%s4733 + $0x74] sm:$0xf]
      %v4764 = vld [vmem:[%s4733 + $0x78] sm:$0xf]
      %v4765 = vld [vmem:[%s4733 + $0x7c] sm:$0xf]
      %v4766 = vld [vmem:[%s4733 + $0x80] sm:$0xf]
      %v4767 = vld [vmem:[%s4733 + $0x84] sm:$0xf]
      %v4768 = vld [vmem:[%s4733 + $0x88] sm:$0xf]
      %v4769 = vld [vmem:[%s4733 + $0x8c] sm:$0xf]
      %v4770 = vld [vmem:[%s4733 + $0x90] sm:$0xf]
      %v4771 = vld [vmem:[%s4733 + $0x94] sm:$0xf]
      %v4772 = vld [vmem:[%s4733 + $0x98] sm:$0xf]
      %v4773 = vld [vmem:[%s4733 + $0x9c] sm:$0xf]
      %v4814 = vunpack.c.l.b16 %v4734
      %v4815 = vunpack.c.l.b16 %v4735
      %v4816 = vunpack.c.l.b16 %v4736
      %v4817 = vunpack.c.l.b16 %v4737
      %v4818 = vunpack.c.l.b16 %v4738
      %v4819 = vunpack.c.l.b16 %v4739
      %v4820 = vunpack.c.l.b16 %v4740
      %v4821 = vunpack.c.l.b16 %v4741
      %v4822 = vunpack.c.l.b16 %v4742
      %v4823 = vunpack.c.l.b16 %v4743
      %v4824 = vunpack.c.l.b16 %v4744
      %v4825 = vunpack.c.l.b16 %v4745
      %v4826 = vunpack.c.l.b16 %v4746
      %v4827 = vunpack.c.l.b16 %v4747
      %v4828 = vunpack.c.l.b16 %v4748
      %v4829 = vunpack.c.l.b16 %v4749
      %v4830 = vunpack.c.l.b16 %v4750
      %v4831 = vunpack.c.l.b16 %v4751
      %v4832 = vunpack.c.l.b16 %v4752
      %v4833 = vunpack.c.l.b16 %v4753
      %v4834 = vunpack.c.l.b16 %v4754
      %v4835 = vunpack.c.l.b16 %v4755
      %v4836 = vunpack.c.l.b16 %v4756
      %v4837 = vunpack.c.l.b16 %v4757
      %v4838 = vunpack.c.l.b16 %v4758
      %v4839 = vunpack.c.l.b16 %v4759
      %v4840 = vunpack.c.l.b16 %v4760
      %v4841 = vunpack.c.l.b16 %v4761
      %v4842 = vunpack.c.l.b16 %v4762
      %v4843 = vunpack.c.l.b16 %v4763
      %v4844 = vunpack.c.l.b16 %v4764
      %v4845 = vunpack.c.l.b16 %v4765
      %v4846 = vunpack.c.l.b16 %v4766
      %v4847 = vunpack.c.l.b16 %v4767
      %v4848 = vunpack.c.l.b16 %v4768
      %v4849 = vunpack.c.l.b16 %v4769
      %v4850 = vunpack.c.l.b16 %v4770
      %v4851 = vunpack.c.l.b16 %v4771
      %v4852 = vunpack.c.l.b16 %v4772
      %v4853 = vunpack.c.l.b16 %v4773
      %v4854 = vpack.c.b16 %v4815, %v4814
      %v4855 = vpack.c.b16 %v4817, %v4816
      %v4856 = vpack.c.b16 %v4819, %v4818
      %v4857 = vpack.c.b16 %v4821, %v4820
      %v4858 = vpack.c.b16 %v4823, %v4822
      %v4859 = vpack.c.b16 %v4825, %v4824
      %v4860 = vpack.c.b16 %v4827, %v4826
      %v4861 = vpack.c.b16 %v4829, %v4828
      %v4862 = vpack.c.b16 %v4831, %v4830
      %v4863 = vpack.c.b16 %v4833, %v4832
      %v4864 = vpack.c.b16 %v4835, %v4834
      %v4865 = vpack.c.b16 %v4837, %v4836
      %v4866 = vpack.c.b16 %v4839, %v4838
      %v4867 = vpack.c.b16 %v4841, %v4840
      %v4868 = vpack.c.b16 %v4843, %v4842
      %v4869 = vpack.c.b16 %v4845, %v4844
      %v4870 = vpack.c.b16 %v4847, %v4846
      %v4871 = vpack.c.b16 %v4849, %v4848
      %v4872 = vpack.c.b16 %v4851, %v4850
      %v4873 = vpack.c.b16 %v4853, %v4852
      %v4895 = vsel %vm2287, %v4702, 0
      %v4898 = vsel %vm2287, %v4705, 0
      %v4901 = vsel %vm2287, %v4708, 0
      %v4904 = vsel %vm2287, %v4711, 0
      %v4907 = vsel %vm2287, %v4714, 0
      %v4910 = vsel %vm2287, %v4717, 0
      %v4913 = vsel %vm2287, %v4720, 0
      %v4916 = vsel %vm2287, %v4723, 0
      %v4919 = vsel %vm2287, %v4726, 0
      %v4922 = vsel %vm2287, %v4729, 0
      %v4925 = vsel %vm2287, %v4732, 0
      %4927 = vmatprep.subr.bf16.mxu0 0
      %4928 = vmatpush1.bf16.msra.mxu0 %v4854
      %4929 = vmatprep.subr.bf16.mxu0 0
      %4930 = vmatpush1.bf16.msra.mxu0 %v4855
      %4931 = vmatprep.subr.bf16.mxu0 0
      %4932 = vmatpush1.bf16.msra.mxu0 %v4856
      %4933 = vmatprep.subr.bf16.mxu0 0
      %4934 = vmatpush1.bf16.msra.mxu0 %v4857
      %4935 = vmatprep.subr.bf16.mxu0 0
      %4936 = vmatpush1.bf16.msra.mxu0 %v4858
      %4937 = vmatprep.subr.bf16.mxu0 0
      %4938 = vmatpush1.bf16.msra.mxu0 %v4859
      %4939 = vmatprep.subr.bf16.mxu0 0
      %4940 = vmatpush1.bf16.msra.mxu0 %v4860
      %4941 = vmatprep.subr.bf16.mxu0 0
      %4942 = vmatpush1.bf16.msra.mxu0 %v4861
      %4943 = vmatprep.subr.bf16.mxu0 0
      %4944 = vmatpush1.bf16.msra.mxu0 %v4862
      %4945 = vmatprep.subr.bf16.mxu0 0
      %4946 = vmatpush1.bf16.msra.mxu0 %v4863
      %4947 = vmatprep.subr.bf16.mxu0 0
      %4948 = vmatpush1.bf16.msra.mxu0 %v4864
      %4949 = vmatprep.subr.bf16.mxu0 0
      %4950 = vmatpush1.bf16.msra.mxu0 %v4865
      %4951 = vmatprep.subr.bf16.mxu0 0
      %4952 = vmatpush1.bf16.msra.mxu0 %v4866
      %4953 = vmatprep.subr.bf16.mxu0 0
      %4954 = vmatpush1.bf16.msra.mxu0 %v4867
      %4955 = vmatprep.subr.bf16.mxu0 0
      %4956 = vmatpush1.bf16.msra.mxu0 %v4868
      %4957 = vmatprep.subr.bf16.mxu0 0
      %4958 = vmatpush1.bf16.msra.mxu0 %v4869
      %4959 = vmatprep.mubr.bf16.mxu0 %v4701
      %4960 = vmatmul.mubr.bf16.gmra.mrb[0].mxu0 %v4700
      %v4961 = vpop.f32.mrb[0].mxu0
      %v4962 = vadd.f32 0.0, %v4961
      %v4963 = vpop.f32.mrb[0].mxu0
      %v4964 = vpop.f32.mrb[0].mxu0
      %v4965 = vadd.f32 0.0, %v4964
      %v4966 = vpop.f32.mrb[0].mxu0
      %4967 = vmatprep.mubr.bf16.mxu0 %v4704
      %4968 = vmatmul.mubr.bf16.gmra.mrb[0].mxu0 %v4703
      %v4969 = vpop.f32.mrb[0].mxu0
      %v4970 = vadd.f32 0.0, %v4969
      %v4971 = vpop.f32.mrb[0].mxu0
      %v4972 = vpop.f32.mrb[0].mxu0
      %v4973 = vadd.f32 0.0, %v4972
      %v4974 = vpop.f32.mrb[0].mxu0
      %4975 = vmatprep.mubr.bf16.mxu0 %v4707
      %4976 = vmatmul.mubr.bf16.gmra.mrb[0].mxu0 %v4706
      %v4977 = vpop.f32.mrb[0].mxu0
      %v4978 = vadd.f32 0.0, %v4977
      %v4979 = vpop.f32.mrb[0].mxu0
      %v4980 = vpop.f32.mrb[0].mxu0
      %v4981 = vadd.f32 0.0, %v4980
      %v4982 = vpop.f32.mrb[0].mxu0
      %4983 = vmatprep.mubr.bf16.mxu0 %v4710
      %4984 = vmatmul.mubr.bf16.gmra.mrb[0].mxu0 %v4709
      %v4985 = vpop.f32.mrb[0].mxu0
      %v4986 = vadd.f32 0.0, %v4985
      %v4987 = vpop.f32.mrb[0].mxu0
      %v4988 = vpop.f32.mrb[0].mxu0
      %v4989 = vadd.f32 0.0, %v4988
      %v4990 = vpop.f32.mrb[0].mxu0
      %4991 = vmatprep.mubr.bf16.mxu0 %v4713
      %4992 = vmatmul.mubr.bf16.gmra.mrb[0].mxu0 %v4712
      %v4993 = vpop.f32.mrb[0].mxu0
      %v4994 = vadd.f32 0.0, %v4993
      %v4995 = vpop.f32.mrb[0].mxu0
      %v4996 = vpop.f32.mrb[0].mxu0
      %v4997 = vadd.f32 0.0, %v4996
      %v4998 = vpop.f32.mrb[0].mxu0
      %4999 = vmatprep.mubr.bf16.mxu0 %v4716
      %5000 = vmatmul.mubr.bf16.gmra.mrb[0].mxu0 %v4715
      %v5001 = vpop.f32.mrb[0].mxu0
      %v5002 = vadd.f32 0.0, %v5001
      %v5003 = vpop.f32.mrb[0].mxu0
      %v5004 = vpop.f32.mrb[0].mxu0
      %v5005 = vadd.f32 0.0, %v5004
      %v5006 = vpop.f32.mrb[0].mxu0
      %5007 = vmatprep.mubr.bf16.mxu0 %v4719
      %5008 = vmatmul.mubr.bf16.gmra.mrb[0].mxu0 %v4718
      %v5009 = vpop.f32.mrb[0].mxu0
      %v5010 = vadd.f32 0.0, %v5009
      %v5011 = vpop.f32.mrb[0].mxu0
      %v5012 = vpop.f32.mrb[0].mxu0
      %v5013 = vadd.f32 0.0, %v5012
      %v5014 = vpop.f32.mrb[0].mxu0
      %5015 = vmatprep.mubr.bf16.mxu0 %v4722
      %5016 = vmatmul.mubr.bf16.gmra.mrb[0].mxu0 %v4721
      %v5017 = vpop.f32.mrb[0].mxu0
      %v5018 = vadd.f32 0.0, %v5017
      %v5019 = vpop.f32.mrb[0].mxu0
      %v5020 = vpop.f32.mrb[0].mxu0
      %v5021 = vadd.f32 0.0, %v5020
      %v5022 = vpop.f32.mrb[0].mxu0
      %5023 = vmatprep.mubr.bf16.mxu0 %v4725
      %5024 = vmatmul.mubr.bf16.gmra.mrb[0].mxu0 %v4724
      %v5025 = vpop.f32.mrb[0].mxu0
      %v5026 = vadd.f32 0.0, %v5025
      %v5027 = vpop.f32.mrb[0].mxu0
      %v5028 = vpop.f32.mrb[0].mxu0
      %v5029 = vadd.f32 0.0, %v5028
      %v5030 = vpop.f32.mrb[0].mxu0
      %5031 = vmatprep.mubr.bf16.mxu0 %v4728
      %5032 = vmatmul.mubr.bf16.gmra.mrb[0].mxu0 %v4727
      %v5033 = vpop.f32.mrb[0].mxu0
      %v5034 = vadd.f32 0.0, %v5033
      %v5035 = vpop.f32.mrb[0].mxu0
      %v5036 = vpop.f32.mrb[0].mxu0
      %v5037 = vadd.f32 0.0, %v5036
      %v5038 = vpop.f32.mrb[0].mxu0
      %5039 = vmatprep.mubr.bf16.mxu0 %v4731
      %5040 = vmatmul.mubr.bf16.gmra.mrb[0].mxu0 %v4730
      %v5041 = vpop.f32.mrb[0].mxu0
      %v5042 = vadd.f32 0.0, %v5041
      %v5043 = vpop.f32.mrb[0].mxu0
      %v5044 = vpop.f32.mrb[0].mxu0
      %v5045 = vadd.f32 0.0, %v5044
      %v5046 = vpop.f32.mrb[0].mxu0
      %5047 = vdwg.mxu0
      %5048 = vmatprep.subr.bf16.mxu0 0
      %5049 = vmatpush1.bf16.msra.mxu0 %v4870
      %5050 = vmatprep.subr.bf16.mxu0 0
      %5051 = vmatpush1.bf16.msra.mxu0 %v4871
      %5052 = vmatprep.subr.bf16.mxu0 0
      %5053 = vmatpush1.bf16.msra.mxu0 %v4872
      %5054 = vmatprep.subr.bf16.mxu0 0
      %5055 = vmatpush1.bf16.msra.mxu0 %v4873
      %5056 = vmatprep.subr.bf16.mxu0 0
      %5057 = vmatpush1.bf16.msra.mxu0 0
      %5058 = vmatprep.subr.bf16.mxu0 0
      %5059 = vmatpush1.bf16.msra.mxu0 0
      %5060 = vmatprep.subr.bf16.mxu0 0
      %5061 = vmatpush1.bf16.msra.mxu0 0
      %5062 = vmatprep.subr.bf16.mxu0 0
      %5063 = vmatpush1.bf16.msra.mxu0 0
      %5064 = vmatprep.subr.bf16.mxu0 0
      %5065 = vmatpush1.bf16.msra.mxu0 0
      %5066 = vmatprep.subr.bf16.mxu0 0
      %5067 = vmatpush1.bf16.msra.mxu0 0
      %5068 = vmatprep.subr.bf16.mxu0 0
      %5069 = vmatpush1.bf16.msra.mxu0 0
      %5070 = vmatprep.subr.bf16.mxu0 0
      %5071 = vmatpush1.bf16.msra.mxu0 0
      %5072 = vmatprep.subr.bf16.mxu0 0
      %5073 = vmatpush1.bf16.msra.mxu0 0
      %5074 = vmatprep.subr.bf16.mxu0 0
      %5075 = vmatpush1.bf16.msra.mxu0 0
      %5076 = vmatprep.subr.bf16.mxu0 0
      %5077 = vmatpush1.bf16.msra.mxu0 0
      %5078 = vmatprep.subr.bf16.mxu0 0
      %5079 = vmatpush1.bf16.msra.mxu0 0
      %5080 = vmatprep.mubr.bf16.mxu0 0
      %5081 = vmatmul.mubr.bf16.gmra.mrb[0].mxu0 %v4895
      %v5082 = vpop.f32.mrb[0].mxu0
      %v5083 = vadd.f32 %v4962, %v5082
      %v5084 = vpop.f32.mrb[0].mxu0
      %v5085 = vpop.f32.mrb[0].mxu0
      %v5086 = vadd.f32 %v4965, %v5085
      %v5087 = vpop.f32.mrb[0].mxu0
      %5088 = vmatprep.mubr.bf16.mxu0 0
      %5089 = vmatmul.mubr.bf16.gmra.mrb[0].mxu0 %v4898
      %v5090 = vpop.f32.mrb[0].mxu0
      %v5091 = vadd.f32 %v4970, %v5090
      %v5092 = vpop.f32.mrb[0].mxu0
      %v5093 = vpop.f32.mrb[0].mxu0
      %v5094 = vadd.f32 %v4973, %v5093
      %v5095 = vpop.f32.mrb[0].mxu0
      %5096 = vmatprep.mubr.bf16.mxu0 0
      %5097 = vmatmul.mubr.bf16.gmra.mrb[0].mxu0 %v4901
      %v5098 = vpop.f32.mrb[0].mxu0
      %v5099 = vadd.f32 %v4978, %v5098
      %v5100 = vpop.f32.mrb[0].mxu0
      %v5101 = vpop.f32.mrb[0].mxu0
      %v5102 = vadd.f32 %v4981, %v5101
      %v5103 = vpop.f32.mrb[0].mxu0
      %5104 = vmatprep.mubr.bf16.mxu0 0
      %5105 = vmatmul.mubr.bf16.gmra.mrb[0].mxu0 %v4904
      %v5106 = vpop.f32.mrb[0].mxu0
      %v5107 = vadd.f32 %v4986, %v5106
      %v5108 = vpop.f32.mrb[0].mxu0
      %v5109 = vpop.f32.mrb[0].mxu0
      %v5110 = vadd.f32 %v4989, %v5109
      %v5111 = vpop.f32.mrb[0].mxu0
      %5112 = vmatprep.mubr.bf16.mxu0 0
      %5113 = vmatmul.mubr.bf16.gmra.mrb[0].mxu0 %v4907
      %v5114 = vpop.f32.mrb[0].mxu0
      %v5115 = vadd.f32 %v4994, %v5114
      %v5116 = vpop.f32.mrb[0].mxu0
      %v5117 = vpop.f32.mrb[0].mxu0
      %v5118 = vadd.f32 %v4997, %v5117
      %v5119 = vpop.f32.mrb[0].mxu0
      %5120 = vmatprep.mubr.bf16.mxu0 0
      %5121 = vmatmul.mubr.bf16.gmra.mrb[0].mxu0 %v4910
      %v5122 = vpop.f32.mrb[0].mxu0
      %v5123 = vadd.f32 %v5002, %v5122
      %v5124 = vpop.f32.mrb[0].mxu0
      %v5125 = vpop.f32.mrb[0].mxu0
      %v5126 = vadd.f32 %v5005, %v5125
      %v5127 = vpop.f32.mrb[0].mxu0
      %5128 = vmatprep.mubr.bf16.mxu0 0
      %5129 = vmatmul.mubr.bf16.gmra.mrb[0].mxu0 %v4913
      %v5130 = vpop.f32.mrb[0].mxu0
      %v5131 = vadd.f32 %v5010, %v5130
      %v5132 = vpop.f32.mrb[0].mxu0
      %v5133 = vpop.f32.mrb[0].mxu0
      %v5134 = vadd.f32 %v5013, %v5133
      %v5135 = vpop.f32.mrb[0].mxu0
      %5136 = vmatprep.mubr.bf16.mxu0 0
      %5137 = vmatmul.mubr.bf16.gmra.mrb[0].mxu0 %v4916
      %v5138 = vpop.f32.mrb[0].mxu0
      %v5139 = vadd.f32 %v5018, %v5138
      %v5140 = vpop.f32.mrb[0].mxu0
      %v5141 = vpop.f32.mrb[0].mxu0
      %v5142 = vadd.f32 %v5021, %v5141
      %v5143 = vpop.f32.mrb[0].mxu0
      %5144 = vmatprep.mubr.bf16.mxu0 0
      %5145 = vmatmul.mubr.bf16.gmra.mrb[0].mxu0 %v4919
      %v5146 = vpop.f32.mrb[0].mxu0
      %v5147 = vadd.f32 %v5026, %v5146
      %v5148 = vpop.f32.mrb[0].mxu0
      %v5149 = vpop.f32.mrb[0].mxu0
      %v5150 = vadd.f32 %v5029, %v5149
      %v5151 = vpop.f32.mrb[0].mxu0
      %5152 = vmatprep.mubr.bf16.mxu0 0
      %5153 = vmatmul.mubr.bf16.gmra.mrb[0].mxu0 %v4922
      %v5154 = vpop.f32.mrb[0].mxu0
      %v5155 = vadd.f32 %v5034, %v5154
      %v5156 = vpop.f32.mrb[0].mxu0
      %v5157 = vpop.f32.mrb[0].mxu0
      %v5158 = vadd.f32 %v5037, %v5157
      %v5159 = vpop.f32.mrb[0].mxu0
      %5160 = vmatprep.mubr.bf16.mxu0 0
      %5161 = vmatmul.mubr.bf16.gmra.mrb[0].mxu0 %v4925
      %v5162 = vpop.f32.mrb[0].mxu0
      %v5163 = vadd.f32 %v5042, %v5162
      %v5164 = vpop.f32.mrb[0].mxu0
      %v5165 = vpop.f32.mrb[0].mxu0
      %v5166 = vadd.f32 %v5045, %v5165
      %v5167 = vpop.f32.mrb[0].mxu0
      %5168 = vdwg.mxu0
      %v5169 = vadd.f32 %v4677, %v5083
      %v5170 = vadd.f32 %v4678, %v5086
      %v5171 = vadd.f32 %v4679, %v5091
      %v5172 = vadd.f32 %v4680, %v5094
      %v5173 = vadd.f32 %v4681, %v5099
      %v5174 = vadd.f32 %v4682, %v5102
      %v5175 = vadd.f32 %v4683, %v5107
      %v5176 = vadd.f32 %v4684, %v5110
      %v5177 = vadd.f32 %v4685, %v5115
      %v5178 = vadd.f32 %v4686, %v5118
      %v5179 = vadd.f32 %v4687, %v5123
      %v5180 = vadd.f32 %v4688, %v5126
      %v5181 = vadd.f32 %v4689, %v5131
      %v5182 = vadd.f32 %v4690, %v5134
      %v5183 = vadd.f32 %v4691, %v5139
      %v5184 = vadd.f32 %v4692, %v5142
      %v5185 = vadd.f32 %v4693, %v5147
      %v5186 = vadd.f32 %v4694, %v5150
      %v5187 = vadd.f32 %v4695, %v5155
      %v5188 = vadd.f32 %v4696, %v5158
      %v5189 = vadd.f32 %v4697, %v5163
      %v5190 = vadd.f32 %v4698, %v5166
      %v5211 = vrot.slane %v5169, 1
      %v5212 = vrot.slane %v5170, 1
      %v5213 = vsel %vm2082, %v5211, %v5212
      %v5214 = vrot.slane %v5171, 1
      %v5215 = vrot.slane %v5172, 1
      %v5216 = vsel %vm2082, %v5214, %v5215
      %v5217 = vrot.slane %v5173, 1
      %v5218 = vrot.slane %v5174, 1
      %v5219 = vsel %vm2082, %v5217, %v5218
      %v5220 = vrot.slane %v5175, 1
      %v5221 = vrot.slane %v5176, 1
      %v5222 = vsel %vm2082, %v5220, %v5221
      %v5223 = vrot.slane %v5177, 1
      %v5224 = vrot.slane %v5178, 1
      %v5225 = vsel %vm2082, %v5223, %v5224
      %v5226 = vrot.slane %v5179, 1
      %v5227 = vrot.slane %v5180, 1
      %v5228 = vsel %vm2082, %v5226, %v5227
      %v5229 = vrot.slane %v5181, 1
      %v5230 = vrot.slane %v5182, 1
      %v5231 = vsel %vm2082, %v5229, %v5230
      %v5232 = vrot.slane %v5183, 1
      %v5233 = vrot.slane %v5184, 1
      %v5234 = vsel %vm2082, %v5232, %v5233
      %v5235 = vrot.slane %v5185, 1
      %v5236 = vrot.slane %v5186, 1
      %v5237 = vsel %vm2082, %v5235, %v5236
      %v5238 = vrot.slane %v5187, 1
      %v5239 = vrot.slane %v5188, 1
      %v5240 = vsel %vm2082, %v5238, %v5239
      %v5261 = vmax.f32 %v5169, %v5213
      %v5262 = vmax.f32 %v5170, %v5212
      %v5263 = vmax.f32 %v5171, %v5216
      %v5264 = vmax.f32 %v5172, %v5215
      %v5265 = vmax.f32 %v5173, %v5219
      %v5266 = vmax.f32 %v5174, %v5218
      %v5267 = vmax.f32 %v5175, %v5222
      %v5268 = vmax.f32 %v5176, %v5221
      %v5269 = vmax.f32 %v5177, %v5225
      %v5270 = vmax.f32 %v5178, %v5224
      %v5271 = vmax.f32 %v5179, %v5228
      %v5272 = vmax.f32 %v5180, %v5227
      %v5273 = vmax.f32 %v5181, %v5231
      %v5274 = vmax.f32 %v5182, %v5230
      %v5275 = vmax.f32 %v5183, %v5234
      %v5276 = vmax.f32 %v5184, %v5233
      %v5277 = vmax.f32 %v5185, %v5237
      %v5278 = vmax.f32 %v5186, %v5236
      %v5279 = vmax.f32 %v5187, %v5240
      %v5280 = vmax.f32 %v5188, %v5239
      %v5283 = vrot.slane %v5189, 1
      %v5284 = vrot.slane %v5190, 1
      %v5285 = vsel %vm2082, %v5283, %v5284
      %v5288 = vmax.f32 %v5189, %v5285
      %v5289 = vmax.f32 %v5190, %v5284
      %v5290 = vmax.f32 %v5261, %v5263
      %v5291 = vmax.f32 %v5262, %v5264
      %v5292 = vmax.f32 %v5263, %v5265
      %v5293 = vmax.f32 %v5264, %v5266
      %v5294 = vmax.f32 %v5265, %v5267
      %v5295 = vmax.f32 %v5266, %v5268
      %v5296 = vmax.f32 %v5267, %v5269
      %v5297 = vmax.f32 %v5268, %v5270
      %v5298 = vmax.f32 %v5269, %v5271
      %v5299 = vmax.f32 %v5270, %v5272
      %v5300 = vmax.f32 %v5271, %v5273
      %v5301 = vmax.f32 %v5272, %v5274
      %v5302 = vmax.f32 %v5273, %v5275
      %v5303 = vmax.f32 %v5274, %v5276
      %v5304 = vmax.f32 %v5275, %v5277
      %v5305 = vmax.f32 %v5276, %v5278
      %v5306 = vmax.f32 %v5277, %v5279
      %v5307 = vmax.f32 %v5278, %v5280
      %v5308 = vmax.f32 %v5279, %v5288
      %v5309 = vmax.f32 %v5280, %v5289
      %vm5310 = vcmp.ge.f32.partialorder %v5290, 0.0
      %vm5311 = vcmp.ge.f32.partialorder %v5291, 0.0
      %vm5312 = vcmp.ge.f32.partialorder %v5292, 0.0
      %vm5313 = vcmp.ge.f32.partialorder %v5293, 0.0
      %vm5314 = vcmp.ge.f32.partialorder %v5294, 0.0
      %vm5315 = vcmp.ge.f32.partialorder %v5295, 0.0
      %vm5316 = vcmp.ge.f32.partialorder %v5296, 0.0
      %vm5317 = vcmp.ge.f32.partialorder %v5297, 0.0
      %vm5318 = vcmp.ge.f32.partialorder %v5298, 0.0
      %vm5319 = vcmp.ge.f32.partialorder %v5299, 0.0
      %vm5320 = vcmp.ge.f32.partialorder %v5300, 0.0
      %vm5321 = vcmp.ge.f32.partialorder %v5301, 0.0
      %vm5322 = vcmp.ge.f32.partialorder %v5302, 0.0
      %vm5323 = vcmp.ge.f32.partialorder %v5303, 0.0
      %vm5324 = vcmp.ge.f32.partialorder %v5304, 0.0
      %vm5325 = vcmp.ge.f32.partialorder %v5305, 0.0
      %vm5326 = vcmp.ge.f32.partialorder %v5306, 0.0
      %vm5327 = vcmp.ge.f32.partialorder %v5307, 0.0
      %vm5328 = vcmp.ge.f32.partialorder %v5308, 0.0
      %vm5329 = vcmp.ge.f32.partialorder %v5309, 0.0
      %v5330 = vmul.f32 %v5290, 0.01
      %v5331 = vmul.f32 %v5291, 0.01
      %v5332 = vmul.f32 %v5292, 0.01
      %v5333 = vmul.f32 %v5293, 0.01
      %v5334 = vmul.f32 %v5294, 0.01
      %v5335 = vmul.f32 %v5295, 0.01
      %v5336 = vmul.f32 %v5296, 0.01
      %v5337 = vmul.f32 %v5297, 0.01
      %v5338 = vmul.f32 %v5298, 0.01
      %v5339 = vmul.f32 %v5299, 0.01
      %v5340 = vmul.f32 %v5300, 0.01
      %v5341 = vmul.f32 %v5301, 0.01
      %v5342 = vmul.f32 %v5302, 0.01
      %v5343 = vmul.f32 %v5303, 0.01
      %v5344 = vmul.f32 %v5304, 0.01
      %v5345 = vmul.f32 %v5305, 0.01
      %v5346 = vmul.f32 %v5306, 0.01
      %v5347 = vmul.f32 %v5307, 0.01
      %v5348 = vmul.f32 %v5308, 0.01
      %v5349 = vmul.f32 %v5309, 0.01
      %v5350 = vsel %vm5310, %v5290, %v5330
      %v5351 = vsel %vm5311, %v5291, %v5331
      %v5352 = vsel %vm5312, %v5292, %v5332
      %v5353 = vsel %vm5313, %v5293, %v5333
      %v5354 = vsel %vm5314, %v5294, %v5334
      %v5355 = vsel %vm5315, %v5295, %v5335
      %v5356 = vsel %vm5316, %v5296, %v5336
      %v5357 = vsel %vm5317, %v5297, %v5337
      %v5358 = vsel %vm5318, %v5298, %v5338
      %v5359 = vsel %vm5319, %v5299, %v5339
      %v5360 = vsel %vm5320, %v5300, %v5340
      %v5361 = vsel %vm5321, %v5301, %v5341
      %v5362 = vsel %vm5322, %v5302, %v5342
      %v5363 = vsel %vm5323, %v5303, %v5343
      %v5364 = vsel %vm5324, %v5304, %v5344
      %v5365 = vsel %vm5325, %v5305, %v5345
      %v5366 = vsel %vm5326, %v5306, %v5346
      %v5367 = vsel %vm5327, %v5307, %v5347
      %v5368 = vsel %vm5328, %v5308, %v5348
      %v5369 = vsel %vm5329, %v5309, %v5349
      %5370 = vst.msk [vmem:[#allocation4] sm:$0xff] %vm2287, 0.0
      %5371 = vst.msk [vmem:[#allocation4 + $0x8] sm:$0xff] %vm2287, 0.0
      %5372 = vst.msk [vmem:[#allocation4 + $0x10] sm:$0xf] %vm2290, 0.0
      %s5373 = scalar_lea.vmem [#allocation4], 264
      %5374 = vst.msk [vmem:[%s5373] sm:$0xff] %vm2287, 0.0
      %5375 = vst.msk [vmem:[%s5373 + $0x8] sm:$0xff] %vm2287, 0.0
      %5376 = vst.msk [vmem:[%s5373 + $0x10] sm:$0xf] %vm2290, 0.0
      %5377 = vst.msk [vmem:[#allocation4] sm:$0x1] %vm2296, 0.0
      %5378 = vst.msk [vmem:[#allocation4 + $0x18] sm:$0x1] %vm2296, 0.0
      %5379 = vst.msk [vmem:[#allocation4 + $0x30] sm:$0x1] %vm2296, 0.0
      %5380 = vst.msk [vmem:[#allocation4 + $0x48] sm:$0x1] %vm2296, 0.0
      %5381 = vst.msk [vmem:[#allocation4 + $0x60] sm:$0x1] %vm2296, 0.0
      %5382 = vst.msk [vmem:[#allocation4 + $0x78] sm:$0x1] %vm2296, 0.0
      %5383 = vst.msk [vmem:[#allocation4 + $0x90] sm:$0x1] %vm2296, 0.0
      %5384 = vst.msk [vmem:[#allocation4 + $0xa8] sm:$0x1] %vm2296, 0.0
      %5385 = vst.msk [vmem:[#allocation4 + $0xc0] sm:$0x1] %vm2296, 0.0
      %5386 = vst.msk [vmem:[#allocation4 + $0xd8] sm:$0x1] %vm2296, 0.0
      %5387 = vst.msk [vmem:[#allocation4 + $0xf0] sm:$0x1] %vm2296, 0.0
      %5388 = vst.msk [vmem:[#allocation4 + $0x108] sm:$0x1] %vm2296, 0.0
      %5389 = vst.msk [vmem:[#allocation4 + $0xb] sm:$0xff] %vm2287, 0.0
      %5390 = vst.msk [vmem:[#allocation4 + $0x13] sm:$0x1] %vm2296, 0.0
      %5391 = vst.msk [vmem:[#allocation4 + $0x23] sm:$0xff] %vm2287, 0.0
      %5392 = vst.msk [vmem:[#allocation4 + $0x2b] sm:$0x1] %vm2296, 0.0
      %5393 = vst.msk [vmem:[#allocation4 + $0x3b] sm:$0xff] %vm2287, 0.0
      %5394 = vst.msk [vmem:[#allocation4 + $0x43] sm:$0x1] %vm2296, 0.0
      %5395 = vst.msk [vmem:[#allocation4 + $0x53] sm:$0xff] %vm2287, 0.0
      %5396 = vst.msk [vmem:[#allocation4 + $0x5b] sm:$0x1] %vm2296, 0.0
      %5397 = vst.msk [vmem:[#allocation4 + $0x6b] sm:$0xff] %vm2287, 0.0
      %5398 = vst.msk [vmem:[#allocation4 + $0x73] sm:$0x1] %vm2296, 0.0
      %5399 = vst.msk [vmem:[#allocation4 + $0x83] sm:$0xff] %vm2287, 0.0
      %5400 = vst.msk [vmem:[#allocation4 + $0x8b] sm:$0x1] %vm2296, 0.0
      %5401 = vst.msk [vmem:[#allocation4 + $0x9b] sm:$0xff] %vm2287, 0.0
      %5402 = vst.msk [vmem:[#allocation4 + $0xa3] sm:$0x1] %vm2296, 0.0
      %5403 = vst.msk [vmem:[#allocation4 + $0xb3] sm:$0xff] %vm2287, 0.0
      %5404 = vst.msk [vmem:[#allocation4 + $0xbb] sm:$0x1] %vm2296, 0.0
      %5405 = vst.msk [vmem:[#allocation4 + $0xcb] sm:$0xff] %vm2287, 0.0
      %5406 = vst.msk [vmem:[#allocation4 + $0xd3] sm:$0x1] %vm2296, 0.0
      %5407 = vst.msk [vmem:[#allocation4 + $0xe3] sm:$0xff] %vm2287, 0.0
      %5408 = vst.msk [vmem:[#allocation4 + $0xeb] sm:$0x1] %vm2296, 0.0
      %5409 = vst.msk [vmem:[#allocation4 + $0xfb] sm:$0xff] %vm2287, 0.0
      %5410 = vst.msk [vmem:[#allocation4 + $0x103] sm:$0x1] %vm2296, 0.0
      %5411 = vst.msk [vmem:[#allocation4 + $0x113] sm:$0xff] %vm2287, 0.0
      %5412 = vst.msk [vmem:[#allocation4 + $0x11b] sm:$0x1] %vm2296, 0.0
      %s5413 = scalar_lea.vmem [#allocation4], 24
      %5414 = vst.msk [vmem:[%s5413 + $0x1] sm:$0xff] %vm2287, %v5350
      %vm5415 = vcmask 517120
      %5416 = vst.msk [vmem:[%s5413 + $0x9] sm:$0x3] %vm5415, %v5351
      %5417 = vst.msk [vmem:[%s5413 + $0x19] sm:$0xff] %vm2287, %v5352
      %5418 = vst.msk [vmem:[%s5413 + $0x21] sm:$0x3] %vm5415, %v5353
      %5419 = vst.msk [vmem:[%s5413 + $0x31] sm:$0xff] %vm2287, %v5354
      %5420 = vst.msk [vmem:[%s5413 + $0x39] sm:$0x3] %vm5415, %v5355
      %5421 = vst.msk [vmem:[%s5413 + $0x49] sm:$0xff] %vm2287, %v5356
      %5422 = vst.msk [vmem:[%s5413 + $0x51] sm:$0x3] %vm5415, %v5357
      %5423 = vst.msk [vmem:[%s5413 + $0x61] sm:$0xff] %vm2287, %v5358
      %5424 = vst.msk [vmem:[%s5413 + $0x69] sm:$0x3] %vm5415, %v5359
      %5425 = vst.msk [vmem:[%s5413 + $0x79] sm:$0xff] %vm2287, %v5360
      %5426 = vst.msk [vmem:[%s5413 + $0x81] sm:$0x3] %vm5415, %v5361
      %5427 = vst.msk [vmem:[%s5413 + $0x91] sm:$0xff] %vm2287, %v5362
      %5428 = vst.msk [vmem:[%s5413 + $0x99] sm:$0x3] %vm5415, %v5363
      %5429 = vst.msk [vmem:[%s5413 + $0xa9] sm:$0xff] %vm2287, %v5364
      %5430 = vst.msk [vmem:[%s5413 + $0xb1] sm:$0x3] %vm5415, %v5365
      %5431 = vst.msk [vmem:[%s5413 + $0xc1] sm:$0xff] %vm2287, %v5366
      %5432 = vst.msk [vmem:[%s5413 + $0xc9] sm:$0x3] %vm5415, %v5367
      %5433 = vst.msk [vmem:[%s5413 + $0xd9] sm:$0xff] %vm2287, %v5368
      %5434 = vst.msk [vmem:[%s5413 + $0xe1] sm:$0x3] %vm5415, %v5369
      %v5435 = vld [vmem:[#allocation4] sm:$0xff]
      %v5436 = vld [vmem:[#allocation4 + $0x8] sm:$0xff]
      %v5437 = vld [vmem:[#allocation4 + $0x18] sm:$0xff]
      %v5438 = vld [vmem:[#allocation4 + $0x20] sm:$0xff]
      %v5439 = vld [vmem:[#allocation4 + $0x30] sm:$0xff]
      %v5440 = vld [vmem:[#allocation4 + $0x38] sm:$0xff]
      %v5441 = vld [vmem:[#allocation4 + $0x48] sm:$0xff]
      %v5442 = vld [vmem:[#allocation4 + $0x50] sm:$0xff]
      %v5443 = vld [vmem:[#allocation4 + $0x60] sm:$0xff]
      %v5444 = vld [vmem:[#allocation4 + $0x68] sm:$0xff]
      %v5445 = vld [vmem:[#allocation4 + $0x78] sm:$0xff]
      %v5446 = vld [vmem:[#allocation4 + $0x80] sm:$0xff]
      %v5447 = vld [vmem:[#allocation4 + $0x90] sm:$0xff]
      %v5448 = vld [vmem:[#allocation4 + $0x98] sm:$0xff]
      %v5449 = vld [vmem:[#allocation4 + $0xa8] sm:$0xff]
      %v5450 = vld [vmem:[#allocation4 + $0xb0] sm:$0xff]
      %v5451 = vld [vmem:[#allocation4 + $0xc0] sm:$0xff]
      %v5452 = vld [vmem:[#allocation4 + $0xc8] sm:$0xff]
      %v5453 = vld [vmem:[#allocation4 + $0xd8] sm:$0xff]
      %v5454 = vld [vmem:[#allocation4 + $0xe0] sm:$0xff]
      %v5455 = vld [vmem:[#allocation4 + $0xf0] sm:$0xff]
      %v5456 = vld [vmem:[#allocation4 + $0xf8] sm:$0xff]
      %v5457 = vld [vmem:[#allocation4 + $0x108] sm:$0xff]
      %v5458 = vld [vmem:[#allocation4 + $0x110] sm:$0xff]
      %v5459 = vpack.c.bf16 %v5436, %v5435
      %v5460 = vpack.c.bf16 %v5438, %v5437
      %v5461 = vpack.c.bf16 %v5440, %v5439
      %v5462 = vpack.c.bf16 %v5442, %v5441
      %v5463 = vpack.c.bf16 %v5444, %v5443
      %v5464 = vpack.c.bf16 %v5446, %v5445
      %v5465 = vpack.c.bf16 %v5448, %v5447
      %v5466 = vpack.c.bf16 %v5450, %v5449
      %v5467 = vpack.c.bf16 %v5452, %v5451
      %v5468 = vpack.c.bf16 %v5454, %v5453
      %v5469 = vpack.c.bf16 %v5456, %v5455
      %v5470 = vpack.c.bf16 %v5458, %v5457
      %5471 = vst.msk [vmem:[#allocation5] sm:$0xff] %vm2287, %v5459
      %5472 = vst.msk [vmem:[#allocation5 + $0x18] sm:$0xff] %vm2287, %v5460
      %5473 = vst.msk [vmem:[#allocation5 + $0x30] sm:$0xff] %vm2287, %v5461
      %5474 = vst.msk [vmem:[#allocation5 + $0x48] sm:$0xff] %vm2287, %v5462
      %5475 = vst.msk [vmem:[#allocation5 + $0x60] sm:$0xff] %vm2287, %v5463
      %5476 = vst.msk [vmem:[#allocation5 + $0x78] sm:$0xff] %vm2287, %v5464
      %5477 = vst.msk [vmem:[#allocation5 + $0x90] sm:$0xff] %vm2287, %v5465
      %5478 = vst.msk [vmem:[#allocation5 + $0xa8] sm:$0xff] %vm2287, %v5466
      %5479 = vst.msk [vmem:[#allocation5 + $0xc0] sm:$0xff] %vm2287, %v5467
      %5480 = vst.msk [vmem:[#allocation5 + $0xd8] sm:$0xff] %vm2287, %v5468
      %5481 = vst.msk [vmem:[#allocation5 + $0xf0] sm:$0xff] %vm2287, %v5469
      %5482 = vst.msk [vmem:[#allocation5 + $0x108] sm:$0xff] %vm2287, %v5470
      %v5483 = vld [vmem:[#allocation4 + $0x1] sm:$0xff]
      %v5484 = vld [vmem:[#allocation4 + $0x9] sm:$0xff]
      %v5485 = vld [vmem:[#allocation4 + $0x19] sm:$0xff]
      %v5486 = vld [vmem:[#allocation4 + $0x21] sm:$0xff]
      %v5487 = vld [vmem:[#allocation4 + $0x31] sm:$0xff]
      %v5488 = vld [vmem:[#allocation4 + $0x39] sm:$0xff]
      %v5489 = vld [vmem:[#allocation4 + $0x49] sm:$0xff]
      %v5490 = vld [vmem:[#allocation4 + $0x51] sm:$0xff]
      %v5491 = vld [vmem:[#allocation4 + $0x61] sm:$0xff]
      %v5492 = vld [vmem:[#allocation4 + $0x69] sm:$0xff]
      %v5493 = vld [vmem:[#allocation4 + $0x79] sm:$0xff]
      %v5494 = vld [vmem:[#allocation4 + $0x81] sm:$0xff]
      %v5495 = vld [vmem:[#allocation4 + $0x91] sm:$0xff]
      %v5496 = vld [vmem:[#allocation4 + $0x99] sm:$0xff]
      %v5497 = vld [vmem:[#allocation4 + $0xa9] sm:$0xff]
      %v5498 = vld [vmem:[#allocation4 + $0xb1] sm:$0xff]
      %v5499 = vld [vmem:[#allocation4 + $0xc1] sm:$0xff]
      %v5500 = vld [vmem:[#allocation4 + $0xc9] sm:$0xff]
      %v5501 = vld [vmem:[#allocation4 + $0xd9] sm:$0xff]
      %v5502 = vld [vmem:[#allocation4 + $0xe1] sm:$0xff]
      %v5503 = vld [vmem:[#allocation4 + $0xf1] sm:$0xff]
      %v5504 = vld [vmem:[#allocation4 + $0xf9] sm:$0xff]
      %v5505 = vld [vmem:[#allocation4 + $0x109] sm:$0xff]
      %v5506 = vld [vmem:[#allocation4 + $0x111] sm:$0xff]
      %v5507 = vpack.c.bf16 %v5484, %v5483
      %v5508 = vpack.c.bf16 %v5486, %v5485
      %v5509 = vpack.c.bf16 %v5488, %v5487
      %v5510 = vpack.c.bf16 %v5490, %v5489
      %v5511 = vpack.c.bf16 %v5492, %v5491
      %v5512 = vpack.c.bf16 %v5494, %v5493
      %v5513 = vpack.c.bf16 %v5496, %v5495
      %v5514 = vpack.c.bf16 %v5498, %v5497
      %v5515 = vpack.c.bf16 %v5500, %v5499
      %v5516 = vpack.c.bf16 %v5502, %v5501
      %v5517 = vpack.c.bf16 %v5504, %v5503
      %v5518 = vpack.c.bf16 %v5506, %v5505
      %5531 = vrot.lane.b32.xlu0 %v5507, 64
      %v5532 = vpop.permute.xlu0 %5531
      %5533 = vrot.lane.b32.xlu0 %v5508, 64
      %v5534 = vpop.permute.xlu0 %5533
      %5535 = vrot.lane.b32.xlu0 %v5509, 64
      %v5536 = vpop.permute.xlu0 %5535
      %5537 = vrot.lane.b32.xlu0 %v5510, 64
      %v5538 = vpop.permute.xlu0 %5537
      %5539 = vrot.lane.b32.xlu0 %v5511, 64
      %v5540 = vpop.permute.xlu0 %5539
      %5541 = vrot.lane.b32.xlu0 %v5512, 64
      %v5542 = vpop.permute.xlu0 %5541
      %5543 = vrot.lane.b32.xlu0 %v5513, 64
      %v5544 = vpop.permute.xlu0 %5543
      %5545 = vrot.lane.b32.xlu0 %v5514, 64
      %v5546 = vpop.permute.xlu0 %5545
      %5547 = vrot.lane.b32.xlu0 %v5515, 64
      %v5548 = vpop.permute.xlu0 %5547
      %5549 = vrot.lane.b32.xlu0 %v5516, 64
      %v5550 = vpop.permute.xlu0 %5549
      %5551 = vrot.lane.b32.xlu0 %v5517, 64
      %v5552 = vpop.permute.xlu0 %5551
      %5553 = vrot.lane.b32.xlu0 %v5518, 64
      %v5554 = vpop.permute.xlu0 %5553
      %5567 = vst.msk [vmem:[#allocation5] sm:$0xff] %vm2521, %v5532
      %5568 = vst.msk [vmem:[#allocation5 + $0x18] sm:$0xff] %vm2521, %v5534
      %5569 = vst.msk [vmem:[#allocation5 + $0x30] sm:$0xff] %vm2521, %v5536
      %5570 = vst.msk [vmem:[#allocation5 + $0x48] sm:$0xff] %vm2521, %v5538
      %5571 = vst.msk [vmem:[#allocation5 + $0x60] sm:$0xff] %vm2521, %v5540
      %5572 = vst.msk [vmem:[#allocation5 + $0x78] sm:$0xff] %vm2521, %v5542
      %5573 = vst.msk [vmem:[#allocation5 + $0x90] sm:$0xff] %vm2521, %v5544
      %5574 = vst.msk [vmem:[#allocation5 + $0xa8] sm:$0xff] %vm2521, %v5546
      %5575 = vst.msk [vmem:[#allocation5 + $0xc0] sm:$0xff] %vm2521, %v5548
      %5576 = vst.msk [vmem:[#allocation5 + $0xd8] sm:$0xff] %vm2521, %v5550
      %5577 = vst.msk [vmem:[#allocation5 + $0xf0] sm:$0xff] %vm2521, %v5552
      %5578 = vst.msk [vmem:[#allocation5 + $0x108] sm:$0xff] %vm2521, %v5554
      %v5579 = vld [vmem:[#allocation4 + $0x2] sm:$0xff]
      %v5580 = vld [vmem:[#allocation4 + $0xa] sm:$0xff]
      %v5581 = vld [vmem:[#allocation4 + $0x1a] sm:$0xff]
      %v5582 = vld [vmem:[#allocation4 + $0x22] sm:$0xff]
      %v5583 = vld [vmem:[#allocation4 + $0x32] sm:$0xff]
      %v5584 = vld [vmem:[#allocation4 + $0x3a] sm:$0xff]
      %v5585 = vld [vmem:[#allocation4 + $0x4a] sm:$0xff]
      %v5586 = vld [vmem:[#allocation4 + $0x52] sm:$0xff]
      %v5587 = vld [vmem:[#allocation4 + $0x62] sm:$0xff]
      %v5588 = vld [vmem:[#allocation4 + $0x6a] sm:$0xff]
      %v5589 = vld [vmem:[#allocation4 + $0x7a] sm:$0xff]
      %v5590 = vld [vmem:[#allocation4 + $0x82] sm:$0xff]
      %v5591 = vld [vmem:[#allocation4 + $0x92] sm:$0xff]
      %v5592 = vld [vmem:[#allocation4 + $0x9a] sm:$0xff]
      %v5593 = vld [vmem:[#allocation4 + $0xaa] sm:$0xff]
      %v5594 = vld [vmem:[#allocation4 + $0xb2] sm:$0xff]
      %v5595 = vld [vmem:[#allocation4 + $0xc2] sm:$0xff]
      %v5596 = vld [vmem:[#allocation4 + $0xca] sm:$0xff]
      %v5597 = vld [vmem:[#allocation4 + $0xda] sm:$0xff]
      %v5598 = vld [vmem:[#allocation4 + $0xe2] sm:$0xff]
      %v5599 = vld [vmem:[#allocation4 + $0xf2] sm:$0xff]
      %v5600 = vld [vmem:[#allocation4 + $0xfa] sm:$0xff]
      %v5601 = vld [vmem:[#allocation4 + $0x10a] sm:$0xff]
      %v5602 = vld [vmem:[#allocation4 + $0x112] sm:$0xff]
      %v5603 = vpack.c.bf16 %v5580, %v5579
      %v5604 = vpack.c.bf16 %v5582, %v5581
      %v5605 = vpack.c.bf16 %v5584, %v5583
      %v5606 = vpack.c.bf16 %v5586, %v5585
      %v5607 = vpack.c.bf16 %v5588, %v5587
      %v5608 = vpack.c.bf16 %v5590, %v5589
      %v5609 = vpack.c.bf16 %v5592, %v5591
      %v5610 = vpack.c.bf16 %v5594, %v5593
      %v5611 = vpack.c.bf16 %v5596, %v5595
      %v5612 = vpack.c.bf16 %v5598, %v5597
      %v5613 = vpack.c.bf16 %v5600, %v5599
      %v5614 = vpack.c.bf16 %v5602, %v5601
      %5615 = vst.msk [vmem:[#allocation5 + $0x8] sm:$0xff] %vm2287, %v5603
      %5616 = vst.msk [vmem:[#allocation5 + $0x20] sm:$0xff] %vm2287, %v5604
      %5617 = vst.msk [vmem:[#allocation5 + $0x38] sm:$0xff] %vm2287, %v5605
      %5618 = vst.msk [vmem:[#allocation5 + $0x50] sm:$0xff] %vm2287, %v5606
      %5619 = vst.msk [vmem:[#allocation5 + $0x68] sm:$0xff] %vm2287, %v5607
      %5620 = vst.msk [vmem:[#allocation5 + $0x80] sm:$0xff] %vm2287, %v5608
      %5621 = vst.msk [vmem:[#allocation5 + $0x98] sm:$0xff] %vm2287, %v5609
      %5622 = vst.msk [vmem:[#allocation5 + $0xb0] sm:$0xff] %vm2287, %v5610
      %5623 = vst.msk [vmem:[#allocation5 + $0xc8] sm:$0xff] %vm2287, %v5611
      %5624 = vst.msk [vmem:[#allocation5 + $0xe0] sm:$0xff] %vm2287, %v5612
      %5625 = vst.msk [vmem:[#allocation5 + $0xf8] sm:$0xff] %vm2287, %v5613
      %5626 = vst.msk [vmem:[#allocation5 + $0x110] sm:$0xff] %vm2287, %v5614
      %v5627 = vld [vmem:[#allocation4 + $0x3] sm:$0xff]
      %v5628 = vld [vmem:[#allocation4 + $0xb] sm:$0xff]
      %v5629 = vld [vmem:[#allocation4 + $0x1b] sm:$0xff]
      %v5630 = vld [vmem:[#allocation4 + $0x23] sm:$0xff]
      %v5631 = vld [vmem:[#allocation4 + $0x33] sm:$0xff]
      %v5632 = vld [vmem:[#allocation4 + $0x3b] sm:$0xff]
      %v5633 = vld [vmem:[#allocation4 + $0x4b] sm:$0xff]
      %v5634 = vld [vmem:[#allocation4 + $0x53] sm:$0xff]
      %v5635 = vld [vmem:[#allocation4 + $0x63] sm:$0xff]
      %v5636 = vld [vmem:[#allocation4 + $0x6b] sm:$0xff]
      %v5637 = vld [vmem:[#allocation4 + $0x7b] sm:$0xff]
      %v5638 = vld [vmem:[#allocation4 + $0x83] sm:$0xff]
      %v5639 = vld [vmem:[#allocation4 + $0x93] sm:$0xff]
      %v5640 = vld [vmem:[#allocation4 + $0x9b] sm:$0xff]
      %v5641 = vld [vmem:[#allocation4 + $0xab] sm:$0xff]
      %v5642 = vld [vmem:[#allocation4 + $0xb3] sm:$0xff]
      %v5643 = vld [vmem:[#allocation4 + $0xc3] sm:$0xff]
      %v5644 = vld [vmem:[#allocation4 + $0xcb] sm:$0xff]
      %v5645 = vld [vmem:[#allocation4 + $0xdb] sm:$0xff]
      %v5646 = vld [vmem:[#allocation4 + $0xe3] sm:$0xff]
      %v5647 = vld [vmem:[#allocation4 + $0xf3] sm:$0xff]
      %v5648 = vld [vmem:[#allocation4 + $0xfb] sm:$0xff]
      %v5649 = vld [vmem:[#allocation4 + $0x10b] sm:$0xff]
      %v5650 = vld [vmem:[#allocation4 + $0x113] sm:$0xff]
      %v5651 = vpack.c.bf16 %v5628, %v5627
      %v5652 = vpack.c.bf16 %v5630, %v5629
      %v5653 = vpack.c.bf16 %v5632, %v5631
      %v5654 = vpack.c.bf16 %v5634, %v5633
      %v5655 = vpack.c.bf16 %v5636, %v5635
      %v5656 = vpack.c.bf16 %v5638, %v5637
      %v5657 = vpack.c.bf16 %v5640, %v5639
      %v5658 = vpack.c.bf16 %v5642, %v5641
      %v5659 = vpack.c.bf16 %v5644, %v5643
      %v5660 = vpack.c.bf16 %v5646, %v5645
      %v5661 = vpack.c.bf16 %v5648, %v5647
      %v5662 = vpack.c.bf16 %v5650, %v5649
      %5675 = vrot.lane.b32.xlu0 %v5651, 64
      %v5676 = vpop.permute.xlu0 %5675
      %5677 = vrot.lane.b32.xlu0 %v5652, 64
      %v5678 = vpop.permute.xlu0 %5677
      %5679 = vrot.lane.b32.xlu0 %v5653, 64
      %v5680 = vpop.permute.xlu0 %5679
      %5681 = vrot.lane.b32.xlu0 %v5654, 64
      %v5682 = vpop.permute.xlu0 %5681
      %5683 = vrot.lane.b32.xlu0 %v5655, 64
      %v5684 = vpop.permute.xlu0 %5683
      %5685 = vrot.lane.b32.xlu0 %v5656, 64
      %v5686 = vpop.permute.xlu0 %5685
      %5687 = vrot.lane.b32.xlu0 %v5657, 64
      %v5688 = vpop.permute.xlu0 %5687
      %5689 = vrot.lane.b32.xlu0 %v5658, 64
      %v5690 = vpop.permute.xlu0 %5689
      %5691 = vrot.lane.b32.xlu0 %v5659, 64
      %v5692 = vpop.permute.xlu0 %5691
      %5693 = vrot.lane.b32.xlu0 %v5660, 64
      %v5694 = vpop.permute.xlu0 %5693
      %5695 = vrot.lane.b32.xlu0 %v5661, 64
      %v5696 = vpop.permute.xlu0 %5695
      %5697 = vrot.lane.b32.xlu0 %v5662, 64
      %v5698 = vpop.permute.xlu0 %5697
      %5711 = vst.msk [vmem:[#allocation5 + $0x8] sm:$0xff] %vm2521, %v5676
      %5712 = vst.msk [vmem:[#allocation5 + $0x20] sm:$0xff] %vm2521, %v5678
      %5713 = vst.msk [vmem:[#allocation5 + $0x38] sm:$0xff] %vm2521, %v5680
      %5714 = vst.msk [vmem:[#allocation5 + $0x50] sm:$0xff] %vm2521, %v5682
      %5715 = vst.msk [vmem:[#allocation5 + $0x68] sm:$0xff] %vm2521, %v5684
      %5716 = vst.msk [vmem:[#allocation5 + $0x80] sm:$0xff] %vm2521, %v5686
      %5717 = vst.msk [vmem:[#allocation5 + $0x98] sm:$0xff] %vm2521, %v5688
      %5718 = vst.msk [vmem:[#allocation5 + $0xb0] sm:$0xff] %vm2521, %v5690
      %5719 = vst.msk [vmem:[#allocation5 + $0xc8] sm:$0xff] %vm2521, %v5692
      %5720 = vst.msk [vmem:[#allocation5 + $0xe0] sm:$0xff] %vm2521, %v5694
      %5721 = vst.msk [vmem:[#allocation5 + $0xf8] sm:$0xff] %vm2521, %v5696
      %5722 = vst.msk [vmem:[#allocation5 + $0x110] sm:$0xff] %vm2521, %v5698
      %v5723 = vld [vmem:[#allocation4 + $0x4] sm:$0xff]
      %v5724 = vld [vmem:[#allocation4 + $0xc] sm:$0xff]
      %v5725 = vld [vmem:[#allocation4 + $0x1c] sm:$0xff]
      %v5726 = vld [vmem:[#allocation4 + $0x24] sm:$0xff]
      %v5727 = vld [vmem:[#allocation4 + $0x34] sm:$0xff]
      %v5728 = vld [vmem:[#allocation4 + $0x3c] sm:$0xff]
      %v5729 = vld [vmem:[#allocation4 + $0x4c] sm:$0xff]
      %v5730 = vld [vmem:[#allocation4 + $0x54] sm:$0xff]
      %v5731 = vld [vmem:[#allocation4 + $0x64] sm:$0xff]
      %v5732 = vld [vmem:[#allocation4 + $0x6c] sm:$0xff]
      %v5733 = vld [vmem:[#allocation4 + $0x7c] sm:$0xff]
      %v5734 = vld [vmem:[#allocation4 + $0x84] sm:$0xff]
      %v5735 = vld [vmem:[#allocation4 + $0x94] sm:$0xff]
      %v5736 = vld [vmem:[#allocation4 + $0x9c] sm:$0xff]
      %v5737 = vld [vmem:[#allocation4 + $0xac] sm:$0xff]
      %v5738 = vld [vmem:[#allocation4 + $0xb4] sm:$0xff]
      %v5739 = vld [vmem:[#allocation4 + $0xc4] sm:$0xff]
      %v5740 = vld [vmem:[#allocation4 + $0xcc] sm:$0xff]
      %v5741 = vld [vmem:[#allocation4 + $0xdc] sm:$0xff]
      %v5742 = vld [vmem:[#allocation4 + $0xe4] sm:$0xff]
      %v5743 = vld [vmem:[#allocation4 + $0xf4] sm:$0xff]
      %v5744 = vld [vmem:[#allocation4 + $0xfc] sm:$0xff]
      %v5745 = vld [vmem:[#allocation4 + $0x10c] sm:$0xff]
      %v5746 = vld [vmem:[#allocation4 + $0x114] sm:$0xff]
      %v5747 = vpack.c.bf16 %v5724, %v5723
      %v5748 = vpack.c.bf16 %v5726, %v5725
      %v5749 = vpack.c.bf16 %v5728, %v5727
      %v5750 = vpack.c.bf16 %v5730, %v5729
      %v5751 = vpack.c.bf16 %v5732, %v5731
      %v5752 = vpack.c.bf16 %v5734, %v5733
      %v5753 = vpack.c.bf16 %v5736, %v5735
      %v5754 = vpack.c.bf16 %v5738, %v5737
      %v5755 = vpack.c.bf16 %v5740, %v5739
      %v5756 = vpack.c.bf16 %v5742, %v5741
      %v5757 = vpack.c.bf16 %v5744, %v5743
      %v5758 = vpack.c.bf16 %v5746, %v5745
      %5759 = vst.msk [vmem:[#allocation5 + $0x10] sm:$0xff] %vm2287, %v5747
      %5760 = vst.msk [vmem:[#allocation5 + $0x28] sm:$0xff] %vm2287, %v5748
      %5761 = vst.msk [vmem:[#allocation5 + $0x40] sm:$0xff] %vm2287, %v5749
      %5762 = vst.msk [vmem:[#allocation5 + $0x58] sm:$0xff] %vm2287, %v5750
      %5763 = vst.msk [vmem:[#allocation5 + $0x70] sm:$0xff] %vm2287, %v5751
      %5764 = vst.msk [vmem:[#allocation5 + $0x88] sm:$0xff] %vm2287, %v5752
      %5765 = vst.msk [vmem:[#allocation5 + $0xa0] sm:$0xff] %vm2287, %v5753
      %5766 = vst.msk [vmem:[#allocation5 + $0xb8] sm:$0xff] %vm2287, %v5754
      %5767 = vst.msk [vmem:[#allocation5 + $0xd0] sm:$0xff] %vm2287, %v5755
      %5768 = vst.msk [vmem:[#allocation5 + $0xe8] sm:$0xff] %vm2287, %v5756
      %5769 = vst.msk [vmem:[#allocation5 + $0x100] sm:$0xff] %vm2287, %v5757
      %5770 = vst.msk [vmem:[#allocation5 + $0x118] sm:$0xff] %vm2287, %v5758
      %v5771 = vld [vmem:[#allocation5] sm:$0xff]
      %v5772 = vld [vmem:[#allocation5 + $0x8] sm:$0xff]
      %v5773 = vld [vmem:[#allocation5 + $0x10] sm:$0xff]
      %v5774 = vld [vmem:[#allocation5 + $0x18] sm:$0xff]
      %v5775 = vld [vmem:[#allocation5 + $0x20] sm:$0xff]
      %v5776 = vld [vmem:[#allocation5 + $0x28] sm:$0xff]
      %v5777 = vld [vmem:[#allocation5 + $0x30] sm:$0xff]
      %v5778 = vld [vmem:[#allocation5 + $0x38] sm:$0xff]
      %v5779 = vld [vmem:[#allocation5 + $0x40] sm:$0xff]
      %v5780 = vld [vmem:[#allocation5 + $0x48] sm:$0xff]
      %v5781 = vld [vmem:[#allocation5 + $0x50] sm:$0xff]
      %v5782 = vld [vmem:[#allocation5 + $0x58] sm:$0xff]
      %v5783 = vld [vmem:[#allocation5 + $0x60] sm:$0xff]
      %v5784 = vld [vmem:[#allocation5 + $0x68] sm:$0xff]
      %v5785 = vld [vmem:[#allocation5 + $0x70] sm:$0xff]
      %v5786 = vld [vmem:[#allocation5 + $0x78] sm:$0xff]
      %v5787 = vld [vmem:[#allocation5 + $0x80] sm:$0xff]
      %v5788 = vld [vmem:[#allocation5 + $0x88] sm:$0xff]
      %v5789 = vld [vmem:[#allocation5 + $0x90] sm:$0xff]
      %v5790 = vld [vmem:[#allocation5 + $0x98] sm:$0xff]
      %v5791 = vld [vmem:[#allocation5 + $0xa0] sm:$0xff]
      %v5792 = vld [vmem:[#allocation5 + $0xa8] sm:$0xff]
      %v5793 = vld [vmem:[#allocation5 + $0xb0] sm:$0xff]
      %v5794 = vld [vmem:[#allocation5 + $0xb8] sm:$0xff]
      %v5795 = vld [vmem:[%s3] sm:$0xf]
      %v5796 = vld [vmem:[%s3 + $0x4] sm:$0xf]
      %v5797 = vld [vmem:[%s3 + $0x8] sm:$0xf]
      %v5798 = vld [vmem:[%s3 + $0xc] sm:$0xf]
      %v5799 = vld [vmem:[%s3 + $0x10] sm:$0xf]
      %v5800 = vld [vmem:[%s3 + $0x14] sm:$0xf]
      %v5801 = vld [vmem:[%s3 + $0x18] sm:$0xf]
      %v5802 = vld [vmem:[%s3 + $0x1c] sm:$0xf]
      %v5803 = vld [vmem:[%s3 + $0x20] sm:$0xf]
      %v5804 = vld [vmem:[%s3 + $0x24] sm:$0xf]
      %v5805 = vld [vmem:[%s3 + $0x28] sm:$0xf]
      %v5806 = vld [vmem:[%s3 + $0x2c] sm:$0xf]
      %v5807 = vld [vmem:[%s3 + $0x30] sm:$0xf]
      %v5808 = vld [vmem:[%s3 + $0x34] sm:$0xf]
      %v5809 = vld [vmem:[%s3 + $0x38] sm:$0xf]
      %v5810 = vld [vmem:[%s3 + $0x3c] sm:$0xf]
      %v5811 = vld [vmem:[%s3 + $0x40] sm:$0xf]
      %v5812 = vld [vmem:[%s3 + $0x44] sm:$0xf]
      %v5813 = vld [vmem:[%s3 + $0x48] sm:$0xf]
      %v5814 = vld [vmem:[%s3 + $0x4c] sm:$0xf]
      %v5815 = vld [vmem:[%s3 + $0x50] sm:$0xf]
      %v5816 = vld [vmem:[%s3 + $0x54] sm:$0xf]
      %v5817 = vld [vmem:[%s3 + $0x58] sm:$0xf]
      %v5818 = vld [vmem:[%s3 + $0x5c] sm:$0xf]
      %v5819 = vld [vmem:[%s3 + $0x60] sm:$0xf]
      %v5820 = vld [vmem:[%s3 + $0x64] sm:$0xf]
      %v5821 = vld [vmem:[%s3 + $0x68] sm:$0xf]
      %v5822 = vld [vmem:[%s3 + $0x6c] sm:$0xf]
      %v5823 = vld [vmem:[%s3 + $0x70] sm:$0xf]
      %v5824 = vld [vmem:[%s3 + $0x74] sm:$0xf]
      %v5825 = vld [vmem:[%s3 + $0x78] sm:$0xf]
      %v5826 = vld [vmem:[%s3 + $0x7c] sm:$0xf]
      %v5827 = vld [vmem:[%s3 + $0x80] sm:$0xf]
      %v5828 = vld [vmem:[%s3 + $0x84] sm:$0xf]
      %v5829 = vld [vmem:[%s3 + $0x88] sm:$0xf]
      %v5830 = vld [vmem:[%s3 + $0x8c] sm:$0xf]
      %v5831 = vld [vmem:[%s3 + $0x90] sm:$0xf]
      %v5832 = vld [vmem:[%s3 + $0x94] sm:$0xf]
      %v5833 = vld [vmem:[%s3 + $0x98] sm:$0xf]
      %v5834 = vld [vmem:[%s3 + $0x9c] sm:$0xf]
      %s5835 = scalar_lea.vmem [#allocation5], 24
      %v5836 = vld [vmem:[%s5835] sm:$0xff]
      %v5837 = vld [vmem:[%s5835 + $0x8] sm:$0xff]
      %v5838 = vld [vmem:[%s5835 + $0x10] sm:$0xff]
      %v5839 = vld [vmem:[%s5835 + $0x18] sm:$0xff]
      %v5840 = vld [vmem:[%s5835 + $0x20] sm:$0xff]
      %v5841 = vld [vmem:[%s5835 + $0x28] sm:$0xff]
      %v5842 = vld [vmem:[%s5835 + $0x30] sm:$0xff]
      %v5843 = vld [vmem:[%s5835 + $0x38] sm:$0xff]
      %v5844 = vld [vmem:[%s5835 + $0x40] sm:$0xff]
      %v5845 = vld [vmem:[%s5835 + $0x48] sm:$0xff]
      %v5846 = vld [vmem:[%s5835 + $0x50] sm:$0xff]
      %v5847 = vld [vmem:[%s5835 + $0x58] sm:$0xff]
      %v5848 = vld [vmem:[%s5835 + $0x60] sm:$0xff]
      %v5849 = vld [vmem:[%s5835 + $0x68] sm:$0xff]
      %v5850 = vld [vmem:[%s5835 + $0x70] sm:$0xff]
      %v5851 = vld [vmem:[%s5835 + $0x78] sm:$0xff]
      %v5852 = vld [vmem:[%s5835 + $0x80] sm:$0xff]
      %v5853 = vld [vmem:[%s5835 + $0x88] sm:$0xff]
      %v5854 = vld [vmem:[%s5835 + $0x90] sm:$0xff]
      %v5855 = vld [vmem:[%s5835 + $0x98] sm:$0xff]
      %v5856 = vld [vmem:[%s5835 + $0xa0] sm:$0xff]
      %v5857 = vld [vmem:[%s5835 + $0xa8] sm:$0xff]
      %v5858 = vld [vmem:[%s5835 + $0xb0] sm:$0xff]
      %v5859 = vld [vmem:[%s5835 + $0xb8] sm:$0xff]
      %s5860 = scalar_lea.vmem %s3, 160
      %v5861 = vld [vmem:[%s5860] sm:$0xf]
      %v5862 = vld [vmem:[%s5860 + $0x4] sm:$0xf]
      %v5863 = vld [vmem:[%s5860 + $0x8] sm:$0xf]
      %v5864 = vld [vmem:[%s5860 + $0xc] sm:$0xf]
      %v5865 = vld [vmem:[%s5860 + $0x10] sm:$0xf]
      %v5866 = vld [vmem:[%s5860 + $0x14] sm:$0xf]
      %v5867 = vld [vmem:[%s5860 + $0x18] sm:$0xf]
      %v5868 = vld [vmem:[%s5860 + $0x1c] sm:$0xf]
      %v5869 = vld [vmem:[%s5860 + $0x20] sm:$0xf]
      %v5870 = vld [vmem:[%s5860 + $0x24] sm:$0xf]
      %v5871 = vld [vmem:[%s5860 + $0x28] sm:$0xf]
      %v5872 = vld [vmem:[%s5860 + $0x2c] sm:$0xf]
      %v5873 = vld [vmem:[%s5860 + $0x30] sm:$0xf]
      %v5874 = vld [vmem:[%s5860 + $0x34] sm:$0xf]
      %v5875 = vld [vmem:[%s5860 + $0x38] sm:$0xf]
      %v5876 = vld [vmem:[%s5860 + $0x3c] sm:$0xf]
      %v5877 = vld [vmem:[%s5860 + $0x40] sm:$0xf]
      %v5878 = vld [vmem:[%s5860 + $0x44] sm:$0xf]
      %v5879 = vld [vmem:[%s5860 + $0x48] sm:$0xf]
      %v5880 = vld [vmem:[%s5860 + $0x4c] sm:$0xf]
      %v5881 = vld [vmem:[%s5860 + $0x50] sm:$0xf]
      %v5882 = vld [vmem:[%s5860 + $0x54] sm:$0xf]
      %v5883 = vld [vmem:[%s5860 + $0x58] sm:$0xf]
      %v5884 = vld [vmem:[%s5860 + $0x5c] sm:$0xf]
      %v5885 = vld [vmem:[%s5860 + $0x60] sm:$0xf]
      %v5886 = vld [vmem:[%s5860 + $0x64] sm:$0xf]
      %v5887 = vld [vmem:[%s5860 + $0x68] sm:$0xf]
      %v5888 = vld [vmem:[%s5860 + $0x6c] sm:$0xf]
      %v5889 = vld [vmem:[%s5860 + $0x70] sm:$0xf]
      %v5890 = vld [vmem:[%s5860 + $0x74] sm:$0xf]
      %v5891 = vld [vmem:[%s5860 + $0x78] sm:$0xf]
      %v5892 = vld [vmem:[%s5860 + $0x7c] sm:$0xf]
      %v5893 = vld [vmem:[%s5860 + $0x80] sm:$0xf]
      %v5894 = vld [vmem:[%s5860 + $0x84] sm:$0xf]
      %v5895 = vld [vmem:[%s5860 + $0x88] sm:$0xf]
      %v5896 = vld [vmem:[%s5860 + $0x8c] sm:$0xf]
      %v5897 = vld [vmem:[%s5860 + $0x90] sm:$0xf]
      %v5898 = vld [vmem:[%s5860 + $0x94] sm:$0xf]
      %v5899 = vld [vmem:[%s5860 + $0x98] sm:$0xf]
      %v5900 = vld [vmem:[%s5860 + $0x9c] sm:$0xf]
      %v5941 = vunpack.c.l.b16 %v5861
      %v5942 = vunpack.c.l.b16 %v5862
      %v5943 = vunpack.c.l.b16 %v5863
      %v5944 = vunpack.c.l.b16 %v5864
      %v5945 = vunpack.c.l.b16 %v5865
      %v5946 = vunpack.c.l.b16 %v5866
      %v5947 = vunpack.c.l.b16 %v5867
      %v5948 = vunpack.c.l.b16 %v5868
      %v5949 = vunpack.c.l.b16 %v5869
      %v5950 = vunpack.c.l.b16 %v5870
      %v5951 = vunpack.c.l.b16 %v5871
      %v5952 = vunpack.c.l.b16 %v5872
      %v5953 = vunpack.c.l.b16 %v5873
      %v5954 = vunpack.c.l.b16 %v5874
      %v5955 = vunpack.c.l.b16 %v5875
      %v5956 = vunpack.c.l.b16 %v5876
      %v5957 = vunpack.c.l.b16 %v5877
      %v5958 = vunpack.c.l.b16 %v5878
      %v5959 = vunpack.c.l.b16 %v5879
      %v5960 = vunpack.c.l.b16 %v5880
      %v5961 = vunpack.c.l.b16 %v5881
      %v5962 = vunpack.c.l.b16 %v5882
      %v5963 = vunpack.c.l.b16 %v5883
      %v5964 = vunpack.c.l.b16 %v5884
      %v5965 = vunpack.c.l.b16 %v5885
      %v5966 = vunpack.c.l.b16 %v5886
      %v5967 = vunpack.c.l.b16 %v5887
      %v5968 = vunpack.c.l.b16 %v5888
      %v5969 = vunpack.c.l.b16 %v5889
      %v5970 = vunpack.c.l.b16 %v5890
      %v5971 = vunpack.c.l.b16 %v5891
      %v5972 = vunpack.c.l.b16 %v5892
      %v5973 = vunpack.c.l.b16 %v5893
      %v5974 = vunpack.c.l.b16 %v5894
      %v5975 = vunpack.c.l.b16 %v5895
      %v5976 = vunpack.c.l.b16 %v5896
      %v5977 = vunpack.c.l.b16 %v5897
      %v5978 = vunpack.c.l.b16 %v5898
      %v5979 = vunpack.c.l.b16 %v5899
      %v5980 = vunpack.c.l.b16 %v5900
      %v5981 = vpack.c.b16 %v5942, %v5941
      %v5982 = vpack.c.b16 %v5944, %v5943
      %v5983 = vpack.c.b16 %v5946, %v5945
      %v5984 = vpack.c.b16 %v5948, %v5947
      %v5985 = vpack.c.b16 %v5950, %v5949
      %v5986 = vpack.c.b16 %v5952, %v5951
      %v5987 = vpack.c.b16 %v5954, %v5953
      %v5988 = vpack.c.b16 %v5956, %v5955
      %v5989 = vpack.c.b16 %v5958, %v5957
      %v5990 = vpack.c.b16 %v5960, %v5959
      %v5991 = vpack.c.b16 %v5962, %v5961
      %v5992 = vpack.c.b16 %v5964, %v5963
      %v5993 = vpack.c.b16 %v5966, %v5965
      %v5994 = vpack.c.b16 %v5968, %v5967
      %v5995 = vpack.c.b16 %v5970, %v5969
      %v5996 = vpack.c.b16 %v5972, %v5971
      %v5997 = vpack.c.b16 %v5974, %v5973
      %v5998 = vpack.c.b16 %v5976, %v5975
      %v5999 = vpack.c.b16 %v5978, %v5977
      %v6000 = vpack.c.b16 %v5980, %v5979
      %v6022 = vsel %vm2287, %v5838, 0
      %v6025 = vsel %vm2287, %v5841, 0
      %v6028 = vsel %vm2287, %v5844, 0
      %v6031 = vsel %vm2287, %v5847, 0
      %v6034 = vsel %vm2287, %v5850, 0
      %v6037 = vsel %vm2287, %v5853, 0
      %v6040 = vsel %vm2287, %v5856, 0
      %v6043 = vsel %vm2287, %v5859, 0
      %6045 = vmatprep.subr.bf16.mxu0 0
      %6046 = vmatpush1.bf16.msra.mxu0 %v5981
      %6047 = vmatprep.subr.bf16.mxu0 0
      %6048 = vmatpush1.bf16.msra.mxu0 %v5982
      %6049 = vmatprep.subr.bf16.mxu0 0
      %6050 = vmatpush1.bf16.msra.mxu0 %v5983
      %6051 = vmatprep.subr.bf16.mxu0 0
      %6052 = vmatpush1.bf16.msra.mxu0 %v5984
      %6053 = vmatprep.subr.bf16.mxu0 0
      %6054 = vmatpush1.bf16.msra.mxu0 %v5985
      %6055 = vmatprep.subr.bf16.mxu0 0
      %6056 = vmatpush1.bf16.msra.mxu0 %v5986
      %6057 = vmatprep.subr.bf16.mxu0 0
      %6058 = vmatpush1.bf16.msra.mxu0 %v5987
      %6059 = vmatprep.subr.bf16.mxu0 0
      %6060 = vmatpush1.bf16.msra.mxu0 %v5988
      %6061 = vmatprep.subr.bf16.mxu0 0
      %6062 = vmatpush1.bf16.msra.mxu0 %v5989
      %6063 = vmatprep.subr.bf16.mxu0 0
      %6064 = vmatpush1.bf16.msra.mxu0 %v5990
      %6065 = vmatprep.subr.bf16.mxu0 0
      %6066 = vmatpush1.bf16.msra.mxu0 %v5991
      %6067 = vmatprep.subr.bf16.mxu0 0
      %6068 = vmatpush1.bf16.msra.mxu0 %v5992
      %6069 = vmatprep.subr.bf16.mxu0 0
      %6070 = vmatpush1.bf16.msra.mxu0 %v5993
      %6071 = vmatprep.subr.bf16.mxu0 0
      %6072 = vmatpush1.bf16.msra.mxu0 %v5994
      %6073 = vmatprep.subr.bf16.mxu0 0
      %6074 = vmatpush1.bf16.msra.mxu0 %v5995
      %6075 = vmatprep.subr.bf16.mxu0 0
      %6076 = vmatpush1.bf16.msra.mxu0 %v5996
      %6077 = vmatprep.mubr.bf16.mxu0 %v5837
      %6078 = vmatmul.mubr.bf16.gmra.mrb[0].mxu0 %v5836
      %v6079 = vpop.f32.mrb[0].mxu0
      %v6080 = vadd.f32 0.0, %v6079
      %v6081 = vpop.f32.mrb[0].mxu0
      %v6082 = vpop.f32.mrb[0].mxu0
      %v6083 = vpop.f32.mrb[0].mxu0
      %6084 = vmatprep.mubr.bf16.mxu0 %v5840
      %6085 = vmatmul.mubr.bf16.gmra.mrb[0].mxu0 %v5839
      %v6086 = vpop.f32.mrb[0].mxu0
      %v6087 = vadd.f32 0.0, %v6086
      %v6088 = vpop.f32.mrb[0].mxu0
      %v6089 = vpop.f32.mrb[0].mxu0
      %v6090 = vpop.f32.mrb[0].mxu0
      %6091 = vmatprep.mubr.bf16.mxu0 %v5843
      %6092 = vmatmul.mubr.bf16.gmra.mrb[0].mxu0 %v5842
      %v6093 = vpop.f32.mrb[0].mxu0
      %v6094 = vadd.f32 0.0, %v6093
      %v6095 = vpop.f32.mrb[0].mxu0
      %v6096 = vpop.f32.mrb[0].mxu0
      %v6097 = vpop.f32.mrb[0].mxu0
      %6098 = vmatprep.mubr.bf16.mxu0 %v5846
      %6099 = vmatmul.mubr.bf16.gmra.mrb[0].mxu0 %v5845
      %v6100 = vpop.f32.mrb[0].mxu0
      %v6101 = vadd.f32 0.0, %v6100
      %v6102 = vpop.f32.mrb[0].mxu0
      %v6103 = vpop.f32.mrb[0].mxu0
      %v6104 = vpop.f32.mrb[0].mxu0
      %6105 = vmatprep.mubr.bf16.mxu0 %v5849
      %6106 = vmatmul.mubr.bf16.gmra.mrb[0].mxu0 %v5848
      %v6107 = vpop.f32.mrb[0].mxu0
      %v6108 = vadd.f32 0.0, %v6107
      %v6109 = vpop.f32.mrb[0].mxu0
      %v6110 = vpop.f32.mrb[0].mxu0
      %v6111 = vpop.f32.mrb[0].mxu0
      %6112 = vmatprep.mubr.bf16.mxu0 %v5852
      %6113 = vmatmul.mubr.bf16.gmra.mrb[0].mxu0 %v5851
      %v6114 = vpop.f32.mrb[0].mxu0
      %v6115 = vadd.f32 0.0, %v6114
      %v6116 = vpop.f32.mrb[0].mxu0
      %v6117 = vpop.f32.mrb[0].mxu0
      %v6118 = vpop.f32.mrb[0].mxu0
      %6119 = vmatprep.mubr.bf16.mxu0 %v5855
      %6120 = vmatmul.mubr.bf16.gmra.mrb[0].mxu0 %v5854
      %v6121 = vpop.f32.mrb[0].mxu0
      %v6122 = vadd.f32 0.0, %v6121
      %v6123 = vpop.f32.mrb[0].mxu0
      %v6124 = vpop.f32.mrb[0].mxu0
      %v6125 = vpop.f32.mrb[0].mxu0
      %6126 = vmatprep.mubr.bf16.mxu0 %v5858
      %6127 = vmatmul.mubr.bf16.gmra.mrb[0].mxu0 %v5857
      %v6128 = vpop.f32.mrb[0].mxu0
      %v6129 = vadd.f32 0.0, %v6128
      %v6130 = vpop.f32.mrb[0].mxu0
      %v6131 = vpop.f32.mrb[0].mxu0
      %v6132 = vpop.f32.mrb[0].mxu0
      %6133 = vdwg.mxu0
      %6134 = vmatprep.subr.bf16.mxu0 0
      %6135 = vmatpush1.bf16.msra.mxu0 %v5997
      %6136 = vmatprep.subr.bf16.mxu0 0
      %6137 = vmatpush1.bf16.msra.mxu0 %v5998
      %6138 = vmatprep.subr.bf16.mxu0 0
      %6139 = vmatpush1.bf16.msra.mxu0 %v5999
      %6140 = vmatprep.subr.bf16.mxu0 0
      %6141 = vmatpush1.bf16.msra.mxu0 %v6000
      %6142 = vmatprep.subr.bf16.mxu0 0
      %6143 = vmatpush1.bf16.msra.mxu0 0
      %6144 = vmatprep.subr.bf16.mxu0 0
      %6145 = vmatpush1.bf16.msra.mxu0 0
      %6146 = vmatprep.subr.bf16.mxu0 0
      %6147 = vmatpush1.bf16.msra.mxu0 0
      %6148 = vmatprep.subr.bf16.mxu0 0
      %6149 = vmatpush1.bf16.msra.mxu0 0
      %6150 = vmatprep.subr.bf16.mxu0 0
      %6151 = vmatpush1.bf16.msra.mxu0 0
      %6152 = vmatprep.subr.bf16.mxu0 0
      %6153 = vmatpush1.bf16.msra.mxu0 0
      %6154 = vmatprep.subr.bf16.mxu0 0
      %6155 = vmatpush1.bf16.msra.mxu0 0
      %6156 = vmatprep.subr.bf16.mxu0 0
      %6157 = vmatpush1.bf16.msra.mxu0 0
      %6158 = vmatprep.subr.bf16.mxu0 0
      %6159 = vmatpush1.bf16.msra.mxu0 0
      %6160 = vmatprep.subr.bf16.mxu0 0
      %6161 = vmatpush1.bf16.msra.mxu0 0
      %6162 = vmatprep.subr.bf16.mxu0 0
      %6163 = vmatpush1.bf16.msra.mxu0 0
      %6164 = vmatprep.subr.bf16.mxu0 0
      %6165 = vmatpush1.bf16.msra.mxu0 0
      %6166 = vmatprep.mubr.bf16.mxu0 0
      %6167 = vmatmul.mubr.bf16.gmra.mrb[0].mxu0 %v6022
      %v6168 = vpop.f32.mrb[0].mxu0
      %v6169 = vadd.f32 %v6080, %v6168
      %v6170 = vpop.f32.mrb[0].mxu0
      %v6171 = vpop.f32.mrb[0].mxu0
      %v6172 = vpop.f32.mrb[0].mxu0
      %6173 = vmatprep.mubr.bf16.mxu0 0
      %6174 = vmatmul.mubr.bf16.gmra.mrb[0].mxu0 %v6025
      %v6175 = vpop.f32.mrb[0].mxu0
      %v6176 = vadd.f32 %v6087, %v6175
      %v6177 = vpop.f32.mrb[0].mxu0
      %v6178 = vpop.f32.mrb[0].mxu0
      %v6179 = vpop.f32.mrb[0].mxu0
      %6180 = vmatprep.mubr.bf16.mxu0 0
      %6181 = vmatmul.mubr.bf16.gmra.mrb[0].mxu0 %v6028
      %v6182 = vpop.f32.mrb[0].mxu0
      %v6183 = vadd.f32 %v6094, %v6182
      %v6184 = vpop.f32.mrb[0].mxu0
      %v6185 = vpop.f32.mrb[0].mxu0
      %v6186 = vpop.f32.mrb[0].mxu0
      %6187 = vmatprep.mubr.bf16.mxu0 0
      %6188 = vmatmul.mubr.bf16.gmra.mrb[0].mxu0 %v6031
      %v6189 = vpop.f32.mrb[0].mxu0
      %v6190 = vadd.f32 %v6101, %v6189
      %v6191 = vpop.f32.mrb[0].mxu0
      %v6192 = vpop.f32.mrb[0].mxu0
      %v6193 = vpop.f32.mrb[0].mxu0
      %6194 = vmatprep.mubr.bf16.mxu0 0
      %6195 = vmatmul.mubr.bf16.gmra.mrb[0].mxu0 %v6034
      %v6196 = vpop.f32.mrb[0].mxu0
      %v6197 = vadd.f32 %v6108, %v6196
      %v6198 = vpop.f32.mrb[0].mxu0
      %v6199 = vpop.f32.mrb[0].mxu0
      %v6200 = vpop.f32.mrb[0].mxu0
      %6201 = vmatprep.mubr.bf16.mxu0 0
      %6202 = vmatmul.mubr.bf16.gmra.mrb[0].mxu0 %v6037
      %v6203 = vpop.f32.mrb[0].mxu0
      %v6204 = vadd.f32 %v6115, %v6203
      %v6205 = vpop.f32.mrb[0].mxu0
      %v6206 = vpop.f32.mrb[0].mxu0
      %v6207 = vpop.f32.mrb[0].mxu0
      %6208 = vmatprep.mubr.bf16.mxu0 0
      %6209 = vmatmul.mubr.bf16.gmra.mrb[0].mxu0 %v6040
      %v6210 = vpop.f32.mrb[0].mxu0
      %v6211 = vadd.f32 %v6122, %v6210
      %v6212 = vpop.f32.mrb[0].mxu0
      %v6213 = vpop.f32.mrb[0].mxu0
      %v6214 = vpop.f32.mrb[0].mxu0
      %6215 = vmatprep.mubr.bf16.mxu0 0
      %6216 = vmatmul.mubr.bf16.gmra.mrb[0].mxu0 %v6043
      %v6217 = vpop.f32.mrb[0].mxu0
      %v6218 = vadd.f32 %v6129, %v6217
      %v6219 = vpop.f32.mrb[0].mxu0
      %v6220 = vpop.f32.mrb[0].mxu0
      %v6221 = vpop.f32.mrb[0].mxu0
      %6222 = vdwg.mxu0
      %v6263 = vunpack.c.l.b16 %v5795
      %v6264 = vunpack.c.l.b16 %v5796
      %v6265 = vunpack.c.l.b16 %v5797
      %v6266 = vunpack.c.l.b16 %v5798
      %v6267 = vunpack.c.l.b16 %v5799
      %v6268 = vunpack.c.l.b16 %v5800
      %v6269 = vunpack.c.l.b16 %v5801
      %v6270 = vunpack.c.l.b16 %v5802
      %v6271 = vunpack.c.l.b16 %v5803
      %v6272 = vunpack.c.l.b16 %v5804
      %v6273 = vunpack.c.l.b16 %v5805
      %v6274 = vunpack.c.l.b16 %v5806
      %v6275 = vunpack.c.l.b16 %v5807
      %v6276 = vunpack.c.l.b16 %v5808
      %v6277 = vunpack.c.l.b16 %v5809
      %v6278 = vunpack.c.l.b16 %v5810
      %v6279 = vunpack.c.l.b16 %v5811
      %v6280 = vunpack.c.l.b16 %v5812
      %v6281 = vunpack.c.l.b16 %v5813
      %v6282 = vunpack.c.l.b16 %v5814
      %v6283 = vunpack.c.l.b16 %v5815
      %v6284 = vunpack.c.l.b16 %v5816
      %v6285 = vunpack.c.l.b16 %v5817
      %v6286 = vunpack.c.l.b16 %v5818
      %v6287 = vunpack.c.l.b16 %v5819
      %v6288 = vunpack.c.l.b16 %v5820
      %v6289 = vunpack.c.l.b16 %v5821
      %v6290 = vunpack.c.l.b16 %v5822
      %v6291 = vunpack.c.l.b16 %v5823
      %v6292 = vunpack.c.l.b16 %v5824
      %v6293 = vunpack.c.l.b16 %v5825
      %v6294 = vunpack.c.l.b16 %v5826
      %v6295 = vunpack.c.l.b16 %v5827
      %v6296 = vunpack.c.l.b16 %v5828
      %v6297 = vunpack.c.l.b16 %v5829
      %v6298 = vunpack.c.l.b16 %v5830
      %v6299 = vunpack.c.l.b16 %v5831
      %v6300 = vunpack.c.l.b16 %v5832
      %v6301 = vunpack.c.l.b16 %v5833
      %v6302 = vunpack.c.l.b16 %v5834
      %v6303 = vpack.c.b16 %v6264, %v6263
      %v6304 = vpack.c.b16 %v6266, %v6265
      %v6305 = vpack.c.b16 %v6268, %v6267
      %v6306 = vpack.c.b16 %v6270, %v6269
      %v6307 = vpack.c.b16 %v6272, %v6271
      %v6308 = vpack.c.b16 %v6274, %v6273
      %v6309 = vpack.c.b16 %v6276, %v6275
      %v6310 = vpack.c.b16 %v6278, %v6277
      %v6311 = vpack.c.b16 %v6280, %v6279
      %v6312 = vpack.c.b16 %v6282, %v6281
      %v6313 = vpack.c.b16 %v6284, %v6283
      %v6314 = vpack.c.b16 %v6286, %v6285
      %v6315 = vpack.c.b16 %v6288, %v6287
      %v6316 = vpack.c.b16 %v6290, %v6289
      %v6317 = vpack.c.b16 %v6292, %v6291
      %v6318 = vpack.c.b16 %v6294, %v6293
      %v6319 = vpack.c.b16 %v6296, %v6295
      %v6320 = vpack.c.b16 %v6298, %v6297
      %v6321 = vpack.c.b16 %v6300, %v6299
      %v6322 = vpack.c.b16 %v6302, %v6301
      %v6344 = vsel %vm2287, %v5773, 0
      %v6347 = vsel %vm2287, %v5776, 0
      %v6350 = vsel %vm2287, %v5779, 0
      %v6353 = vsel %vm2287, %v5782, 0
      %v6356 = vsel %vm2287, %v5785, 0
      %v6359 = vsel %vm2287, %v5788, 0
      %v6362 = vsel %vm2287, %v5791, 0
      %v6365 = vsel %vm2287, %v5794, 0
      %6367 = vmatprep.subr.bf16.mxu0 0
      %6368 = vmatpush1.bf16.msra.mxu0 %v6303
      %6369 = vmatprep.subr.bf16.mxu0 0
      %6370 = vmatpush1.bf16.msra.mxu0 %v6304
      %6371 = vmatprep.subr.bf16.mxu0 0
      %6372 = vmatpush1.bf16.msra.mxu0 %v6305
      %6373 = vmatprep.subr.bf16.mxu0 0
      %6374 = vmatpush1.bf16.msra.mxu0 %v6306
      %6375 = vmatprep.subr.bf16.mxu0 0
      %6376 = vmatpush1.bf16.msra.mxu0 %v6307
      %6377 = vmatprep.subr.bf16.mxu0 0
      %6378 = vmatpush1.bf16.msra.mxu0 %v6308
      %6379 = vmatprep.subr.bf16.mxu0 0
      %6380 = vmatpush1.bf16.msra.mxu0 %v6309
      %6381 = vmatprep.subr.bf16.mxu0 0
      %6382 = vmatpush1.bf16.msra.mxu0 %v6310
      %6383 = vmatprep.subr.bf16.mxu0 0
      %6384 = vmatpush1.bf16.msra.mxu0 %v6311
      %6385 = vmatprep.subr.bf16.mxu0 0
      %6386 = vmatpush1.bf16.msra.mxu0 %v6312
      %6387 = vmatprep.subr.bf16.mxu0 0
      %6388 = vmatpush1.bf16.msra.mxu0 %v6313
      %6389 = vmatprep.subr.bf16.mxu0 0
      %6390 = vmatpush1.bf16.msra.mxu0 %v6314
      %6391 = vmatprep.subr.bf16.mxu0 0
      %6392 = vmatpush1.bf16.msra.mxu0 %v6315
      %6393 = vmatprep.subr.bf16.mxu0 0
      %6394 = vmatpush1.bf16.msra.mxu0 %v6316
      %6395 = vmatprep.subr.bf16.mxu0 0
      %6396 = vmatpush1.bf16.msra.mxu0 %v6317
      %6397 = vmatprep.subr.bf16.mxu0 0
      %6398 = vmatpush1.bf16.msra.mxu0 %v6318
      %6399 = vmatprep.mubr.bf16.mxu0 %v5772
      %6400 = vmatmul.mubr.bf16.gmra.mrb[0].mxu0 %v5771
      %v6401 = vpop.f32.mrb[0].mxu0
      %v6402 = vadd.f32 %v6169, %v6401
      %v6403 = vpop.f32.mrb[0].mxu0
      %v6404 = vpop.f32.mrb[0].mxu0
      %v6405 = vpop.f32.mrb[0].mxu0
      %6406 = vmatprep.mubr.bf16.mxu0 %v5775
      %6407 = vmatmul.mubr.bf16.gmra.mrb[0].mxu0 %v5774
      %v6408 = vpop.f32.mrb[0].mxu0
      %v6409 = vadd.f32 %v6176, %v6408
      %v6410 = vpop.f32.mrb[0].mxu0
      %v6411 = vpop.f32.mrb[0].mxu0
      %v6412 = vpop.f32.mrb[0].mxu0
      %6413 = vmatprep.mubr.bf16.mxu0 %v5778
      %6414 = vmatmul.mubr.bf16.gmra.mrb[0].mxu0 %v5777
      %v6415 = vpop.f32.mrb[0].mxu0
      %v6416 = vadd.f32 %v6183, %v6415
      %v6417 = vpop.f32.mrb[0].mxu0
      %v6418 = vpop.f32.mrb[0].mxu0
      %v6419 = vpop.f32.mrb[0].mxu0
      %6420 = vmatprep.mubr.bf16.mxu0 %v5781
      %6421 = vmatmul.mubr.bf16.gmra.mrb[0].mxu0 %v5780
      %v6422 = vpop.f32.mrb[0].mxu0
      %v6423 = vadd.f32 %v6190, %v6422
      %v6424 = vpop.f32.mrb[0].mxu0
      %v6425 = vpop.f32.mrb[0].mxu0
      %v6426 = vpop.f32.mrb[0].mxu0
      %6427 = vmatprep.mubr.bf16.mxu0 %v5784
      %6428 = vmatmul.mubr.bf16.gmra.mrb[0].mxu0 %v5783
      %v6429 = vpop.f32.mrb[0].mxu0
      %v6430 = vadd.f32 %v6197, %v6429
      %v6431 = vpop.f32.mrb[0].mxu0
      %v6432 = vpop.f32.mrb[0].mxu0
      %v6433 = vpop.f32.mrb[0].mxu0
      %6434 = vmatprep.mubr.bf16.mxu0 %v5787
      %6435 = vmatmul.mubr.bf16.gmra.mrb[0].mxu0 %v5786
      %v6436 = vpop.f32.mrb[0].mxu0
      %v6437 = vadd.f32 %v6204, %v6436
      %v6438 = vpop.f32.mrb[0].mxu0
      %v6439 = vpop.f32.mrb[0].mxu0
      %v6440 = vpop.f32.mrb[0].mxu0
      %6441 = vmatprep.mubr.bf16.mxu0 %v5790
      %6442 = vmatmul.mubr.bf16.gmra.mrb[0].mxu0 %v5789
      %v6443 = vpop.f32.mrb[0].mxu0
      %v6444 = vadd.f32 %v6211, %v6443
      %v6445 = vpop.f32.mrb[0].mxu0
      %v6446 = vpop.f32.mrb[0].mxu0
      %v6447 = vpop.f32.mrb[0].mxu0
      %6448 = vmatprep.mubr.bf16.mxu0 %v5793
      %6449 = vmatmul.mubr.bf16.gmra.mrb[0].mxu0 %v5792
      %v6450 = vpop.f32.mrb[0].mxu0
      %v6451 = vadd.f32 %v6218, %v6450
      %v6452 = vpop.f32.mrb[0].mxu0
      %v6453 = vpop.f32.mrb[0].mxu0
      %v6454 = vpop.f32.mrb[0].mxu0
      %6455 = vdwg.mxu0
      %6456 = vmatprep.subr.bf16.mxu0 0
      %6457 = vmatpush1.bf16.msra.mxu0 %v6319
      %6458 = vmatprep.subr.bf16.mxu0 0
      %6459 = vmatpush1.bf16.msra.mxu0 %v6320
      %6460 = vmatprep.subr.bf16.mxu0 0
      %6461 = vmatpush1.bf16.msra.mxu0 %v6321
      %6462 = vmatprep.subr.bf16.mxu0 0
      %6463 = vmatpush1.bf16.msra.mxu0 %v6322
      %6464 = vmatprep.subr.bf16.mxu0 0
      %6465 = vmatpush1.bf16.msra.mxu0 0
      %6466 = vmatprep.subr.bf16.mxu0 0
      %6467 = vmatpush1.bf16.msra.mxu0 0
      %6468 = vmatprep.subr.bf16.mxu0 0
      %6469 = vmatpush1.bf16.msra.mxu0 0
      %6470 = vmatprep.subr.bf16.mxu0 0
      %6471 = vmatpush1.bf16.msra.mxu0 0
      %6472 = vmatprep.subr.bf16.mxu0 0
      %6473 = vmatpush1.bf16.msra.mxu0 0
      %6474 = vmatprep.subr.bf16.mxu0 0
      %6475 = vmatpush1.bf16.msra.mxu0 0
      %6476 = vmatprep.subr.bf16.mxu0 0
      %6477 = vmatpush1.bf16.msra.mxu0 0
      %6478 = vmatprep.subr.bf16.mxu0 0
      %6479 = vmatpush1.bf16.msra.mxu0 0
      %6480 = vmatprep.subr.bf16.mxu0 0
      %6481 = vmatpush1.bf16.msra.mxu0 0
      %6482 = vmatprep.subr.bf16.mxu0 0
      %6483 = vmatpush1.bf16.msra.mxu0 0
      %6484 = vmatprep.subr.bf16.mxu0 0
      %6485 = vmatpush1.bf16.msra.mxu0 0
      %6486 = vmatprep.subr.bf16.mxu0 0
      %6487 = vmatpush1.bf16.msra.mxu0 0
      %6488 = vmatprep.mubr.bf16.mxu0 0
      %6489 = vmatmul.mubr.bf16.gmra.mrb[0].mxu0 %v6344
      %v6490 = vpop.f32.mrb[0].mxu0
      %v6491 = vadd.f32 %v6402, %v6490
      %v6492 = vpop.f32.mrb[0].mxu0
      %v6493 = vpop.f32.mrb[0].mxu0
      %v6494 = vpop.f32.mrb[0].mxu0
      %6495 = vmatprep.mubr.bf16.mxu0 0
      %6496 = vmatmul.mubr.bf16.gmra.mrb[0].mxu0 %v6347
      %v6497 = vpop.f32.mrb[0].mxu0
      %v6498 = vadd.f32 %v6409, %v6497
      %v6499 = vpop.f32.mrb[0].mxu0
      %v6500 = vpop.f32.mrb[0].mxu0
      %v6501 = vpop.f32.mrb[0].mxu0
      %6502 = vmatprep.mubr.bf16.mxu0 0
      %6503 = vmatmul.mubr.bf16.gmra.mrb[0].mxu0 %v6350
      %v6504 = vpop.f32.mrb[0].mxu0
      %v6505 = vadd.f32 %v6416, %v6504
      %v6506 = vpop.f32.mrb[0].mxu0
      %v6507 = vpop.f32.mrb[0].mxu0
      %v6508 = vpop.f32.mrb[0].mxu0
      %6509 = vmatprep.mubr.bf16.mxu0 0
      %6510 = vmatmul.mubr.bf16.gmra.mrb[0].mxu0 %v6353
      %v6511 = vpop.f32.mrb[0].mxu0
      %v6512 = vadd.f32 %v6423, %v6511
      %v6513 = vpop.f32.mrb[0].mxu0
      %v6514 = vpop.f32.mrb[0].mxu0
      %v6515 = vpop.f32.mrb[0].mxu0
      %6516 = vmatprep.mubr.bf16.mxu0 0
      %6517 = vmatmul.mubr.bf16.gmra.mrb[0].mxu0 %v6356
      %v6518 = vpop.f32.mrb[0].mxu0
      %v6519 = vadd.f32 %v6430, %v6518
      %v6520 = vpop.f32.mrb[0].mxu0
      %v6521 = vpop.f32.mrb[0].mxu0
      %v6522 = vpop.f32.mrb[0].mxu0
      %6523 = vmatprep.mubr.bf16.mxu0 0
      %6524 = vmatmul.mubr.bf16.gmra.mrb[0].mxu0 %v6359
      %v6525 = vpop.f32.mrb[0].mxu0
      %v6526 = vadd.f32 %v6437, %v6525
      %v6527 = vpop.f32.mrb[0].mxu0
      %v6528 = vpop.f32.mrb[0].mxu0
      %v6529 = vpop.f32.mrb[0].mxu0
      %6530 = vmatprep.mubr.bf16.mxu0 0
      %6531 = vmatmul.mubr.bf16.gmra.mrb[0].mxu0 %v6362
      %v6532 = vpop.f32.mrb[0].mxu0
      %v6533 = vadd.f32 %v6444, %v6532
      %v6534 = vpop.f32.mrb[0].mxu0
      %v6535 = vpop.f32.mrb[0].mxu0
      %v6536 = vpop.f32.mrb[0].mxu0
      %6537 = vmatprep.mubr.bf16.mxu0 0
      %6538 = vmatmul.mubr.bf16.gmra.mrb[0].mxu0 %v6365
      %v6539 = vpop.f32.mrb[0].mxu0
      %v6540 = vadd.f32 %v6451, %v6539
      %v6541 = vpop.f32.mrb[0].mxu0
      %v6542 = vpop.f32.mrb[0].mxu0
      %v6543 = vpop.f32.mrb[0].mxu0
      %6544 = vdwg.mxu0
      %s6545 = scalar_lea.vmem [#allocation5], 48
      %v6546 = vld [vmem:[%s6545] sm:$0xff]
      %v6547 = vld [vmem:[%s6545 + $0x8] sm:$0xff]
      %v6548 = vld [vmem:[%s6545 + $0x10] sm:$0xff]
      %v6549 = vld [vmem:[%s6545 + $0x18] sm:$0xff]
      %v6550 = vld [vmem:[%s6545 + $0x20] sm:$0xff]
      %v6551 = vld [vmem:[%s6545 + $0x28] sm:$0xff]
      %v6552 = vld [vmem:[%s6545 + $0x30] sm:$0xff]
      %v6553 = vld [vmem:[%s6545 + $0x38] sm:$0xff]
      %v6554 = vld [vmem:[%s6545 + $0x40] sm:$0xff]
      %v6555 = vld [vmem:[%s6545 + $0x48] sm:$0xff]
      %v6556 = vld [vmem:[%s6545 + $0x50] sm:$0xff]
      %v6557 = vld [vmem:[%s6545 + $0x58] sm:$0xff]
      %v6558 = vld [vmem:[%s6545 + $0x60] sm:$0xff]
      %v6559 = vld [vmem:[%s6545 + $0x68] sm:$0xff]
      %v6560 = vld [vmem:[%s6545 + $0x70] sm:$0xff]
      %v6561 = vld [vmem:[%s6545 + $0x78] sm:$0xff]
      %v6562 = vld [vmem:[%s6545 + $0x80] sm:$0xff]
      %v6563 = vld [vmem:[%s6545 + $0x88] sm:$0xff]
      %v6564 = vld [vmem:[%s6545 + $0x90] sm:$0xff]
      %v6565 = vld [vmem:[%s6545 + $0x98] sm:$0xff]
      %v6566 = vld [vmem:[%s6545 + $0xa0] sm:$0xff]
      %v6567 = vld [vmem:[%s6545 + $0xa8] sm:$0xff]
      %v6568 = vld [vmem:[%s6545 + $0xb0] sm:$0xff]
      %v6569 = vld [vmem:[%s6545 + $0xb8] sm:$0xff]
      %s6570 = scalar_lea.vmem %s3, 320
      %v6571 = vld [vmem:[%s6570] sm:$0xf]
      %v6572 = vld [vmem:[%s6570 + $0x4] sm:$0xf]
      %v6573 = vld [vmem:[%s6570 + $0x8] sm:$0xf]
      %v6574 = vld [vmem:[%s6570 + $0xc] sm:$0xf]
      %v6575 = vld [vmem:[%s6570 + $0x10] sm:$0xf]
      %v6576 = vld [vmem:[%s6570 + $0x14] sm:$0xf]
      %v6577 = vld [vmem:[%s6570 + $0x18] sm:$0xf]
      %v6578 = vld [vmem:[%s6570 + $0x1c] sm:$0xf]
      %v6579 = vld [vmem:[%s6570 + $0x20] sm:$0xf]
      %v6580 = vld [vmem:[%s6570 + $0x24] sm:$0xf]
      %v6581 = vld [vmem:[%s6570 + $0x28] sm:$0xf]
      %v6582 = vld [vmem:[%s6570 + $0x2c] sm:$0xf]
      %v6583 = vld [vmem:[%s6570 + $0x30] sm:$0xf]
      %v6584 = vld [vmem:[%s6570 + $0x34] sm:$0xf]
      %v6585 = vld [vmem:[%s6570 + $0x38] sm:$0xf]
      %v6586 = vld [vmem:[%s6570 + $0x3c] sm:$0xf]
      %v6587 = vld [vmem:[%s6570 + $0x40] sm:$0xf]
      %v6588 = vld [vmem:[%s6570 + $0x44] sm:$0xf]
      %v6589 = vld [vmem:[%s6570 + $0x48] sm:$0xf]
      %v6590 = vld [vmem:[%s6570 + $0x4c] sm:$0xf]
      %v6591 = vld [vmem:[%s6570 + $0x50] sm:$0xf]
      %v6592 = vld [vmem:[%s6570 + $0x54] sm:$0xf]
      %v6593 = vld [vmem:[%s6570 + $0x58] sm:$0xf]
      %v6594 = vld [vmem:[%s6570 + $0x5c] sm:$0xf]
      %v6595 = vld [vmem:[%s6570 + $0x60] sm:$0xf]
      %v6596 = vld [vmem:[%s6570 + $0x64] sm:$0xf]
      %v6597 = vld [vmem:[%s6570 + $0x68] sm:$0xf]
      %v6598 = vld [vmem:[%s6570 + $0x6c] sm:$0xf]
      %v6599 = vld [vmem:[%s6570 + $0x70] sm:$0xf]
      %v6600 = vld [vmem:[%s6570 + $0x74] sm:$0xf]
      %v6601 = vld [vmem:[%s6570 + $0x78] sm:$0xf]
      %v6602 = vld [vmem:[%s6570 + $0x7c] sm:$0xf]
      %v6603 = vld [vmem:[%s6570 + $0x80] sm:$0xf]
      %v6604 = vld [vmem:[%s6570 + $0x84] sm:$0xf]
      %v6605 = vld [vmem:[%s6570 + $0x88] sm:$0xf]
      %v6606 = vld [vmem:[%s6570 + $0x8c] sm:$0xf]
      %v6607 = vld [vmem:[%s6570 + $0x90] sm:$0xf]
      %v6608 = vld [vmem:[%s6570 + $0x94] sm:$0xf]
      %v6609 = vld [vmem:[%s6570 + $0x98] sm:$0xf]
      %v6610 = vld [vmem:[%s6570 + $0x9c] sm:$0xf]
      %v6651 = vunpack.c.l.b16 %v6571
      %v6652 = vunpack.c.l.b16 %v6572
      %v6653 = vunpack.c.l.b16 %v6573
      %v6654 = vunpack.c.l.b16 %v6574
      %v6655 = vunpack.c.l.b16 %v6575
      %v6656 = vunpack.c.l.b16 %v6576
      %v6657 = vunpack.c.l.b16 %v6577
      %v6658 = vunpack.c.l.b16 %v6578
      %v6659 = vunpack.c.l.b16 %v6579
      %v6660 = vunpack.c.l.b16 %v6580
      %v6661 = vunpack.c.l.b16 %v6581
      %v6662 = vunpack.c.l.b16 %v6582
      %v6663 = vunpack.c.l.b16 %v6583
      %v6664 = vunpack.c.l.b16 %v6584
      %v6665 = vunpack.c.l.b16 %v6585
      %v6666 = vunpack.c.l.b16 %v6586
      %v6667 = vunpack.c.l.b16 %v6587
      %v6668 = vunpack.c.l.b16 %v6588
      %v6669 = vunpack.c.l.b16 %v6589
      %v6670 = vunpack.c.l.b16 %v6590
      %v6671 = vunpack.c.l.b16 %v6591
      %v6672 = vunpack.c.l.b16 %v6592
      %v6673 = vunpack.c.l.b16 %v6593
      %v6674 = vunpack.c.l.b16 %v6594
      %v6675 = vunpack.c.l.b16 %v6595
      %v6676 = vunpack.c.l.b16 %v6596
      %v6677 = vunpack.c.l.b16 %v6597
      %v6678 = vunpack.c.l.b16 %v6598
      %v6679 = vunpack.c.l.b16 %v6599
      %v6680 = vunpack.c.l.b16 %v6600
      %v6681 = vunpack.c.l.b16 %v6601
      %v6682 = vunpack.c.l.b16 %v6602
      %v6683 = vunpack.c.l.b16 %v6603
      %v6684 = vunpack.c.l.b16 %v6604
      %v6685 = vunpack.c.l.b16 %v6605
      %v6686 = vunpack.c.l.b16 %v6606
      %v6687 = vunpack.c.l.b16 %v6607
      %v6688 = vunpack.c.l.b16 %v6608
      %v6689 = vunpack.c.l.b16 %v6609
      %v6690 = vunpack.c.l.b16 %v6610
      %v6691 = vpack.c.b16 %v6652, %v6651
      %v6692 = vpack.c.b16 %v6654, %v6653
      %v6693 = vpack.c.b16 %v6656, %v6655
      %v6694 = vpack.c.b16 %v6658, %v6657
      %v6695 = vpack.c.b16 %v6660, %v6659
      %v6696 = vpack.c.b16 %v6662, %v6661
      %v6697 = vpack.c.b16 %v6664, %v6663
      %v6698 = vpack.c.b16 %v6666, %v6665
      %v6699 = vpack.c.b16 %v6668, %v6667
      %v6700 = vpack.c.b16 %v6670, %v6669
      %v6701 = vpack.c.b16 %v6672, %v6671
      %v6702 = vpack.c.b16 %v6674, %v6673
      %v6703 = vpack.c.b16 %v6676, %v6675
      %v6704 = vpack.c.b16 %v6678, %v6677
      %v6705 = vpack.c.b16 %v6680, %v6679
      %v6706 = vpack.c.b16 %v6682, %v6681
      %v6707 = vpack.c.b16 %v6684, %v6683
      %v6708 = vpack.c.b16 %v6686, %v6685
      %v6709 = vpack.c.b16 %v6688, %v6687
      %v6710 = vpack.c.b16 %v6690, %v6689
      %v6732 = vsel %vm2287, %v6548, 0
      %v6735 = vsel %vm2287, %v6551, 0
      %v6738 = vsel %vm2287, %v6554, 0
      %v6741 = vsel %vm2287, %v6557, 0
      %v6744 = vsel %vm2287, %v6560, 0
      %v6747 = vsel %vm2287, %v6563, 0
      %v6750 = vsel %vm2287, %v6566, 0
      %v6753 = vsel %vm2287, %v6569, 0
      %6755 = vmatprep.subr.bf16.mxu0 0
      %6756 = vmatpush1.bf16.msra.mxu0 %v6691
      %6757 = vmatprep.subr.bf16.mxu0 0
      %6758 = vmatpush1.bf16.msra.mxu0 %v6692
      %6759 = vmatprep.subr.bf16.mxu0 0
      %6760 = vmatpush1.bf16.msra.mxu0 %v6693
      %6761 = vmatprep.subr.bf16.mxu0 0
      %6762 = vmatpush1.bf16.msra.mxu0 %v6694
      %6763 = vmatprep.subr.bf16.mxu0 0
      %6764 = vmatpush1.bf16.msra.mxu0 %v6695
      %6765 = vmatprep.subr.bf16.mxu0 0
      %6766 = vmatpush1.bf16.msra.mxu0 %v6696
      %6767 = vmatprep.subr.bf16.mxu0 0
      %6768 = vmatpush1.bf16.msra.mxu0 %v6697
      %6769 = vmatprep.subr.bf16.mxu0 0
      %6770 = vmatpush1.bf16.msra.mxu0 %v6698
      %6771 = vmatprep.subr.bf16.mxu0 0
      %6772 = vmatpush1.bf16.msra.mxu0 %v6699
      %6773 = vmatprep.subr.bf16.mxu0 0
      %6774 = vmatpush1.bf16.msra.mxu0 %v6700
      %6775 = vmatprep.subr.bf16.mxu0 0
      %6776 = vmatpush1.bf16.msra.mxu0 %v6701
      %6777 = vmatprep.subr.bf16.mxu0 0
      %6778 = vmatpush1.bf16.msra.mxu0 %v6702
      %6779 = vmatprep.subr.bf16.mxu0 0
      %6780 = vmatpush1.bf16.msra.mxu0 %v6703
      %6781 = vmatprep.subr.bf16.mxu0 0
      %6782 = vmatpush1.bf16.msra.mxu0 %v6704
      %6783 = vmatprep.subr.bf16.mxu0 0
      %6784 = vmatpush1.bf16.msra.mxu0 %v6705
      %6785 = vmatprep.subr.bf16.mxu0 0
      %6786 = vmatpush1.bf16.msra.mxu0 %v6706
      %6787 = vmatprep.mubr.bf16.mxu0 %v6547
      %6788 = vmatmul.mubr.bf16.gmra.mrb[0].mxu0 %v6546
      %v6789 = vpop.f32.mrb[0].mxu0
      %v6790 = vadd.f32 0.0, %v6789
      %v6791 = vpop.f32.mrb[0].mxu0
      %v6792 = vpop.f32.mrb[0].mxu0
      %v6793 = vpop.f32.mrb[0].mxu0
      %6794 = vmatprep.mubr.bf16.mxu0 %v6550
      %6795 = vmatmul.mubr.bf16.gmra.mrb[0].mxu0 %v6549
      %v6796 = vpop.f32.mrb[0].mxu0
      %v6797 = vadd.f32 0.0, %v6796
      %v6798 = vpop.f32.mrb[0].mxu0
      %v6799 = vpop.f32.mrb[0].mxu0
      %v6800 = vpop.f32.mrb[0].mxu0
      %6801 = vmatprep.mubr.bf16.mxu0 %v6553
      %6802 = vmatmul.mubr.bf16.gmra.mrb[0].mxu0 %v6552
      %v6803 = vpop.f32.mrb[0].mxu0
      %v6804 = vadd.f32 0.0, %v6803
      %v6805 = vpop.f32.mrb[0].mxu0
      %v6806 = vpop.f32.mrb[0].mxu0
      %v6807 = vpop.f32.mrb[0].mxu0
      %6808 = vmatprep.mubr.bf16.mxu0 %v6556
      %6809 = vmatmul.mubr.bf16.gmra.mrb[0].mxu0 %v6555
      %v6810 = vpop.f32.mrb[0].mxu0
      %v6811 = vadd.f32 0.0, %v6810
      %v6812 = vpop.f32.mrb[0].mxu0
      %v6813 = vpop.f32.mrb[0].mxu0
      %v6814 = vpop.f32.mrb[0].mxu0
      %6815 = vmatprep.mubr.bf16.mxu0 %v6559
      %6816 = vmatmul.mubr.bf16.gmra.mrb[0].mxu0 %v6558
      %v6817 = vpop.f32.mrb[0].mxu0
      %v6818 = vadd.f32 0.0, %v6817
      %v6819 = vpop.f32.mrb[0].mxu0
      %v6820 = vpop.f32.mrb[0].mxu0
      %v6821 = vpop.f32.mrb[0].mxu0
      %6822 = vmatprep.mubr.bf16.mxu0 %v6562
      %6823 = vmatmul.mubr.bf16.gmra.mrb[0].mxu0 %v6561
      %v6824 = vpop.f32.mrb[0].mxu0
      %v6825 = vadd.f32 0.0, %v6824
      %v6826 = vpop.f32.mrb[0].mxu0
      %v6827 = vpop.f32.mrb[0].mxu0
      %v6828 = vpop.f32.mrb[0].mxu0
      %6829 = vmatprep.mubr.bf16.mxu0 %v6565
      %6830 = vmatmul.mubr.bf16.gmra.mrb[0].mxu0 %v6564
      %v6831 = vpop.f32.mrb[0].mxu0
      %v6832 = vadd.f32 0.0, %v6831
      %v6833 = vpop.f32.mrb[0].mxu0
      %v6834 = vpop.f32.mrb[0].mxu0
      %v6835 = vpop.f32.mrb[0].mxu0
      %6836 = vmatprep.mubr.bf16.mxu0 %v6568
      %6837 = vmatmul.mubr.bf16.gmra.mrb[0].mxu0 %v6567
      %v6838 = vpop.f32.mrb[0].mxu0
      %v6839 = vadd.f32 0.0, %v6838
      %v6840 = vpop.f32.mrb[0].mxu0
      %v6841 = vpop.f32.mrb[0].mxu0
      %v6842 = vpop.f32.mrb[0].mxu0
      %6843 = vdwg.mxu0
      %6844 = vmatprep.subr.bf16.mxu0 0
      %6845 = vmatpush1.bf16.msra.mxu0 %v6707
      %6846 = vmatprep.subr.bf16.mxu0 0
      %6847 = vmatpush1.bf16.msra.mxu0 %v6708
      %6848 = vmatprep.subr.bf16.mxu0 0
      %6849 = vmatpush1.bf16.msra.mxu0 %v6709
      %6850 = vmatprep.subr.bf16.mxu0 0
      %6851 = vmatpush1.bf16.msra.mxu0 %v6710
      %6852 = vmatprep.subr.bf16.mxu0 0
      %6853 = vmatpush1.bf16.msra.mxu0 0
      %6854 = vmatprep.subr.bf16.mxu0 0
      %6855 = vmatpush1.bf16.msra.mxu0 0
      %6856 = vmatprep.subr.bf16.mxu0 0
      %6857 = vmatpush1.bf16.msra.mxu0 0
      %6858 = vmatprep.subr.bf16.mxu0 0
      %6859 = vmatpush1.bf16.msra.mxu0 0
      %6860 = vmatprep.subr.bf16.mxu0 0
      %6861 = vmatpush1.bf16.msra.mxu0 0
      %6862 = vmatprep.subr.bf16.mxu0 0
      %6863 = vmatpush1.bf16.msra.mxu0 0
      %6864 = vmatprep.subr.bf16.mxu0 0
      %6865 = vmatpush1.bf16.msra.mxu0 0
      %6866 = vmatprep.subr.bf16.mxu0 0
      %6867 = vmatpush1.bf16.msra.mxu0 0
      %6868 = vmatprep.subr.bf16.mxu0 0
      %6869 = vmatpush1.bf16.msra.mxu0 0
      %6870 = vmatprep.subr.bf16.mxu0 0
      %6871 = vmatpush1.bf16.msra.mxu0 0
      %6872 = vmatprep.subr.bf16.mxu0 0
      %6873 = vmatpush1.bf16.msra.mxu0 0
      %6874 = vmatprep.subr.bf16.mxu0 0
      %6875 = vmatpush1.bf16.msra.mxu0 0
      %6876 = vmatprep.mubr.bf16.mxu0 0
      %6877 = vmatmul.mubr.bf16.gmra.mrb[0].mxu0 %v6732
      %v6878 = vpop.f32.mrb[0].mxu0
      %v6879 = vadd.f32 %v6790, %v6878
      %v6880 = vpop.f32.mrb[0].mxu0
      %v6881 = vpop.f32.mrb[0].mxu0
      %v6882 = vpop.f32.mrb[0].mxu0
      %6883 = vmatprep.mubr.bf16.mxu0 0
      %6884 = vmatmul.mubr.bf16.gmra.mrb[0].mxu0 %v6735
      %v6885 = vpop.f32.mrb[0].mxu0
      %v6886 = vadd.f32 %v6797, %v6885
      %v6887 = vpop.f32.mrb[0].mxu0
      %v6888 = vpop.f32.mrb[0].mxu0
      %v6889 = vpop.f32.mrb[0].mxu0
      %6890 = vmatprep.mubr.bf16.mxu0 0
      %6891 = vmatmul.mubr.bf16.gmra.mrb[0].mxu0 %v6738
      %v6892 = vpop.f32.mrb[0].mxu0
      %v6893 = vadd.f32 %v6804, %v6892
      %v6894 = vpop.f32.mrb[0].mxu0
      %v6895 = vpop.f32.mrb[0].mxu0
      %v6896 = vpop.f32.mrb[0].mxu0
      %6897 = vmatprep.mubr.bf16.mxu0 0
      %6898 = vmatmul.mubr.bf16.gmra.mrb[0].mxu0 %v6741
      %v6899 = vpop.f32.mrb[0].mxu0
      %v6900 = vadd.f32 %v6811, %v6899
      %v6901 = vpop.f32.mrb[0].mxu0
      %v6902 = vpop.f32.mrb[0].mxu0
      %v6903 = vpop.f32.mrb[0].mxu0
      %6904 = vmatprep.mubr.bf16.mxu0 0
      %6905 = vmatmul.mubr.bf16.gmra.mrb[0].mxu0 %v6744
      %v6906 = vpop.f32.mrb[0].mxu0
      %v6907 = vadd.f32 %v6818, %v6906
      %v6908 = vpop.f32.mrb[0].mxu0
      %v6909 = vpop.f32.mrb[0].mxu0
      %v6910 = vpop.f32.mrb[0].mxu0
      %6911 = vmatprep.mubr.bf16.mxu0 0
      %6912 = vmatmul.mubr.bf16.gmra.mrb[0].mxu0 %v6747
      %v6913 = vpop.f32.mrb[0].mxu0
      %v6914 = vadd.f32 %v6825, %v6913
      %v6915 = vpop.f32.mrb[0].mxu0
      %v6916 = vpop.f32.mrb[0].mxu0
      %v6917 = vpop.f32.mrb[0].mxu0
      %6918 = vmatprep.mubr.bf16.mxu0 0
      %6919 = vmatmul.mubr.bf16.gmra.mrb[0].mxu0 %v6750
      %v6920 = vpop.f32.mrb[0].mxu0
      %v6921 = vadd.f32 %v6832, %v6920
      %v6922 = vpop.f32.mrb[0].mxu0
      %v6923 = vpop.f32.mrb[0].mxu0
      %v6924 = vpop.f32.mrb[0].mxu0
      %6925 = vmatprep.mubr.bf16.mxu0 0
      %6926 = vmatmul.mubr.bf16.gmra.mrb[0].mxu0 %v6753
      %v6927 = vpop.f32.mrb[0].mxu0
      %v6928 = vadd.f32 %v6839, %v6927
      %v6929 = vpop.f32.mrb[0].mxu0
      %v6930 = vpop.f32.mrb[0].mxu0
      %v6931 = vpop.f32.mrb[0].mxu0
      %6932 = vdwg.mxu0
      %v6933 = vadd.f32 %v6491, %v6879
      %v6934 = vadd.f32 %v6498, %v6886
      %v6935 = vadd.f32 %v6505, %v6893
      %v6936 = vadd.f32 %v6512, %v6900
      %v6937 = vadd.f32 %v6519, %v6907
      %v6938 = vadd.f32 %v6526, %v6914
      %v6939 = vadd.f32 %v6533, %v6921
      %v6940 = vadd.f32 %v6540, %v6928
      %s6941 = scalar_lea.vmem [#allocation5], 72
      %v6942 = vld [vmem:[%s6941] sm:$0xff]
      %v6943 = vld [vmem:[%s6941 + $0x8] sm:$0xff]
      %v6944 = vld [vmem:[%s6941 + $0x10] sm:$0xff]
      %v6945 = vld [vmem:[%s6941 + $0x18] sm:$0xff]
      %v6946 = vld [vmem:[%s6941 + $0x20] sm:$0xff]
      %v6947 = vld [vmem:[%s6941 + $0x28] sm:$0xff]
      %v6948 = vld [vmem:[%s6941 + $0x30] sm:$0xff]
      %v6949 = vld [vmem:[%s6941 + $0x38] sm:$0xff]
      %v6950 = vld [vmem:[%s6941 + $0x40] sm:$0xff]
      %v6951 = vld [vmem:[%s6941 + $0x48] sm:$0xff]
      %v6952 = vld [vmem:[%s6941 + $0x50] sm:$0xff]
      %v6953 = vld [vmem:[%s6941 + $0x58] sm:$0xff]
      %v6954 = vld [vmem:[%s6941 + $0x60] sm:$0xff]
      %v6955 = vld [vmem:[%s6941 + $0x68] sm:$0xff]
      %v6956 = vld [vmem:[%s6941 + $0x70] sm:$0xff]
      %v6957 = vld [vmem:[%s6941 + $0x78] sm:$0xff]
      %v6958 = vld [vmem:[%s6941 + $0x80] sm:$0xff]
      %v6959 = vld [vmem:[%s6941 + $0x88] sm:$0xff]
      %v6960 = vld [vmem:[%s6941 + $0x90] sm:$0xff]
      %v6961 = vld [vmem:[%s6941 + $0x98] sm:$0xff]
      %v6962 = vld [vmem:[%s6941 + $0xa0] sm:$0xff]
      %v6963 = vld [vmem:[%s6941 + $0xa8] sm:$0xff]
      %v6964 = vld [vmem:[%s6941 + $0xb0] sm:$0xff]
      %v6965 = vld [vmem:[%s6941 + $0xb8] sm:$0xff]
      %s6966 = scalar_lea.vmem %s3, 480
      %v6967 = vld [vmem:[%s6966] sm:$0xf]
      %v6968 = vld [vmem:[%s6966 + $0x4] sm:$0xf]
      %v6969 = vld [vmem:[%s6966 + $0x8] sm:$0xf]
      %v6970 = vld [vmem:[%s6966 + $0xc] sm:$0xf]
      %v6971 = vld [vmem:[%s6966 + $0x10] sm:$0xf]
      %v6972 = vld [vmem:[%s6966 + $0x14] sm:$0xf]
      %v6973 = vld [vmem:[%s6966 + $0x18] sm:$0xf]
      %v6974 = vld [vmem:[%s6966 + $0x1c] sm:$0xf]
      %v6975 = vld [vmem:[%s6966 + $0x20] sm:$0xf]
      %v6976 = vld [vmem:[%s6966 + $0x24] sm:$0xf]
      %v6977 = vld [vmem:[%s6966 + $0x28] sm:$0xf]
      %v6978 = vld [vmem:[%s6966 + $0x2c] sm:$0xf]
      %v6979 = vld [vmem:[%s6966 + $0x30] sm:$0xf]
      %v6980 = vld [vmem:[%s6966 + $0x34] sm:$0xf]
      %v6981 = vld [vmem:[%s6966 + $0x38] sm:$0xf]
      %v6982 = vld [vmem:[%s6966 + $0x3c] sm:$0xf]
      %v6983 = vld [vmem:[%s6966 + $0x40] sm:$0xf]
      %v6984 = vld [vmem:[%s6966 + $0x44] sm:$0xf]
      %v6985 = vld [vmem:[%s6966 + $0x48] sm:$0xf]
      %v6986 = vld [vmem:[%s6966 + $0x4c] sm:$0xf]
      %v6987 = vld [vmem:[%s6966 + $0x50] sm:$0xf]
      %v6988 = vld [vmem:[%s6966 + $0x54] sm:$0xf]
      %v6989 = vld [vmem:[%s6966 + $0x58] sm:$0xf]
      %v6990 = vld [vmem:[%s6966 + $0x5c] sm:$0xf]
      %v6991 = vld [vmem:[%s6966 + $0x60] sm:$0xf]
      %v6992 = vld [vmem:[%s6966 + $0x64] sm:$0xf]
      %v6993 = vld [vmem:[%s6966 + $0x68] sm:$0xf]
      %v6994 = vld [vmem:[%s6966 + $0x6c] sm:$0xf]
      %v6995 = vld [vmem:[%s6966 + $0x70] sm:$0xf]
      %v6996 = vld [vmem:[%s6966 + $0x74] sm:$0xf]
      %v6997 = vld [vmem:[%s6966 + $0x78] sm:$0xf]
      %v6998 = vld [vmem:[%s6966 + $0x7c] sm:$0xf]
      %v6999 = vld [vmem:[%s6966 + $0x80] sm:$0xf]
      %v7000 = vld [vmem:[%s6966 + $0x84] sm:$0xf]
      %v7001 = vld [vmem:[%s6966 + $0x88] sm:$0xf]
      %v7002 = vld [vmem:[%s6966 + $0x8c] sm:$0xf]
      %v7003 = vld [vmem:[%s6966 + $0x90] sm:$0xf]
      %v7004 = vld [vmem:[%s6966 + $0x94] sm:$0xf]
      %v7005 = vld [vmem:[%s6966 + $0x98] sm:$0xf]
      %v7006 = vld [vmem:[%s6966 + $0x9c] sm:$0xf]
      %v7047 = vunpack.c.l.b16 %v6967
      %v7048 = vunpack.c.l.b16 %v6968
      %v7049 = vunpack.c.l.b16 %v6969
      %v7050 = vunpack.c.l.b16 %v6970
      %v7051 = vunpack.c.l.b16 %v6971
      %v7052 = vunpack.c.l.b16 %v6972
      %v7053 = vunpack.c.l.b16 %v6973
      %v7054 = vunpack.c.l.b16 %v6974
      %v7055 = vunpack.c.l.b16 %v6975
      %v7056 = vunpack.c.l.b16 %v6976
      %v7057 = vunpack.c.l.b16 %v6977
      %v7058 = vunpack.c.l.b16 %v6978
      %v7059 = vunpack.c.l.b16 %v6979
      %v7060 = vunpack.c.l.b16 %v6980
      %v7061 = vunpack.c.l.b16 %v6981
      %v7062 = vunpack.c.l.b16 %v6982
      %v7063 = vunpack.c.l.b16 %v6983
      %v7064 = vunpack.c.l.b16 %v6984
      %v7065 = vunpack.c.l.b16 %v6985
      %v7066 = vunpack.c.l.b16 %v6986
      %v7067 = vunpack.c.l.b16 %v6987
      %v7068 = vunpack.c.l.b16 %v6988
      %v7069 = vunpack.c.l.b16 %v6989
      %v7070 = vunpack.c.l.b16 %v6990
      %v7071 = vunpack.c.l.b16 %v6991
      %v7072 = vunpack.c.l.b16 %v6992
      %v7073 = vunpack.c.l.b16 %v6993
      %v7074 = vunpack.c.l.b16 %v6994
      %v7075 = vunpack.c.l.b16 %v6995
      %v7076 = vunpack.c.l.b16 %v6996
      %v7077 = vunpack.c.l.b16 %v6997
      %v7078 = vunpack.c.l.b16 %v6998
      %v7079 = vunpack.c.l.b16 %v6999
      %v7080 = vunpack.c.l.b16 %v7000
      %v7081 = vunpack.c.l.b16 %v7001
      %v7082 = vunpack.c.l.b16 %v7002
      %v7083 = vunpack.c.l.b16 %v7003
      %v7084 = vunpack.c.l.b16 %v7004
      %v7085 = vunpack.c.l.b16 %v7005
      %v7086 = vunpack.c.l.b16 %v7006
      %v7087 = vpack.c.b16 %v7048, %v7047
      %v7088 = vpack.c.b16 %v7050, %v7049
      %v7089 = vpack.c.b16 %v7052, %v7051
      %v7090 = vpack.c.b16 %v7054, %v7053
      %v7091 = vpack.c.b16 %v7056, %v7055
      %v7092 = vpack.c.b16 %v7058, %v7057
      %v7093 = vpack.c.b16 %v7060, %v7059
      %v7094 = vpack.c.b16 %v7062, %v7061
      %v7095 = vpack.c.b16 %v7064, %v7063
      %v7096 = vpack.c.b16 %v7066, %v7065
      %v7097 = vpack.c.b16 %v7068, %v7067
      %v7098 = vpack.c.b16 %v7070, %v7069
      %v7099 = vpack.c.b16 %v7072, %v7071
      %v7100 = vpack.c.b16 %v7074, %v7073
      %v7101 = vpack.c.b16 %v7076, %v7075
      %v7102 = vpack.c.b16 %v7078, %v7077
      %v7103 = vpack.c.b16 %v7080, %v7079
      %v7104 = vpack.c.b16 %v7082, %v7081
      %v7105 = vpack.c.b16 %v7084, %v7083
      %v7106 = vpack.c.b16 %v7086, %v7085
      %v7128 = vsel %vm2287, %v6944, 0
      %v7131 = vsel %vm2287, %v6947, 0
      %v7134 = vsel %vm2287, %v6950, 0
      %v7137 = vsel %vm2287, %v6953, 0
      %v7140 = vsel %vm2287, %v6956, 0
      %v7143 = vsel %vm2287, %v6959, 0
      %v7146 = vsel %vm2287, %v6962, 0
      %v7149 = vsel %vm2287, %v6965, 0
      %7151 = vmatprep.subr.bf16.mxu0 0
      %7152 = vmatpush1.bf16.msra.mxu0 %v7087
      %7153 = vmatprep.subr.bf16.mxu0 0
      %7154 = vmatpush1.bf16.msra.mxu0 %v7088
      %7155 = vmatprep.subr.bf16.mxu0 0
      %7156 = vmatpush1.bf16.msra.mxu0 %v7089
      %7157 = vmatprep.subr.bf16.mxu0 0
      %7158 = vmatpush1.bf16.msra.mxu0 %v7090
      %7159 = vmatprep.subr.bf16.mxu0 0
      %7160 = vmatpush1.bf16.msra.mxu0 %v7091
      %7161 = vmatprep.subr.bf16.mxu0 0
      %7162 = vmatpush1.bf16.msra.mxu0 %v7092
      %7163 = vmatprep.subr.bf16.mxu0 0
      %7164 = vmatpush1.bf16.msra.mxu0 %v7093
      %7165 = vmatprep.subr.bf16.mxu0 0
      %7166 = vmatpush1.bf16.msra.mxu0 %v7094
      %7167 = vmatprep.subr.bf16.mxu0 0
      %7168 = vmatpush1.bf16.msra.mxu0 %v7095
      %7169 = vmatprep.subr.bf16.mxu0 0
      %7170 = vmatpush1.bf16.msra.mxu0 %v7096
      %7171 = vmatprep.subr.bf16.mxu0 0
      %7172 = vmatpush1.bf16.msra.mxu0 %v7097
      %7173 = vmatprep.subr.bf16.mxu0 0
      %7174 = vmatpush1.bf16.msra.mxu0 %v7098
      %7175 = vmatprep.subr.bf16.mxu0 0
      %7176 = vmatpush1.bf16.msra.mxu0 %v7099
      %7177 = vmatprep.subr.bf16.mxu0 0
      %7178 = vmatpush1.bf16.msra.mxu0 %v7100
      %7179 = vmatprep.subr.bf16.mxu0 0
      %7180 = vmatpush1.bf16.msra.mxu0 %v7101
      %7181 = vmatprep.subr.bf16.mxu0 0
      %7182 = vmatpush1.bf16.msra.mxu0 %v7102
      %7183 = vmatprep.mubr.bf16.mxu0 %v6943
      %7184 = vmatmul.mubr.bf16.gmra.mrb[0].mxu0 %v6942
      %v7185 = vpop.f32.mrb[0].mxu0
      %v7186 = vadd.f32 0.0, %v7185
      %v7187 = vpop.f32.mrb[0].mxu0
      %v7188 = vpop.f32.mrb[0].mxu0
      %v7189 = vpop.f32.mrb[0].mxu0
      %7190 = vmatprep.mubr.bf16.mxu0 %v6946
      %7191 = vmatmul.mubr.bf16.gmra.mrb[0].mxu0 %v6945
      %v7192 = vpop.f32.mrb[0].mxu0
      %v7193 = vadd.f32 0.0, %v7192
      %v7194 = vpop.f32.mrb[0].mxu0
      %v7195 = vpop.f32.mrb[0].mxu0
      %v7196 = vpop.f32.mrb[0].mxu0
      %7197 = vmatprep.mubr.bf16.mxu0 %v6949
      %7198 = vmatmul.mubr.bf16.gmra.mrb[0].mxu0 %v6948
      %v7199 = vpop.f32.mrb[0].mxu0
      %v7200 = vadd.f32 0.0, %v7199
      %v7201 = vpop.f32.mrb[0].mxu0
      %v7202 = vpop.f32.mrb[0].mxu0
      %v7203 = vpop.f32.mrb[0].mxu0
      %7204 = vmatprep.mubr.bf16.mxu0 %v6952
      %7205 = vmatmul.mubr.bf16.gmra.mrb[0].mxu0 %v6951
      %v7206 = vpop.f32.mrb[0].mxu0
      %v7207 = vadd.f32 0.0, %v7206
      %v7208 = vpop.f32.mrb[0].mxu0
      %v7209 = vpop.f32.mrb[0].mxu0
      %v7210 = vpop.f32.mrb[0].mxu0
      %7211 = vmatprep.mubr.bf16.mxu0 %v6955
      %7212 = vmatmul.mubr.bf16.gmra.mrb[0].mxu0 %v6954
      %v7213 = vpop.f32.mrb[0].mxu0
      %v7214 = vadd.f32 0.0, %v7213
      %v7215 = vpop.f32.mrb[0].mxu0
      %v7216 = vpop.f32.mrb[0].mxu0
      %v7217 = vpop.f32.mrb[0].mxu0
      %7218 = vmatprep.mubr.bf16.mxu0 %v6958
      %7219 = vmatmul.mubr.bf16.gmra.mrb[0].mxu0 %v6957
      %v7220 = vpop.f32.mrb[0].mxu0
      %v7221 = vadd.f32 0.0, %v7220
      %v7222 = vpop.f32.mrb[0].mxu0
      %v7223 = vpop.f32.mrb[0].mxu0
      %v7224 = vpop.f32.mrb[0].mxu0
      %7225 = vmatprep.mubr.bf16.mxu0 %v6961
      %7226 = vmatmul.mubr.bf16.gmra.mrb[0].mxu0 %v6960
      %v7227 = vpop.f32.mrb[0].mxu0
      %v7228 = vadd.f32 0.0, %v7227
      %v7229 = vpop.f32.mrb[0].mxu0
      %v7230 = vpop.f32.mrb[0].mxu0
      %v7231 = vpop.f32.mrb[0].mxu0
      %7232 = vmatprep.mubr.bf16.mxu0 %v6964
      %7233 = vmatmul.mubr.bf16.gmra.mrb[0].mxu0 %v6963
      %v7234 = vpop.f32.mrb[0].mxu0
      %v7235 = vadd.f32 0.0, %v7234
      %v7236 = vpop.f32.mrb[0].mxu0
      %v7237 = vpop.f32.mrb[0].mxu0
      %v7238 = vpop.f32.mrb[0].mxu0
      %7239 = vdwg.mxu0
      %7240 = vmatprep.subr.bf16.mxu0 0
      %7241 = vmatpush1.bf16.msra.mxu0 %v7103
      %7242 = vmatprep.subr.bf16.mxu0 0
      %7243 = vmatpush1.bf16.msra.mxu0 %v7104
      %7244 = vmatprep.subr.bf16.mxu0 0
      %7245 = vmatpush1.bf16.msra.mxu0 %v7105
      %7246 = vmatprep.subr.bf16.mxu0 0
      %7247 = vmatpush1.bf16.msra.mxu0 %v7106
      %7248 = vmatprep.subr.bf16.mxu0 0
      %7249 = vmatpush1.bf16.msra.mxu0 0
      %7250 = vmatprep.subr.bf16.mxu0 0
      %7251 = vmatpush1.bf16.msra.mxu0 0
      %7252 = vmatprep.subr.bf16.mxu0 0
      %7253 = vmatpush1.bf16.msra.mxu0 0
      %7254 = vmatprep.subr.bf16.mxu0 0
      %7255 = vmatpush1.bf16.msra.mxu0 0
      %7256 = vmatprep.subr.bf16.mxu0 0
      %7257 = vmatpush1.bf16.msra.mxu0 0
      %7258 = vmatprep.subr.bf16.mxu0 0
      %7259 = vmatpush1.bf16.msra.mxu0 0
      %7260 = vmatprep.subr.bf16.mxu0 0
      %7261 = vmatpush1.bf16.msra.mxu0 0
      %7262 = vmatprep.subr.bf16.mxu0 0
      %7263 = vmatpush1.bf16.msra.mxu0 0
      %7264 = vmatprep.subr.bf16.mxu0 0
      %7265 = vmatpush1.bf16.msra.mxu0 0
      %7266 = vmatprep.subr.bf16.mxu0 0
      %7267 = vmatpush1.bf16.msra.mxu0 0
      %7268 = vmatprep.subr.bf16.mxu0 0
      %7269 = vmatpush1.bf16.msra.mxu0 0
      %7270 = vmatprep.subr.bf16.mxu0 0
      %7271 = vmatpush1.bf16.msra.mxu0 0
      %7272 = vmatprep.mubr.bf16.mxu0 0
      %7273 = vmatmul.mubr.bf16.gmra.mrb[0].mxu0 %v7128
      %v7274 = vpop.f32.mrb[0].mxu0
      %v7275 = vadd.f32 %v7186, %v7274
      %v7276 = vpop.f32.mrb[0].mxu0
      %v7277 = vpop.f32.mrb[0].mxu0
      %v7278 = vpop.f32.mrb[0].mxu0
      %7279 = vmatprep.mubr.bf16.mxu0 0
      %7280 = vmatmul.mubr.bf16.gmra.mrb[0].mxu0 %v7131
      %v7281 = vpop.f32.mrb[0].mxu0
      %v7282 = vadd.f32 %v7193, %v7281
      %v7283 = vpop.f32.mrb[0].mxu0
      %v7284 = vpop.f32.mrb[0].mxu0
      %v7285 = vpop.f32.mrb[0].mxu0
      %7286 = vmatprep.mubr.bf16.mxu0 0
      %7287 = vmatmul.mubr.bf16.gmra.mrb[0].mxu0 %v7134
      %v7288 = vpop.f32.mrb[0].mxu0
      %v7289 = vadd.f32 %v7200, %v7288
      %v7290 = vpop.f32.mrb[0].mxu0
      %v7291 = vpop.f32.mrb[0].mxu0
      %v7292 = vpop.f32.mrb[0].mxu0
      %7293 = vmatprep.mubr.bf16.mxu0 0
      %7294 = vmatmul.mubr.bf16.gmra.mrb[0].mxu0 %v7137
      %v7295 = vpop.f32.mrb[0].mxu0
      %v7296 = vadd.f32 %v7207, %v7295
      %v7297 = vpop.f32.mrb[0].mxu0
      %v7298 = vpop.f32.mrb[0].mxu0
      %v7299 = vpop.f32.mrb[0].mxu0
      %7300 = vmatprep.mubr.bf16.mxu0 0
      %7301 = vmatmul.mubr.bf16.gmra.mrb[0].mxu0 %v7140
      %v7302 = vpop.f32.mrb[0].mxu0
      %v7303 = vadd.f32 %v7214, %v7302
      %v7304 = vpop.f32.mrb[0].mxu0
      %v7305 = vpop.f32.mrb[0].mxu0
      %v7306 = vpop.f32.mrb[0].mxu0
      %7307 = vmatprep.mubr.bf16.mxu0 0
      %7308 = vmatmul.mubr.bf16.gmra.mrb[0].mxu0 %v7143
      %v7309 = vpop.f32.mrb[0].mxu0
      %v7310 = vadd.f32 %v7221, %v7309
      %v7311 = vpop.f32.mrb[0].mxu0
      %v7312 = vpop.f32.mrb[0].mxu0
      %v7313 = vpop.f32.mrb[0].mxu0
      %7314 = vmatprep.mubr.bf16.mxu0 0
      %7315 = vmatmul.mubr.bf16.gmra.mrb[0].mxu0 %v7146
      %v7316 = vpop.f32.mrb[0].mxu0
      %v7317 = vadd.f32 %v7228, %v7316
      %v7318 = vpop.f32.mrb[0].mxu0
      %v7319 = vpop.f32.mrb[0].mxu0
      %v7320 = vpop.f32.mrb[0].mxu0
      %7321 = vmatprep.mubr.bf16.mxu0 0
      %7322 = vmatmul.mubr.bf16.gmra.mrb[0].mxu0 %v7149
      %v7323 = vpop.f32.mrb[0].mxu0
      %v7324 = vadd.f32 %v7235, %v7323
      %v7325 = vpop.f32.mrb[0].mxu0
      %v7326 = vpop.f32.mrb[0].mxu0
      %v7327 = vpop.f32.mrb[0].mxu0
      %7328 = vdwg.mxu0
      %v7329 = vadd.f32 %v6933, %v7275
      %v7330 = vadd.f32 %v6934, %v7282
      %v7331 = vadd.f32 %v6935, %v7289
      %v7332 = vadd.f32 %v6936, %v7296
      %v7333 = vadd.f32 %v6937, %v7303
      %v7334 = vadd.f32 %v6938, %v7310
      %v7335 = vadd.f32 %v6939, %v7317
      %v7336 = vadd.f32 %v6940, %v7324
      %s7337 = scalar_lea.vmem [#allocation5], 96
      %v7338 = vld [vmem:[%s7337] sm:$0xff]
      %v7339 = vld [vmem:[%s7337 + $0x8] sm:$0xff]
      %v7340 = vld [vmem:[%s7337 + $0x10] sm:$0xff]
      %v7341 = vld [vmem:[%s7337 + $0x18] sm:$0xff]
      %v7342 = vld [vmem:[%s7337 + $0x20] sm:$0xff]
      %v7343 = vld [vmem:[%s7337 + $0x28] sm:$0xff]
      %v7344 = vld [vmem:[%s7337 + $0x30] sm:$0xff]
      %v7345 = vld [vmem:[%s7337 + $0x38] sm:$0xff]
      %v7346 = vld [vmem:[%s7337 + $0x40] sm:$0xff]
      %v7347 = vld [vmem:[%s7337 + $0x48] sm:$0xff]
      %v7348 = vld [vmem:[%s7337 + $0x50] sm:$0xff]
      %v7349 = vld [vmem:[%s7337 + $0x58] sm:$0xff]
      %v7350 = vld [vmem:[%s7337 + $0x60] sm:$0xff]
      %v7351 = vld [vmem:[%s7337 + $0x68] sm:$0xff]
      %v7352 = vld [vmem:[%s7337 + $0x70] sm:$0xff]
      %v7353 = vld [vmem:[%s7337 + $0x78] sm:$0xff]
      %v7354 = vld [vmem:[%s7337 + $0x80] sm:$0xff]
      %v7355 = vld [vmem:[%s7337 + $0x88] sm:$0xff]
      %v7356 = vld [vmem:[%s7337 + $0x90] sm:$0xff]
      %v7357 = vld [vmem:[%s7337 + $0x98] sm:$0xff]
      %v7358 = vld [vmem:[%s7337 + $0xa0] sm:$0xff]
      %v7359 = vld [vmem:[%s7337 + $0xa8] sm:$0xff]
      %v7360 = vld [vmem:[%s7337 + $0xb0] sm:$0xff]
      %v7361 = vld [vmem:[%s7337 + $0xb8] sm:$0xff]
      %s7362 = scalar_lea.vmem %s3, 640
      %v7363 = vld [vmem:[%s7362] sm:$0xf]
      %v7364 = vld [vmem:[%s7362 + $0x4] sm:$0xf]
      %v7365 = vld [vmem:[%s7362 + $0x8] sm:$0xf]
      %v7366 = vld [vmem:[%s7362 + $0xc] sm:$0xf]
      %v7367 = vld [vmem:[%s7362 + $0x10] sm:$0xf]
      %v7368 = vld [vmem:[%s7362 + $0x14] sm:$0xf]
      %v7369 = vld [vmem:[%s7362 + $0x18] sm:$0xf]
      %v7370 = vld [vmem:[%s7362 + $0x1c] sm:$0xf]
      %v7371 = vld [vmem:[%s7362 + $0x20] sm:$0xf]
      %v7372 = vld [vmem:[%s7362 + $0x24] sm:$0xf]
      %v7373 = vld [vmem:[%s7362 + $0x28] sm:$0xf]
      %v7374 = vld [vmem:[%s7362 + $0x2c] sm:$0xf]
      %v7375 = vld [vmem:[%s7362 + $0x30] sm:$0xf]
      %v7376 = vld [vmem:[%s7362 + $0x34] sm:$0xf]
      %v7377 = vld [vmem:[%s7362 + $0x38] sm:$0xf]
      %v7378 = vld [vmem:[%s7362 + $0x3c] sm:$0xf]
      %v7379 = vld [vmem:[%s7362 + $0x40] sm:$0xf]
      %v7380 = vld [vmem:[%s7362 + $0x44] sm:$0xf]
      %v7381 = vld [vmem:[%s7362 + $0x48] sm:$0xf]
      %v7382 = vld [vmem:[%s7362 + $0x4c] sm:$0xf]
      %v7383 = vld [vmem:[%s7362 + $0x50] sm:$0xf]
      %v7384 = vld [vmem:[%s7362 + $0x54] sm:$0xf]
      %v7385 = vld [vmem:[%s7362 + $0x58] sm:$0xf]
      %v7386 = vld [vmem:[%s7362 + $0x5c] sm:$0xf]
      %v7387 = vld [vmem:[%s7362 + $0x60] sm:$0xf]
      %v7388 = vld [vmem:[%s7362 + $0x64] sm:$0xf]
      %v7389 = vld [vmem:[%s7362 + $0x68] sm:$0xf]
      %v7390 = vld [vmem:[%s7362 + $0x6c] sm:$0xf]
      %v7391 = vld [vmem:[%s7362 + $0x70] sm:$0xf]
      %v7392 = vld [vmem:[%s7362 + $0x74] sm:$0xf]
      %v7393 = vld [vmem:[%s7362 + $0x78] sm:$0xf]
      %v7394 = vld [vmem:[%s7362 + $0x7c] sm:$0xf]
      %v7395 = vld [vmem:[%s7362 + $0x80] sm:$0xf]
      %v7396 = vld [vmem:[%s7362 + $0x84] sm:$0xf]
      %v7397 = vld [vmem:[%s7362 + $0x88] sm:$0xf]
      %v7398 = vld [vmem:[%s7362 + $0x8c] sm:$0xf]
      %v7399 = vld [vmem:[%s7362 + $0x90] sm:$0xf]
      %v7400 = vld [vmem:[%s7362 + $0x94] sm:$0xf]
      %v7401 = vld [vmem:[%s7362 + $0x98] sm:$0xf]
      %v7402 = vld [vmem:[%s7362 + $0x9c] sm:$0xf]
      %v7443 = vunpack.c.l.b16 %v7363
      %v7444 = vunpack.c.l.b16 %v7364
      %v7445 = vunpack.c.l.b16 %v7365
      %v7446 = vunpack.c.l.b16 %v7366
      %v7447 = vunpack.c.l.b16 %v7367
      %v7448 = vunpack.c.l.b16 %v7368
      %v7449 = vunpack.c.l.b16 %v7369
      %v7450 = vunpack.c.l.b16 %v7370
      %v7451 = vunpack.c.l.b16 %v7371
      %v7452 = vunpack.c.l.b16 %v7372
      %v7453 = vunpack.c.l.b16 %v7373
      %v7454 = vunpack.c.l.b16 %v7374
      %v7455 = vunpack.c.l.b16 %v7375
      %v7456 = vunpack.c.l.b16 %v7376
      %v7457 = vunpack.c.l.b16 %v7377
      %v7458 = vunpack.c.l.b16 %v7378
      %v7459 = vunpack.c.l.b16 %v7379
      %v7460 = vunpack.c.l.b16 %v7380
      %v7461 = vunpack.c.l.b16 %v7381
      %v7462 = vunpack.c.l.b16 %v7382
      %v7463 = vunpack.c.l.b16 %v7383
      %v7464 = vunpack.c.l.b16 %v7384
      %v7465 = vunpack.c.l.b16 %v7385
      %v7466 = vunpack.c.l.b16 %v7386
      %v7467 = vunpack.c.l.b16 %v7387
      %v7468 = vunpack.c.l.b16 %v7388
      %v7469 = vunpack.c.l.b16 %v7389
      %v7470 = vunpack.c.l.b16 %v7390
      %v7471 = vunpack.c.l.b16 %v7391
      %v7472 = vunpack.c.l.b16 %v7392
      %v7473 = vunpack.c.l.b16 %v7393
      %v7474 = vunpack.c.l.b16 %v7394
      %v7475 = vunpack.c.l.b16 %v7395
      %v7476 = vunpack.c.l.b16 %v7396
      %v7477 = vunpack.c.l.b16 %v7397
      %v7478 = vunpack.c.l.b16 %v7398
      %v7479 = vunpack.c.l.b16 %v7399
      %v7480 = vunpack.c.l.b16 %v7400
      %v7481 = vunpack.c.l.b16 %v7401
      %v7482 = vunpack.c.l.b16 %v7402
      %v7483 = vpack.c.b16 %v7444, %v7443
      %v7484 = vpack.c.b16 %v7446, %v7445
      %v7485 = vpack.c.b16 %v7448, %v7447
      %v7486 = vpack.c.b16 %v7450, %v7449
      %v7487 = vpack.c.b16 %v7452, %v7451
      %v7488 = vpack.c.b16 %v7454, %v7453
      %v7489 = vpack.c.b16 %v7456, %v7455
      %v7490 = vpack.c.b16 %v7458, %v7457
      %v7491 = vpack.c.b16 %v7460, %v7459
      %v7492 = vpack.c.b16 %v7462, %v7461
      %v7493 = vpack.c.b16 %v7464, %v7463
      %v7494 = vpack.c.b16 %v7466, %v7465
      %v7495 = vpack.c.b16 %v7468, %v7467
      %v7496 = vpack.c.b16 %v7470, %v7469
      %v7497 = vpack.c.b16 %v7472, %v7471
      %v7498 = vpack.c.b16 %v7474, %v7473
      %v7499 = vpack.c.b16 %v7476, %v7475
      %v7500 = vpack.c.b16 %v7478, %v7477
      %v7501 = vpack.c.b16 %v7480, %v7479
      %v7502 = vpack.c.b16 %v7482, %v7481
      %v7524 = vsel %vm2287, %v7340, 0
      %v7527 = vsel %vm2287, %v7343, 0
      %v7530 = vsel %vm2287, %v7346, 0
      %v7533 = vsel %vm2287, %v7349, 0
      %v7536 = vsel %vm2287, %v7352, 0
      %v7539 = vsel %vm2287, %v7355, 0
      %v7542 = vsel %vm2287, %v7358, 0
      %v7545 = vsel %vm2287, %v7361, 0
      %7547 = vmatprep.subr.bf16.mxu0 0
      %7548 = vmatpush1.bf16.msra.mxu0 %v7483
      %7549 = vmatprep.subr.bf16.mxu0 0
      %7550 = vmatpush1.bf16.msra.mxu0 %v7484
      %7551 = vmatprep.subr.bf16.mxu0 0
      %7552 = vmatpush1.bf16.msra.mxu0 %v7485
      %7553 = vmatprep.subr.bf16.mxu0 0
      %7554 = vmatpush1.bf16.msra.mxu0 %v7486
      %7555 = vmatprep.subr.bf16.mxu0 0
      %7556 = vmatpush1.bf16.msra.mxu0 %v7487
      %7557 = vmatprep.subr.bf16.mxu0 0
      %7558 = vmatpush1.bf16.msra.mxu0 %v7488
      %7559 = vmatprep.subr.bf16.mxu0 0
      %7560 = vmatpush1.bf16.msra.mxu0 %v7489
      %7561 = vmatprep.subr.bf16.mxu0 0
      %7562 = vmatpush1.bf16.msra.mxu0 %v7490
      %7563 = vmatprep.subr.bf16.mxu0 0
      %7564 = vmatpush1.bf16.msra.mxu0 %v7491
      %7565 = vmatprep.subr.bf16.mxu0 0
      %7566 = vmatpush1.bf16.msra.mxu0 %v7492
      %7567 = vmatprep.subr.bf16.mxu0 0
      %7568 = vmatpush1.bf16.msra.mxu0 %v7493
      %7569 = vmatprep.subr.bf16.mxu0 0
      %7570 = vmatpush1.bf16.msra.mxu0 %v7494
      %7571 = vmatprep.subr.bf16.mxu0 0
      %7572 = vmatpush1.bf16.msra.mxu0 %v7495
      %7573 = vmatprep.subr.bf16.mxu0 0
      %7574 = vmatpush1.bf16.msra.mxu0 %v7496
      %7575 = vmatprep.subr.bf16.mxu0 0
      %7576 = vmatpush1.bf16.msra.mxu0 %v7497
      %7577 = vmatprep.subr.bf16.mxu0 0
      %7578 = vmatpush1.bf16.msra.mxu0 %v7498
      %7579 = vmatprep.mubr.bf16.mxu0 %v7339
      %7580 = vmatmul.mubr.bf16.gmra.mrb[0].mxu0 %v7338
      %v7581 = vpop.f32.mrb[0].mxu0
      %v7582 = vadd.f32 0.0, %v7581
      %v7583 = vpop.f32.mrb[0].mxu0
      %v7584 = vpop.f32.mrb[0].mxu0
      %v7585 = vpop.f32.mrb[0].mxu0
      %7586 = vmatprep.mubr.bf16.mxu0 %v7342
      %7587 = vmatmul.mubr.bf16.gmra.mrb[0].mxu0 %v7341
      %v7588 = vpop.f32.mrb[0].mxu0
      %v7589 = vadd.f32 0.0, %v7588
      %v7590 = vpop.f32.mrb[0].mxu0
      %v7591 = vpop.f32.mrb[0].mxu0
      %v7592 = vpop.f32.mrb[0].mxu0
      %7593 = vmatprep.mubr.bf16.mxu0 %v7345
      %7594 = vmatmul.mubr.bf16.gmra.mrb[0].mxu0 %v7344
      %v7595 = vpop.f32.mrb[0].mxu0
      %v7596 = vadd.f32 0.0, %v7595
      %v7597 = vpop.f32.mrb[0].mxu0
      %v7598 = vpop.f32.mrb[0].mxu0
      %v7599 = vpop.f32.mrb[0].mxu0
      %7600 = vmatprep.mubr.bf16.mxu0 %v7348
      %7601 = vmatmul.mubr.bf16.gmra.mrb[0].mxu0 %v7347
      %v7602 = vpop.f32.mrb[0].mxu0
      %v7603 = vadd.f32 0.0, %v7602
      %v7604 = vpop.f32.mrb[0].mxu0
      %v7605 = vpop.f32.mrb[0].mxu0
      %v7606 = vpop.f32.mrb[0].mxu0
      %7607 = vmatprep.mubr.bf16.mxu0 %v7351
      %7608 = vmatmul.mubr.bf16.gmra.mrb[0].mxu0 %v7350
      %v7609 = vpop.f32.mrb[0].mxu0
      %v7610 = vadd.f32 0.0, %v7609
      %v7611 = vpop.f32.mrb[0].mxu0
      %v7612 = vpop.f32.mrb[0].mxu0
      %v7613 = vpop.f32.mrb[0].mxu0
      %7614 = vmatprep.mubr.bf16.mxu0 %v7354
      %7615 = vmatmul.mubr.bf16.gmra.mrb[0].mxu0 %v7353
      %v7616 = vpop.f32.mrb[0].mxu0
      %v7617 = vadd.f32 0.0, %v7616
      %v7618 = vpop.f32.mrb[0].mxu0
      %v7619 = vpop.f32.mrb[0].mxu0
      %v7620 = vpop.f32.mrb[0].mxu0
      %7621 = vmatprep.mubr.bf16.mxu0 %v7357
      %7622 = vmatmul.mubr.bf16.gmra.mrb[0].mxu0 %v7356
      %v7623 = vpop.f32.mrb[0].mxu0
      %v7624 = vadd.f32 0.0, %v7623
      %v7625 = vpop.f32.mrb[0].mxu0
      %v7626 = vpop.f32.mrb[0].mxu0
      %v7627 = vpop.f32.mrb[0].mxu0
      %7628 = vmatprep.mubr.bf16.mxu0 %v7360
      %7629 = vmatmul.mubr.bf16.gmra.mrb[0].mxu0 %v7359
      %v7630 = vpop.f32.mrb[0].mxu0
      %v7631 = vadd.f32 0.0, %v7630
      %v7632 = vpop.f32.mrb[0].mxu0
      %v7633 = vpop.f32.mrb[0].mxu0
      %v7634 = vpop.f32.mrb[0].mxu0
      %7635 = vdwg.mxu0
      %7636 = vmatprep.subr.bf16.mxu0 0
      %7637 = vmatpush1.bf16.msra.mxu0 %v7499
      %7638 = vmatprep.subr.bf16.mxu0 0
      %7639 = vmatpush1.bf16.msra.mxu0 %v7500
      %7640 = vmatprep.subr.bf16.mxu0 0
      %7641 = vmatpush1.bf16.msra.mxu0 %v7501
      %7642 = vmatprep.subr.bf16.mxu0 0
      %7643 = vmatpush1.bf16.msra.mxu0 %v7502
      %7644 = vmatprep.subr.bf16.mxu0 0
      %7645 = vmatpush1.bf16.msra.mxu0 0
      %7646 = vmatprep.subr.bf16.mxu0 0
      %7647 = vmatpush1.bf16.msra.mxu0 0
      %7648 = vmatprep.subr.bf16.mxu0 0
      %7649 = vmatpush1.bf16.msra.mxu0 0
      %7650 = vmatprep.subr.bf16.mxu0 0
      %7651 = vmatpush1.bf16.msra.mxu0 0
      %7652 = vmatprep.subr.bf16.mxu0 0
      %7653 = vmatpush1.bf16.msra.mxu0 0
      %7654 = vmatprep.subr.bf16.mxu0 0
      %7655 = vmatpush1.bf16.msra.mxu0 0
      %7656 = vmatprep.subr.bf16.mxu0 0
      %7657 = vmatpush1.bf16.msra.mxu0 0
      %7658 = vmatprep.subr.bf16.mxu0 0
      %7659 = vmatpush1.bf16.msra.mxu0 0
      %7660 = vmatprep.subr.bf16.mxu0 0
      %7661 = vmatpush1.bf16.msra.mxu0 0
      %7662 = vmatprep.subr.bf16.mxu0 0
      %7663 = vmatpush1.bf16.msra.mxu0 0
      %7664 = vmatprep.subr.bf16.mxu0 0
      %7665 = vmatpush1.bf16.msra.mxu0 0
      %7666 = vmatprep.subr.bf16.mxu0 0
      %7667 = vmatpush1.bf16.msra.mxu0 0
      %7668 = vmatprep.mubr.bf16.mxu0 0
      %7669 = vmatmul.mubr.bf16.gmra.mrb[0].mxu0 %v7524
      %v7670 = vpop.f32.mrb[0].mxu0
      %v7671 = vadd.f32 %v7582, %v7670
      %v7672 = vpop.f32.mrb[0].mxu0
      %v7673 = vpop.f32.mrb[0].mxu0
      %v7674 = vpop.f32.mrb[0].mxu0
      %7675 = vmatprep.mubr.bf16.mxu0 0
      %7676 = vmatmul.mubr.bf16.gmra.mrb[0].mxu0 %v7527
      %v7677 = vpop.f32.mrb[0].mxu0
      %v7678 = vadd.f32 %v7589, %v7677
      %v7679 = vpop.f32.mrb[0].mxu0
      %v7680 = vpop.f32.mrb[0].mxu0
      %v7681 = vpop.f32.mrb[0].mxu0
      %7682 = vmatprep.mubr.bf16.mxu0 0
      %7683 = vmatmul.mubr.bf16.gmra.mrb[0].mxu0 %v7530
      %v7684 = vpop.f32.mrb[0].mxu0
      %v7685 = vadd.f32 %v7596, %v7684
      %v7686 = vpop.f32.mrb[0].mxu0
      %v7687 = vpop.f32.mrb[0].mxu0
      %v7688 = vpop.f32.mrb[0].mxu0
      %7689 = vmatprep.mubr.bf16.mxu0 0
      %7690 = vmatmul.mubr.bf16.gmra.mrb[0].mxu0 %v7533
      %v7691 = vpop.f32.mrb[0].mxu0
      %v7692 = vadd.f32 %v7603, %v7691
      %v7693 = vpop.f32.mrb[0].mxu0
      %v7694 = vpop.f32.mrb[0].mxu0
      %v7695 = vpop.f32.mrb[0].mxu0
      %7696 = vmatprep.mubr.bf16.mxu0 0
      %7697 = vmatmul.mubr.bf16.gmra.mrb[0].mxu0 %v7536
      %v7698 = vpop.f32.mrb[0].mxu0
      %v7699 = vadd.f32 %v7610, %v7698
      %v7700 = vpop.f32.mrb[0].mxu0
      %v7701 = vpop.f32.mrb[0].mxu0
      %v7702 = vpop.f32.mrb[0].mxu0
      %7703 = vmatprep.mubr.bf16.mxu0 0
      %7704 = vmatmul.mubr.bf16.gmra.mrb[0].mxu0 %v7539
      %v7705 = vpop.f32.mrb[0].mxu0
      %v7706 = vadd.f32 %v7617, %v7705
      %v7707 = vpop.f32.mrb[0].mxu0
      %v7708 = vpop.f32.mrb[0].mxu0
      %v7709 = vpop.f32.mrb[0].mxu0
      %7710 = vmatprep.mubr.bf16.mxu0 0
      %7711 = vmatmul.mubr.bf16.gmra.mrb[0].mxu0 %v7542
      %v7712 = vpop.f32.mrb[0].mxu0
      %v7713 = vadd.f32 %v7624, %v7712
      %v7714 = vpop.f32.mrb[0].mxu0
      %v7715 = vpop.f32.mrb[0].mxu0
      %v7716 = vpop.f32.mrb[0].mxu0
      %7717 = vmatprep.mubr.bf16.mxu0 0
      %7718 = vmatmul.mubr.bf16.gmra.mrb[0].mxu0 %v7545
      %v7719 = vpop.f32.mrb[0].mxu0
      %v7720 = vadd.f32 %v7631, %v7719
      %v7721 = vpop.f32.mrb[0].mxu0
      %v7722 = vpop.f32.mrb[0].mxu0
      %v7723 = vpop.f32.mrb[0].mxu0
      %7724 = vdwg.mxu0
      %v7725 = vadd.f32 %v7329, %v7671
      %v7726 = vadd.f32 %v7330, %v7678
      %v7727 = vadd.f32 %v7331, %v7685
      %v7728 = vadd.f32 %v7332, %v7692
      %v7729 = vadd.f32 %v7333, %v7699
      %v7730 = vadd.f32 %v7334, %v7706
      %v7731 = vadd.f32 %v7335, %v7713
      %v7732 = vadd.f32 %v7336, %v7720
      %v7740 = vrot.slane %v7725, 1
      %v7741 = vrot.slane %v7726, 1
      %v7742 = vrot.slane %v7727, 1
      %v7743 = vrot.slane %v7728, 1
      %v7744 = vrot.slane %v7729, 1
      %v7745 = vrot.slane %v7730, 1
      %v7746 = vrot.slane %v7731, 1
      %v7754 = vmax.f32 %v7725, %v7740
      %v7755 = vmax.f32 %v7726, %v7741
      %v7756 = vmax.f32 %v7727, %v7742
      %v7757 = vmax.f32 %v7728, %v7743
      %v7758 = vmax.f32 %v7729, %v7744
      %v7759 = vmax.f32 %v7730, %v7745
      %v7760 = vmax.f32 %v7731, %v7746
      %v7762 = vrot.slane %v7732, 1
      %v7764 = vmax.f32 %v7732, %v7762
      %v7765 = vmax.f32 %v7754, %v7755
      %v7766 = vmax.f32 %v7755, %v7756
      %v7767 = vmax.f32 %v7756, %v7757
      %v7768 = vmax.f32 %v7757, %v7758
      %v7769 = vmax.f32 %v7758, %v7759
      %v7770 = vmax.f32 %v7759, %v7760
      %v7771 = vmax.f32 %v7760, %v7764
      %vm7772 = vcmp.ge.f32.partialorder %v7765, 0.0
      %vm7773 = vcmp.ge.f32.partialorder %v7766, 0.0
      %vm7774 = vcmp.ge.f32.partialorder %v7767, 0.0
      %vm7775 = vcmp.ge.f32.partialorder %v7768, 0.0
      %vm7776 = vcmp.ge.f32.partialorder %v7769, 0.0
      %vm7777 = vcmp.ge.f32.partialorder %v7770, 0.0
      %vm7778 = vcmp.ge.f32.partialorder %v7771, 0.0
      %v7779 = vmul.f32 %v7765, 0.01
      %v7780 = vmul.f32 %v7766, 0.01
      %v7781 = vmul.f32 %v7767, 0.01
      %v7782 = vmul.f32 %v7768, 0.01
      %v7783 = vmul.f32 %v7769, 0.01
      %v7784 = vmul.f32 %v7770, 0.01
      %v7785 = vmul.f32 %v7771, 0.01
      %v7786 = vsel %vm7772, %v7765, %v7779
      %v7787 = vsel %vm7773, %v7766, %v7780
      %v7788 = vsel %vm7774, %v7767, %v7781
      %v7789 = vsel %vm7775, %v7768, %v7782
      %v7790 = vsel %vm7776, %v7769, %v7783
      %v7791 = vsel %vm7777, %v7770, %v7784
      %v7792 = vsel %vm7778, %v7771, %v7785
      %vm7793 = vcmask 522240
      %v7794 = vsel %vm7793, %v7786, 0.0
      %v7795 = vsel %vm7793, %v7787, 0.0
      %v7796 = vadd.f32 %v7794, %v7795
      %v7797 = vsel %vm7793, %v7788, 0.0
      %v7798 = vadd.f32 %v7796, %v7797
      %v7799 = vsel %vm7793, %v7789, 0.0
      %v7800 = vadd.f32 %v7798, %v7799
      %v7801 = vsel %vm7793, %v7790, 0.0
      %v7802 = vadd.f32 %v7800, %v7801
      %v7803 = vsel %vm7793, %v7791, 0.0
      %v7804 = vadd.f32 %v7802, %v7803
      %v7805 = vsel %vm7793, %v7792, 0.0
      %v7806 = vadd.f32 %v7804, %v7805
      %v7807 = vsel %vm7793, %v7806, 0.0
      %v7808 = vrot.slane %v7807, 4
      %v7809 = vadd.f32 %v7807, %v7808
      %v7810 = vrot.slane %v7809, 2
      %v7811 = vadd.f32 %v7809, %v7810
      %v7812 = vrot.slane %v7811, 1
      %v7813 = vadd.f32 %v7811, %v7812
      %v7814 = vmul.f32 %v7813, 0.020408163
      %v7815 = vld [vmem:[%s4] sm:$0xff]
      %v7816 = vld [vmem:[%s4 + $0x8] sm:$0xff]
      %v7817 = vld [vmem:[%s4 + $0x10] sm:$0xff]
      %v7818 = vld [vmem:[%s4 + $0x18] sm:$0xff]
      %v7819 = vld [vmem:[%s4 + $0x20] sm:$0xff]
      %v7820 = vld [vmem:[%s4 + $0x28] sm:$0xff]
      %v7821 = vld [vmem:[%s4 + $0x30] sm:$0xff]
      %v7822 = vld [vmem:[%s4 + $0x38] sm:$0xff]
      %v7823 = vld [vmem:[%s5] sm:$0x1]
      %v7825 = vsel %vm2287, %v7814, 0
      %7827 = vmatprep.subr.mxu0 0.0
      %7828 = vmatpush1.msra.mxu0 %v7815
      %7829 = vmatprep.subr.mxu0 0.0
      %7830 = vmatpush1.msra.mxu0 %v7816
      %7831 = vmatprep.subr.mxu0 0.0
      %7832 = vmatpush1.msra.mxu0 %v7817
      %7833 = vmatprep.subr.mxu0 0.0
      %7834 = vmatpush1.msra.mxu0 %v7818
      %7835 = vmatprep.subr.mxu0 0.0
      %7836 = vmatpush1.msra.mxu0 %v7819
      %7837 = vmatprep.subr.mxu0 0.0
      %7838 = vmatpush1.msra.mxu0 %v7820
      %7839 = vmatprep.subr.mxu0 0.0
      %7840 = vmatpush1.msra.mxu0 %v7821
      %7841 = vmatprep.subr.mxu0 0.0
      %7842 = vmatpush1.msra.mxu0 %v7822
      %7843 = vmatprep.subr.mxu0 0.0
      %7844 = vmatpush1.msra.mxu0 0.0
      %7845 = vmatprep.subr.mxu0 0.0
      %7846 = vmatpush1.msra.mxu0 0.0
      %7847 = vmatprep.subr.mxu0 0.0
      %7848 = vmatpush1.msra.mxu0 0.0
      %7849 = vmatprep.subr.mxu0 0.0
      %7850 = vmatpush1.msra.mxu0 0.0
      %7851 = vmatprep.subr.mxu0 0.0
      %7852 = vmatpush1.msra.mxu0 0.0
      %7853 = vmatprep.subr.mxu0 0.0
      %7854 = vmatpush1.msra.mxu0 0.0
      %7855 = vmatprep.subr.mxu0 0.0
      %7856 = vmatpush1.msra.mxu0 0.0
      %7857 = vmatprep.subr.mxu0 0.0
      %7858 = vmatpush1.msra.mxu0 0.0
      %7859 = vmatprep.subr.mxu0 0.0
      %7860 = vmatpush1.msra.mxu0 0.0
      %7861 = vmatprep.subr.mxu0 0.0
      %7862 = vmatpush1.msra.mxu0 0.0
      %7863 = vmatprep.subr.mxu0 0.0
      %7864 = vmatpush1.msra.mxu0 0.0
      %7865 = vmatprep.subr.mxu0 0.0
      %7866 = vmatpush1.msra.mxu0 0.0
      %7867 = vmatprep.subr.mxu0 0.0
      %7868 = vmatpush1.msra.mxu0 0.0
      %7869 = vmatprep.subr.mxu0 0.0
      %7870 = vmatpush1.msra.mxu0 0.0
      %7871 = vmatprep.subr.mxu0 0.0
      %7872 = vmatpush1.msra.mxu0 0.0
      %7873 = vmatprep.subr.mxu0 0.0
      %7874 = vmatpush1.msra.mxu0 0.0
      %7875 = vmatprep.subr.mxu0 0.0
      %7876 = vmatpush1.msra.mxu0 0.0
      %7877 = vmatprep.subr.mxu0 0.0
      %7878 = vmatpush1.msra.mxu0 0.0
      %7879 = vmatprep.subr.mxu0 0.0
      %7880 = vmatpush1.msra.mxu0 0.0
      %7881 = vmatprep.subr.mxu0 0.0
      %7882 = vmatpush1.msra.mxu0 0.0
      %7883 = vmatprep.subr.mxu0 0.0
      %7884 = vmatpush1.msra.mxu0 0.0
      %7885 = vmatprep.subr.mxu0 0.0
      %7886 = vmatpush1.msra.mxu0 0.0
      %7887 = vmatprep.subr.mxu0 0.0
      %7888 = vmatpush1.msra.mxu0 0.0
      %7889 = vmatprep.subr.mxu0 0.0
      %7890 = vmatpush1.msra.mxu0 0.0
      %7891 = vmatprep.mubr.f32.mxu0 0.0
      %7892 = vmatmul.mubr.f32.gmra.mrb[0].mxu0 %v7825
      %v7893 = vpop.f32.mrb[0].mxu0
      %v7894 = vadd.f32 %v7823, %v7893
      %v7895 = vpop.f32.mrb[0].mxu0
      %7896 = vdwg.mxu0
      %v7897 = vtanh.pop %v7894
      %v7898 = vld [vmem:[%s6] sm:$0xff]
      %v7899 = vld [vmem:[%s6 + $0x8] sm:$0xff]
      %v7900 = vld [vmem:[%s6 + $0x10] sm:$0xff]
      %v7901 = vld [vmem:[%s6 + $0x18] sm:$0xff]
      %v7902 = vld [vmem:[%s6 + $0x20] sm:$0xff]
      %v7903 = vld [vmem:[%s6 + $0x28] sm:$0xff]
      %v7904 = vld [vmem:[%s6 + $0x30] sm:$0xff]
      %v7905 = vld [vmem:[%s6 + $0x38] sm:$0xff]
      %v7906 = vld [vmem:[%s6 + $0x40] sm:$0xff]
      %v7907 = vld [vmem:[%s6 + $0x48] sm:$0xff]
      %v7908 = vld [vmem:[%s6 + $0x50] sm:$0xff]
      %v7909 = vld [vmem:[%s6 + $0x58] sm:$0xff]
      %v7910 = vld [vmem:[%s6 + $0x60] sm:$0xff]
      %v7911 = vld [vmem:[%s6 + $0x68] sm:$0xff]
      %v7912 = vld [vmem:[%s6 + $0x70] sm:$0xff]
      %v7913 = vld [vmem:[%s6 + $0x78] sm:$0xff]
      %v7914 = vld [vmem:[%s7] sm:$0x1]
      %7915 = vmatprep.subr.mxu0 0.0
      %7916 = vmatpush1.msra.mxu0 %v7898
      %7917 = vmatprep.subr.mxu0 0.0
      %7918 = vmatpush1.msra.mxu0 %v7899
      %7919 = vmatprep.subr.mxu0 0.0
      %7920 = vmatpush1.msra.mxu0 %v7900
      %7921 = vmatprep.subr.mxu0 0.0
      %7922 = vmatpush1.msra.mxu0 %v7901
      %7923 = vmatprep.subr.mxu0 0.0
      %7924 = vmatpush1.msra.mxu0 %v7902
      %7925 = vmatprep.subr.mxu0 0.0
      %7926 = vmatpush1.msra.mxu0 %v7903
      %7927 = vmatprep.subr.mxu0 0.0
      %7928 = vmatpush1.msra.mxu0 %v7904
      %7929 = vmatprep.subr.mxu0 0.0
      %7930 = vmatpush1.msra.mxu0 %v7905
      %7931 = vmatprep.subr.mxu0 0.0
      %7932 = vmatpush1.msra.mxu0 %v7906
      %7933 = vmatprep.subr.mxu0 0.0
      %7934 = vmatpush1.msra.mxu0 %v7907
      %7935 = vmatprep.subr.mxu0 0.0
      %7936 = vmatpush1.msra.mxu0 %v7908
      %7937 = vmatprep.subr.mxu0 0.0
      %7938 = vmatpush1.msra.mxu0 %v7909
      %7939 = vmatprep.subr.mxu0 0.0
      %7940 = vmatpush1.msra.mxu0 %v7910
      %7941 = vmatprep.subr.mxu0 0.0
      %7942 = vmatpush1.msra.mxu0 %v7911
      %7943 = vmatprep.subr.mxu0 0.0
      %7944 = vmatpush1.msra.mxu0 %v7912
      %7945 = vmatprep.subr.mxu0 0.0
      %7946 = vmatpush1.msra.mxu0 %v7913
      %7947 = vmatprep.subr.mxu0 0.0
      %7948 = vmatpush1.msra.mxu0 0.0
      %7949 = vmatprep.subr.mxu0 0.0
      %7950 = vmatpush1.msra.mxu0 0.0
      %7951 = vmatprep.subr.mxu0 0.0
      %7952 = vmatpush1.msra.mxu0 0.0
      %7953 = vmatprep.subr.mxu0 0.0
      %7954 = vmatpush1.msra.mxu0 0.0
      %7955 = vmatprep.subr.mxu0 0.0
      %7956 = vmatpush1.msra.mxu0 0.0
      %7957 = vmatprep.subr.mxu0 0.0
      %7958 = vmatpush1.msra.mxu0 0.0
      %7959 = vmatprep.subr.mxu0 0.0
      %7960 = vmatpush1.msra.mxu0 0.0
      %7961 = vmatprep.subr.mxu0 0.0
      %7962 = vmatpush1.msra.mxu0 0.0
      %7963 = vmatprep.subr.mxu0 0.0
      %7964 = vmatpush1.msra.mxu0 0.0
      %7965 = vmatprep.subr.mxu0 0.0
      %7966 = vmatpush1.msra.mxu0 0.0
      %7967 = vmatprep.subr.mxu0 0.0
      %7968 = vmatpush1.msra.mxu0 0.0
      %7969 = vmatprep.subr.mxu0 0.0
      %7970 = vmatpush1.msra.mxu0 0.0
      %7971 = vmatprep.subr.mxu0 0.0
      %7972 = vmatpush1.msra.mxu0 0.0
      %7973 = vmatprep.subr.mxu0 0.0
      %7974 = vmatpush1.msra.mxu0 0.0
      %7975 = vmatprep.subr.mxu0 0.0
      %7976 = vmatpush1.msra.mxu0 0.0
      %7977 = vmatprep.subr.mxu0 0.0
      %7978 = vmatpush1.msra.mxu0 0.0
      %7979 = vmatprep.mubr.f32.mxu0 0.0
      %7980 = vmatmul.mubr.f32.gmra.mrb[0].mxu0 %v7897
      %v7981 = vpop.f32.mrb[0].mxu0
      %v7982 = vadd.f32 %v7914, %v7981
      %v7983 = vpop.f32.mrb[0].mxu0
      %7984 = vdwg.mxu0
      %v7985 = vtanh.pop %v7982
      %v7986 = vld [vmem:[%s8] sm:$0x1]
      %v7988 = vlaneseq
      %v7989 = vshrl.u32 %v7988, 7
      %v7990 = vsub.s32 0, %v7989
      %v7991 = vrot.slane %v7986, %v7990
      %7992 = vrot.lane.b32.xlu0 %v7991, 64
      %v7993 = vpop.permute.xlu0 %7992
      %v7995 = vmul.f32 %v7985, %v7993
      %7997 = vrot.lane.b32.xlu0 %v7995, 64
      %v7998 = vpop.permute.xlu0 %7997
      %v8000 = vsel %vm2296, %v7998, 0.0
      %8001 = vadd.xlane.f32.xlu0 %v8000
      %v8002 = vpop.xlane.xlu0 %8001
      %v8003 = vld [vmem:[#allocation6] sm:$0x1]
      %v8004 = vadd.f32 %v8002, %v8003
      %v8005 = vlaneseq
      %v8006 = vand.u32 %v8005, 127
      %vm8007 = vcmp.lt.s32.totalorder %v8006, 64
      %8009 = vset.pattern.permute.xlu0 0
      %8010 = vperm.xlu0 %8009, %v8004
      %v8011 = vpop.permute.xlu0 %8010
      %v8013 = vsel %vm8007, %v7985, %v8011
      %8014 = vst [vmem:[%s357] sm:$0x1] %v8013
      %p8015 = scmp.lt.s32.totalorder %s23, 1
      %s8016 = scalar_select %p8015, %s23, 1
      %s8017 = scalar_lea.vmem %s10, %s8016
      // Predicated region
      $region61: #{model_forward.1} parent=59 // pred_check
        %p8018 = pneg %p256
      $region62: #{model_forward.1} parent=59 // pred_check_branch
        %8020 = sbr.rel (%p8018) target = $region64
      $region63: #{model_forward.1} parent=59 // pred_region
        _
      $region64: #{model_forward.1} parent=59 // pred_fallthru
        _
    $region60: #{model_forward.1} parent=5 // pred_fallthru
      _
    %p8021 = scmp.le.s32.totalorder 2, %s18
    // Predicated region
    $region65: #{model_forward.1} parent=5 // pred_check
      %p8022 = pneg %p8021
    $region66: #{model_forward.1} parent=5 // pred_check_branch
      %8024 = sbr.rel (%p8022) target = $region68
    $region67: #{model_forward.1} parent=5 // pred_region
      %s8025 = ssub.s32 %s18, 2
      // Predicated region
      $region69: #{model_forward.1} parent=67 // pred_check
        %p8026 = pneg %p262
      $region70: #{model_forward.1} parent=67 // pred_check_branch
        %8028 = sbr.rel (%p8026) target = $region72
      $region71: #{model_forward.1} parent=67 // pred_region
        %p8029 = scmp.lt.s32.totalorder %s24, 1
        %s8030 = scalar_select %p8029, %s24, 1
        %s8031 = scalar_lea.vmem %s10, %s8030
      $region72: #{model_forward.1} parent=67 // pred_fallthru
        _
    $region68: #{model_forward.1} parent=5 // pred_fallthru
      _
  $region6: #{model_forward.1} parent=0 // loop_footer
    %s22 = sadd.s32 1, %s18
  $region7: #{model_forward.1} parent=0 // loop_footer_branch
    %17 = sbr.rel target = $region3
  $region8: #{model_forward.1} parent=0 // loop_exit
    _

</llo_original>
